<compile_context>
chip_gen: v7x
topology: tpu7x:2x2x1
jax: 0.10.0
libtpu: 0.0.40
codegen_flags: <defaults>
</compile_context>

<pallas_src>
import functools

import jax
import jax.numpy as jnp
from jax.experimental import pallas as pl
from jax.experimental.pallas import tpu as pltpu

EPS = 1e-5          # torch.nn.BatchNorm1d default
LANES = 1024        # channels of the last backbone layer / MaxPooling width
_T12_CAP = 8192     # row-tile cap for the cheap stats passes (layers 1-2)


# ---------------------------------------------------------------------------
# hardware plan
# ---------------------------------------------------------------------------

@functools.lru_cache(maxsize=1)
def _vmem_capacity_bytes():
    try:
        return int(pltpu.get_tpu_info().vmem_capacity_bytes)
    except Exception:
        # Unknown chip / no info -> assume the smallest (v7x-like, 64 MiB).
        return 64 * 1024 * 1024


def _round_up(a, m):
    return -(-a // m) * m


def _plan(n, t34_cap):
    """Row padding and row tiles.

    t34 is used by the passes that materialize the (t, 1024) activation
    (stats3 / pool); t12 by the cheap stats1/stats2 passes.
    """
    if n <= t34_cap:
        n_pad = _round_up(n, 8)
        return n_pad, n_pad, n_pad
    t34 = t34_cap
    n_pad = _round_up(n, t34)
    m = n_pad // t34
    k = 1
    for cand in range(max(1, min(m, _T12_CAP // t34)), 0, -1):
        if m % cand == 0:
            k = cand
            break
    return n_pad, t34, t34 * k


# ---------------------------------------------------------------------------
# in-kernel helpers
# ---------------------------------------------------------------------------

def _layer1(x, w1, b1):
    # (T,3) @ (3,64): K=3 is too shallow for the MXU -> 3 broadcast FMAs (VPU).
    z = (x[:, 0:1] * w1[0:1, :]
         + x[:, 1:2] * w1[1:2, :]
         + x[:, 2:3] * w1[2:3, :] + b1)
    return jnp.maximum(z, 0.0)


def _linear_relu(h, w, b):
    return jnp.maximum(jnp.dot(h, w, preferred_element_type=jnp.float32) + b, 0.0)


def _backbone(x, w1, b1, sc1, sh1, w2, b2, sc2, sh2, w3, b3, sc3, sh3):
    h1 = _layer1(x, w1, b1) * sc1 + sh1
    h2 = _linear_relu(h1, w2, b2) * sc2 + sh2
    return _linear_relu(h2, w3, b3) * sc3 + sh3


def _row_mask(mask_info, rows):
    # Only generated when padded rows exist (static decision).
    if mask_info is None:
        return None
    n_true, tile, steps = mask_info
    start = (pl.program_id(0) * steps + pl.program_id(1)) * tile
    idx = start + jax.lax.broadcasted_iota(jnp.int32, (rows, 1), 0)
    return (idx < n_true).astype(jnp.float32)


def _accum_stats(stat_ref, comp_ref, z, mask):
    """Accumulate per-channel [sum, sumsq] into a revisited (1,2,C) block."""
    if mask is not None:
        z = z * mask
    upd = jnp.concatenate(
        [jnp.sum(z, axis=0, keepdims=True),
         jnp.sum(z * z, axis=0, keepdims=True)], axis=0)[None]   # (1, 2, C)

    @pl.when(pl.program_id(1) == 0)
    def _():
        stat_ref[...] = jnp.zeros_like(stat_ref)
        comp_ref[...] = jnp.zeros_like(comp_ref)

    # Kahan-compensated accumulation across row tiles (the per-tile jnp.sum
    # reductions are already accurate; this keeps the cross-tile chain tight
    # so the E[x^2] - mean^2 subtraction stays well-conditioned).
    acc = stat_ref[...]
    y = upd - comp_ref[...]
    new = acc + y
    comp_ref[...] = (new - acc) - y
    stat_ref[...] = new


# ---------------------------------------------------------------------------
# kernels
# ---------------------------------------------------------------------------

def stats1_kernel(mask_info, x_ref, w1, b1, stat_ref, comp_ref):
    z = _layer1(x_ref[...], w1[...], b1[...])
    _accum_stats(stat_ref, comp_ref, z, _row_mask(mask_info, z.shape[0]))


def stats2_kernel(mask_info, x_ref, w1, b1, sc1, sh1, w2, b2, stat_ref, comp_ref):
    h1 = _layer1(x_ref[...], w1[...], b1[...]) * sc1[...] + sh1[...]
    z = _linear_relu(h1, w2[...], b2[...])
    _accum_stats(stat_ref, comp_ref, z, _row_mask(mask_info, z.shape[0]))


def stats3_kernel(mask_info, x_ref, w1, b1, sc1, sh1, w2, b2, sc2, sh2,
                  w3, b3, stat_ref, comp_ref):
    h1 = _layer1(x_ref[...], w1[...], b1[...]) * sc1[...] + sh1[...]
    h2 = _linear_relu(h1, w2[...], b2[...]) * sc2[...] + sh2[...]
    z = _linear_relu(h2, w3[...], b3[...])
    _accum_stats(stat_ref, comp_ref, z, _row_mask(mask_info, z.shape[0]))


def pool_small_p_kernel(num_points, x_ref, w1, b1, sc1, sh1, w2, b2, sc2, sh2,
                        w3, b3, sc3, sh3, sel_ref, m_ref):
    # P < 128: grouped lane max via window-doubling rolls (log2(P) XLU ops),
    # then a one-hot MXU matmul picks the group-start lanes.
    h3 = _backbone(x_ref[...], w1[...], b1[...], sc1[...], sh1[...],
                   w2[...], b2[...], sc2[...], sh2[...],
                   w3[...], b3[...], sc3[...], sh3[...])       # (T, 1024)
    red = h3
    span = 1
    while span < num_points:
        # jnp.roll semantics: result[c] = x[(c + span) % 1024]
        red = jnp.maximum(red, pltpu.roll(red, shift=LANES - span, axis=1))
        span *= 2
    m_ref[...] = jnp.dot(red, sel_ref[...], preferred_element_type=jnp.float32)


def pool_big_p_kernel(num_points, x_ref, w1, b1, sc1, sh1, w2, b2, sc2, sh2,
                      w3, b3, sc3, sh3, m_ref):
    # P >= 128: each group spans whole 128-lane chunks -> vreg-aligned column
    # maxes (VPU) followed by one cross-lane reduce per group.  No rolls, no
    # selection matmul.  For P=1024 this degenerates to a plain row max.
    h3 = _backbone(x_ref[...], w1[...], b1[...], sc1[...], sh1[...],
                   w2[...], b2[...], sc2[...], sh2[...],
                   w3[...], b3[...], sc3[...], sh3[...])       # (T, 1024)
    n_chunks = num_points // 128
    n_groups = LANES // num_points
    for g in range(n_groups):
        base = g * num_points
        gm = h3[:, base:base + 128]
        for j in range(1, n_chunks):
            gm = jnp.maximum(gm, h3[:, base + j * 128: base + (j + 1) * 128])
        m_ref[:, g:g + 1] = jnp.max(gm, axis=1, keepdims=True)


def _nl_batch(h, w, b, g, beta):
    # NonLinear with in-kernel (full-batch) BatchNorm1d training statistics.
    z = jnp.maximum(jnp.dot(h, w, preferred_element_type=jnp.float32) + b, 0.0)
    mu = jnp.mean(z, axis=0, keepdims=True)
    var = jnp.mean((z - mu) ** 2, axis=0, keepdims=True)   # biased, like torch
    return g * (z - mu) * jax.lax.rsqrt(var + EPS) + beta


def head_kernel(pooled_ref, w4, b4, g4, be4, w5, b5, g5, be5, w6, b6, mat_ref):
    h = _nl_batch(pooled_ref[...], w4[...], b4[...], g4[...], be4[...])
    h = _nl_batch(h, w5[...], b5[...], g5[...], be5[...])
    mat_ref[...] = jnp.dot(h, w6[...], preferred_element_type=jnp.float32) + b6[...]


# ---------------------------------------------------------------------------
# wrapper
# ---------------------------------------------------------------------------

def _full(a):
    nd = a.ndim
    return pl.BlockSpec(a.shape, lambda *_: (0,) * nd)


def _bn_affine(stats, gamma, beta, n_rows):
    mean = stats[0:1, :] / n_rows
    var = jnp.maximum(stats[1:2, :] / n_rows - mean * mean, 0.0)
    scale = gamma * jax.lax.rsqrt(var + EPS)
    return scale, beta - mean * scale


def _stats_pass(kernel_fn, x_pad, operands, c, t, n_pad, n_true, vmem_limit):
    steps_total = n_pad // t
    # Leading size-2 "parallel" shard axis: on v7x each TensorCore accumulates
    # its own (1,2,C) partial; on single-core chips the extra cost is one tiny
    # block writeback.  Partials are combined outside the kernel.
    n_shards = 2 if (steps_total >= 2 and steps_total % 2 == 0) else 1
    steps = steps_total // n_shards
    mask_info = None if n_pad == n_true else (n_true, t, steps)
    parts = pl.pallas_call(
        functools.partial(kernel_fn, mask_info),
        out_shape=jax.ShapeDtypeStruct((n_shards, 2, c), jnp.float32),
        grid=(n_shards, steps),
        in_specs=[pl.BlockSpec((t, 3), lambda s, i: (s * steps + i, 0))]
                 + [_full(a) for a in operands],
        out_specs=pl.BlockSpec((1, 2, c), lambda s, i: (s, 0, 0)),
        scratch_shapes=[pltpu.VMEM((1, 2, c), jnp.float32)],
        compiler_params=pltpu.CompilerParams(
            dimension_semantics=("parallel", "arbitrary"),
            vmem_limit_bytes=vmem_limit),
    )(x_pad, *operands)
    return jnp.sum(parts, axis=0)


@functools.partial(jax.jit, static_argnums=2)
def input_tnet_forward(x, params, num_points):
    (w1, b1, g1, be1, w2, b2, g2, be2, w3, b3, g3, be3,
     w4, b4, g4, be4, w5, b5, g5, be5, w6, b6) = params

    n = x.shape[0]
    p = num_points
    assert n % p == 0, "rows must be divisible by num_points"
    n_batch = n // p
    if LANES % p != 0:
        # TODO(synk): general num_points (not dividing 1024) needs a strided
        # odd-view pooling fallback; only P | 1024 (PointNet's usual sizes).
        raise NotImplementedError("num_points must divide 1024")
    n_groups = LANES // p

    # ---- chip-aware tiling ---------------------------------------------------
    vmem_cap = _vmem_capacity_bytes()
    big_vmem = vmem_cap >= (100 << 20)            # v5e / v6e (128 MiB physical)
    vmem_limit = (80 << 20) if big_vmem else (44 << 20)
    t34_cap = 2048 if big_vmem else 1024          # passes that hold (t,1024)

    n_pad, t34, t12 = _plan(n, t34_cap)
    x_pad = x if n_pad == n else jnp.pad(x, ((0, n_pad - n), (0, 0)))

    # ---- pass 1: batch stats of relu(x @ W1 + b1) ----------------------------
    stats1 = _stats_pass(stats1_kernel, x_pad, (w1, b1),
                         64, t12, n_pad, n, vmem_limit)
    sc1, sh1 = _bn_affine(stats1, g1, be1, n)

    # ---- pass 2: batch stats of layer 2 --------------------------------------
    stats2 = _stats_pass(stats2_kernel, x_pad, (w1, b1, sc1, sh1, w2, b2),
                         128, t12, n_pad, n, vmem_limit)
    sc2, sh2 = _bn_affine(stats2, g2, be2, n)

    # ---- pass 3: batch stats of layer 3 --------------------------------------
    stats3 = _stats_pass(stats3_kernel, x_pad,
                         (w1, b1, sc1, sh1, w2, b2, sc2, sh2, w3, b3),
                         LANES, t34, n_pad, n, vmem_limit)
    sc3, sh3 = _bn_affine(stats3, g3, be3, n)

    bb_ops = (w1, b1, sc1, sh1, w2, b2, sc2, sh2, w3, b3, sc3, sh3)

    # ---- pass 4: recompute backbone + fused odd-view max-pool ----------------
    if p >= 128:
        kern = functools.partial(pool_big_p_kernel, p)
        ops = bb_ops
    else:
        # one-hot (1024, n_groups) selector built from iota comparisons:
        # column g picks lane g*P (the group-start lane after the roll tree).
        lane = jax.lax.broadcasted_iota(jnp.int32, (LANES, n_groups), 0)
        grp = jax.lax.broadcasted_iota(jnp.int32, (LANES, n_groups), 1)
        sel = (lane == grp * p).astype(jnp.float32)
        kern = functools.partial(pool_small_p_kernel, p)
        ops = bb_ops + (sel,)

    grouped = pl.pallas_call(
        kern,
        out_shape=jax.ShapeDtypeStruct((n_pad, n_groups), jnp.float32),
        grid=(n_pad // t34,),
        in_specs=[pl.BlockSpec((t34, 3), lambda i: (i, 0))]
                 + [_full(a) for a in ops],
        out_specs=pl.BlockSpec((t34, n_groups), lambda i: (i, 0)),
        compiler_params=pltpu.CompilerParams(
            dimension_semantics=("parallel",),
            vmem_limit_bytes=vmem_limit),
    )(x_pad, *ops)
    if n_pad != n:
        grouped = grouped[:n]
    pooled = grouped.reshape(n_batch, LANES)   # exact PyTorch MaxPooling result

    # ---- head: 1024 -> 512 -> 256 -> 9 (BN over the B pooled rows) -----------
    mats = pl.pallas_call(
        head_kernel,
        out_shape=jax.ShapeDtypeStruct((n_batch, 9), jnp.float32),
        in_specs=[pl.BlockSpec(memory_space=pltpu.MemorySpace.VMEM)
                  for _ in range(11)],
        out_specs=pl.BlockSpec(memory_space=pltpu.MemorySpace.VMEM),
    )(pooled, w4, b4, g4, be4, w5, b5, g5, be5, w6, b6)

    # ---- apply the per-batch 3x3 transform (tiny & memory-bound; per the
    # performance review this is left to XLA's batched matmul). ----------------
    mat3 = mats.reshape(n_batch, 3, 3)
    out = jnp.einsum('bpd,bde->bpe', x.reshape(n_batch, p, 3), mat3)
    return out.reshape(n, 3)


# ---------------------------------------------------------------------------
# params / reference
# ---------------------------------------------------------------------------

def init_params(key):
    """PyTorch-default-style init (U(-1/sqrt(in), 1/sqrt(in)), BN gamma=1,
    beta=0).  Weights stored (in, out); bias/gamma/beta stored (1, out)."""
    dims = [(3, 64), (64, 128), (128, 1024), (1024, 512), (512, 256), (256, 9)]
    params = []
    for i, (cin, cout) in enumerate(dims):
        key, kw, kb = jax.random.split(key, 3)
        bound = 1.0 / (cin ** 0.5)
        w = jax.random.uniform(kw, (cin, cout), jnp.float32, -bound, bound)
        b = jax.random.uniform(kb, (1, cout), jnp.float32, -bound, bound)
        params += [w, b]
        if i < 5:   # NonLinear layers have BatchNorm; the last Linear does not
            params += [jnp.ones((1, cout), jnp.float32),
                       jnp.zeros((1, cout), jnp.float32)]
    return params


def reference_forward(x, params, num_points):
    """Pure-JAX mirror of the PyTorch forward (for correctness check)."""
    (w1, b1, g1, be1, w2, b2, g2, be2, w3, b3, g3, be3,
     w4, b4, g4, be4, w5, b5, g5, be5, w6, b6) = params

    def nl(h, w, b, g, be):
        z = jnp.maximum(h @ w + b, 0.0)
        mu = z.mean(0, keepdims=True)
        var = ((z - mu) ** 2).mean(0, keepdims=True)
        return g * (z - mu) / jnp.sqrt(var + EPS) + be

    n = x.shape[0]
    p = num_points
    b_ = n // p
    h = nl(nl(nl(x, w1, b1, g1, be1), w2, b2, g2, be2), w3, b3, g3, be3)
    pooled = jnp.max(h.reshape(b_, 1024, p), axis=-1)        # exact odd view
    h = nl(nl(pooled, w4, b4, g4, be4), w5, b5, g5, be5)
    mat = (h @ w6 + b6).reshape(b_, 3, 3)
    out = jnp.einsum('bpd,bde->bpe', x.reshape(b_, p, 3), mat)
    return out.reshape(n, 3)


if __name__ == "__main__":
    key = jax.random.PRNGKey(0)
    # (batch, num_points): small original case; a padded/masked awkward case
    # with P >= 128; and a larger case exercising the sharded stats passes and
    # the P = 1024 row-max pooling path.
    configs = [(2, 16), (5, 512), (8, 1024)]
    for batch, num_points in configs:
        n = batch * num_points
        key, kx, kp = jax.random.split(key, 3)
        x = jax.random.normal(kx, (n, 3), jnp.float32)   # (B * num_points, 3)
        params = init_params(kp)

        out = jax.block_until_ready(input_tnet_forward(x, params, num_points))
        ref = reference_forward(x, params, num_points)

        assert out.shape == (n, 3), (out.shape, batch, num_points)
        max_err = float(jnp.max(jnp.abs(out - ref)))
        assert jnp.allclose(out, ref, rtol=5e-2, atol=5e-2), (
            "mismatch vs JAX reference for (batch=%d, P=%d), max abs err = %f"
            % (batch, num_points, max_err))

    print("KERNEL_OK")
</pallas_src>

<mosaic_0001>
module attributes {stable_mosaic.version = 11 : i64} {
  func.func @stats2_kernel(%arg0: i32, %arg1: i32, %arg2: memref<32x3xf32, #tpu.memory_space<vmem>>, %arg3: memref<3x64xf32, #tpu.memory_space<vmem>>, %arg4: memref<1x64xf32, #tpu.memory_space<vmem>>, %arg5: memref<1x64xf32, #tpu.memory_space<vmem>>, %arg6: memref<1x64xf32, #tpu.memory_space<vmem>>, %arg7: memref<64x128xf32, #tpu.memory_space<vmem>>, %arg8: memref<1x128xf32, #tpu.memory_space<vmem>>, %arg9: memref<1x2x128xf32, #tpu.memory_space<vmem>>, %arg10: memref<1x2x128xf32, #tpu.memory_space<vmem>>) attributes {dimension_semantics = [#tpu.dimension_semantics<parallel>, #tpu.dimension_semantics<arbitrary>], iteration_bounds = array<i64: 1, 1>, scalar_prefetch = 0 : i64, scratch_operands = 1 : i64, tpu.core_type = #tpu.core_type<tc>, window_params = [{transform_indices = @transform_0, window_bounds = array<i64: 32, 3>}, {pipeline_mode = #tpu.pipeline_mode<synchronous>, transform_indices = @transform_1, window_bounds = array<i64: 3, 64>}, {pipeline_mode = #tpu.pipeline_mode<synchronous>, transform_indices = @transform_2, window_bounds = array<i64: 1, 64>}, {pipeline_mode = #tpu.pipeline_mode<synchronous>, transform_indices = @transform_3, window_bounds = array<i64: 1, 64>}, {pipeline_mode = #tpu.pipeline_mode<synchronous>, transform_indices = @transform_4, window_bounds = array<i64: 1, 64>}, {pipeline_mode = #tpu.pipeline_mode<synchronous>, transform_indices = @transform_5, window_bounds = array<i64: 64, 128>}, {pipeline_mode = #tpu.pipeline_mode<synchronous>, transform_indices = @transform_6, window_bounds = array<i64: 1, 128>}, {transform_indices = @transform_7, window_bounds = array<i64: 1, 2, 128>}]} {
    %c0 = arith.constant 0 : index
    %c0_0 = arith.constant 0 : index
    %0 = vector.load %arg2[%c0, %c0_0] : memref<32x3xf32, #tpu.memory_space<vmem>>, vector<32x3xf32>
    %c0_1 = arith.constant 0 : index
    %c0_2 = arith.constant 0 : index
    %1 = vector.load %arg3[%c0_1, %c0_2] : memref<3x64xf32, #tpu.memory_space<vmem>>, vector<3x64xf32>
    %c0_3 = arith.constant 0 : index
    %c0_4 = arith.constant 0 : index
    %2 = vector.load %arg4[%c0_3, %c0_4] : memref<1x64xf32, #tpu.memory_space<vmem>>, vector<1x64xf32>
    %3 = vector.extract_strided_slice %0 {offsets = [0, 0], sizes = [32, 1], strides = [1, 1]} : vector<32x3xf32> to vector<32x1xf32>
    %4 = vector.extract_strided_slice %1 {offsets = [0, 0], sizes = [1, 64], strides = [1, 1]} : vector<3x64xf32> to vector<1x64xf32>
    %5 = vector.broadcast %3 : vector<32x1xf32> to vector<32x64xf32>
    %6 = vector.broadcast %4 : vector<1x64xf32> to vector<32x64xf32>
    %7 = arith.mulf %5, %6 : vector<32x64xf32>
    %8 = vector.extract_strided_slice %0 {offsets = [0, 1], sizes = [32, 1], strides = [1, 1]} : vector<32x3xf32> to vector<32x1xf32>
    %9 = vector.extract_strided_slice %1 {offsets = [1, 0], sizes = [1, 64], strides = [1, 1]} : vector<3x64xf32> to vector<1x64xf32>
    %10 = vector.broadcast %8 : vector<32x1xf32> to vector<32x64xf32>
    %11 = vector.broadcast %9 : vector<1x64xf32> to vector<32x64xf32>
    %12 = arith.mulf %10, %11 : vector<32x64xf32>
    %13 = arith.addf %7, %12 : vector<32x64xf32>
    %14 = vector.extract_strided_slice %0 {offsets = [0, 2], sizes = [32, 1], strides = [1, 1]} : vector<32x3xf32> to vector<32x1xf32>
    %15 = vector.extract_strided_slice %1 {offsets = [2, 0], sizes = [1, 64], strides = [1, 1]} : vector<3x64xf32> to vector<1x64xf32>
    %16 = vector.broadcast %14 : vector<32x1xf32> to vector<32x64xf32>
    %17 = vector.broadcast %15 : vector<1x64xf32> to vector<32x64xf32>
    %18 = arith.mulf %16, %17 : vector<32x64xf32>
    %19 = arith.addf %13, %18 : vector<32x64xf32>
    %20 = vector.broadcast %2 : vector<1x64xf32> to vector<32x64xf32>
    %21 = arith.addf %19, %20 : vector<32x64xf32>
    %cst = arith.constant 0.000000e+00 : f32
    %22 = vector.broadcast %cst : f32 to vector<32x64xf32>
    %23 = arith.maximumf %21, %22 : vector<32x64xf32>
    %c0_5 = arith.constant 0 : index
    %c0_6 = arith.constant 0 : index
    %24 = vector.load %arg5[%c0_5, %c0_6] : memref<1x64xf32, #tpu.memory_space<vmem>>, vector<1x64xf32>
    %25 = vector.broadcast %24 : vector<1x64xf32> to vector<32x64xf32>
    %26 = arith.mulf %23, %25 : vector<32x64xf32>
    %c0_7 = arith.constant 0 : index
    %c0_8 = arith.constant 0 : index
    %27 = vector.load %arg6[%c0_7, %c0_8] : memref<1x64xf32, #tpu.memory_space<vmem>>, vector<1x64xf32>
    %28 = vector.broadcast %27 : vector<1x64xf32> to vector<32x64xf32>
    %29 = arith.addf %26, %28 : vector<32x64xf32>
    %c0_9 = arith.constant 0 : index
    %c0_10 = arith.constant 0 : index
    %30 = vector.load %arg7[%c0_9, %c0_10] : memref<64x128xf32, #tpu.memory_space<vmem>>, vector<64x128xf32>
    %c0_11 = arith.constant 0 : index
    %c0_12 = arith.constant 0 : index
    %31 = vector.load %arg8[%c0_11, %c0_12] : memref<1x128xf32, #tpu.memory_space<vmem>>, vector<1x128xf32>
    %cst_13 = arith.constant dense<0.000000e+00> : vector<32x128xf32>
    %32 = tpu.matmul %29, %30, %cst_13 {dimension_numbers = #tpu.dot_dimension_numbers<[1], [0], [0], [1], [0, 0, 1, 1], [], []>} : vector<32x64xf32>, vector<64x128xf32>, vector<32x128xf32> -> vector<32x128xf32>
    %33 = vector.broadcast %31 : vector<1x128xf32> to vector<32x128xf32>
    %34 = arith.addf %32, %33 : vector<32x128xf32>
    %cst_14 = arith.constant 0.000000e+00 : f32
    %35 = vector.broadcast %cst_14 : f32 to vector<32x128xf32>
    %36 = arith.maximumf %34, %35 : vector<32x128xf32>
    %cst_15 = arith.constant dense<0.000000e+00> : vector<128xf32>
    %37 = vector.multi_reduction <add>, %36, %cst_15 [0] : vector<32x128xf32> to vector<128xf32>
    %38 = vector.shape_cast %37 : vector<128xf32> to vector<1x128xf32>
    %39 = arith.mulf %36, %36 : vector<32x128xf32>
    %cst_16 = arith.constant dense<0.000000e+00> : vector<128xf32>
    %40 = vector.multi_reduction <add>, %39, %cst_16 [0] : vector<32x128xf32> to vector<128xf32>
    %41 = vector.shape_cast %40 : vector<128xf32> to vector<1x128xf32>
    %42 = tpu.concatenate %38, %41 in 0 : vector<1x128xf32>, vector<1x128xf32> -> vector<2x128xf32>
    %43 = vector.shape_cast %42 : vector<2x128xf32> to vector<1x2x128xf32>
    %c0_i32 = arith.constant 0 : i32
    %44 = arith.cmpi eq, %arg1, %c0_i32 : i32
    %45 = arith.extui %44 : i1 to i32
    %c0_i32_17 = arith.constant 0 : i32
    %46 = arith.cmpi ne, %45, %c0_i32_17 : i32
    scf.if %46 {
      %cst_30 = arith.constant 0.000000e+00 : f32
      %55 = vector.broadcast %cst_30 : f32 to vector<1x2x128xf32>
      %c0_31 = arith.constant 0 : index
      %c0_32 = arith.constant 0 : index
      %c0_33 = arith.constant 0 : index
      %56 = vector.load %arg9[%c0_31, %c0_32, %c0_33] : memref<1x2x128xf32, #tpu.memory_space<vmem>>, vector<1x2x128xf32>
      tpu.vector_store %arg9[%c0_31, %c0_32, %c0_33], %55 {strides = array<i32>} : memref<1x2x128xf32, #tpu.memory_space<vmem>>, vector<1x2x128xf32>,
      %cst_34 = arith.constant 0.000000e+00 : f32
      %57 = vector.broadcast %cst_34 : f32 to vector<1x2x128xf32>
      %c0_35 = arith.constant 0 : index
      %c0_36 = arith.constant 0 : index
      %c0_37 = arith.constant 0 : index
      %58 = vector.load %arg10[%c0_35, %c0_36, %c0_37] : memref<1x2x128xf32, #tpu.memory_space<vmem>>, vector<1x2x128xf32>
      tpu.vector_store %arg10[%c0_35, %c0_36, %c0_37], %57 {strides = array<i32>} : memref<1x2x128xf32, #tpu.memory_space<vmem>>, vector<1x2x128xf32>,
    } else {
    }
    %c0_18 = arith.constant 0 : index
    %c0_19 = arith.constant 0 : index
    %c0_20 = arith.constant 0 : index
    %47 = vector.load %arg9[%c0_18, %c0_19, %c0_20] : memref<1x2x128xf32, #tpu.memory_space<vmem>>, vector<1x2x128xf32>
    %c0_21 = arith.constant 0 : index
    %c0_22 = arith.constant 0 : index
    %c0_23 = arith.constant 0 : index
    %48 = vector.load %arg10[%c0_21, %c0_22, %c0_23] : memref<1x2x128xf32, #tpu.memory_space<vmem>>, vector<1x2x128xf32>
    %49 = arith.subf %43, %48 : vector<1x2x128xf32>
    %50 = arith.addf %47, %49 : vector<1x2x128xf32>
    %51 = arith.subf %50, %47 : vector<1x2x128xf32>
    %52 = arith.subf %51, %49 : vector<1x2x128xf32>
    %c0_24 = arith.constant 0 : index
    %c0_25 = arith.constant 0 : index
    %c0_26 = arith.constant 0 : index
    %53 = vector.load %arg10[%c0_24, %c0_25, %c0_26] : memref<1x2x128xf32, #tpu.memory_space<vmem>>, vector<1x2x128xf32>
    tpu.vector_store %arg10[%c0_24, %c0_25, %c0_26], %52 {strides = array<i32>} : memref<1x2x128xf32, #tpu.memory_space<vmem>>, vector<1x2x128xf32>,
    %c0_27 = arith.constant 0 : index
    %c0_28 = arith.constant 0 : index
    %c0_29 = arith.constant 0 : index
    %54 = vector.load %arg9[%c0_27, %c0_28, %c0_29] : memref<1x2x128xf32, #tpu.memory_space<vmem>>, vector<1x2x128xf32>
    tpu.vector_store %arg9[%c0_27, %c0_28, %c0_29], %50 {strides = array<i32>} : memref<1x2x128xf32, #tpu.memory_space<vmem>>, vector<1x2x128xf32>,
    return
  }
  func.func @transform_0(%arg0: i32, %arg1: i32) -> (i32, i32) {
    %c1_i32 = arith.constant 1 : i32
    %0 = arith.muli %arg0, %c1_i32 : i32
    %1 = arith.addi %0, %arg1 : i32
    %c0_i32 = arith.constant 0 : i32
    %c0_i32_0 = arith.constant 0 : i32
    return %1, %c0_i32 : i32, i32
  }
  func.func @transform_1(%arg0: i32, %arg1: i32) -> (i32, i32) {
    %c0_i32 = arith.constant 0 : i32
    %c0_i32_0 = arith.constant 0 : i32
    %c0_i32_1 = arith.constant 0 : i32
    return %c0_i32, %c0_i32_0 : i32, i32
  }
  func.func @transform_2(%arg0: i32, %arg1: i32) -> (i32, i32) {
    %c0_i32 = arith.constant 0 : i32
    %c0_i32_0 = arith.constant 0 : i32
    %c0_i32_1 = arith.constant 0 : i32
    return %c0_i32, %c0_i32_0 : i32, i32
  }
  func.func @transform_3(%arg0: i32, %arg1: i32) -> (i32, i32) {
    %c0_i32 = arith.constant 0 : i32
    %c0_i32_0 = arith.constant 0 : i32
    %c0_i32_1 = arith.constant 0 : i32
    return %c0_i32, %c0_i32_0 : i32, i32
  }
  func.func @transform_4(%arg0: i32, %arg1: i32) -> (i32, i32) {
    %c0_i32 = arith.constant 0 : i32
    %c0_i32_0 = arith.constant 0 : i32
    %c0_i32_1 = arith.constant 0 : i32
    return %c0_i32, %c0_i32_0 : i32, i32
  }
  func.func @transform_5(%arg0: i32, %arg1: i32) -> (i32, i32) {
    %c0_i32 = arith.constant 0 : i32
    %c0_i32_0 = arith.constant 0 : i32
    %c0_i32_1 = arith.constant 0 : i32
    return %c0_i32, %c0_i32_0 : i32, i32
  }
  func.func @transform_6(%arg0: i32, %arg1: i32) -> (i32, i32) {
    %c0_i32 = arith.constant 0 : i32
    %c0_i32_0 = arith.constant 0 : i32
    %c0_i32_1 = arith.constant 0 : i32
    return %c0_i32, %c0_i32_0 : i32, i32
  }
  func.func @transform_7(%arg0: i32, %arg1: i32) -> (i32, i32, i32) {
    %c0_i32 = arith.constant 0 : i32
    %c0_i32_0 = arith.constant 0 : i32
    %c0_i32_1 = arith.constant 0 : i32
    return %arg0, %c0_i32, %c0_i32_0 : i32, i32, i32
  }
}

module attributes {stable_mosaic.version = 11 : i64} {
  func.func @stats1_kernel(%arg0: i32, %arg1: i32, %arg2: memref<32x3xf32, #tpu.memory_space<vmem>>, %arg3: memref<3x64xf32, #tpu.memory_space<vmem>>, %arg4: memref<1x64xf32, #tpu.memory_space<vmem>>, %arg5: memref<1x2x64xf32, #tpu.memory_space<vmem>>, %arg6: memref<1x2x64xf32, #tpu.memory_space<vmem>>) attributes {dimension_semantics = [#tpu.dimension_semantics<parallel>, #tpu.dimension_semantics<arbitrary>], iteration_bounds = array<i64: 1, 1>, scalar_prefetch = 0 : i64, scratch_operands = 1 : i64, tpu.core_type = #tpu.core_type<tc>, window_params = [{transform_indices = @transform_0, window_bounds = array<i64: 32, 3>}, {pipeline_mode = #tpu.pipeline_mode<synchronous>, transform_indices = @transform_1, window_bounds = array<i64: 3, 64>}, {pipeline_mode = #tpu.pipeline_mode<synchronous>, transform_indices = @transform_2, window_bounds = array<i64: 1, 64>}, {transform_indices = @transform_3, window_bounds = array<i64: 1, 2, 64>}]} {
    %c0 = arith.constant 0 : index
    %c0_0 = arith.constant 0 : index
    %0 = vector.load %arg2[%c0, %c0_0] : memref<32x3xf32, #tpu.memory_space<vmem>>, vector<32x3xf32>
    %c0_1 = arith.constant 0 : index
    %c0_2 = arith.constant 0 : index
    %1 = vector.load %arg3[%c0_1, %c0_2] : memref<3x64xf32, #tpu.memory_space<vmem>>, vector<3x64xf32>
    %c0_3 = arith.constant 0 : index
    %c0_4 = arith.constant 0 : index
    %2 = vector.load %arg4[%c0_3, %c0_4] : memref<1x64xf32, #tpu.memory_space<vmem>>, vector<1x64xf32>
    %3 = vector.extract_strided_slice %0 {offsets = [0, 0], sizes = [32, 1], strides = [1, 1]} : vector<32x3xf32> to vector<32x1xf32>
    %4 = vector.extract_strided_slice %1 {offsets = [0, 0], sizes = [1, 64], strides = [1, 1]} : vector<3x64xf32> to vector<1x64xf32>
    %5 = vector.broadcast %3 : vector<32x1xf32> to vector<32x64xf32>
    %6 = vector.broadcast %4 : vector<1x64xf32> to vector<32x64xf32>
    %7 = arith.mulf %5, %6 : vector<32x64xf32>
    %8 = vector.extract_strided_slice %0 {offsets = [0, 1], sizes = [32, 1], strides = [1, 1]} : vector<32x3xf32> to vector<32x1xf32>
    %9 = vector.extract_strided_slice %1 {offsets = [1, 0], sizes = [1, 64], strides = [1, 1]} : vector<3x64xf32> to vector<1x64xf32>
    %10 = vector.broadcast %8 : vector<32x1xf32> to vector<32x64xf32>
    %11 = vector.broadcast %9 : vector<1x64xf32> to vector<32x64xf32>
    %12 = arith.mulf %10, %11 : vector<32x64xf32>
    %13 = arith.addf %7, %12 : vector<32x64xf32>
    %14 = vector.extract_strided_slice %0 {offsets = [0, 2], sizes = [32, 1], strides = [1, 1]} : vector<32x3xf32> to vector<32x1xf32>
    %15 = vector.extract_strided_slice %1 {offsets = [2, 0], sizes = [1, 64], strides = [1, 1]} : vector<3x64xf32> to vector<1x64xf32>
    %16 = vector.broadcast %14 : vector<32x1xf32> to vector<32x64xf32>
    %17 = vector.broadcast %15 : vector<1x64xf32> to vector<32x64xf32>
    %18 = arith.mulf %16, %17 : vector<32x64xf32>
    %19 = arith.addf %13, %18 : vector<32x64xf32>
    %20 = vector.broadcast %2 : vector<1x64xf32> to vector<32x64xf32>
    %21 = arith.addf %19, %20 : vector<32x64xf32>
    %cst = arith.constant 0.000000e+00 : f32
    %22 = vector.broadcast %cst : f32 to vector<32x64xf32>
    %23 = arith.maximumf %21, %22 : vector<32x64xf32>
    %cst_5 = arith.constant dense<0.000000e+00> : vector<64xf32>
    %24 = vector.multi_reduction <add>, %23, %cst_5 [0] : vector<32x64xf32> to vector<64xf32>
    %25 = vector.shape_cast %24 : vector<64xf32> to vector<1x64xf32>
    %26 = arith.mulf %23, %23 : vector<32x64xf32>
    %cst_6 = arith.constant dense<0.000000e+00> : vector<64xf32>
    %27 = vector.multi_reduction <add>, %26, %cst_6 [0] : vector<32x64xf32> to vector<64xf32>
    %28 = vector.shape_cast %27 : vector<64xf32> to vector<1x64xf32>
    %29 = tpu.concatenate %25, %28 in 0 : vector<1x64xf32>, vector<1x64xf32> -> vector<2x64xf32>
    %30 = vector.shape_cast %29 : vector<2x64xf32> to vector<1x2x64xf32>
    %c0_i32 = arith.constant 0 : i32
    %31 = arith.cmpi eq, %arg1, %c0_i32 : i32
    %32 = arith.extui %31 : i1 to i32
    %c0_i32_7 = arith.constant 0 : i32
    %33 = arith.cmpi ne, %32, %c0_i32_7 : i32
    scf.if %33 {
      %cst_20 = arith.constant 0.000000e+00 : f32
      %42 = vector.broadcast %cst_20 : f32 to vector<1x2x64xf32>
      %c0_21 = arith.constant 0 : index
      %c0_22 = arith.constant 0 : index
      %c0_23 = arith.constant 0 : index
      %43 = vector.load %arg5[%c0_21, %c0_22, %c0_23] : memref<1x2x64xf32, #tpu.memory_space<vmem>>, vector<1x2x64xf32>
      tpu.vector_store %arg5[%c0_21, %c0_22, %c0_23], %42 {strides = array<i32>} : memref<1x2x64xf32, #tpu.memory_space<vmem>>, vector<1x2x64xf32>,
      %cst_24 = arith.constant 0.000000e+00 : f32
      %44 = vector.broadcast %cst_24 : f32 to vector<1x2x64xf32>
      %c0_25 = arith.constant 0 : index
      %c0_26 = arith.constant 0 : index
      %c0_27 = arith.constant 0 : index
      %45 = vector.load %arg6[%c0_25, %c0_26, %c0_27] : memref<1x2x64xf32, #tpu.memory_space<vmem>>, vector<1x2x64xf32>
      tpu.vector_store %arg6[%c0_25, %c0_26, %c0_27], %44 {strides = array<i32>} : memref<1x2x64xf32, #tpu.memory_space<vmem>>, vector<1x2x64xf32>,
    } else {
    }
    %c0_8 = arith.constant 0 : index
    %c0_9 = arith.constant 0 : index
    %c0_10 = arith.constant 0 : index
    %34 = vector.load %arg5[%c0_8, %c0_9, %c0_10] : memref<1x2x64xf32, #tpu.memory_space<vmem>>, vector<1x2x64xf32>
    %c0_11 = arith.constant 0 : index
    %c0_12 = arith.constant 0 : index
    %c0_13 = arith.constant 0 : index
    %35 = vector.load %arg6[%c0_11, %c0_12, %c0_13] : memref<1x2x64xf32, #tpu.memory_space<vmem>>, vector<1x2x64xf32>
    %36 = arith.subf %30, %35 : vector<1x2x64xf32>
    %37 = arith.addf %34, %36 : vector<1x2x64xf32>
    %38 = arith.subf %37, %34 : vector<1x2x64xf32>
    %39 = arith.subf %38, %36 : vector<1x2x64xf32>
    %c0_14 = arith.constant 0 : index
    %c0_15 = arith.constant 0 : index
    %c0_16 = arith.constant 0 : index
    %40 = vector.load %arg6[%c0_14, %c0_15, %c0_16] : memref<1x2x64xf32, #tpu.memory_space<vmem>>, vector<1x2x64xf32>
    tpu.vector_store %arg6[%c0_14, %c0_15, %c0_16], %39 {strides = array<i32>} : memref<1x2x64xf32, #tpu.memory_space<vmem>>, vector<1x2x64xf32>,
    %c0_17 = arith.constant 0 : index
    %c0_18 = arith.constant 0 : index
    %c0_19 = arith.constant 0 : index
    %41 = vector.load %arg5[%c0_17, %c0_18, %c0_19] : memref<1x2x64xf32, #tpu.memory_space<vmem>>, vector<1x2x64xf32>
    tpu.vector_store %arg5[%c0_17, %c0_18, %c0_19], %37 {strides = array<i32>} : memref<1x2x64xf32, #tpu.memory_space<vmem>>, vector<1x2x64xf32>,
    return
  }
  func.func @transform_0(%arg0: i32, %arg1: i32) -> (i32, i32) {
    %c1_i32 = arith.constant 1 : i32
    %0 = arith.muli %arg0, %c1_i32 : i32
    %1 = arith.addi %0, %arg1 : i32
    %c0_i32 = arith.constant 0 : i32
    %c0_i32_0 = arith.constant 0 : i32
    return %1, %c0_i32 : i32, i32
  }
  func.func @transform_1(%arg0: i32, %arg1: i32) -> (i32, i32) {
    %c0_i32 = arith.constant 0 : i32
    %c0_i32_0 = arith.constant 0 : i32
    %c0_i32_1 = arith.constant 0 : i32
    return %c0_i32, %c0_i32_0 : i32, i32
  }
  func.func @transform_2(%arg0: i32, %arg1: i32) -> (i32, i32) {
    %c0_i32 = arith.constant 0 : i32
    %c0_i32_0 = arith.constant 0 : i32
    %c0_i32_1 = arith.constant 0 : i32
    return %c0_i32, %c0_i32_0 : i32, i32
  }
  func.func @transform_3(%arg0: i32, %arg1: i32) -> (i32, i32, i32) {
    %c0_i32 = arith.constant 0 : i32
    %c0_i32_0 = arith.constant 0 : i32
    %c0_i32_1 = arith.constant 0 : i32
    return %arg0, %c0_i32, %c0_i32_0 : i32, i32, i32
  }
}

module attributes {stable_mosaic.version = 11 : i64} {
  func.func @stats3_kernel(%arg0: i32, %arg1: i32, %arg2: memref<32x3xf32, #tpu.memory_space<vmem>>, %arg3: memref<3x64xf32, #tpu.memory_space<vmem>>, %arg4: memref<1x64xf32, #tpu.memory_space<vmem>>, %arg5: memref<1x64xf32, #tpu.memory_space<vmem>>, %arg6: memref<1x64xf32, #tpu.memory_space<vmem>>, %arg7: memref<64x128xf32, #tpu.memory_space<vmem>>, %arg8: memref<1x128xf32, #tpu.memory_space<vmem>>, %arg9: memref<1x128xf32, #tpu.memory_space<vmem>>, %arg10: memref<1x128xf32, #tpu.memory_space<vmem>>, %arg11: memref<128x1024xf32, #tpu.memory_space<vmem>>, %arg12: memref<1x1024xf32, #tpu.memory_space<vmem>>, %arg13: memref<1x2x1024xf32, #tpu.memory_space<vmem>>, %arg14: memref<1x2x1024xf32, #tpu.memory_space<vmem>>) attributes {dimension_semantics = [#tpu.dimension_semantics<parallel>, #tpu.dimension_semantics<arbitrary>], iteration_bounds = array<i64: 1, 1>, scalar_prefetch = 0 : i64, scratch_operands = 1 : i64, tpu.core_type = #tpu.core_type<tc>, window_params = [{transform_indices = @transform_0, window_bounds = array<i64: 32, 3>}, {pipeline_mode = #tpu.pipeline_mode<synchronous>, transform_indices = @transform_1, window_bounds = array<i64: 3, 64>}, {pipeline_mode = #tpu.pipeline_mode<synchronous>, transform_indices = @transform_2, window_bounds = array<i64: 1, 64>}, {pipeline_mode = #tpu.pipeline_mode<synchronous>, transform_indices = @transform_3, window_bounds = array<i64: 1, 64>}, {pipeline_mode = #tpu.pipeline_mode<synchronous>, transform_indices = @transform_4, window_bounds = array<i64: 1, 64>}, {pipeline_mode = #tpu.pipeline_mode<synchronous>, transform_indices = @transform_5, window_bounds = array<i64: 64, 128>}, {pipeline_mode = #tpu.pipeline_mode<synchronous>, transform_indices = @transform_6, window_bounds = array<i64: 1, 128>}, {pipeline_mode = #tpu.pipeline_mode<synchronous>, transform_indices = @transform_7, window_bounds = array<i64: 1, 128>}, {pipeline_mode = #tpu.pipeline_mode<synchronous>, transform_indices = @transform_8, window_bounds = array<i64: 1, 128>}, {pipeline_mode = #tpu.pipeline_mode<synchronous>, transform_indices = @transform_9, window_bounds = array<i64: 128, 1024>}, {pipeline_mode = #tpu.pipeline_mode<synchronous>, transform_indices = @transform_10, window_bounds = array<i64: 1, 1024>}, {transform_indices = @transform_11, window_bounds = array<i64: 1, 2, 1024>}]} {
    %c0 = arith.constant 0 : index
    %c0_0 = arith.constant 0 : index
    %0 = vector.load %arg2[%c0, %c0_0] : memref<32x3xf32, #tpu.memory_space<vmem>>, vector<32x3xf32>
    %c0_1 = arith.constant 0 : index
    %c0_2 = arith.constant 0 : index
    %1 = vector.load %arg3[%c0_1, %c0_2] : memref<3x64xf32, #tpu.memory_space<vmem>>, vector<3x64xf32>
    %c0_3 = arith.constant 0 : index
    %c0_4 = arith.constant 0 : index
    %2 = vector.load %arg4[%c0_3, %c0_4] : memref<1x64xf32, #tpu.memory_space<vmem>>, vector<1x64xf32>
    %3 = vector.extract_strided_slice %0 {offsets = [0, 0], sizes = [32, 1], strides = [1, 1]} : vector<32x3xf32> to vector<32x1xf32>
    %4 = vector.extract_strided_slice %1 {offsets = [0, 0], sizes = [1, 64], strides = [1, 1]} : vector<3x64xf32> to vector<1x64xf32>
    %5 = vector.broadcast %3 : vector<32x1xf32> to vector<32x64xf32>
    %6 = vector.broadcast %4 : vector<1x64xf32> to vector<32x64xf32>
    %7 = arith.mulf %5, %6 : vector<32x64xf32>
    %8 = vector.extract_strided_slice %0 {offsets = [0, 1], sizes = [32, 1], strides = [1, 1]} : vector<32x3xf32> to vector<32x1xf32>
    %9 = vector.extract_strided_slice %1 {offsets = [1, 0], sizes = [1, 64], strides = [1, 1]} : vector<3x64xf32> to vector<1x64xf32>
    %10 = vector.broadcast %8 : vector<32x1xf32> to vector<32x64xf32>
    %11 = vector.broadcast %9 : vector<1x64xf32> to vector<32x64xf32>
    %12 = arith.mulf %10, %11 : vector<32x64xf32>
    %13 = arith.addf %7, %12 : vector<32x64xf32>
    %14 = vector.extract_strided_slice %0 {offsets = [0, 2], sizes = [32, 1], strides = [1, 1]} : vector<32x3xf32> to vector<32x1xf32>
    %15 = vector.extract_strided_slice %1 {offsets = [2, 0], sizes = [1, 64], strides = [1, 1]} : vector<3x64xf32> to vector<1x64xf32>
    %16 = vector.broadcast %14 : vector<32x1xf32> to vector<32x64xf32>
    %17 = vector.broadcast %15 : vector<1x64xf32> to vector<32x64xf32>
    %18 = arith.mulf %16, %17 : vector<32x64xf32>
    %19 = arith.addf %13, %18 : vector<32x64xf32>
    %20 = vector.broadcast %2 : vector<1x64xf32> to vector<32x64xf32>
    %21 = arith.addf %19, %20 : vector<32x64xf32>
    %cst = arith.constant 0.000000e+00 : f32
    %22 = vector.broadcast %cst : f32 to vector<32x64xf32>
    %23 = arith.maximumf %21, %22 : vector<32x64xf32>
    %c0_5 = arith.constant 0 : index
    %c0_6 = arith.constant 0 : index
    %24 = vector.load %arg5[%c0_5, %c0_6] : memref<1x64xf32, #tpu.memory_space<vmem>>, vector<1x64xf32>
    %25 = vector.broadcast %24 : vector<1x64xf32> to vector<32x64xf32>
    %26 = arith.mulf %23, %25 : vector<32x64xf32>
    %c0_7 = arith.constant 0 : index
    %c0_8 = arith.constant 0 : index
    %27 = vector.load %arg6[%c0_7, %c0_8] : memref<1x64xf32, #tpu.memory_space<vmem>>, vector<1x64xf32>
    %28 = vector.broadcast %27 : vector<1x64xf32> to vector<32x64xf32>
    %29 = arith.addf %26, %28 : vector<32x64xf32>
    %c0_9 = arith.constant 0 : index
    %c0_10 = arith.constant 0 : index
    %30 = vector.load %arg7[%c0_9, %c0_10] : memref<64x128xf32, #tpu.memory_space<vmem>>, vector<64x128xf32>
    %c0_11 = arith.constant 0 : index
    %c0_12 = arith.constant 0 : index
    %31 = vector.load %arg8[%c0_11, %c0_12] : memref<1x128xf32, #tpu.memory_space<vmem>>, vector<1x128xf32>
    %cst_13 = arith.constant dense<0.000000e+00> : vector<32x128xf32>
    %32 = tpu.matmul %29, %30, %cst_13 {dimension_numbers = #tpu.dot_dimension_numbers<[1], [0], [0], [1], [0, 0, 1, 1], [], []>} : vector<32x64xf32>, vector<64x128xf32>, vector<32x128xf32> -> vector<32x128xf32>
    %33 = vector.broadcast %31 : vector<1x128xf32> to vector<32x128xf32>
    %34 = arith.addf %32, %33 : vector<32x128xf32>
    %cst_14 = arith.constant 0.000000e+00 : f32
    %35 = vector.broadcast %cst_14 : f32 to vector<32x128xf32>
    %36 = arith.maximumf %34, %35 : vector<32x128xf32>
    %c0_15 = arith.constant 0 : index
    %c0_16 = arith.constant 0 : index
    %37 = vector.load %arg9[%c0_15, %c0_16] : memref<1x128xf32, #tpu.memory_space<vmem>>, vector<1x128xf32>
    %38 = vector.broadcast %37 : vector<1x128xf32> to vector<32x128xf32>
    %39 = arith.mulf %36, %38 : vector<32x128xf32>
    %c0_17 = arith.constant 0 : index
    %c0_18 = arith.constant 0 : index
    %40 = vector.load %arg10[%c0_17, %c0_18] : memref<1x128xf32, #tpu.memory_space<vmem>>, vector<1x128xf32>
    %41 = vector.broadcast %40 : vector<1x128xf32> to vector<32x128xf32>
    %42 = arith.addf %39, %41 : vector<32x128xf32>
    %c0_19 = arith.constant 0 : index
    %c0_20 = arith.constant 0 : index
    %43 = vector.load %arg11[%c0_19, %c0_20] : memref<128x1024xf32, #tpu.memory_space<vmem>>, vector<128x1024xf32>
    %c0_21 = arith.constant 0 : index
    %c0_22 = arith.constant 0 : index
    %44 = vector.load %arg12[%c0_21, %c0_22] : memref<1x1024xf32, #tpu.memory_space<vmem>>, vector<1x1024xf32>
    %cst_23 = arith.constant dense<0.000000e+00> : vector<32x1024xf32>
    %45 = tpu.matmul %42, %43, %cst_23 {dimension_numbers = #tpu.dot_dimension_numbers<[1], [0], [0], [1], [0, 0, 1, 1], [], []>} : vector<32x128xf32>, vector<128x1024xf32>, vector<32x1024xf32> -> vector<32x1024xf32>
    %46 = vector.broadcast %44 : vector<1x1024xf32> to vector<32x1024xf32>
    %47 = arith.addf %45, %46 : vector<32x1024xf32>
    %cst_24 = arith.constant 0.000000e+00 : f32
    %48 = vector.broadcast %cst_24 : f32 to vector<32x1024xf32>
    %49 = arith.maximumf %47, %48 : vector<32x1024xf32>
    %cst_25 = arith.constant dense<0.000000e+00> : vector<1024xf32>
    %50 = vector.multi_reduction <add>, %49, %cst_25 [0] : vector<32x1024xf32> to vector<1024xf32>
    %51 = vector.shape_cast %50 : vector<1024xf32> to vector<1x1024xf32>
    %52 = arith.mulf %49, %49 : vector<32x1024xf32>
    %cst_26 = arith.constant dense<0.000000e+00> : vector<1024xf32>
    %53 = vector.multi_reduction <add>, %52, %cst_26 [0] : vector<32x1024xf32> to vector<1024xf32>
    %54 = vector.shape_cast %53 : vector<1024xf32> to vector<1x1024xf32>
    %55 = tpu.concatenate %51, %54 in 0 : vector<1x1024xf32>, vector<1x1024xf32> -> vector<2x1024xf32>
    %56 = vector.shape_cast %55 : vector<2x1024xf32> to vector<1x2x1024xf32>
    %c0_i32 = arith.constant 0 : i32
    %57 = arith.cmpi eq, %arg1, %c0_i32 : i32
    %58 = arith.extui %57 : i1 to i32
    %c0_i32_27 = arith.constant 0 : i32
    %59 = arith.cmpi ne, %58, %c0_i32_27 : i32
    scf.if %59 {
      %cst_40 = arith.constant 0.000000e+00 : f32
      %68 = vector.broadcast %cst_40 : f32 to vector<1x2x1024xf32>
      %c0_41 = arith.constant 0 : index
      %c0_42 = arith.constant 0 : index
      %c0_43 = arith.constant 0 : index
      %69 = vector.load %arg13[%c0_41, %c0_42, %c0_43] : memref<1x2x1024xf32, #tpu.memory_space<vmem>>, vector<1x2x1024xf32>
      tpu.vector_store %arg13[%c0_41, %c0_42, %c0_43], %68 {strides = array<i32>} : memref<1x2x1024xf32, #tpu.memory_space<vmem>>, vector<1x2x1024xf32>,
      %cst_44 = arith.constant 0.000000e+00 : f32
      %70 = vector.broadcast %cst_44 : f32 to vector<1x2x1024xf32>
      %c0_45 = arith.constant 0 : index
      %c0_46 = arith.constant 0 : index
      %c0_47 = arith.constant 0 : index
      %71 = vector.load %arg14[%c0_45, %c0_46, %c0_47] : memref<1x2x1024xf32, #tpu.memory_space<vmem>>, vector<1x2x1024xf32>
      tpu.vector_store %arg14[%c0_45, %c0_46, %c0_47], %70 {strides = array<i32>} : memref<1x2x1024xf32, #tpu.memory_space<vmem>>, vector<1x2x1024xf32>,
    } else {
    }
    %c0_28 = arith.constant 0 : index
    %c0_29 = arith.constant 0 : index
    %c0_30 = arith.constant 0 : index
    %60 = vector.load %arg13[%c0_28, %c0_29, %c0_30] : memref<1x2x1024xf32, #tpu.memory_space<vmem>>, vector<1x2x1024xf32>
    %c0_31 = arith.constant 0 : index
    %c0_32 = arith.constant 0 : index
    %c0_33 = arith.constant 0 : index
    %61 = vector.load %arg14[%c0_31, %c0_32, %c0_33] : memref<1x2x1024xf32, #tpu.memory_space<vmem>>, vector<1x2x1024xf32>
    %62 = arith.subf %56, %61 : vector<1x2x1024xf32>
    %63 = arith.addf %60, %62 : vector<1x2x1024xf32>
    %64 = arith.subf %63, %60 : vector<1x2x1024xf32>
    %65 = arith.subf %64, %62 : vector<1x2x1024xf32>
    %c0_34 = arith.constant 0 : index
    %c0_35 = arith.constant 0 : index
    %c0_36 = arith.constant 0 : index
    %66 = vector.load %arg14[%c0_34, %c0_35, %c0_36] : memref<1x2x1024xf32, #tpu.memory_space<vmem>>, vector<1x2x1024xf32>
    tpu.vector_store %arg14[%c0_34, %c0_35, %c0_36], %65 {strides = array<i32>} : memref<1x2x1024xf32, #tpu.memory_space<vmem>>, vector<1x2x1024xf32>,
    %c0_37 = arith.constant 0 : index
    %c0_38 = arith.constant 0 : index
    %c0_39 = arith.constant 0 : index
    %67 = vector.load %arg13[%c0_37, %c0_38, %c0_39] : memref<1x2x1024xf32, #tpu.memory_space<vmem>>, vector<1x2x1024xf32>
    tpu.vector_store %arg13[%c0_37, %c0_38, %c0_39], %63 {strides = array<i32>} : memref<1x2x1024xf32, #tpu.memory_space<vmem>>, vector<1x2x1024xf32>,
    return
  }
  func.func @transform_0(%arg0: i32, %arg1: i32) -> (i32, i32) {
    %c1_i32 = arith.constant 1 : i32
    %0 = arith.muli %arg0, %c1_i32 : i32
    %1 = arith.addi %0, %arg1 : i32
    %c0_i32 = arith.constant 0 : i32
    %c0_i32_0 = arith.constant 0 : i32
    return %1, %c0_i32 : i32, i32
  }
  func.func @transform_1(%arg0: i32, %arg1: i32) -> (i32, i32) {
    %c0_i32 = arith.constant 0 : i32
    %c0_i32_0 = arith.constant 0 : i32
    %c0_i32_1 = arith.constant 0 : i32
    return %c0_i32, %c0_i32_0 : i32, i32
  }
  func.func @transform_2(%arg0: i32, %arg1: i32) -> (i32, i32) {
    %c0_i32 = arith.constant 0 : i32
    %c0_i32_0 = arith.constant 0 : i32
    %c0_i32_1 = arith.constant 0 : i32
    return %c0_i32, %c0_i32_0 : i32, i32
  }
  func.func @transform_3(%arg0: i32, %arg1: i32) -> (i32, i32) {
    %c0_i32 = arith.constant 0 : i32
    %c0_i32_0 = arith.constant 0 : i32
    %c0_i32_1 = arith.constant 0 : i32
    return %c0_i32, %c0_i32_0 : i32, i32
  }
  func.func @transform_4(%arg0: i32, %arg1: i32) -> (i32, i32) {
    %c0_i32 = arith.constant 0 : i32
    %c0_i32_0 = arith.constant 0 : i32
    %c0_i32_1 = arith.constant 0 : i32
    return %c0_i32, %c0_i32_0 : i32, i32
  }
  func.func @transform_5(%arg0: i32, %arg1: i32) -> (i32, i32) {
    %c0_i32 = arith.constant 0 : i32
    %c0_i32_0 = arith.constant 0 : i32
    %c0_i32_1 = arith.constant 0 : i32
    return %c0_i32, %c0_i32_0 : i32, i32
  }
  func.func @transform_6(%arg0: i32, %arg1: i32) -> (i32, i32) {
    %c0_i32 = arith.constant 0 : i32
    %c0_i32_0 = arith.constant 0 : i32
    %c0_i32_1 = arith.constant 0 : i32
    return %c0_i32, %c0_i32_0 : i32, i32
  }
  func.func @transform_7(%arg0: i32, %arg1: i32) -> (i32, i32) {
    %c0_i32 = arith.constant 0 : i32
    %c0_i32_0 = arith.constant 0 : i32
    %c0_i32_1 = arith.constant 0 : i32
    return %c0_i32, %c0_i32_0 : i32, i32
  }
  func.func @transform_8(%arg0: i32, %arg1: i32) -> (i32, i32) {
    %c0_i32 = arith.constant 0 : i32
    %c0_i32_0 = arith.constant 0 : i32
    %c0_i32_1 = arith.constant 0 : i32
    return %c0_i32, %c0_i32_0 : i32, i32
  }
  func.func @transform_9(%arg0: i32, %arg1: i32) -> (i32, i32) {
    %c0_i32 = arith.constant 0 : i32
    %c0_i32_0 = arith.constant 0 : i32
    %c0_i32_1 = arith.constant 0 : i32
    return %c0_i32, %c0_i32_0 : i32, i32
  }
  func.func @transform_10(%arg0: i32, %arg1: i32) -> (i32, i32) {
    %c0_i32 = arith.constant 0 : i32
    %c0_i32_0 = arith.constant 0 : i32
    %c0_i32_1 = arith.constant 0 : i32
    return %c0_i32, %c0_i32_0 : i32, i32
  }
  func.func @transform_11(%arg0: i32, %arg1: i32) -> (i32, i32, i32) {
    %c0_i32 = arith.constant 0 : i32
    %c0_i32_0 = arith.constant 0 : i32
    %c0_i32_1 = arith.constant 0 : i32
    return %arg0, %c0_i32, %c0_i32_0 : i32, i32, i32
  }
}

module attributes {stable_mosaic.version = 11 : i64} {
  func.func @head_kernel(%arg0: memref<2x1024xf32, #tpu.memory_space<vmem>>, %arg1: memref<1024x512xf32, #tpu.memory_space<vmem>>, %arg2: memref<1x512xf32, #tpu.memory_space<vmem>>, %arg3: memref<1x512xf32, #tpu.memory_space<vmem>>, %arg4: memref<1x512xf32, #tpu.memory_space<vmem>>, %arg5: memref<512x256xf32, #tpu.memory_space<vmem>>, %arg6: memref<1x256xf32, #tpu.memory_space<vmem>>, %arg7: memref<1x256xf32, #tpu.memory_space<vmem>>, %arg8: memref<1x256xf32, #tpu.memory_space<vmem>>, %arg9: memref<256x9xf32, #tpu.memory_space<vmem>>, %arg10: memref<1x9xf32, #tpu.memory_space<vmem>>, %arg11: memref<2x9xf32, #tpu.memory_space<vmem>>) attributes {dimension_semantics = [], scalar_prefetch = 0 : i64, scratch_operands = 0 : i64, tpu.core_type = #tpu.core_type<tc>} {
    %c0 = arith.constant 0 : index
    %c0_0 = arith.constant 0 : index
    %0 = vector.load %arg0[%c0, %c0_0] : memref<2x1024xf32, #tpu.memory_space<vmem>>, vector<2x1024xf32>
    %c0_1 = arith.constant 0 : index
    %c0_2 = arith.constant 0 : index
    %1 = vector.load %arg1[%c0_1, %c0_2] : memref<1024x512xf32, #tpu.memory_space<vmem>>, vector<1024x512xf32>
    %c0_3 = arith.constant 0 : index
    %c0_4 = arith.constant 0 : index
    %2 = vector.load %arg2[%c0_3, %c0_4] : memref<1x512xf32, #tpu.memory_space<vmem>>, vector<1x512xf32>
    %c0_5 = arith.constant 0 : index
    %c0_6 = arith.constant 0 : index
    %3 = vector.load %arg3[%c0_5, %c0_6] : memref<1x512xf32, #tpu.memory_space<vmem>>, vector<1x512xf32>
    %c0_7 = arith.constant 0 : index
    %c0_8 = arith.constant 0 : index
    %4 = vector.load %arg4[%c0_7, %c0_8] : memref<1x512xf32, #tpu.memory_space<vmem>>, vector<1x512xf32>
    %cst = arith.constant dense<0.000000e+00> : vector<2x512xf32>
    %5 = tpu.matmul %0, %1, %cst {dimension_numbers = #tpu.dot_dimension_numbers<[1], [0], [0], [1], [0, 0, 1, 1], [], []>} : vector<2x1024xf32>, vector<1024x512xf32>, vector<2x512xf32> -> vector<2x512xf32>
    %6 = vector.broadcast %2 : vector<1x512xf32> to vector<2x512xf32>
    %7 = arith.addf %5, %6 : vector<2x512xf32>
    %cst_9 = arith.constant 0.000000e+00 : f32
    %8 = vector.broadcast %cst_9 : f32 to vector<2x512xf32>
    %9 = arith.maximumf %7, %8 : vector<2x512xf32>
    %cst_10 = arith.constant dense<0.000000e+00> : vector<512xf32>
    %10 = vector.multi_reduction <add>, %9, %cst_10 [0] : vector<2x512xf32> to vector<512xf32>
    %11 = vector.shape_cast %10 : vector<512xf32> to vector<1x512xf32>
    %cst_11 = arith.constant 2.000000e+00 : f32
    %12 = vector.broadcast %cst_11 : f32 to vector<1x512xf32>
    %13 = arith.divf %11, %12 : vector<1x512xf32>
    %14 = vector.broadcast %13 : vector<1x512xf32> to vector<2x512xf32>
    %15 = arith.subf %9, %14 : vector<2x512xf32>
    %16 = arith.mulf %15, %15 : vector<2x512xf32>
    %cst_12 = arith.constant dense<0.000000e+00> : vector<512xf32>
    %17 = vector.multi_reduction <add>, %16, %cst_12 [0] : vector<2x512xf32> to vector<512xf32>
    %18 = vector.shape_cast %17 : vector<512xf32> to vector<1x512xf32>
    %cst_13 = arith.constant 2.000000e+00 : f32
    %19 = vector.broadcast %cst_13 : f32 to vector<1x512xf32>
    %20 = arith.divf %18, %19 : vector<1x512xf32>
    %21 = vector.broadcast %13 : vector<1x512xf32> to vector<2x512xf32>
    %22 = arith.subf %9, %21 : vector<2x512xf32>
    %23 = vector.broadcast %3 : vector<1x512xf32> to vector<2x512xf32>
    %24 = arith.mulf %23, %22 : vector<2x512xf32>
    %cst_14 = arith.constant 9.99999974E-6 : f32
    %25 = vector.broadcast %cst_14 : f32 to vector<1x512xf32>
    %26 = arith.addf %20, %25 : vector<1x512xf32>
    %27 = math.rsqrt %26 : vector<1x512xf32>
    %28 = vector.broadcast %27 : vector<1x512xf32> to vector<2x512xf32>
    %29 = arith.mulf %24, %28 : vector<2x512xf32>
    %30 = vector.broadcast %4 : vector<1x512xf32> to vector<2x512xf32>
    %31 = arith.addf %29, %30 : vector<2x512xf32>
    %c0_15 = arith.constant 0 : index
    %c0_16 = arith.constant 0 : index
    %32 = vector.load %arg5[%c0_15, %c0_16] : memref<512x256xf32, #tpu.memory_space<vmem>>, vector<512x256xf32>
    %c0_17 = arith.constant 0 : index
    %c0_18 = arith.constant 0 : index
    %33 = vector.load %arg6[%c0_17, %c0_18] : memref<1x256xf32, #tpu.memory_space<vmem>>, vector<1x256xf32>
    %c0_19 = arith.constant 0 : index
    %c0_20 = arith.constant 0 : index
    %34 = vector.load %arg7[%c0_19, %c0_20] : memref<1x256xf32, #tpu.memory_space<vmem>>, vector<1x256xf32>
    %c0_21 = arith.constant 0 : index
    %c0_22 = arith.constant 0 : index
    %35 = vector.load %arg8[%c0_21, %c0_22] : memref<1x256xf32, #tpu.memory_space<vmem>>, vector<1x256xf32>
    %cst_23 = arith.constant dense<0.000000e+00> : vector<2x256xf32>
    %36 = tpu.matmul %31, %32, %cst_23 {dimension_numbers = #tpu.dot_dimension_numbers<[1], [0], [0], [1], [0, 0, 1, 1], [], []>} : vector<2x512xf32>, vector<512x256xf32>, vector<2x256xf32> -> vector<2x256xf32>
    %37 = vector.broadcast %33 : vector<1x256xf32> to vector<2x256xf32>
    %38 = arith.addf %36, %37 : vector<2x256xf32>
    %cst_24 = arith.constant 0.000000e+00 : f32
    %39 = vector.broadcast %cst_24 : f32 to vector<2x256xf32>
    %40 = arith.maximumf %38, %39 : vector<2x256xf32>
    %cst_25 = arith.constant dense<0.000000e+00> : vector<256xf32>
    %41 = vector.multi_reduction <add>, %40, %cst_25 [0] : vector<2x256xf32> to vector<256xf32>
    %42 = vector.shape_cast %41 : vector<256xf32> to vector<1x256xf32>
    %cst_26 = arith.constant 2.000000e+00 : f32
    %43 = vector.broadcast %cst_26 : f32 to vector<1x256xf32>
    %44 = arith.divf %42, %43 : vector<1x256xf32>
    %45 = vector.broadcast %44 : vector<1x256xf32> to vector<2x256xf32>
    %46 = arith.subf %40, %45 : vector<2x256xf32>
    %47 = arith.mulf %46, %46 : vector<2x256xf32>
    %cst_27 = arith.constant dense<0.000000e+00> : vector<256xf32>
    %48 = vector.multi_reduction <add>, %47, %cst_27 [0] : vector<2x256xf32> to vector<256xf32>
    %49 = vector.shape_cast %48 : vector<256xf32> to vector<1x256xf32>
    %cst_28 = arith.constant 2.000000e+00 : f32
    %50 = vector.broadcast %cst_28 : f32 to vector<1x256xf32>
    %51 = arith.divf %49, %50 : vector<1x256xf32>
    %52 = vector.broadcast %44 : vector<1x256xf32> to vector<2x256xf32>
    %53 = arith.subf %40, %52 : vector<2x256xf32>
    %54 = vector.broadcast %34 : vector<1x256xf32> to vector<2x256xf32>
    %55 = arith.mulf %54, %53 : vector<2x256xf32>
    %cst_29 = arith.constant 9.99999974E-6 : f32
    %56 = vector.broadcast %cst_29 : f32 to vector<1x256xf32>
    %57 = arith.addf %51, %56 : vector<1x256xf32>
    %58 = math.rsqrt %57 : vector<1x256xf32>
    %59 = vector.broadcast %58 : vector<1x256xf32> to vector<2x256xf32>
    %60 = arith.mulf %55, %59 : vector<2x256xf32>
    %61 = vector.broadcast %35 : vector<1x256xf32> to vector<2x256xf32>
    %62 = arith.addf %60, %61 : vector<2x256xf32>
    %c0_30 = arith.constant 0 : index
    %c0_31 = arith.constant 0 : index
    %63 = vector.load %arg9[%c0_30, %c0_31] : memref<256x9xf32, #tpu.memory_space<vmem>>, vector<256x9xf32>
    %cst_32 = arith.constant dense<0.000000e+00> : vector<2x9xf32>
    %64 = tpu.matmul %62, %63, %cst_32 {dimension_numbers = #tpu.dot_dimension_numbers<[1], [0], [0], [1], [0, 0, 1, 1], [], []>} : vector<2x256xf32>, vector<256x9xf32>, vector<2x9xf32> -> vector<2x9xf32>
    %c0_33 = arith.constant 0 : index
    %c0_34 = arith.constant 0 : index
    %65 = vector.load %arg10[%c0_33, %c0_34] : memref<1x9xf32, #tpu.memory_space<vmem>>, vector<1x9xf32>
    %66 = vector.broadcast %65 : vector<1x9xf32> to vector<2x9xf32>
    %67 = arith.addf %64, %66 : vector<2x9xf32>
    %c0_35 = arith.constant 0 : index
    %c0_36 = arith.constant 0 : index
    %68 = vector.load %arg11[%c0_35, %c0_36] : memref<2x9xf32, #tpu.memory_space<vmem>>, vector<2x9xf32>
    tpu.vector_store %arg11[%c0_35, %c0_36], %67 {strides = array<i32>} : memref<2x9xf32, #tpu.memory_space<vmem>>, vector<2x9xf32>,
    return
  }
}

module attributes {stable_mosaic.version = 11 : i64} {
  func.func @pool_small_p_kernel(%arg0: i32, %arg1: memref<32x3xf32, #tpu.memory_space<vmem>>, %arg2: memref<3x64xf32, #tpu.memory_space<vmem>>, %arg3: memref<1x64xf32, #tpu.memory_space<vmem>>, %arg4: memref<1x64xf32, #tpu.memory_space<vmem>>, %arg5: memref<1x64xf32, #tpu.memory_space<vmem>>, %arg6: memref<64x128xf32, #tpu.memory_space<vmem>>, %arg7: memref<1x128xf32, #tpu.memory_space<vmem>>, %arg8: memref<1x128xf32, #tpu.memory_space<vmem>>, %arg9: memref<1x128xf32, #tpu.memory_space<vmem>>, %arg10: memref<128x1024xf32, #tpu.memory_space<vmem>>, %arg11: memref<1x1024xf32, #tpu.memory_space<vmem>>, %arg12: memref<1x1024xf32, #tpu.memory_space<vmem>>, %arg13: memref<1x1024xf32, #tpu.memory_space<vmem>>, %arg14: memref<1024x64xf32, #tpu.memory_space<vmem>>, %arg15: memref<32x64xf32, #tpu.memory_space<vmem>>) attributes {dimension_semantics = [#tpu.dimension_semantics<parallel>], iteration_bounds = array<i64: 1>, scalar_prefetch = 0 : i64, scratch_operands = 0 : i64, tpu.core_type = #tpu.core_type<tc>, window_params = [{transform_indices = @transform_0, window_bounds = array<i64: 32, 3>}, {pipeline_mode = #tpu.pipeline_mode<synchronous>, transform_indices = @transform_1, window_bounds = array<i64: 3, 64>}, {pipeline_mode = #tpu.pipeline_mode<synchronous>, transform_indices = @transform_2, window_bounds = array<i64: 1, 64>}, {pipeline_mode = #tpu.pipeline_mode<synchronous>, transform_indices = @transform_3, window_bounds = array<i64: 1, 64>}, {pipeline_mode = #tpu.pipeline_mode<synchronous>, transform_indices = @transform_4, window_bounds = array<i64: 1, 64>}, {pipeline_mode = #tpu.pipeline_mode<synchronous>, transform_indices = @transform_5, window_bounds = array<i64: 64, 128>}, {pipeline_mode = #tpu.pipeline_mode<synchronous>, transform_indices = @transform_6, window_bounds = array<i64: 1, 128>}, {pipeline_mode = #tpu.pipeline_mode<synchronous>, transform_indices = @transform_7, window_bounds = array<i64: 1, 128>}, {pipeline_mode = #tpu.pipeline_mode<synchronous>, transform_indices = @transform_8, window_bounds = array<i64: 1, 128>}, {pipeline_mode = #tpu.pipeline_mode<synchronous>, transform_indices = @transform_9, window_bounds = array<i64: 128, 1024>}, {pipeline_mode = #tpu.pipeline_mode<synchronous>, transform_indices = @transform_10, window_bounds = array<i64: 1, 1024>}, {pipeline_mode = #tpu.pipeline_mode<synchronous>, transform_indices = @transform_11, window_bounds = array<i64: 1, 1024>}, {pipeline_mode = #tpu.pipeline_mode<synchronous>, transform_indices = @transform_12, window_bounds = array<i64: 1, 1024>}, {pipeline_mode = #tpu.pipeline_mode<synchronous>, transform_indices = @transform_13, window_bounds = array<i64: 1024, 64>}, {transform_indices = @transform_14, window_bounds = array<i64: 32, 64>}]} {
    %c0 = arith.constant 0 : index
    %c0_0 = arith.constant 0 : index
    %0 = vector.load %arg1[%c0, %c0_0] : memref<32x3xf32, #tpu.memory_space<vmem>>, vector<32x3xf32>
    %c0_1 = arith.constant 0 : index
    %c0_2 = arith.constant 0 : index
    %1 = vector.load %arg2[%c0_1, %c0_2] : memref<3x64xf32, #tpu.memory_space<vmem>>, vector<3x64xf32>
    %c0_3 = arith.constant 0 : index
    %c0_4 = arith.constant 0 : index
    %2 = vector.load %arg3[%c0_3, %c0_4] : memref<1x64xf32, #tpu.memory_space<vmem>>, vector<1x64xf32>
    %c0_5 = arith.constant 0 : index
    %c0_6 = arith.constant 0 : index
    %3 = vector.load %arg4[%c0_5, %c0_6] : memref<1x64xf32, #tpu.memory_space<vmem>>, vector<1x64xf32>
    %c0_7 = arith.constant 0 : index
    %c0_8 = arith.constant 0 : index
    %4 = vector.load %arg5[%c0_7, %c0_8] : memref<1x64xf32, #tpu.memory_space<vmem>>, vector<1x64xf32>
    %c0_9 = arith.constant 0 : index
    %c0_10 = arith.constant 0 : index
    %5 = vector.load %arg6[%c0_9, %c0_10] : memref<64x128xf32, #tpu.memory_space<vmem>>, vector<64x128xf32>
    %c0_11 = arith.constant 0 : index
    %c0_12 = arith.constant 0 : index
    %6 = vector.load %arg7[%c0_11, %c0_12] : memref<1x128xf32, #tpu.memory_space<vmem>>, vector<1x128xf32>
    %c0_13 = arith.constant 0 : index
    %c0_14 = arith.constant 0 : index
    %7 = vector.load %arg8[%c0_13, %c0_14] : memref<1x128xf32, #tpu.memory_space<vmem>>, vector<1x128xf32>
    %c0_15 = arith.constant 0 : index
    %c0_16 = arith.constant 0 : index
    %8 = vector.load %arg9[%c0_15, %c0_16] : memref<1x128xf32, #tpu.memory_space<vmem>>, vector<1x128xf32>
    %c0_17 = arith.constant 0 : index
    %c0_18 = arith.constant 0 : index
    %9 = vector.load %arg10[%c0_17, %c0_18] : memref<128x1024xf32, #tpu.memory_space<vmem>>, vector<128x1024xf32>
    %c0_19 = arith.constant 0 : index
    %c0_20 = arith.constant 0 : index
    %10 = vector.load %arg11[%c0_19, %c0_20] : memref<1x1024xf32, #tpu.memory_space<vmem>>, vector<1x1024xf32>
    %c0_21 = arith.constant 0 : index
    %c0_22 = arith.constant 0 : index
    %11 = vector.load %arg12[%c0_21, %c0_22] : memref<1x1024xf32, #tpu.memory_space<vmem>>, vector<1x1024xf32>
    %c0_23 = arith.constant 0 : index
    %c0_24 = arith.constant 0 : index
    %12 = vector.load %arg13[%c0_23, %c0_24] : memref<1x1024xf32, #tpu.memory_space<vmem>>, vector<1x1024xf32>
    %13 = vector.extract_strided_slice %0 {offsets = [0, 0], sizes = [32, 1], strides = [1, 1]} : vector<32x3xf32> to vector<32x1xf32>
    %14 = vector.extract_strided_slice %1 {offsets = [0, 0], sizes = [1, 64], strides = [1, 1]} : vector<3x64xf32> to vector<1x64xf32>
    %15 = vector.broadcast %13 : vector<32x1xf32> to vector<32x64xf32>
    %16 = vector.broadcast %14 : vector<1x64xf32> to vector<32x64xf32>
    %17 = arith.mulf %15, %16 : vector<32x64xf32>
    %18 = vector.extract_strided_slice %0 {offsets = [0, 1], sizes = [32, 1], strides = [1, 1]} : vector<32x3xf32> to vector<32x1xf32>
    %19 = vector.extract_strided_slice %1 {offsets = [1, 0], sizes = [1, 64], strides = [1, 1]} : vector<3x64xf32> to vector<1x64xf32>
    %20 = vector.broadcast %18 : vector<32x1xf32> to vector<32x64xf32>
    %21 = vector.broadcast %19 : vector<1x64xf32> to vector<32x64xf32>
    %22 = arith.mulf %20, %21 : vector<32x64xf32>
    %23 = arith.addf %17, %22 : vector<32x64xf32>
    %24 = vector.extract_strided_slice %0 {offsets = [0, 2], sizes = [32, 1], strides = [1, 1]} : vector<32x3xf32> to vector<32x1xf32>
    %25 = vector.extract_strided_slice %1 {offsets = [2, 0], sizes = [1, 64], strides = [1, 1]} : vector<3x64xf32> to vector<1x64xf32>
    %26 = vector.broadcast %24 : vector<32x1xf32> to vector<32x64xf32>
    %27 = vector.broadcast %25 : vector<1x64xf32> to vector<32x64xf32>
    %28 = arith.mulf %26, %27 : vector<32x64xf32>
    %29 = arith.addf %23, %28 : vector<32x64xf32>
    %30 = vector.broadcast %2 : vector<1x64xf32> to vector<32x64xf32>
    %31 = arith.addf %29, %30 : vector<32x64xf32>
    %cst = arith.constant 0.000000e+00 : f32
    %32 = vector.broadcast %cst : f32 to vector<32x64xf32>
    %33 = arith.maximumf %31, %32 : vector<32x64xf32>
    %34 = vector.broadcast %3 : vector<1x64xf32> to vector<32x64xf32>
    %35 = arith.mulf %33, %34 : vector<32x64xf32>
    %36 = vector.broadcast %4 : vector<1x64xf32> to vector<32x64xf32>
    %37 = arith.addf %35, %36 : vector<32x64xf32>
    %cst_25 = arith.constant dense<0.000000e+00> : vector<32x128xf32>
    %38 = tpu.matmul %37, %5, %cst_25 {dimension_numbers = #tpu.dot_dimension_numbers<[1], [0], [0], [1], [0, 0, 1, 1], [], []>} : vector<32x64xf32>, vector<64x128xf32>, vector<32x128xf32> -> vector<32x128xf32>
    %39 = vector.broadcast %6 : vector<1x128xf32> to vector<32x128xf32>
    %40 = arith.addf %38, %39 : vector<32x128xf32>
    %cst_26 = arith.constant 0.000000e+00 : f32
    %41 = vector.broadcast %cst_26 : f32 to vector<32x128xf32>
    %42 = arith.maximumf %40, %41 : vector<32x128xf32>
    %43 = vector.broadcast %7 : vector<1x128xf32> to vector<32x128xf32>
    %44 = arith.mulf %42, %43 : vector<32x128xf32>
    %45 = vector.broadcast %8 : vector<1x128xf32> to vector<32x128xf32>
    %46 = arith.addf %44, %45 : vector<32x128xf32>
    %cst_27 = arith.constant dense<0.000000e+00> : vector<32x1024xf32>
    %47 = tpu.matmul %46, %9, %cst_27 {dimension_numbers = #tpu.dot_dimension_numbers<[1], [0], [0], [1], [0, 0, 1, 1], [], []>} : vector<32x128xf32>, vector<128x1024xf32>, vector<32x1024xf32> -> vector<32x1024xf32>
    %48 = vector.broadcast %10 : vector<1x1024xf32> to vector<32x1024xf32>
    %49 = arith.addf %47, %48 : vector<32x1024xf32>
    %cst_28 = arith.constant 0.000000e+00 : f32
    %50 = vector.broadcast %cst_28 : f32 to vector<32x1024xf32>
    %51 = arith.maximumf %49, %50 : vector<32x1024xf32>
    %52 = vector.broadcast %11 : vector<1x1024xf32> to vector<32x1024xf32>
    %53 = arith.mulf %51, %52 : vector<32x1024xf32>
    %54 = vector.broadcast %12 : vector<1x1024xf32> to vector<32x1024xf32>
    %55 = arith.addf %53, %54 : vector<32x1024xf32>
    %c1023_i32 = arith.constant 1023 : i32
    %56 = tpu.dynamic_rotate %55 by %c1023_i32 dim 1 : vector<32x1024xf32>, i32 -> vector<32x1024xf32>
    %57 = arith.maximumf %55, %56 : vector<32x1024xf32>
    %c1022_i32 = arith.constant 1022 : i32
    %58 = tpu.dynamic_rotate %57 by %c1022_i32 dim 1 : vector<32x1024xf32>, i32 -> vector<32x1024xf32>
    %59 = arith.maximumf %57, %58 : vector<32x1024xf32>
    %c1020_i32 = arith.constant 1020 : i32
    %60 = tpu.dynamic_rotate %59 by %c1020_i32 dim 1 : vector<32x1024xf32>, i32 -> vector<32x1024xf32>
    %61 = arith.maximumf %59, %60 : vector<32x1024xf32>
    %c1016_i32 = arith.constant 1016 : i32
    %62 = tpu.dynamic_rotate %61 by %c1016_i32 dim 1 : vector<32x1024xf32>, i32 -> vector<32x1024xf32>
    %63 = arith.maximumf %61, %62 : vector<32x1024xf32>
    %c0_29 = arith.constant 0 : index
    %c0_30 = arith.constant 0 : index
    %64 = vector.load %arg14[%c0_29, %c0_30] : memref<1024x64xf32, #tpu.memory_space<vmem>>, vector<1024x64xf32>
    %cst_31 = arith.constant dense<0.000000e+00> : vector<32x64xf32>
    %65 = tpu.matmul %63, %64, %cst_31 {dimension_numbers = #tpu.dot_dimension_numbers<[1], [0], [0], [1], [0, 0, 1, 1], [], []>} : vector<32x1024xf32>, vector<1024x64xf32>, vector<32x64xf32> -> vector<32x64xf32>
    %c0_32 = arith.constant 0 : index
    %c0_33 = arith.constant 0 : index
    %66 = vector.load %arg15[%c0_32, %c0_33] : memref<32x64xf32, #tpu.memory_space<vmem>>, vector<32x64xf32>
    tpu.vector_store %arg15[%c0_32, %c0_33], %65 {strides = array<i32>} : memref<32x64xf32, #tpu.memory_space<vmem>>, vector<32x64xf32>,
    return
  }
  func.func @transform_0(%arg0: i32) -> (i32, i32) {
    %c0_i32 = arith.constant 0 : i32
    %c0_i32_0 = arith.constant 0 : i32
    return %arg0, %c0_i32 : i32, i32
  }
  func.func @transform_1(%arg0: i32) -> (i32, i32) {
    %c0_i32 = arith.constant 0 : i32
    %c0_i32_0 = arith.constant 0 : i32
    %c0_i32_1 = arith.constant 0 : i32
    return %c0_i32, %c0_i32_0 : i32, i32
  }
  func.func @transform_2(%arg0: i32) -> (i32, i32) {
    %c0_i32 = arith.constant 0 : i32
    %c0_i32_0 = arith.constant 0 : i32
    %c0_i32_1 = arith.constant 0 : i32
    return %c0_i32, %c0_i32_0 : i32, i32
  }
  func.func @transform_3(%arg0: i32) -> (i32, i32) {
    %c0_i32 = arith.constant 0 : i32
    %c0_i32_0 = arith.constant 0 : i32
    %c0_i32_1 = arith.constant 0 : i32
    return %c0_i32, %c0_i32_0 : i32, i32
  }
  func.func @transform_4(%arg0: i32) -> (i32, i32) {
    %c0_i32 = arith.constant 0 : i32
    %c0_i32_0 = arith.constant 0 : i32
    %c0_i32_1 = arith.constant 0 : i32
    return %c0_i32, %c0_i32_0 : i32, i32
  }
  func.func @transform_5(%arg0: i32) -> (i32, i32) {
    %c0_i32 = arith.constant 0 : i32
    %c0_i32_0 = arith.constant 0 : i32
    %c0_i32_1 = arith.constant 0 : i32
    return %c0_i32, %c0_i32_0 : i32, i32
  }
  func.func @transform_6(%arg0: i32) -> (i32, i32) {
    %c0_i32 = arith.constant 0 : i32
    %c0_i32_0 = arith.constant 0 : i32
    %c0_i32_1 = arith.constant 0 : i32
    return %c0_i32, %c0_i32_0 : i32, i32
  }
  func.func @transform_7(%arg0: i32) -> (i32, i32) {
    %c0_i32 = arith.constant 0 : i32
    %c0_i32_0 = arith.constant 0 : i32
    %c0_i32_1 = arith.constant 0 : i32
    return %c0_i32, %c0_i32_0 : i32, i32
  }
  func.func @transform_8(%arg0: i32) -> (i32, i32) {
    %c0_i32 = arith.constant 0 : i32
    %c0_i32_0 = arith.constant 0 : i32
    %c0_i32_1 = arith.constant 0 : i32
    return %c0_i32, %c0_i32_0 : i32, i32
  }
  func.func @transform_9(%arg0: i32) -> (i32, i32) {
    %c0_i32 = arith.constant 0 : i32
    %c0_i32_0 = arith.constant 0 : i32
    %c0_i32_1 = arith.constant 0 : i32
    return %c0_i32, %c0_i32_0 : i32, i32
  }
  func.func @transform_10(%arg0: i32) -> (i32, i32) {
    %c0_i32 = arith.constant 0 : i32
    %c0_i32_0 = arith.constant 0 : i32
    %c0_i32_1 = arith.constant 0 : i32
    return %c0_i32, %c0_i32_0 : i32, i32
  }
  func.func @transform_11(%arg0: i32) -> (i32, i32) {
    %c0_i32 = arith.constant 0 : i32
    %c0_i32_0 = arith.constant 0 : i32
    %c0_i32_1 = arith.constant 0 : i32
    return %c0_i32, %c0_i32_0 : i32, i32
  }
  func.func @transform_12(%arg0: i32) -> (i32, i32) {
    %c0_i32 = arith.constant 0 : i32
    %c0_i32_0 = arith.constant 0 : i32
    %c0_i32_1 = arith.constant 0 : i32
    return %c0_i32, %c0_i32_0 : i32, i32
  }
  func.func @transform_13(%arg0: i32) -> (i32, i32) {
    %c0_i32 = arith.constant 0 : i32
    %c0_i32_0 = arith.constant 0 : i32
    %c0_i32_1 = arith.constant 0 : i32
    return %c0_i32, %c0_i32_0 : i32, i32
  }
  func.func @transform_14(%arg0: i32) -> (i32, i32) {
    %c0_i32 = arith.constant 0 : i32
    %c0_i32_0 = arith.constant 0 : i32
    return %arg0, %c0_i32 : i32, i32
  }
}

</mosaic_0001>

<llo_original>
// kernel: input_tnet_forward.5
$region0: #{input_tnet_forward.5}
  #allocation0 [shape = 'u32[]', space=smem, size = 0x4, offset = 0x4, fixed_abs, tag = 'smem constant byte address 0x4 - core index']
  #allocation1 [shape = 'u32[144,128]{1,0:T(1,128)}', space=vmem, size = 0x12000, scoped, tag = 'internal scratch']
  #allocation2 [shape = 'f32[1,2,64]{2,1,0:T(2,128)}', space=vmem, size = 0x400, scoped, tag = 'scratch operand']
  %s0 = inlined_call_operand.vmem [shape: f32[32,3], index: 0, kind: input, shape index: {}]
  %s1 = inlined_call_operand.hbm [shape: f32[3,64], index: 1, kind: input, shape index: {}]
  %s2 = inlined_call_operand.hbm [shape: f32[1,64], index: 2, kind: input, shape index: {}]
  %s3 = inlined_call_operand.vmem [shape: f32[1,2,64], index: 3, kind: output, shape index: {}]
  %s4 = sld [smem:[#allocation0]]
  $region34: #{input_tnet_forward.5} parent=0
    _
  %s6 = ssub.s32 1, %s4
  %s7 = scalar_select 0, %s6, %s4
  $region1: #{input_tnet_forward.5} parent=0
    #allocation3 [shape = 'u8[2048]{0}', space=vmem, size = 0x800, scoped, tag = 'input window, operand 1, single buffered']
    #allocation4 [shape = 's32[1]{0}', space=sflag, size = 0x4, scoped, tag = 'scoped memory for input_tnet_forward.5']
    #allocation5 [shape = 'u8[512]{0}', space=vmem, size = 0x400, scoped, tag = 'input window, operand 2, single buffered']
    #allocation6 [shape = 's32[1]{0}', space=sflag, size = 0x4, scoped, tag = 'scoped memory for input_tnet_forward.5']
    %8 = vsyncpa [#allocation4], 0
    %9 = vsyncpa [#allocation6], 0
    // Predicated region
    $region2: #{input_tnet_forward.5} parent=1 // pred_check
      _
    $region3: #{input_tnet_forward.5} parent=1 // pred_check_branch
      %11 = sbr.rel (0) target = $region5
    $region4: #{input_tnet_forward.5} parent=1 // pred_region
      %s12 = sadd.s32 0, 0
      %s13 = smul.u32 4, %s12
      %p14 = scmp.lt.s32.totalorder %s13, 3
      %s15 = scalar_select %p14, %s13, 3
      %s16 = smul.addr %s15, 8
      %s17 = scalar_lea.vmem %s0, %s16
      %s18 = sadd.s32 0, 0
      %s19 = smul.u32 4, %s18
    $region5: #{input_tnet_forward.5} parent=1 // pred_fallthru
      _
    // Predicated region
    $region6: #{input_tnet_forward.5} parent=1 // pred_check
      _
    $region7: #{input_tnet_forward.5} parent=1 // pred_check_branch
      %21 = sbr.rel (0) target = $region9
    $region8: #{input_tnet_forward.5} parent=1 // pred_region
      %s23 = ssub.s32 64, 64
      %24 = vsyncadd [#allocation4], %s23
      %s26 = sshll.u32 [#allocation3], 4
      %s27 = int_to_ptr.vmem [resolvable:$true] %s26
      %29 = dma.hbm_to_vmem [thread:$0]  %s1, 64, %s27, [#allocation4]
    $region9: #{input_tnet_forward.5} parent=1 // pred_fallthru
      _
    // Predicated region
    $region10: #{input_tnet_forward.5} parent=1 // pred_check
      _
    $region11: #{input_tnet_forward.5} parent=1 // pred_check_branch
      %31 = sbr.rel (0) target = $region13
    $region12: #{input_tnet_forward.5} parent=1 // pred_region
      %s33 = ssub.s32 16, 16
      %34 = vsyncadd [#allocation6], %s33
      %s36 = sshll.u32 [#allocation5], 4
      %s37 = int_to_ptr.vmem [resolvable:$true] %s36
      %39 = dma.hbm_to_vmem [thread:$0]  %s2, 16, %s37, [#allocation6]
    $region13: #{input_tnet_forward.5} parent=1 // pred_fallthru
      _
    // Predicated region
    $region14: #{input_tnet_forward.5} parent=1 // pred_check
      _
    $region15: #{input_tnet_forward.5} parent=1 // pred_check_branch
      %41 = sbr.rel (0) target = $region17
    $region16: #{input_tnet_forward.5} parent=1 // pred_region
      %42 = dma.done [#allocation4], 64
    $region17: #{input_tnet_forward.5} parent=1 // pred_fallthru
      _
    // Predicated region
    $region18: #{input_tnet_forward.5} parent=1 // pred_check
      _
    $region19: #{input_tnet_forward.5} parent=1 // pred_check_branch
      %44 = sbr.rel (0) target = $region21
    $region20: #{input_tnet_forward.5} parent=1 // pred_region
      %45 = dma.done [#allocation6], 16
    $region21: #{input_tnet_forward.5} parent=1 // pred_fallthru
      _
    %s46 = sadd.s32 0, 0
    %s47 = smul.u32 4, %s46
    %p48 = scmp.lt.s32.totalorder %s47, 3
    %s49 = scalar_select %p48, %s47, 3
    %s50 = smul.addr %s49, 8
    %s51 = scalar_lea.vmem %s0, %s50
    %s52 = sadd.s32 0, 0
    %s53 = smul.u32 4, %s52
    %p54 = scmp.lt.s32.totalorder %s53, 3
    %s55 = scalar_select %p54, %s53, 3
    %s56 = smul.addr %s55, 8
    %s57 = scalar_lea.vmem %s0, %s56
    %s58 = sadd.s32 0, 0
    %s59 = smul.u32 4, %s58
    %v60 = vld [vmem:[%s57] sm:$0xff]
    %v61 = vld [vmem:[%s57 + $0x8] sm:$0xff]
    %v62 = vld [vmem:[%s57 + $0x10] sm:$0xff]
    %v63 = vld [vmem:[%s57 + $0x18] sm:$0xff]
    %v64 = vld [vmem:[#allocation3] sm:$0x7]
    %v65 = vld [vmem:[#allocation5] sm:$0x1]
    %67 = vset.pattern.permute.xlu0 0
    %68 = vperm.xlu0 %67, %v60
    %v69 = vpop.permute.xlu0 %68
    %72 = vset.pattern.permute.xlu0 0
    %73 = vperm.xlu0 %72, %v61
    %v74 = vpop.permute.xlu0 %73
    %77 = vset.pattern.permute.xlu0 0
    %78 = vperm.xlu0 %77, %v62
    %v79 = vpop.permute.xlu0 %78
    %82 = vset.pattern.permute.xlu0 0
    %83 = vperm.xlu0 %82, %v63
    %v84 = vpop.permute.xlu0 %83
    %v86 = vlaneseq
    %v87 = vshrl.u32 %v86, 7
    %v88 = vsub.s32 0, %v87
    %v89 = vrot.slane %v64, %v88
    %v90 = vmul.f32 %v69, %v89
    %v91 = vmul.f32 %v74, %v89
    %v92 = vmul.f32 %v79, %v89
    %v93 = vmul.f32 %v84, %v89
    %94 = vset.pattern.permute.xlu0 1
    %95 = vperm.xlu0 %94, %v60
    %v96 = vpop.permute.xlu0 %95
    %98 = vset.pattern.permute.xlu0 1
    %99 = vperm.xlu0 %98, %v61
    %v100 = vpop.permute.xlu0 %99
    %102 = vset.pattern.permute.xlu0 1
    %103 = vperm.xlu0 %102, %v62
    %v104 = vpop.permute.xlu0 %103
    %106 = vset.pattern.permute.xlu0 1
    %107 = vperm.xlu0 %106, %v63
    %v108 = vpop.permute.xlu0 %107
    %v110 = vlaneseq
    %v111 = vshrl.u32 %v110, 7
    %v112 = vsub.s32 1, %v111
    %v113 = vrot.slane %v64, %v112
    %v114 = vmul.f32 %v96, %v113
    %v115 = vmul.f32 %v100, %v113
    %v116 = vmul.f32 %v104, %v113
    %v117 = vmul.f32 %v108, %v113
    %v118 = vadd.f32 %v90, %v114
    %v119 = vadd.f32 %v91, %v115
    %v120 = vadd.f32 %v92, %v116
    %v121 = vadd.f32 %v93, %v117
    %122 = vset.pattern.permute.xlu0 2
    %123 = vperm.xlu0 %122, %v60
    %v124 = vpop.permute.xlu0 %123
    %126 = vset.pattern.permute.xlu0 2
    %127 = vperm.xlu0 %126, %v61
    %v128 = vpop.permute.xlu0 %127
    %130 = vset.pattern.permute.xlu0 2
    %131 = vperm.xlu0 %130, %v62
    %v132 = vpop.permute.xlu0 %131
    %134 = vset.pattern.permute.xlu0 2
    %135 = vperm.xlu0 %134, %v63
    %v136 = vpop.permute.xlu0 %135
    %v138 = vlaneseq
    %v139 = vshrl.u32 %v138, 7
    %v140 = vsub.s32 2, %v139
    %v141 = vrot.slane %v64, %v140
    %v142 = vmul.f32 %v124, %v141
    %v143 = vmul.f32 %v128, %v141
    %v144 = vmul.f32 %v132, %v141
    %v145 = vmul.f32 %v136, %v141
    %v146 = vadd.f32 %v118, %v142
    %v147 = vadd.f32 %v119, %v143
    %v148 = vadd.f32 %v120, %v144
    %v149 = vadd.f32 %v121, %v145
    %v151 = vlaneseq
    %v152 = vshrl.u32 %v151, 7
    %v153 = vsub.s32 0, %v152
    %v154 = vrot.slane %v65, %v153
    %v156 = vadd.f32 %v146, %v154
    %v157 = vadd.f32 %v147, %v154
    %v158 = vadd.f32 %v148, %v154
    %v159 = vadd.f32 %v149, %v154
    %v160 = vmax.f32 %v156, 0.0
    %v161 = vmax.f32 %v157, 0.0
    %v162 = vmax.f32 %v158, 0.0
    %v163 = vmax.f32 %v159, 0.0
    %vm164 = vcmask 523264
    %v165 = vsel %vm164, %v160, 0.0
    %v166 = vsel %vm164, %v161, 0.0
    %v167 = vadd.f32 %v165, %v166
    %v168 = vsel %vm164, %v162, 0.0
    %v169 = vadd.f32 %v167, %v168
    %v170 = vsel %vm164, %v163, 0.0
    %v171 = vadd.f32 %v169, %v170
    %v172 = vrot.slane %v171, 4
    %v173 = vadd.f32 %v171, %v172
    %v174 = vrot.slane %v173, 2
    %v175 = vadd.f32 %v173, %v174
    %v176 = vrot.slane %v175, 1
    %v177 = vadd.f32 %v175, %v176
    %v178 = vmul.f32 %v160, %v160
    %v179 = vmul.f32 %v161, %v161
    %v180 = vmul.f32 %v162, %v162
    %v181 = vmul.f32 %v163, %v163
    %v182 = vsel %vm164, %v178, 0.0
    %v183 = vsel %vm164, %v179, 0.0
    %v184 = vadd.f32 %v182, %v183
    %v185 = vsel %vm164, %v180, 0.0
    %v186 = vadd.f32 %v184, %v185
    %v187 = vsel %vm164, %v181, 0.0
    %v188 = vadd.f32 %v186, %v187
    %v189 = vrot.slane %v188, 4
    %v190 = vadd.f32 %v188, %v189
    %v191 = vrot.slane %v190, 2
    %v192 = vadd.f32 %v190, %v191
    %v193 = vrot.slane %v192, 1
    %v194 = vadd.f32 %v192, %v193
    %vm195 = vcmask 1040384
    %v196 = vsel %vm195, %v177, %v194
    %p197 = scmp.eq.s32.totalorder 0, 0
    // Predicated region
    $region22: #{input_tnet_forward.5} parent=1 // pred_check
      %p198 = pneg %p197
    $region23: #{input_tnet_forward.5} parent=1 // pred_check_branch
      %200 = sbr.rel (%p198) target = $region25
    $region24: #{input_tnet_forward.5} parent=1 // pred_region
      %vm201 = vcmask 517120
      %202 = vst.msk [vmem:[%s3] sm:$0x3] %vm201, 0.0
      %203 = vst.msk [vmem:[#allocation2] sm:$0x3] %vm201, 0.0
    $region25: #{input_tnet_forward.5} parent=1 // pred_fallthru
      _
    %v204 = vld [vmem:[%s3] sm:$0x3]
    %v205 = vld [vmem:[#allocation2] sm:$0x3]
    %v206 = vsub.f32 %v196, %v205
    %v207 = vadd.f32 %v204, %v206
    %v208 = vsub.f32 %v207, %v204
    %v209 = vsub.f32 %v208, %v206
    %vm210 = vcmask 517120
    %211 = vst.msk [vmem:[#allocation2] sm:$0x3] %vm210, %v209
    %212 = vst.msk [vmem:[%s3] sm:$0x3] %vm210, %v207
    // Predicated region
    $region26: #{input_tnet_forward.5} parent=1 // pred_check
      _
    $region27: #{input_tnet_forward.5} parent=1 // pred_check_branch
      %214 = sbr.rel (0) target = $region29
    $region28: #{input_tnet_forward.5} parent=1 // pred_region
      _
    $region29: #{input_tnet_forward.5} parent=1 // pred_fallthru
      _
    // Predicated region
    $region30: #{input_tnet_forward.5} parent=1 // pred_check
      _
    $region31: #{input_tnet_forward.5} parent=1 // pred_check_branch
      %216 = sbr.rel (0) target = $region33
    $region32: #{input_tnet_forward.5} parent=1 // pred_region
      _
    $region33: #{input_tnet_forward.5} parent=1 // pred_fallthru
      _
    %217 = vsyncpa [#allocation4], 1
    %218 = vsyncpa [#allocation6], 1

// kernel: input_tnet_forward.6
$region0: #{input_tnet_forward.6}
  #allocation0 [shape = 'u32[]', space=smem, size = 0x4, offset = 0x4, fixed_abs, tag = 'smem constant byte address 0x4 - core index']
  #allocation1 [shape = 'u32[144,128]{1,0:T(1,128)}', space=vmem, size = 0x12000, scoped, tag = 'internal scratch']
  #allocation2 [shape = 'f32[1,2,128]{2,1,0:T(2,128)}', space=vmem, size = 0x400, scoped, tag = 'scratch operand']
  %s0 = inlined_call_operand.vmem [shape: f32[32,3], index: 0, kind: input, shape index: {}]
  %s1 = inlined_call_operand.hbm [shape: f32[3,64], index: 1, kind: input, shape index: {}]
  %s2 = inlined_call_operand.hbm [shape: f32[1,64], index: 2, kind: input, shape index: {}]
  %s3 = inlined_call_operand.vmem [shape: f32[1,64], index: 3, kind: input, shape index: {}]
  %s4 = inlined_call_operand.vmem [shape: f32[1,64], index: 4, kind: input, shape index: {}]
  %s5 = inlined_call_operand.hbm [shape: f32[64,128], index: 5, kind: input, shape index: {}]
  %s6 = inlined_call_operand.hbm [shape: f32[1,128], index: 6, kind: input, shape index: {}]
  %s7 = inlined_call_operand.vmem [shape: f32[1,2,128], index: 7, kind: output, shape index: {}]
  %s8 = sld [smem:[#allocation0]]
  $region58: #{input_tnet_forward.6} parent=0
    _
  %s10 = ssub.s32 1, %s8
  %s11 = scalar_select 0, %s10, %s8
  $region1: #{input_tnet_forward.6} parent=0
    #allocation3 [shape = 'u8[2048]{0}', space=vmem, size = 0x800, scoped, tag = 'input window, operand 1, single buffered']
    #allocation4 [shape = 's32[1]{0}', space=sflag, size = 0x4, scoped, tag = 'scoped memory for input_tnet_forward.6']
    #allocation5 [shape = 'u8[512]{0}', space=vmem, size = 0x400, scoped, tag = 'input window, operand 2, single buffered']
    #allocation6 [shape = 's32[1]{0}', space=sflag, size = 0x4, scoped, tag = 'scoped memory for input_tnet_forward.6']
    #allocation7 [shape = 'u8[32768]{0}', space=vmem, size = 0x8000, scoped, tag = 'input window, operand 5, single buffered']
    #allocation8 [shape = 'u8[512]{0}', space=vmem, size = 0x400, scoped, tag = 'input window, operand 6, single buffered']
    #allocation9 [shape = 's32[1]{0}', space=sflag, size = 0x4, scoped, tag = 'scoped memory for input_tnet_forward.6']
    %12 = vsyncpa [#allocation4], 0
    %13 = vsyncpa [#allocation6], 0
    %14 = vsyncpa [#allocation9], 0
    // Predicated region
    $region2: #{input_tnet_forward.6} parent=1 // pred_check
      _
    $region3: #{input_tnet_forward.6} parent=1 // pred_check_branch
      %16 = sbr.rel (0) target = $region5
    $region4: #{input_tnet_forward.6} parent=1 // pred_region
      %s17 = sadd.s32 0, 0
      %s18 = smul.u32 4, %s17
      %p19 = scmp.lt.s32.totalorder %s18, 3
      %s20 = scalar_select %p19, %s18, 3
      %s21 = smul.addr %s20, 8
      %s22 = scalar_lea.vmem %s0, %s21
      %s23 = sadd.s32 0, 0
      %s24 = smul.u32 4, %s23
    $region5: #{input_tnet_forward.6} parent=1 // pred_fallthru
      _
    // Predicated region
    $region6: #{input_tnet_forward.6} parent=1 // pred_check
      _
    $region7: #{input_tnet_forward.6} parent=1 // pred_check_branch
      %26 = sbr.rel (0) target = $region9
    $region8: #{input_tnet_forward.6} parent=1 // pred_region
      %s28 = ssub.s32 64, 64
      %29 = vsyncadd [#allocation4], %s28
      %s31 = sshll.u32 [#allocation3], 4
      %s32 = int_to_ptr.vmem [resolvable:$true] %s31
      %34 = dma.hbm_to_vmem [thread:$0]  %s1, 64, %s32, [#allocation4]
    $region9: #{input_tnet_forward.6} parent=1 // pred_fallthru
      _
    // Predicated region
    $region10: #{input_tnet_forward.6} parent=1 // pred_check
      _
    $region11: #{input_tnet_forward.6} parent=1 // pred_check_branch
      %36 = sbr.rel (0) target = $region13
    $region12: #{input_tnet_forward.6} parent=1 // pred_region
      %s38 = ssub.s32 16, 16
      %39 = vsyncadd [#allocation6], %s38
      %s41 = sshll.u32 [#allocation5], 4
      %s42 = int_to_ptr.vmem [resolvable:$true] %s41
      %44 = dma.hbm_to_vmem [thread:$0]  %s2, 16, %s42, [#allocation6]
    $region13: #{input_tnet_forward.6} parent=1 // pred_fallthru
      _
    // Predicated region
    $region14: #{input_tnet_forward.6} parent=1 // pred_check
      _
    $region15: #{input_tnet_forward.6} parent=1 // pred_check_branch
      %46 = sbr.rel (0) target = $region17
    $region16: #{input_tnet_forward.6} parent=1 // pred_region
      _
    $region17: #{input_tnet_forward.6} parent=1 // pred_fallthru
      _
    // Predicated region
    $region18: #{input_tnet_forward.6} parent=1 // pred_check
      _
    $region19: #{input_tnet_forward.6} parent=1 // pred_check_branch
      %48 = sbr.rel (0) target = $region21
    $region20: #{input_tnet_forward.6} parent=1 // pred_region
      _
    $region21: #{input_tnet_forward.6} parent=1 // pred_fallthru
      _
    // Predicated region
    $region22: #{input_tnet_forward.6} parent=1 // pred_check
      _
    $region23: #{input_tnet_forward.6} parent=1 // pred_check_branch
      %50 = sbr.rel (0) target = $region25
    $region24: #{input_tnet_forward.6} parent=1 // pred_region
      %s52 = ssub.s32 1024, 1024
      %53 = vsyncadd [#allocation6], %s52
      %s54 = sshll.u32 [#allocation7], 4
      %s55 = int_to_ptr.vmem [resolvable:$true] %s54
      %60 = dma.hbm_to_vmem [thread:$0]  %s5, 1024, %s55, [#allocation6], 128, 128, 8
    $region25: #{input_tnet_forward.6} parent=1 // pred_fallthru
      _
    // Predicated region
    $region26: #{input_tnet_forward.6} parent=1 // pred_check
      _
    $region27: #{input_tnet_forward.6} parent=1 // pred_check_branch
      %62 = sbr.rel (0) target = $region29
    $region28: #{input_tnet_forward.6} parent=1 // pred_region
      %s64 = ssub.s32 16, 16
      %65 = vsyncadd [#allocation9], %s64
      %s67 = sshll.u32 [#allocation8], 4
      %s68 = int_to_ptr.vmem [resolvable:$true] %s67
      %70 = dma.hbm_to_vmem [thread:$0]  %s6, 16, %s68, [#allocation9]
    $region29: #{input_tnet_forward.6} parent=1 // pred_fallthru
      _
    // Predicated region
    $region30: #{input_tnet_forward.6} parent=1 // pred_check
      _
    $region31: #{input_tnet_forward.6} parent=1 // pred_check_branch
      %72 = sbr.rel (0) target = $region33
    $region32: #{input_tnet_forward.6} parent=1 // pred_region
      %73 = dma.done [#allocation4], 64
    $region33: #{input_tnet_forward.6} parent=1 // pred_fallthru
      _
    // Predicated region
    $region34: #{input_tnet_forward.6} parent=1 // pred_check
      _
    $region35: #{input_tnet_forward.6} parent=1 // pred_check_branch
      %75 = sbr.rel (0) target = $region37
    $region36: #{input_tnet_forward.6} parent=1 // pred_region
      %76 = dma.done [#allocation6], 16
    $region37: #{input_tnet_forward.6} parent=1 // pred_fallthru
      _
    // Predicated region
    $region38: #{input_tnet_forward.6} parent=1 // pred_check
      _
    $region39: #{input_tnet_forward.6} parent=1 // pred_check_branch
      %78 = sbr.rel (0) target = $region41
    $region40: #{input_tnet_forward.6} parent=1 // pred_region
      %79 = dma.done [#allocation6], 1024
    $region41: #{input_tnet_forward.6} parent=1 // pred_fallthru
      _
    // Predicated region
    $region42: #{input_tnet_forward.6} parent=1 // pred_check
      _
    $region43: #{input_tnet_forward.6} parent=1 // pred_check_branch
      %81 = sbr.rel (0) target = $region45
    $region44: #{input_tnet_forward.6} parent=1 // pred_region
      %82 = dma.done [#allocation9], 16
    $region45: #{input_tnet_forward.6} parent=1 // pred_fallthru
      _
    %s83 = sadd.s32 0, 0
    %s84 = smul.u32 4, %s83
    %p85 = scmp.lt.s32.totalorder %s84, 3
    %s86 = scalar_select %p85, %s84, 3
    %s87 = smul.addr %s86, 8
    %s88 = scalar_lea.vmem %s0, %s87
    %s89 = sadd.s32 0, 0
    %s90 = smul.u32 4, %s89
    %p91 = scmp.lt.s32.totalorder %s90, 3
    %s92 = scalar_select %p91, %s90, 3
    %s93 = smul.addr %s92, 8
    %s94 = scalar_lea.vmem %s0, %s93
    %s95 = sadd.s32 0, 0
    %s96 = smul.u32 4, %s95
    %v97 = vld [vmem:[%s94] sm:$0xff]
    %v98 = vld [vmem:[%s94 + $0x8] sm:$0xff]
    %v99 = vld [vmem:[%s94 + $0x10] sm:$0xff]
    %v100 = vld [vmem:[%s94 + $0x18] sm:$0xff]
    %v101 = vld [vmem:[#allocation3] sm:$0x7]
    %v102 = vld [vmem:[#allocation5] sm:$0x1]
    %104 = vset.pattern.permute.xlu0 0
    %105 = vperm.xlu0 %104, %v97
    %v106 = vpop.permute.xlu0 %105
    %109 = vset.pattern.permute.xlu0 0
    %110 = vperm.xlu0 %109, %v98
    %v111 = vpop.permute.xlu0 %110
    %114 = vset.pattern.permute.xlu0 0
    %115 = vperm.xlu0 %114, %v99
    %v116 = vpop.permute.xlu0 %115
    %119 = vset.pattern.permute.xlu0 0
    %120 = vperm.xlu0 %119, %v100
    %v121 = vpop.permute.xlu0 %120
    %v123 = vlaneseq
    %v124 = vshrl.u32 %v123, 7
    %v125 = vsub.s32 0, %v124
    %v126 = vrot.slane %v101, %v125
    %v127 = vmul.f32 %v106, %v126
    %v128 = vmul.f32 %v111, %v126
    %v129 = vmul.f32 %v116, %v126
    %v130 = vmul.f32 %v121, %v126
    %131 = vset.pattern.permute.xlu0 1
    %132 = vperm.xlu0 %131, %v97
    %v133 = vpop.permute.xlu0 %132
    %135 = vset.pattern.permute.xlu0 1
    %136 = vperm.xlu0 %135, %v98
    %v137 = vpop.permute.xlu0 %136
    %139 = vset.pattern.permute.xlu0 1
    %140 = vperm.xlu0 %139, %v99
    %v141 = vpop.permute.xlu0 %140
    %143 = vset.pattern.permute.xlu0 1
    %144 = vperm.xlu0 %143, %v100
    %v145 = vpop.permute.xlu0 %144
    %v147 = vlaneseq
    %v148 = vshrl.u32 %v147, 7
    %v149 = vsub.s32 1, %v148
    %v150 = vrot.slane %v101, %v149
    %v151 = vmul.f32 %v133, %v150
    %v152 = vmul.f32 %v137, %v150
    %v153 = vmul.f32 %v141, %v150
    %v154 = vmul.f32 %v145, %v150
    %v155 = vadd.f32 %v127, %v151
    %v156 = vadd.f32 %v128, %v152
    %v157 = vadd.f32 %v129, %v153
    %v158 = vadd.f32 %v130, %v154
    %159 = vset.pattern.permute.xlu0 2
    %160 = vperm.xlu0 %159, %v97
    %v161 = vpop.permute.xlu0 %160
    %163 = vset.pattern.permute.xlu0 2
    %164 = vperm.xlu0 %163, %v98
    %v165 = vpop.permute.xlu0 %164
    %167 = vset.pattern.permute.xlu0 2
    %168 = vperm.xlu0 %167, %v99
    %v169 = vpop.permute.xlu0 %168
    %171 = vset.pattern.permute.xlu0 2
    %172 = vperm.xlu0 %171, %v100
    %v173 = vpop.permute.xlu0 %172
    %v175 = vlaneseq
    %v176 = vshrl.u32 %v175, 7
    %v177 = vsub.s32 2, %v176
    %v178 = vrot.slane %v101, %v177
    %v179 = vmul.f32 %v161, %v178
    %v180 = vmul.f32 %v165, %v178
    %v181 = vmul.f32 %v169, %v178
    %v182 = vmul.f32 %v173, %v178
    %v183 = vadd.f32 %v155, %v179
    %v184 = vadd.f32 %v156, %v180
    %v185 = vadd.f32 %v157, %v181
    %v186 = vadd.f32 %v158, %v182
    %v188 = vlaneseq
    %v189 = vshrl.u32 %v188, 7
    %v190 = vsub.s32 0, %v189
    %v191 = vrot.slane %v102, %v190
    %v193 = vadd.f32 %v183, %v191
    %v194 = vadd.f32 %v184, %v191
    %v195 = vadd.f32 %v185, %v191
    %v196 = vadd.f32 %v186, %v191
    %v197 = vmax.f32 %v193, 0.0
    %v198 = vmax.f32 %v194, 0.0
    %v199 = vmax.f32 %v195, 0.0
    %v200 = vmax.f32 %v196, 0.0
    %v201 = vld [vmem:[%s3] sm:$0x1]
    %v203 = vlaneseq
    %v204 = vshrl.u32 %v203, 7
    %v205 = vsub.s32 0, %v204
    %v206 = vrot.slane %v201, %v205
    %v208 = vmul.f32 %v197, %v206
    %v209 = vmul.f32 %v198, %v206
    %v210 = vmul.f32 %v199, %v206
    %v211 = vmul.f32 %v200, %v206
    %v212 = vld [vmem:[%s4] sm:$0x1]
    %v214 = vlaneseq
    %v215 = vshrl.u32 %v214, 7
    %v216 = vsub.s32 0, %v215
    %v217 = vrot.slane %v212, %v216
    %v219 = vadd.f32 %v208, %v217
    %v220 = vadd.f32 %v209, %v217
    %v221 = vadd.f32 %v210, %v217
    %v222 = vadd.f32 %v211, %v217
    %v223 = vld [vmem:[#allocation7] sm:$0xff]
    %v224 = vld [vmem:[#allocation7 + $0x8] sm:$0xff]
    %v225 = vld [vmem:[#allocation7 + $0x10] sm:$0xff]
    %v226 = vld [vmem:[#allocation7 + $0x18] sm:$0xff]
    %v227 = vld [vmem:[#allocation7 + $0x20] sm:$0xff]
    %v228 = vld [vmem:[#allocation7 + $0x28] sm:$0xff]
    %v229 = vld [vmem:[#allocation7 + $0x30] sm:$0xff]
    %v230 = vld [vmem:[#allocation7 + $0x38] sm:$0xff]
    %v231 = vld [vmem:[#allocation8] sm:$0x1]
    %v233 = vlaneseq
    %v234 = vshrl.u32 %v233, 7
    %v235 = vsub.s32 0, %v234
    %v236 = vrot.slane %v231, %v235
    %vm238 = vcmask 523264
    %v240 = vsel %vm238, %v219, 0
    %v243 = vsel %vm238, %v220, 0
    %v246 = vsel %vm238, %v221, 0
    %v249 = vsel %vm238, %v222, 0
    %251 = vmatprep.subr.mxu0 0.0
    %252 = vmatpush1.msra.mxu0 %v223
    %253 = vmatprep.subr.mxu0 0.0
    %254 = vmatpush1.msra.mxu0 %v224
    %255 = vmatprep.subr.mxu0 0.0
    %256 = vmatpush1.msra.mxu0 %v225
    %257 = vmatprep.subr.mxu0 0.0
    %258 = vmatpush1.msra.mxu0 %v226
    %259 = vmatprep.subr.mxu0 0.0
    %260 = vmatpush1.msra.mxu0 %v227
    %261 = vmatprep.subr.mxu0 0.0
    %262 = vmatpush1.msra.mxu0 %v228
    %263 = vmatprep.subr.mxu0 0.0
    %264 = vmatpush1.msra.mxu0 %v229
    %265 = vmatprep.subr.mxu0 0.0
    %266 = vmatpush1.msra.mxu0 %v230
    %267 = vmatprep.subr.mxu0 0.0
    %268 = vmatpush1.msra.mxu0 0.0
    %269 = vmatprep.subr.mxu0 0.0
    %270 = vmatpush1.msra.mxu0 0.0
    %271 = vmatprep.subr.mxu0 0.0
    %272 = vmatpush1.msra.mxu0 0.0
    %273 = vmatprep.subr.mxu0 0.0
    %274 = vmatpush1.msra.mxu0 0.0
    %275 = vmatprep.subr.mxu0 0.0
    %276 = vmatpush1.msra.mxu0 0.0
    %277 = vmatprep.subr.mxu0 0.0
    %278 = vmatpush1.msra.mxu0 0.0
    %279 = vmatprep.subr.mxu0 0.0
    %280 = vmatpush1.msra.mxu0 0.0
    %281 = vmatprep.subr.mxu0 0.0
    %282 = vmatpush1.msra.mxu0 0.0
    %283 = vmatprep.subr.mxu0 0.0
    %284 = vmatpush1.msra.mxu0 0.0
    %285 = vmatprep.subr.mxu0 0.0
    %286 = vmatpush1.msra.mxu0 0.0
    %287 = vmatprep.subr.mxu0 0.0
    %288 = vmatpush1.msra.mxu0 0.0
    %289 = vmatprep.subr.mxu0 0.0
    %290 = vmatpush1.msra.mxu0 0.0
    %291 = vmatprep.subr.mxu0 0.0
    %292 = vmatpush1.msra.mxu0 0.0
    %293 = vmatprep.subr.mxu0 0.0
    %294 = vmatpush1.msra.mxu0 0.0
    %295 = vmatprep.subr.mxu0 0.0
    %296 = vmatpush1.msra.mxu0 0.0
    %297 = vmatprep.subr.mxu0 0.0
    %298 = vmatpush1.msra.mxu0 0.0
    %299 = vmatprep.subr.mxu0 0.0
    %300 = vmatpush1.msra.mxu0 0.0
    %301 = vmatprep.subr.mxu0 0.0
    %302 = vmatpush1.msra.mxu0 0.0
    %303 = vmatprep.subr.mxu0 0.0
    %304 = vmatpush1.msra.mxu0 0.0
    %305 = vmatprep.subr.mxu0 0.0
    %306 = vmatpush1.msra.mxu0 0.0
    %307 = vmatprep.subr.mxu0 0.0
    %308 = vmatpush1.msra.mxu0 0.0
    %309 = vmatprep.subr.mxu0 0.0
    %310 = vmatpush1.msra.mxu0 0.0
    %311 = vmatprep.subr.mxu0 0.0
    %312 = vmatpush1.msra.mxu0 0.0
    %313 = vmatprep.subr.mxu0 0.0
    %314 = vmatpush1.msra.mxu0 0.0
    %315 = vmatprep.mubr.f32.mxu0 0.0
    %316 = vmatmul.mubr.f32.gmra.mrb[0].mxu0 %v240
    %v317 = vpop.f32.mrb[0].mxu0
    %v318 = vadd.f32 %v236, %v317
    %v319 = vpop.f32.mrb[0].mxu0
    %320 = vmatprep.mubr.f32.mxu0 0.0
    %321 = vmatmul.mubr.f32.gmra.mrb[0].mxu0 %v243
    %v322 = vpop.f32.mrb[0].mxu0
    %v323 = vadd.f32 %v236, %v322
    %v324 = vpop.f32.mrb[0].mxu0
    %325 = vmatprep.mubr.f32.mxu0 0.0
    %326 = vmatmul.mubr.f32.gmra.mrb[0].mxu0 %v246
    %v327 = vpop.f32.mrb[0].mxu0
    %v328 = vadd.f32 %v236, %v327
    %v329 = vpop.f32.mrb[0].mxu0
    %330 = vmatprep.mubr.f32.mxu0 0.0
    %331 = vmatmul.mubr.f32.gmra.mrb[0].mxu0 %v249
    %v332 = vpop.f32.mrb[0].mxu0
    %v333 = vadd.f32 %v236, %v332
    %v334 = vpop.f32.mrb[0].mxu0
    %335 = vdwg.mxu0
    %v336 = vmax.f32 %v318, 0.0
    %v337 = vmax.f32 %v323, 0.0
    %v338 = vmax.f32 %v328, 0.0
    %v339 = vmax.f32 %v333, 0.0
    %v340 = vadd.f32 %v336, %v337
    %v341 = vadd.f32 %v340, %v338
    %v342 = vadd.f32 %v341, %v339
    %v343 = vrot.slane %v342, 4
    %v344 = vadd.f32 %v342, %v343
    %v345 = vrot.slane %v344, 2
    %v346 = vadd.f32 %v344, %v345
    %v347 = vrot.slane %v346, 1
    %v348 = vadd.f32 %v346, %v347
    %v349 = vmul.f32 %v336, %v336
    %v350 = vmul.f32 %v337, %v337
    %v351 = vmul.f32 %v338, %v338
    %v352 = vmul.f32 %v339, %v339
    %v353 = vadd.f32 %v349, %v350
    %v354 = vadd.f32 %v353, %v351
    %v355 = vadd.f32 %v354, %v352
    %v356 = vrot.slane %v355, 4
    %v357 = vadd.f32 %v355, %v356
    %v358 = vrot.slane %v357, 2
    %v359 = vadd.f32 %v357, %v358
    %v360 = vrot.slane %v359, 1
    %v361 = vadd.f32 %v359, %v360
    %vm362 = vcmask 1040384
    %v363 = vsel %vm362, %v348, %v361
    %p364 = scmp.eq.s32.totalorder 0, 0
    // Predicated region
    $region46: #{input_tnet_forward.6} parent=1 // pred_check
      %p365 = pneg %p364
    $region47: #{input_tnet_forward.6} parent=1 // pred_check_branch
      %367 = sbr.rel (%p365) target = $region49
    $region48: #{input_tnet_forward.6} parent=1 // pred_region
      %368 = vst [vmem:[%s7] sm:$0x3] 0.0
      %369 = vst [vmem:[#allocation2] sm:$0x3] 0.0
    $region49: #{input_tnet_forward.6} parent=1 // pred_fallthru
      _
    %v370 = vld [vmem:[%s7] sm:$0x3]
    %v371 = vld [vmem:[#allocation2] sm:$0x3]
    %v372 = vsub.f32 %v363, %v371
    %v373 = vadd.f32 %v370, %v372
    %v374 = vsub.f32 %v373, %v370
    %v375 = vsub.f32 %v374, %v372
    %376 = vst [vmem:[#allocation2] sm:$0x3] %v375
    %377 = vst [vmem:[%s7] sm:$0x3] %v373
    // Predicated region
    $region50: #{input_tnet_forward.6} parent=1 // pred_check
      _
    $region51: #{input_tnet_forward.6} parent=1 // pred_check_branch
      %379 = sbr.rel (0) target = $region53
    $region52: #{input_tnet_forward.6} parent=1 // pred_region
      _
    $region53: #{input_tnet_forward.6} parent=1 // pred_fallthru
      _
    // Predicated region
    $region54: #{input_tnet_forward.6} parent=1 // pred_check
      _
    $region55: #{input_tnet_forward.6} parent=1 // pred_check_branch
      %381 = sbr.rel (0) target = $region57
    $region56: #{input_tnet_forward.6} parent=1 // pred_region
      _
    $region57: #{input_tnet_forward.6} parent=1 // pred_fallthru
      _
    %382 = vsyncpa [#allocation4], 1
    %383 = vsyncpa [#allocation6], 1
    %384 = vsyncpa [#allocation9], 1

// kernel: input_tnet_forward.7
$region0: #{input_tnet_forward.7}
  #allocation0 [shape = 'u32[]', space=smem, size = 0x4, offset = 0x4, fixed_abs, tag = 'smem constant byte address 0x4 - core index']
  #allocation1 [shape = 'u32[144,128]{1,0:T(1,128)}', space=vmem, size = 0x12000, scoped, tag = 'internal scratch']
  #allocation2 [shape = 'f32[1,2,1024]{2,1,0:T(2,128)}', space=vmem, size = 0x2000, scoped, tag = 'scratch operand']
  %s0 = inlined_call_operand.vmem [shape: f32[32,3], index: 0, kind: input, shape index: {}]
  %s1 = inlined_call_operand.hbm [shape: f32[3,64], index: 1, kind: input, shape index: {}]
  %s2 = inlined_call_operand.hbm [shape: f32[1,64], index: 2, kind: input, shape index: {}]
  %s3 = inlined_call_operand.vmem [shape: f32[1,64], index: 3, kind: input, shape index: {}]
  %s4 = inlined_call_operand.vmem [shape: f32[1,64], index: 4, kind: input, shape index: {}]
  %s5 = inlined_call_operand.hbm [shape: f32[64,128], index: 5, kind: input, shape index: {}]
  %s6 = inlined_call_operand.hbm [shape: f32[1,128], index: 6, kind: input, shape index: {}]
  %s7 = inlined_call_operand.vmem [shape: f32[1,128], index: 7, kind: input, shape index: {}]
  %s8 = inlined_call_operand.vmem [shape: f32[1,128], index: 8, kind: input, shape index: {}]
  %s9 = inlined_call_operand.hbm [shape: f32[128,1024], index: 9, kind: input, shape index: {}]
  %s10 = inlined_call_operand.hbm [shape: f32[1,1024], index: 10, kind: input, shape index: {}]
  %s11 = inlined_call_operand.vmem [shape: f32[1,2,1024], index: 11, kind: output, shape index: {}]
  %s12 = sld [smem:[#allocation0]]
  $region82: #{input_tnet_forward.7} parent=0
    _
  %s14 = ssub.s32 1, %s12
  %s15 = scalar_select 0, %s14, %s12
  $region1: #{input_tnet_forward.7} parent=0
    #allocation3 [shape = 'u8[2048]{0}', space=vmem, size = 0x800, scoped, tag = 'input window, operand 1, single buffered']
    #allocation4 [shape = 's32[1]{0}', space=sflag, size = 0x4, scoped, tag = 'scoped memory for input_tnet_forward.7']
    #allocation5 [shape = 'u8[512]{0}', space=vmem, size = 0x400, scoped, tag = 'input window, operand 2, single buffered']
    #allocation6 [shape = 's32[1]{0}', space=sflag, size = 0x4, scoped, tag = 'scoped memory for input_tnet_forward.7']
    #allocation7 [shape = 'u8[32768]{0}', space=vmem, size = 0x8000, scoped, tag = 'input window, operand 5, single buffered']
    #allocation8 [shape = 'u8[512]{0}', space=vmem, size = 0x400, scoped, tag = 'input window, operand 6, single buffered']
    #allocation9 [shape = 's32[1]{0}', space=sflag, size = 0x4, scoped, tag = 'scoped memory for input_tnet_forward.7']
    #allocation10 [shape = 'u8[524288]{0}', space=vmem, size = 0x80000, scoped, tag = 'input window, operand 9, single buffered']
    #allocation11 [shape = 'u8[4096]{0}', space=vmem, size = 0x1000, scoped, tag = 'input window, operand 10, single buffered']
    #allocation12 [shape = 's32[1]{0}', space=sflag, size = 0x4, scoped, tag = 'scoped memory for input_tnet_forward.7']
    %16 = vsyncpa [#allocation4], 0
    %17 = vsyncpa [#allocation6], 0
    %18 = vsyncpa [#allocation9], 0
    %19 = vsyncpa [#allocation12], 0
    // Predicated region
    $region2: #{input_tnet_forward.7} parent=1 // pred_check
      _
    $region3: #{input_tnet_forward.7} parent=1 // pred_check_branch
      %21 = sbr.rel (0) target = $region5
    $region4: #{input_tnet_forward.7} parent=1 // pred_region
      %s22 = sadd.s32 0, 0
      %s23 = smul.u32 4, %s22
      %p24 = scmp.lt.s32.totalorder %s23, 3
      %s25 = scalar_select %p24, %s23, 3
      %s26 = smul.addr %s25, 8
      %s27 = scalar_lea.vmem %s0, %s26
      %s28 = sadd.s32 0, 0
      %s29 = smul.u32 4, %s28
    $region5: #{input_tnet_forward.7} parent=1 // pred_fallthru
      _
    // Predicated region
    $region6: #{input_tnet_forward.7} parent=1 // pred_check
      _
    $region7: #{input_tnet_forward.7} parent=1 // pred_check_branch
      %31 = sbr.rel (0) target = $region9
    $region8: #{input_tnet_forward.7} parent=1 // pred_region
      %s33 = ssub.s32 64, 64
      %34 = vsyncadd [#allocation4], %s33
      %s36 = sshll.u32 [#allocation3], 4
      %s37 = int_to_ptr.vmem [resolvable:$true] %s36
      %39 = dma.hbm_to_vmem [thread:$0]  %s1, 64, %s37, [#allocation4]
    $region9: #{input_tnet_forward.7} parent=1 // pred_fallthru
      _
    // Predicated region
    $region10: #{input_tnet_forward.7} parent=1 // pred_check
      _
    $region11: #{input_tnet_forward.7} parent=1 // pred_check_branch
      %41 = sbr.rel (0) target = $region13
    $region12: #{input_tnet_forward.7} parent=1 // pred_region
      %s43 = ssub.s32 16, 16
      %44 = vsyncadd [#allocation6], %s43
      %s46 = sshll.u32 [#allocation5], 4
      %s47 = int_to_ptr.vmem [resolvable:$true] %s46
      %49 = dma.hbm_to_vmem [thread:$0]  %s2, 16, %s47, [#allocation6]
    $region13: #{input_tnet_forward.7} parent=1 // pred_fallthru
      _
    // Predicated region
    $region14: #{input_tnet_forward.7} parent=1 // pred_check
      _
    $region15: #{input_tnet_forward.7} parent=1 // pred_check_branch
      %51 = sbr.rel (0) target = $region17
    $region16: #{input_tnet_forward.7} parent=1 // pred_region
      _
    $region17: #{input_tnet_forward.7} parent=1 // pred_fallthru
      _
    // Predicated region
    $region18: #{input_tnet_forward.7} parent=1 // pred_check
      _
    $region19: #{input_tnet_forward.7} parent=1 // pred_check_branch
      %53 = sbr.rel (0) target = $region21
    $region20: #{input_tnet_forward.7} parent=1 // pred_region
      _
    $region21: #{input_tnet_forward.7} parent=1 // pred_fallthru
      _
    // Predicated region
    $region22: #{input_tnet_forward.7} parent=1 // pred_check
      _
    $region23: #{input_tnet_forward.7} parent=1 // pred_check_branch
      %55 = sbr.rel (0) target = $region25
    $region24: #{input_tnet_forward.7} parent=1 // pred_region
      %s57 = ssub.s32 1024, 1024
      %58 = vsyncadd [#allocation6], %s57
      %s59 = sshll.u32 [#allocation7], 4
      %s60 = int_to_ptr.vmem [resolvable:$true] %s59
      %65 = dma.hbm_to_vmem [thread:$0]  %s5, 1024, %s60, [#allocation6], 128, 128, 8
    $region25: #{input_tnet_forward.7} parent=1 // pred_fallthru
      _
    // Predicated region
    $region26: #{input_tnet_forward.7} parent=1 // pred_check
      _
    $region27: #{input_tnet_forward.7} parent=1 // pred_check_branch
      %67 = sbr.rel (0) target = $region29
    $region28: #{input_tnet_forward.7} parent=1 // pred_region
      %s69 = ssub.s32 16, 16
      %70 = vsyncadd [#allocation9], %s69
      %s72 = sshll.u32 [#allocation8], 4
      %s73 = int_to_ptr.vmem [resolvable:$true] %s72
      %75 = dma.hbm_to_vmem [thread:$0]  %s6, 16, %s73, [#allocation9]
    $region29: #{input_tnet_forward.7} parent=1 // pred_fallthru
      _
    // Predicated region
    $region30: #{input_tnet_forward.7} parent=1 // pred_check
      _
    $region31: #{input_tnet_forward.7} parent=1 // pred_check_branch
      %77 = sbr.rel (0) target = $region33
    $region32: #{input_tnet_forward.7} parent=1 // pred_region
      _
    $region33: #{input_tnet_forward.7} parent=1 // pred_fallthru
      _
    // Predicated region
    $region34: #{input_tnet_forward.7} parent=1 // pred_check
      _
    $region35: #{input_tnet_forward.7} parent=1 // pred_check_branch
      %79 = sbr.rel (0) target = $region37
    $region36: #{input_tnet_forward.7} parent=1 // pred_region
      _
    $region37: #{input_tnet_forward.7} parent=1 // pred_fallthru
      _
    // Predicated region
    $region38: #{input_tnet_forward.7} parent=1 // pred_check
      _
    $region39: #{input_tnet_forward.7} parent=1 // pred_check_branch
      %81 = sbr.rel (0) target = $region41
    $region40: #{input_tnet_forward.7} parent=1 // pred_region
      %s83 = ssub.s32 16384, 16384
      %84 = vsyncadd [#allocation9], %s83
      %s85 = sshll.u32 [#allocation10], 4
      %s86 = int_to_ptr.vmem [resolvable:$true] %s85
      %91 = dma.hbm_to_vmem [thread:$0]  %s9, 16384, %s86, [#allocation9], 1024, 1024, 64
    $region41: #{input_tnet_forward.7} parent=1 // pred_fallthru
      _
    // Predicated region
    $region42: #{input_tnet_forward.7} parent=1 // pred_check
      _
    $region43: #{input_tnet_forward.7} parent=1 // pred_check_branch
      %93 = sbr.rel (0) target = $region45
    $region44: #{input_tnet_forward.7} parent=1 // pred_region
      %s95 = ssub.s32 128, 128
      %96 = vsyncadd [#allocation12], %s95
      %s98 = sshll.u32 [#allocation11], 4
      %s99 = int_to_ptr.vmem [resolvable:$true] %s98
      %101 = dma.hbm_to_vmem [thread:$0]  %s10, 128, %s99, [#allocation12]
    $region45: #{input_tnet_forward.7} parent=1 // pred_fallthru
      _
    // Predicated region
    $region46: #{input_tnet_forward.7} parent=1 // pred_check
      _
    $region47: #{input_tnet_forward.7} parent=1 // pred_check_branch
      %103 = sbr.rel (0) target = $region49
    $region48: #{input_tnet_forward.7} parent=1 // pred_region
      %104 = dma.done [#allocation4], 64
    $region49: #{input_tnet_forward.7} parent=1 // pred_fallthru
      _
    // Predicated region
    $region50: #{input_tnet_forward.7} parent=1 // pred_check
      _
    $region51: #{input_tnet_forward.7} parent=1 // pred_check_branch
      %106 = sbr.rel (0) target = $region53
    $region52: #{input_tnet_forward.7} parent=1 // pred_region
      %107 = dma.done [#allocation6], 16
    $region53: #{input_tnet_forward.7} parent=1 // pred_fallthru
      _
    // Predicated region
    $region54: #{input_tnet_forward.7} parent=1 // pred_check
      _
    $region55: #{input_tnet_forward.7} parent=1 // pred_check_branch
      %109 = sbr.rel (0) target = $region57
    $region56: #{input_tnet_forward.7} parent=1 // pred_region
      %110 = dma.done [#allocation6], 1024
    $region57: #{input_tnet_forward.7} parent=1 // pred_fallthru
      _
    // Predicated region
    $region58: #{input_tnet_forward.7} parent=1 // pred_check
      _
    $region59: #{input_tnet_forward.7} parent=1 // pred_check_branch
      %112 = sbr.rel (0) target = $region61
    $region60: #{input_tnet_forward.7} parent=1 // pred_region
      %113 = dma.done [#allocation9], 16
    $region61: #{input_tnet_forward.7} parent=1 // pred_fallthru
      _
    // Predicated region
    $region62: #{input_tnet_forward.7} parent=1 // pred_check
      _
    $region63: #{input_tnet_forward.7} parent=1 // pred_check_branch
      %115 = sbr.rel (0) target = $region65
    $region64: #{input_tnet_forward.7} parent=1 // pred_region
      %116 = dma.done [#allocation9], 16384
    $region65: #{input_tnet_forward.7} parent=1 // pred_fallthru
      _
    // Predicated region
    $region66: #{input_tnet_forward.7} parent=1 // pred_check
      _
    $region67: #{input_tnet_forward.7} parent=1 // pred_check_branch
      %118 = sbr.rel (0) target = $region69
    $region68: #{input_tnet_forward.7} parent=1 // pred_region
      %119 = dma.done [#allocation12], 128
    $region69: #{input_tnet_forward.7} parent=1 // pred_fallthru
      _
    %s120 = sadd.s32 0, 0
    %s121 = smul.u32 4, %s120
    %p122 = scmp.lt.s32.totalorder %s121, 3
    %s123 = scalar_select %p122, %s121, 3
    %s124 = smul.addr %s123, 8
    %s125 = scalar_lea.vmem %s0, %s124
    %s126 = sadd.s32 0, 0
    %s127 = smul.u32 4, %s126
    %p128 = scmp.lt.s32.totalorder %s127, 3
    %s129 = scalar_select %p128, %s127, 3
    %s130 = smul.addr %s129, 8
    %s131 = scalar_lea.vmem %s0, %s130
    %s132 = sadd.s32 0, 0
    %s133 = smul.u32 4, %s132
    %v134 = vld [vmem:[%s131] sm:$0xff]
    %v135 = vld [vmem:[%s131 + $0x8] sm:$0xff]
    %v136 = vld [vmem:[%s131 + $0x10] sm:$0xff]
    %v137 = vld [vmem:[%s131 + $0x18] sm:$0xff]
    %v138 = vld [vmem:[#allocation3] sm:$0x7]
    %v139 = vld [vmem:[#allocation5] sm:$0x1]
    %141 = vset.pattern.permute.xlu0 0
    %142 = vperm.xlu0 %141, %v134
    %v143 = vpop.permute.xlu0 %142
    %146 = vset.pattern.permute.xlu0 0
    %147 = vperm.xlu0 %146, %v135
    %v148 = vpop.permute.xlu0 %147
    %151 = vset.pattern.permute.xlu0 0
    %152 = vperm.xlu0 %151, %v136
    %v153 = vpop.permute.xlu0 %152
    %156 = vset.pattern.permute.xlu0 0
    %157 = vperm.xlu0 %156, %v137
    %v158 = vpop.permute.xlu0 %157
    %v160 = vlaneseq
    %v161 = vshrl.u32 %v160, 7
    %v162 = vsub.s32 0, %v161
    %v163 = vrot.slane %v138, %v162
    %v164 = vmul.f32 %v143, %v163
    %v165 = vmul.f32 %v148, %v163
    %v166 = vmul.f32 %v153, %v163
    %v167 = vmul.f32 %v158, %v163
    %168 = vset.pattern.permute.xlu0 1
    %169 = vperm.xlu0 %168, %v134
    %v170 = vpop.permute.xlu0 %169
    %172 = vset.pattern.permute.xlu0 1
    %173 = vperm.xlu0 %172, %v135
    %v174 = vpop.permute.xlu0 %173
    %176 = vset.pattern.permute.xlu0 1
    %177 = vperm.xlu0 %176, %v136
    %v178 = vpop.permute.xlu0 %177
    %180 = vset.pattern.permute.xlu0 1
    %181 = vperm.xlu0 %180, %v137
    %v182 = vpop.permute.xlu0 %181
    %v184 = vlaneseq
    %v185 = vshrl.u32 %v184, 7
    %v186 = vsub.s32 1, %v185
    %v187 = vrot.slane %v138, %v186
    %v188 = vmul.f32 %v170, %v187
    %v189 = vmul.f32 %v174, %v187
    %v190 = vmul.f32 %v178, %v187
    %v191 = vmul.f32 %v182, %v187
    %v192 = vadd.f32 %v164, %v188
    %v193 = vadd.f32 %v165, %v189
    %v194 = vadd.f32 %v166, %v190
    %v195 = vadd.f32 %v167, %v191
    %196 = vset.pattern.permute.xlu0 2
    %197 = vperm.xlu0 %196, %v134
    %v198 = vpop.permute.xlu0 %197
    %200 = vset.pattern.permute.xlu0 2
    %201 = vperm.xlu0 %200, %v135
    %v202 = vpop.permute.xlu0 %201
    %204 = vset.pattern.permute.xlu0 2
    %205 = vperm.xlu0 %204, %v136
    %v206 = vpop.permute.xlu0 %205
    %208 = vset.pattern.permute.xlu0 2
    %209 = vperm.xlu0 %208, %v137
    %v210 = vpop.permute.xlu0 %209
    %v212 = vlaneseq
    %v213 = vshrl.u32 %v212, 7
    %v214 = vsub.s32 2, %v213
    %v215 = vrot.slane %v138, %v214
    %v216 = vmul.f32 %v198, %v215
    %v217 = vmul.f32 %v202, %v215
    %v218 = vmul.f32 %v206, %v215
    %v219 = vmul.f32 %v210, %v215
    %v220 = vadd.f32 %v192, %v216
    %v221 = vadd.f32 %v193, %v217
    %v222 = vadd.f32 %v194, %v218
    %v223 = vadd.f32 %v195, %v219
    %v225 = vlaneseq
    %v226 = vshrl.u32 %v225, 7
    %v227 = vsub.s32 0, %v226
    %v228 = vrot.slane %v139, %v227
    %v230 = vadd.f32 %v220, %v228
    %v231 = vadd.f32 %v221, %v228
    %v232 = vadd.f32 %v222, %v228
    %v233 = vadd.f32 %v223, %v228
    %v234 = vmax.f32 %v230, 0.0
    %v235 = vmax.f32 %v231, 0.0
    %v236 = vmax.f32 %v232, 0.0
    %v237 = vmax.f32 %v233, 0.0
    %v238 = vld [vmem:[%s3] sm:$0x1]
    %v240 = vlaneseq
    %v241 = vshrl.u32 %v240, 7
    %v242 = vsub.s32 0, %v241
    %v243 = vrot.slane %v238, %v242
    %v245 = vmul.f32 %v234, %v243
    %v246 = vmul.f32 %v235, %v243
    %v247 = vmul.f32 %v236, %v243
    %v248 = vmul.f32 %v237, %v243
    %v249 = vld [vmem:[%s4] sm:$0x1]
    %v251 = vlaneseq
    %v252 = vshrl.u32 %v251, 7
    %v253 = vsub.s32 0, %v252
    %v254 = vrot.slane %v249, %v253
    %v256 = vadd.f32 %v245, %v254
    %v257 = vadd.f32 %v246, %v254
    %v258 = vadd.f32 %v247, %v254
    %v259 = vadd.f32 %v248, %v254
    %v260 = vld [vmem:[#allocation7] sm:$0xff]
    %v261 = vld [vmem:[#allocation7 + $0x8] sm:$0xff]
    %v262 = vld [vmem:[#allocation7 + $0x10] sm:$0xff]
    %v263 = vld [vmem:[#allocation7 + $0x18] sm:$0xff]
    %v264 = vld [vmem:[#allocation7 + $0x20] sm:$0xff]
    %v265 = vld [vmem:[#allocation7 + $0x28] sm:$0xff]
    %v266 = vld [vmem:[#allocation7 + $0x30] sm:$0xff]
    %v267 = vld [vmem:[#allocation7 + $0x38] sm:$0xff]
    %v268 = vld [vmem:[#allocation8] sm:$0x1]
    %v270 = vlaneseq
    %v271 = vshrl.u32 %v270, 7
    %v272 = vsub.s32 0, %v271
    %v273 = vrot.slane %v268, %v272
    %vm275 = vcmask 523264
    %v277 = vsel %vm275, %v256, 0
    %v280 = vsel %vm275, %v257, 0
    %v283 = vsel %vm275, %v258, 0
    %v286 = vsel %vm275, %v259, 0
    %288 = vmatprep.subr.mxu0 0.0
    %289 = vmatpush1.msra.mxu0 %v260
    %290 = vmatprep.subr.mxu0 0.0
    %291 = vmatpush1.msra.mxu0 %v261
    %292 = vmatprep.subr.mxu0 0.0
    %293 = vmatpush1.msra.mxu0 %v262
    %294 = vmatprep.subr.mxu0 0.0
    %295 = vmatpush1.msra.mxu0 %v263
    %296 = vmatprep.subr.mxu0 0.0
    %297 = vmatpush1.msra.mxu0 %v264
    %298 = vmatprep.subr.mxu0 0.0
    %299 = vmatpush1.msra.mxu0 %v265
    %300 = vmatprep.subr.mxu0 0.0
    %301 = vmatpush1.msra.mxu0 %v266
    %302 = vmatprep.subr.mxu0 0.0
    %303 = vmatpush1.msra.mxu0 %v267
    %304 = vmatprep.subr.mxu0 0.0
    %305 = vmatpush1.msra.mxu0 0.0
    %306 = vmatprep.subr.mxu0 0.0
    %307 = vmatpush1.msra.mxu0 0.0
    %308 = vmatprep.subr.mxu0 0.0
    %309 = vmatpush1.msra.mxu0 0.0
    %310 = vmatprep.subr.mxu0 0.0
    %311 = vmatpush1.msra.mxu0 0.0
    %312 = vmatprep.subr.mxu0 0.0
    %313 = vmatpush1.msra.mxu0 0.0
    %314 = vmatprep.subr.mxu0 0.0
    %315 = vmatpush1.msra.mxu0 0.0
    %316 = vmatprep.subr.mxu0 0.0
    %317 = vmatpush1.msra.mxu0 0.0
    %318 = vmatprep.subr.mxu0 0.0
    %319 = vmatpush1.msra.mxu0 0.0
    %320 = vmatprep.subr.mxu0 0.0
    %321 = vmatpush1.msra.mxu0 0.0
    %322 = vmatprep.subr.mxu0 0.0
    %323 = vmatpush1.msra.mxu0 0.0
    %324 = vmatprep.subr.mxu0 0.0
    %325 = vmatpush1.msra.mxu0 0.0
    %326 = vmatprep.subr.mxu0 0.0
    %327 = vmatpush1.msra.mxu0 0.0
    %328 = vmatprep.subr.mxu0 0.0
    %329 = vmatpush1.msra.mxu0 0.0
    %330 = vmatprep.subr.mxu0 0.0
    %331 = vmatpush1.msra.mxu0 0.0
    %332 = vmatprep.subr.mxu0 0.0
    %333 = vmatpush1.msra.mxu0 0.0
    %334 = vmatprep.subr.mxu0 0.0
    %335 = vmatpush1.msra.mxu0 0.0
    %336 = vmatprep.subr.mxu0 0.0
    %337 = vmatpush1.msra.mxu0 0.0
    %338 = vmatprep.subr.mxu0 0.0
    %339 = vmatpush1.msra.mxu0 0.0
    %340 = vmatprep.subr.mxu0 0.0
    %341 = vmatpush1.msra.mxu0 0.0
    %342 = vmatprep.subr.mxu0 0.0
    %343 = vmatpush1.msra.mxu0 0.0
    %344 = vmatprep.subr.mxu0 0.0
    %345 = vmatpush1.msra.mxu0 0.0
    %346 = vmatprep.subr.mxu0 0.0
    %347 = vmatpush1.msra.mxu0 0.0
    %348 = vmatprep.subr.mxu0 0.0
    %349 = vmatpush1.msra.mxu0 0.0
    %350 = vmatprep.subr.mxu0 0.0
    %351 = vmatpush1.msra.mxu0 0.0
    %352 = vmatprep.mubr.f32.mxu0 0.0
    %353 = vmatmul.mubr.f32.gmra.mrb[0].mxu0 %v277
    %v354 = vpop.f32.mrb[0].mxu0
    %v355 = vadd.f32 %v273, %v354
    %v356 = vpop.f32.mrb[0].mxu0
    %357 = vmatprep.mubr.f32.mxu0 0.0
    %358 = vmatmul.mubr.f32.gmra.mrb[0].mxu0 %v280
    %v359 = vpop.f32.mrb[0].mxu0
    %v360 = vadd.f32 %v273, %v359
    %v361 = vpop.f32.mrb[0].mxu0
    %362 = vmatprep.mubr.f32.mxu0 0.0
    %363 = vmatmul.mubr.f32.gmra.mrb[0].mxu0 %v283
    %v364 = vpop.f32.mrb[0].mxu0
    %v365 = vadd.f32 %v273, %v364
    %v366 = vpop.f32.mrb[0].mxu0
    %367 = vmatprep.mubr.f32.mxu0 0.0
    %368 = vmatmul.mubr.f32.gmra.mrb[0].mxu0 %v286
    %v369 = vpop.f32.mrb[0].mxu0
    %v370 = vadd.f32 %v273, %v369
    %v371 = vpop.f32.mrb[0].mxu0
    %372 = vdwg.mxu0
    %v373 = vmax.f32 %v355, 0.0
    %v374 = vmax.f32 %v360, 0.0
    %v375 = vmax.f32 %v365, 0.0
    %v376 = vmax.f32 %v370, 0.0
    %v377 = vld [vmem:[%s7] sm:$0x1]
    %v379 = vlaneseq
    %v380 = vshrl.u32 %v379, 7
    %v381 = vsub.s32 0, %v380
    %v382 = vrot.slane %v377, %v381
    %v384 = vmul.f32 %v373, %v382
    %v385 = vmul.f32 %v374, %v382
    %v386 = vmul.f32 %v375, %v382
    %v387 = vmul.f32 %v376, %v382
    %v388 = vld [vmem:[%s8] sm:$0x1]
    %v390 = vlaneseq
    %v391 = vshrl.u32 %v390, 7
    %v392 = vsub.s32 0, %v391
    %v393 = vrot.slane %v388, %v392
    %v395 = vadd.f32 %v384, %v393
    %v396 = vadd.f32 %v385, %v393
    %v397 = vadd.f32 %v386, %v393
    %v398 = vadd.f32 %v387, %v393
    %v399 = vld [vmem:[#allocation10] sm:$0xff]
    %v400 = vld [vmem:[#allocation10 + $0x8] sm:$0xff]
    %v401 = vld [vmem:[#allocation10 + $0x10] sm:$0xff]
    %v402 = vld [vmem:[#allocation10 + $0x18] sm:$0xff]
    %v403 = vld [vmem:[#allocation10 + $0x20] sm:$0xff]
    %v404 = vld [vmem:[#allocation10 + $0x28] sm:$0xff]
    %v405 = vld [vmem:[#allocation10 + $0x30] sm:$0xff]
    %v406 = vld [vmem:[#allocation10 + $0x38] sm:$0xff]
    %v407 = vld [vmem:[#allocation10 + $0x40] sm:$0xff]
    %v408 = vld [vmem:[#allocation10 + $0x48] sm:$0xff]
    %v409 = vld [vmem:[#allocation10 + $0x50] sm:$0xff]
    %v410 = vld [vmem:[#allocation10 + $0x58] sm:$0xff]
    %v411 = vld [vmem:[#allocation10 + $0x60] sm:$0xff]
    %v412 = vld [vmem:[#allocation10 + $0x68] sm:$0xff]
    %v413 = vld [vmem:[#allocation10 + $0x70] sm:$0xff]
    %v414 = vld [vmem:[#allocation10 + $0x78] sm:$0xff]
    %v415 = vld [vmem:[#allocation10 + $0x80] sm:$0xff]
    %v416 = vld [vmem:[#allocation10 + $0x88] sm:$0xff]
    %v417 = vld [vmem:[#allocation10 + $0x90] sm:$0xff]
    %v418 = vld [vmem:[#allocation10 + $0x98] sm:$0xff]
    %v419 = vld [vmem:[#allocation10 + $0xa0] sm:$0xff]
    %v420 = vld [vmem:[#allocation10 + $0xa8] sm:$0xff]
    %v421 = vld [vmem:[#allocation10 + $0xb0] sm:$0xff]
    %v422 = vld [vmem:[#allocation10 + $0xb8] sm:$0xff]
    %v423 = vld [vmem:[#allocation10 + $0xc0] sm:$0xff]
    %v424 = vld [vmem:[#allocation10 + $0xc8] sm:$0xff]
    %v425 = vld [vmem:[#allocation10 + $0xd0] sm:$0xff]
    %v426 = vld [vmem:[#allocation10 + $0xd8] sm:$0xff]
    %v427 = vld [vmem:[#allocation10 + $0xe0] sm:$0xff]
    %v428 = vld [vmem:[#allocation10 + $0xe8] sm:$0xff]
    %v429 = vld [vmem:[#allocation10 + $0xf0] sm:$0xff]
    %v430 = vld [vmem:[#allocation10 + $0xf8] sm:$0xff]
    %v431 = vld [vmem:[#allocation10 + $0x100] sm:$0xff]
    %v432 = vld [vmem:[#allocation10 + $0x108] sm:$0xff]
    %v433 = vld [vmem:[#allocation10 + $0x110] sm:$0xff]
    %v434 = vld [vmem:[#allocation10 + $0x118] sm:$0xff]
    %v435 = vld [vmem:[#allocation10 + $0x120] sm:$0xff]
    %v436 = vld [vmem:[#allocation10 + $0x128] sm:$0xff]
    %v437 = vld [vmem:[#allocation10 + $0x130] sm:$0xff]
    %v438 = vld [vmem:[#allocation10 + $0x138] sm:$0xff]
    %v439 = vld [vmem:[#allocation10 + $0x140] sm:$0xff]
    %v440 = vld [vmem:[#allocation10 + $0x148] sm:$0xff]
    %v441 = vld [vmem:[#allocation10 + $0x150] sm:$0xff]
    %v442 = vld [vmem:[#allocation10 + $0x158] sm:$0xff]
    %v443 = vld [vmem:[#allocation10 + $0x160] sm:$0xff]
    %v444 = vld [vmem:[#allocation10 + $0x168] sm:$0xff]
    %v445 = vld [vmem:[#allocation10 + $0x170] sm:$0xff]
    %v446 = vld [vmem:[#allocation10 + $0x178] sm:$0xff]
    %v447 = vld [vmem:[#allocation10 + $0x180] sm:$0xff]
    %v448 = vld [vmem:[#allocation10 + $0x188] sm:$0xff]
    %v449 = vld [vmem:[#allocation10 + $0x190] sm:$0xff]
    %v450 = vld [vmem:[#allocation10 + $0x198] sm:$0xff]
    %v451 = vld [vmem:[#allocation10 + $0x1a0] sm:$0xff]
    %v452 = vld [vmem:[#allocation10 + $0x1a8] sm:$0xff]
    %v453 = vld [vmem:[#allocation10 + $0x1b0] sm:$0xff]
    %v454 = vld [vmem:[#allocation10 + $0x1b8] sm:$0xff]
    %v455 = vld [vmem:[#allocation10 + $0x1c0] sm:$0xff]
    %v456 = vld [vmem:[#allocation10 + $0x1c8] sm:$0xff]
    %v457 = vld [vmem:[#allocation10 + $0x1d0] sm:$0xff]
    %v458 = vld [vmem:[#allocation10 + $0x1d8] sm:$0xff]
    %v459 = vld [vmem:[#allocation10 + $0x1e0] sm:$0xff]
    %v460 = vld [vmem:[#allocation10 + $0x1e8] sm:$0xff]
    %v461 = vld [vmem:[#allocation10 + $0x1f0] sm:$0xff]
    %v462 = vld [vmem:[#allocation10 + $0x1f8] sm:$0xff]
    %v463 = vld [vmem:[#allocation10 + $0x200] sm:$0xff]
    %v464 = vld [vmem:[#allocation10 + $0x208] sm:$0xff]
    %v465 = vld [vmem:[#allocation10 + $0x210] sm:$0xff]
    %v466 = vld [vmem:[#allocation10 + $0x218] sm:$0xff]
    %v467 = vld [vmem:[#allocation10 + $0x220] sm:$0xff]
    %v468 = vld [vmem:[#allocation10 + $0x228] sm:$0xff]
    %v469 = vld [vmem:[#allocation10 + $0x230] sm:$0xff]
    %v470 = vld [vmem:[#allocation10 + $0x238] sm:$0xff]
    %v471 = vld [vmem:[#allocation10 + $0x240] sm:$0xff]
    %v472 = vld [vmem:[#allocation10 + $0x248] sm:$0xff]
    %v473 = vld [vmem:[#allocation10 + $0x250] sm:$0xff]
    %v474 = vld [vmem:[#allocation10 + $0x258] sm:$0xff]
    %v475 = vld [vmem:[#allocation10 + $0x260] sm:$0xff]
    %v476 = vld [vmem:[#allocation10 + $0x268] sm:$0xff]
    %v477 = vld [vmem:[#allocation10 + $0x270] sm:$0xff]
    %v478 = vld [vmem:[#allocation10 + $0x278] sm:$0xff]
    %v479 = vld [vmem:[#allocation10 + $0x280] sm:$0xff]
    %v480 = vld [vmem:[#allocation10 + $0x288] sm:$0xff]
    %v481 = vld [vmem:[#allocation10 + $0x290] sm:$0xff]
    %v482 = vld [vmem:[#allocation10 + $0x298] sm:$0xff]
    %v483 = vld [vmem:[#allocation10 + $0x2a0] sm:$0xff]
    %v484 = vld [vmem:[#allocation10 + $0x2a8] sm:$0xff]
    %v485 = vld [vmem:[#allocation10 + $0x2b0] sm:$0xff]
    %v486 = vld [vmem:[#allocation10 + $0x2b8] sm:$0xff]
    %v487 = vld [vmem:[#allocation10 + $0x2c0] sm:$0xff]
    %v488 = vld [vmem:[#allocation10 + $0x2c8] sm:$0xff]
    %v489 = vld [vmem:[#allocation10 + $0x2d0] sm:$0xff]
    %v490 = vld [vmem:[#allocation10 + $0x2d8] sm:$0xff]
    %v491 = vld [vmem:[#allocation10 + $0x2e0] sm:$0xff]
    %v492 = vld [vmem:[#allocation10 + $0x2e8] sm:$0xff]
    %v493 = vld [vmem:[#allocation10 + $0x2f0] sm:$0xff]
    %v494 = vld [vmem:[#allocation10 + $0x2f8] sm:$0xff]
    %v495 = vld [vmem:[#allocation10 + $0x300] sm:$0xff]
    %v496 = vld [vmem:[#allocation10 + $0x308] sm:$0xff]
    %v497 = vld [vmem:[#allocation10 + $0x310] sm:$0xff]
    %v498 = vld [vmem:[#allocation10 + $0x318] sm:$0xff]
    %v499 = vld [vmem:[#allocation10 + $0x320] sm:$0xff]
    %v500 = vld [vmem:[#allocation10 + $0x328] sm:$0xff]
    %v501 = vld [vmem:[#allocation10 + $0x330] sm:$0xff]
    %v502 = vld [vmem:[#allocation10 + $0x338] sm:$0xff]
    %v503 = vld [vmem:[#allocation10 + $0x340] sm:$0xff]
    %v504 = vld [vmem:[#allocation10 + $0x348] sm:$0xff]
    %v505 = vld [vmem:[#allocation10 + $0x350] sm:$0xff]
    %v506 = vld [vmem:[#allocation10 + $0x358] sm:$0xff]
    %v507 = vld [vmem:[#allocation10 + $0x360] sm:$0xff]
    %v508 = vld [vmem:[#allocation10 + $0x368] sm:$0xff]
    %v509 = vld [vmem:[#allocation10 + $0x370] sm:$0xff]
    %v510 = vld [vmem:[#allocation10 + $0x378] sm:$0xff]
    %v511 = vld [vmem:[#allocation10 + $0x380] sm:$0xff]
    %v512 = vld [vmem:[#allocation10 + $0x388] sm:$0xff]
    %v513 = vld [vmem:[#allocation10 + $0x390] sm:$0xff]
    %v514 = vld [vmem:[#allocation10 + $0x398] sm:$0xff]
    %v515 = vld [vmem:[#allocation10 + $0x3a0] sm:$0xff]
    %v516 = vld [vmem:[#allocation10 + $0x3a8] sm:$0xff]
    %v517 = vld [vmem:[#allocation10 + $0x3b0] sm:$0xff]
    %v518 = vld [vmem:[#allocation10 + $0x3b8] sm:$0xff]
    %v519 = vld [vmem:[#allocation10 + $0x3c0] sm:$0xff]
    %v520 = vld [vmem:[#allocation10 + $0x3c8] sm:$0xff]
    %v521 = vld [vmem:[#allocation10 + $0x3d0] sm:$0xff]
    %v522 = vld [vmem:[#allocation10 + $0x3d8] sm:$0xff]
    %v523 = vld [vmem:[#allocation10 + $0x3e0] sm:$0xff]
    %v524 = vld [vmem:[#allocation10 + $0x3e8] sm:$0xff]
    %v525 = vld [vmem:[#allocation10 + $0x3f0] sm:$0xff]
    %v526 = vld [vmem:[#allocation10 + $0x3f8] sm:$0xff]
    %v527 = vld [vmem:[#allocation11] sm:$0xff]
    %v529 = vlaneseq
    %v530 = vshrl.u32 %v529, 7
    %v531 = vsub.s32 0, %v530
    %v532 = vrot.slane %v527, %v531
    %v533 = vlaneseq
    %v534 = vshrl.u32 %v533, 7
    %v535 = vsub.s32 1, %v534
    %v536 = vrot.slane %v527, %v535
    %v537 = vlaneseq
    %v538 = vshrl.u32 %v537, 7
    %v539 = vsub.s32 2, %v538
    %v540 = vrot.slane %v527, %v539
    %v541 = vlaneseq
    %v542 = vshrl.u32 %v541, 7
    %v543 = vsub.s32 3, %v542
    %v544 = vrot.slane %v527, %v543
    %v545 = vlaneseq
    %v546 = vshrl.u32 %v545, 7
    %v547 = vsub.s32 4, %v546
    %v548 = vrot.slane %v527, %v547
    %v549 = vlaneseq
    %v550 = vshrl.u32 %v549, 7
    %v551 = vsub.s32 5, %v550
    %v552 = vrot.slane %v527, %v551
    %v553 = vlaneseq
    %v554 = vshrl.u32 %v553, 7
    %v555 = vsub.s32 6, %v554
    %v556 = vrot.slane %v527, %v555
    %v557 = vlaneseq
    %v558 = vshrl.u32 %v557, 7
    %v559 = vsub.s32 7, %v558
    %v560 = vrot.slane %v527, %v559
    %569 = vmatprep.subr.mxu0 %v400
    %570 = vmatpush1.msra.mxu0 %v399
    %571 = vmatprep.subr.mxu0 %v408
    %572 = vmatpush1.msra.mxu0 %v407
    %573 = vmatprep.subr.mxu0 %v416
    %574 = vmatpush1.msra.mxu0 %v415
    %575 = vmatprep.subr.mxu0 %v424
    %576 = vmatpush1.msra.mxu0 %v423
    %577 = vmatprep.subr.mxu0 %v432
    %578 = vmatpush1.msra.mxu0 %v431
    %579 = vmatprep.subr.mxu0 %v440
    %580 = vmatpush1.msra.mxu0 %v439
    %581 = vmatprep.subr.mxu0 %v448
    %582 = vmatpush1.msra.mxu0 %v447
    %583 = vmatprep.subr.mxu0 %v456
    %584 = vmatpush1.msra.mxu0 %v455
    %585 = vmatprep.subr.mxu0 %v464
    %586 = vmatpush1.msra.mxu0 %v463
    %587 = vmatprep.subr.mxu0 %v472
    %588 = vmatpush1.msra.mxu0 %v471
    %589 = vmatprep.subr.mxu0 %v480
    %590 = vmatpush1.msra.mxu0 %v479
    %591 = vmatprep.subr.mxu0 %v488
    %592 = vmatpush1.msra.mxu0 %v487
    %593 = vmatprep.subr.mxu0 %v496
    %594 = vmatpush1.msra.mxu0 %v495
    %595 = vmatprep.subr.mxu0 %v504
    %596 = vmatpush1.msra.mxu0 %v503
    %597 = vmatprep.subr.mxu0 %v512
    %598 = vmatpush1.msra.mxu0 %v511
    %599 = vmatprep.subr.mxu0 %v520
    %600 = vmatpush1.msra.mxu0 %v519
    %601 = vmatprep.subr.mxu0 0.0
    %602 = vmatpush1.msra.mxu0 0.0
    %603 = vmatprep.subr.mxu0 0.0
    %604 = vmatpush1.msra.mxu0 0.0
    %605 = vmatprep.subr.mxu0 0.0
    %606 = vmatpush1.msra.mxu0 0.0
    %607 = vmatprep.subr.mxu0 0.0
    %608 = vmatpush1.msra.mxu0 0.0
    %609 = vmatprep.subr.mxu0 0.0
    %610 = vmatpush1.msra.mxu0 0.0
    %611 = vmatprep.subr.mxu0 0.0
    %612 = vmatpush1.msra.mxu0 0.0
    %613 = vmatprep.subr.mxu0 0.0
    %614 = vmatpush1.msra.mxu0 0.0
    %615 = vmatprep.subr.mxu0 0.0
    %616 = vmatpush1.msra.mxu0 0.0
    %617 = vmatprep.subr.mxu0 0.0
    %618 = vmatpush1.msra.mxu0 0.0
    %619 = vmatprep.subr.mxu0 0.0
    %620 = vmatpush1.msra.mxu0 0.0
    %621 = vmatprep.subr.mxu0 0.0
    %622 = vmatpush1.msra.mxu0 0.0
    %623 = vmatprep.subr.mxu0 0.0
    %624 = vmatpush1.msra.mxu0 0.0
    %625 = vmatprep.subr.mxu0 0.0
    %626 = vmatpush1.msra.mxu0 0.0
    %627 = vmatprep.subr.mxu0 0.0
    %628 = vmatpush1.msra.mxu0 0.0
    %629 = vmatprep.subr.mxu0 0.0
    %630 = vmatpush1.msra.mxu0 0.0
    %631 = vmatprep.subr.mxu0 0.0
    %632 = vmatpush1.msra.mxu0 0.0
    %633 = vmatprep.mubr.f32.mxu0 0.0
    %634 = vmatmul.mubr.f32.gmra.mrb[0].mxu0 %v395
    %v635 = vpop.f32.mrb[0].mxu0
    %v636 = vadd.f32 %v532, %v635
    %v637 = vpop.f32.mrb[0].mxu0
    %v638 = vadd.f32 %v536, %v637
    %639 = vmatprep.mubr.f32.mxu0 0.0
    %640 = vmatmul.mubr.f32.gmra.mrb[0].mxu0 %v396
    %v641 = vpop.f32.mrb[0].mxu0
    %v642 = vadd.f32 %v532, %v641
    %v643 = vpop.f32.mrb[0].mxu0
    %v644 = vadd.f32 %v536, %v643
    %645 = vmatprep.mubr.f32.mxu0 0.0
    %646 = vmatmul.mubr.f32.gmra.mrb[0].mxu0 %v397
    %v647 = vpop.f32.mrb[0].mxu0
    %v648 = vadd.f32 %v532, %v647
    %v649 = vpop.f32.mrb[0].mxu0
    %v650 = vadd.f32 %v536, %v649
    %651 = vmatprep.mubr.f32.mxu0 0.0
    %652 = vmatmul.mubr.f32.gmra.mrb[0].mxu0 %v398
    %v653 = vpop.f32.mrb[0].mxu0
    %v654 = vadd.f32 %v532, %v653
    %v655 = vpop.f32.mrb[0].mxu0
    %v656 = vadd.f32 %v536, %v655
    %657 = vdwg.mxu0
    %658 = vmatprep.subr.mxu0 %v402
    %659 = vmatpush1.msra.mxu0 %v401
    %660 = vmatprep.subr.mxu0 %v410
    %661 = vmatpush1.msra.mxu0 %v409
    %662 = vmatprep.subr.mxu0 %v418
    %663 = vmatpush1.msra.mxu0 %v417
    %664 = vmatprep.subr.mxu0 %v426
    %665 = vmatpush1.msra.mxu0 %v425
    %666 = vmatprep.subr.mxu0 %v434
    %667 = vmatpush1.msra.mxu0 %v433
    %668 = vmatprep.subr.mxu0 %v442
    %669 = vmatpush1.msra.mxu0 %v441
    %670 = vmatprep.subr.mxu0 %v450
    %671 = vmatpush1.msra.mxu0 %v449
    %672 = vmatprep.subr.mxu0 %v458
    %673 = vmatpush1.msra.mxu0 %v457
    %674 = vmatprep.subr.mxu0 %v466
    %675 = vmatpush1.msra.mxu0 %v465
    %676 = vmatprep.subr.mxu0 %v474
    %677 = vmatpush1.msra.mxu0 %v473
    %678 = vmatprep.subr.mxu0 %v482
    %679 = vmatpush1.msra.mxu0 %v481
    %680 = vmatprep.subr.mxu0 %v490
    %681 = vmatpush1.msra.mxu0 %v489
    %682 = vmatprep.subr.mxu0 %v498
    %683 = vmatpush1.msra.mxu0 %v497
    %684 = vmatprep.subr.mxu0 %v506
    %685 = vmatpush1.msra.mxu0 %v505
    %686 = vmatprep.subr.mxu0 %v514
    %687 = vmatpush1.msra.mxu0 %v513
    %688 = vmatprep.subr.mxu0 %v522
    %689 = vmatpush1.msra.mxu0 %v521
    %690 = vmatprep.subr.mxu0 0.0
    %691 = vmatpush1.msra.mxu0 0.0
    %692 = vmatprep.subr.mxu0 0.0
    %693 = vmatpush1.msra.mxu0 0.0
    %694 = vmatprep.subr.mxu0 0.0
    %695 = vmatpush1.msra.mxu0 0.0
    %696 = vmatprep.subr.mxu0 0.0
    %697 = vmatpush1.msra.mxu0 0.0
    %698 = vmatprep.subr.mxu0 0.0
    %699 = vmatpush1.msra.mxu0 0.0
    %700 = vmatprep.subr.mxu0 0.0
    %701 = vmatpush1.msra.mxu0 0.0
    %702 = vmatprep.subr.mxu0 0.0
    %703 = vmatpush1.msra.mxu0 0.0
    %704 = vmatprep.subr.mxu0 0.0
    %705 = vmatpush1.msra.mxu0 0.0
    %706 = vmatprep.subr.mxu0 0.0
    %707 = vmatpush1.msra.mxu0 0.0
    %708 = vmatprep.subr.mxu0 0.0
    %709 = vmatpush1.msra.mxu0 0.0
    %710 = vmatprep.subr.mxu0 0.0
    %711 = vmatpush1.msra.mxu0 0.0
    %712 = vmatprep.subr.mxu0 0.0
    %713 = vmatpush1.msra.mxu0 0.0
    %714 = vmatprep.subr.mxu0 0.0
    %715 = vmatpush1.msra.mxu0 0.0
    %716 = vmatprep.subr.mxu0 0.0
    %717 = vmatpush1.msra.mxu0 0.0
    %718 = vmatprep.subr.mxu0 0.0
    %719 = vmatpush1.msra.mxu0 0.0
    %720 = vmatprep.subr.mxu0 0.0
    %721 = vmatpush1.msra.mxu0 0.0
    %722 = vmatprep.mubr.f32.mxu0 0.0
    %723 = vmatmul.mubr.f32.gmra.mrb[0].mxu0 %v395
    %v724 = vpop.f32.mrb[0].mxu0
    %v725 = vadd.f32 %v540, %v724
    %v726 = vpop.f32.mrb[0].mxu0
    %v727 = vadd.f32 %v544, %v726
    %728 = vmatprep.mubr.f32.mxu0 0.0
    %729 = vmatmul.mubr.f32.gmra.mrb[0].mxu0 %v396
    %v730 = vpop.f32.mrb[0].mxu0
    %v731 = vadd.f32 %v540, %v730
    %v732 = vpop.f32.mrb[0].mxu0
    %v733 = vadd.f32 %v544, %v732
    %734 = vmatprep.mubr.f32.mxu0 0.0
    %735 = vmatmul.mubr.f32.gmra.mrb[0].mxu0 %v397
    %v736 = vpop.f32.mrb[0].mxu0
    %v737 = vadd.f32 %v540, %v736
    %v738 = vpop.f32.mrb[0].mxu0
    %v739 = vadd.f32 %v544, %v738
    %740 = vmatprep.mubr.f32.mxu0 0.0
    %741 = vmatmul.mubr.f32.gmra.mrb[0].mxu0 %v398
    %v742 = vpop.f32.mrb[0].mxu0
    %v743 = vadd.f32 %v540, %v742
    %v744 = vpop.f32.mrb[0].mxu0
    %v745 = vadd.f32 %v544, %v744
    %746 = vdwg.mxu0
    %747 = vmatprep.subr.mxu0 %v404
    %748 = vmatpush1.msra.mxu0 %v403
    %749 = vmatprep.subr.mxu0 %v412
    %750 = vmatpush1.msra.mxu0 %v411
    %751 = vmatprep.subr.mxu0 %v420
    %752 = vmatpush1.msra.mxu0 %v419
    %753 = vmatprep.subr.mxu0 %v428
    %754 = vmatpush1.msra.mxu0 %v427
    %755 = vmatprep.subr.mxu0 %v436
    %756 = vmatpush1.msra.mxu0 %v435
    %757 = vmatprep.subr.mxu0 %v444
    %758 = vmatpush1.msra.mxu0 %v443
    %759 = vmatprep.subr.mxu0 %v452
    %760 = vmatpush1.msra.mxu0 %v451
    %761 = vmatprep.subr.mxu0 %v460
    %762 = vmatpush1.msra.mxu0 %v459
    %763 = vmatprep.subr.mxu0 %v468
    %764 = vmatpush1.msra.mxu0 %v467
    %765 = vmatprep.subr.mxu0 %v476
    %766 = vmatpush1.msra.mxu0 %v475
    %767 = vmatprep.subr.mxu0 %v484
    %768 = vmatpush1.msra.mxu0 %v483
    %769 = vmatprep.subr.mxu0 %v492
    %770 = vmatpush1.msra.mxu0 %v491
    %771 = vmatprep.subr.mxu0 %v500
    %772 = vmatpush1.msra.mxu0 %v499
    %773 = vmatprep.subr.mxu0 %v508
    %774 = vmatpush1.msra.mxu0 %v507
    %775 = vmatprep.subr.mxu0 %v516
    %776 = vmatpush1.msra.mxu0 %v515
    %777 = vmatprep.subr.mxu0 %v524
    %778 = vmatpush1.msra.mxu0 %v523
    %779 = vmatprep.subr.mxu0 0.0
    %780 = vmatpush1.msra.mxu0 0.0
    %781 = vmatprep.subr.mxu0 0.0
    %782 = vmatpush1.msra.mxu0 0.0
    %783 = vmatprep.subr.mxu0 0.0
    %784 = vmatpush1.msra.mxu0 0.0
    %785 = vmatprep.subr.mxu0 0.0
    %786 = vmatpush1.msra.mxu0 0.0
    %787 = vmatprep.subr.mxu0 0.0
    %788 = vmatpush1.msra.mxu0 0.0
    %789 = vmatprep.subr.mxu0 0.0
    %790 = vmatpush1.msra.mxu0 0.0
    %791 = vmatprep.subr.mxu0 0.0
    %792 = vmatpush1.msra.mxu0 0.0
    %793 = vmatprep.subr.mxu0 0.0
    %794 = vmatpush1.msra.mxu0 0.0
    %795 = vmatprep.subr.mxu0 0.0
    %796 = vmatpush1.msra.mxu0 0.0
    %797 = vmatprep.subr.mxu0 0.0
    %798 = vmatpush1.msra.mxu0 0.0
    %799 = vmatprep.subr.mxu0 0.0
    %800 = vmatpush1.msra.mxu0 0.0
    %801 = vmatprep.subr.mxu0 0.0
    %802 = vmatpush1.msra.mxu0 0.0
    %803 = vmatprep.subr.mxu0 0.0
    %804 = vmatpush1.msra.mxu0 0.0
    %805 = vmatprep.subr.mxu0 0.0
    %806 = vmatpush1.msra.mxu0 0.0
    %807 = vmatprep.subr.mxu0 0.0
    %808 = vmatpush1.msra.mxu0 0.0
    %809 = vmatprep.subr.mxu0 0.0
    %810 = vmatpush1.msra.mxu0 0.0
    %811 = vmatprep.mubr.f32.mxu0 0.0
    %812 = vmatmul.mubr.f32.gmra.mrb[0].mxu0 %v395
    %v813 = vpop.f32.mrb[0].mxu0
    %v814 = vadd.f32 %v548, %v813
    %v815 = vpop.f32.mrb[0].mxu0
    %v816 = vadd.f32 %v552, %v815
    %817 = vmatprep.mubr.f32.mxu0 0.0
    %818 = vmatmul.mubr.f32.gmra.mrb[0].mxu0 %v396
    %v819 = vpop.f32.mrb[0].mxu0
    %v820 = vadd.f32 %v548, %v819
    %v821 = vpop.f32.mrb[0].mxu0
    %v822 = vadd.f32 %v552, %v821
    %823 = vmatprep.mubr.f32.mxu0 0.0
    %824 = vmatmul.mubr.f32.gmra.mrb[0].mxu0 %v397
    %v825 = vpop.f32.mrb[0].mxu0
    %v826 = vadd.f32 %v548, %v825
    %v827 = vpop.f32.mrb[0].mxu0
    %v828 = vadd.f32 %v552, %v827
    %829 = vmatprep.mubr.f32.mxu0 0.0
    %830 = vmatmul.mubr.f32.gmra.mrb[0].mxu0 %v398
    %v831 = vpop.f32.mrb[0].mxu0
    %v832 = vadd.f32 %v548, %v831
    %v833 = vpop.f32.mrb[0].mxu0
    %v834 = vadd.f32 %v552, %v833
    %835 = vdwg.mxu0
    %836 = vmatprep.subr.mxu0 %v406
    %837 = vmatpush1.msra.mxu0 %v405
    %838 = vmatprep.subr.mxu0 %v414
    %839 = vmatpush1.msra.mxu0 %v413
    %840 = vmatprep.subr.mxu0 %v422
    %841 = vmatpush1.msra.mxu0 %v421
    %842 = vmatprep.subr.mxu0 %v430
    %843 = vmatpush1.msra.mxu0 %v429
    %844 = vmatprep.subr.mxu0 %v438
    %845 = vmatpush1.msra.mxu0 %v437
    %846 = vmatprep.subr.mxu0 %v446
    %847 = vmatpush1.msra.mxu0 %v445
    %848 = vmatprep.subr.mxu0 %v454
    %849 = vmatpush1.msra.mxu0 %v453
    %850 = vmatprep.subr.mxu0 %v462
    %851 = vmatpush1.msra.mxu0 %v461
    %852 = vmatprep.subr.mxu0 %v470
    %853 = vmatpush1.msra.mxu0 %v469
    %854 = vmatprep.subr.mxu0 %v478
    %855 = vmatpush1.msra.mxu0 %v477
    %856 = vmatprep.subr.mxu0 %v486
    %857 = vmatpush1.msra.mxu0 %v485
    %858 = vmatprep.subr.mxu0 %v494
    %859 = vmatpush1.msra.mxu0 %v493
    %860 = vmatprep.subr.mxu0 %v502
    %861 = vmatpush1.msra.mxu0 %v501
    %862 = vmatprep.subr.mxu0 %v510
    %863 = vmatpush1.msra.mxu0 %v509
    %864 = vmatprep.subr.mxu0 %v518
    %865 = vmatpush1.msra.mxu0 %v517
    %866 = vmatprep.subr.mxu0 %v526
    %867 = vmatpush1.msra.mxu0 %v525
    %868 = vmatprep.subr.mxu0 0.0
    %869 = vmatpush1.msra.mxu0 0.0
    %870 = vmatprep.subr.mxu0 0.0
    %871 = vmatpush1.msra.mxu0 0.0
    %872 = vmatprep.subr.mxu0 0.0
    %873 = vmatpush1.msra.mxu0 0.0
    %874 = vmatprep.subr.mxu0 0.0
    %875 = vmatpush1.msra.mxu0 0.0
    %876 = vmatprep.subr.mxu0 0.0
    %877 = vmatpush1.msra.mxu0 0.0
    %878 = vmatprep.subr.mxu0 0.0
    %879 = vmatpush1.msra.mxu0 0.0
    %880 = vmatprep.subr.mxu0 0.0
    %881 = vmatpush1.msra.mxu0 0.0
    %882 = vmatprep.subr.mxu0 0.0
    %883 = vmatpush1.msra.mxu0 0.0
    %884 = vmatprep.subr.mxu0 0.0
    %885 = vmatpush1.msra.mxu0 0.0
    %886 = vmatprep.subr.mxu0 0.0
    %887 = vmatpush1.msra.mxu0 0.0
    %888 = vmatprep.subr.mxu0 0.0
    %889 = vmatpush1.msra.mxu0 0.0
    %890 = vmatprep.subr.mxu0 0.0
    %891 = vmatpush1.msra.mxu0 0.0
    %892 = vmatprep.subr.mxu0 0.0
    %893 = vmatpush1.msra.mxu0 0.0
    %894 = vmatprep.subr.mxu0 0.0
    %895 = vmatpush1.msra.mxu0 0.0
    %896 = vmatprep.subr.mxu0 0.0
    %897 = vmatpush1.msra.mxu0 0.0
    %898 = vmatprep.subr.mxu0 0.0
    %899 = vmatpush1.msra.mxu0 0.0
    %900 = vmatprep.mubr.f32.mxu0 0.0
    %901 = vmatmul.mubr.f32.gmra.mrb[0].mxu0 %v395
    %v902 = vpop.f32.mrb[0].mxu0
    %v903 = vadd.f32 %v556, %v902
    %v904 = vpop.f32.mrb[0].mxu0
    %v905 = vadd.f32 %v560, %v904
    %906 = vmatprep.mubr.f32.mxu0 0.0
    %907 = vmatmul.mubr.f32.gmra.mrb[0].mxu0 %v396
    %v908 = vpop.f32.mrb[0].mxu0
    %v909 = vadd.f32 %v556, %v908
    %v910 = vpop.f32.mrb[0].mxu0
    %v911 = vadd.f32 %v560, %v910
    %912 = vmatprep.mubr.f32.mxu0 0.0
    %913 = vmatmul.mubr.f32.gmra.mrb[0].mxu0 %v397
    %v914 = vpop.f32.mrb[0].mxu0
    %v915 = vadd.f32 %v556, %v914
    %v916 = vpop.f32.mrb[0].mxu0
    %v917 = vadd.f32 %v560, %v916
    %918 = vmatprep.mubr.f32.mxu0 0.0
    %919 = vmatmul.mubr.f32.gmra.mrb[0].mxu0 %v398
    %v920 = vpop.f32.mrb[0].mxu0
    %v921 = vadd.f32 %v556, %v920
    %v922 = vpop.f32.mrb[0].mxu0
    %v923 = vadd.f32 %v560, %v922
    %924 = vdwg.mxu0
    %v925 = vmax.f32 %v636, 0.0
    %v926 = vmax.f32 %v638, 0.0
    %v927 = vmax.f32 %v725, 0.0
    %v928 = vmax.f32 %v727, 0.0
    %v929 = vmax.f32 %v814, 0.0
    %v930 = vmax.f32 %v816, 0.0
    %v931 = vmax.f32 %v903, 0.0
    %v932 = vmax.f32 %v905, 0.0
    %v933 = vmax.f32 %v642, 0.0
    %v934 = vmax.f32 %v644, 0.0
    %v935 = vmax.f32 %v731, 0.0
    %v936 = vmax.f32 %v733, 0.0
    %v937 = vmax.f32 %v820, 0.0
    %v938 = vmax.f32 %v822, 0.0
    %v939 = vmax.f32 %v909, 0.0
    %v940 = vmax.f32 %v911, 0.0
    %v941 = vmax.f32 %v648, 0.0
    %v942 = vmax.f32 %v650, 0.0
    %v943 = vmax.f32 %v737, 0.0
    %v944 = vmax.f32 %v739, 0.0
    %v945 = vmax.f32 %v826, 0.0
    %v946 = vmax.f32 %v828, 0.0
    %v947 = vmax.f32 %v915, 0.0
    %v948 = vmax.f32 %v917, 0.0
    %v949 = vmax.f32 %v654, 0.0
    %v950 = vmax.f32 %v656, 0.0
    %v951 = vmax.f32 %v743, 0.0
    %v952 = vmax.f32 %v745, 0.0
    %v953 = vmax.f32 %v832, 0.0
    %v954 = vmax.f32 %v834, 0.0
    %v955 = vmax.f32 %v921, 0.0
    %v956 = vmax.f32 %v923, 0.0
    %v957 = vadd.f32 %v925, %v933
    %v958 = vadd.f32 %v957, %v941
    %v959 = vadd.f32 %v958, %v949
    %v960 = vrot.slane %v959, 4
    %v961 = vadd.f32 %v959, %v960
    %v962 = vrot.slane %v961, 2
    %v963 = vadd.f32 %v961, %v962
    %v964 = vrot.slane %v963, 1
    %v965 = vadd.f32 %v963, %v964
    %v966 = vadd.f32 %v926, %v934
    %v967 = vadd.f32 %v966, %v942
    %v968 = vadd.f32 %v967, %v950
    %v969 = vrot.slane %v968, 4
    %v970 = vadd.f32 %v968, %v969
    %v971 = vrot.slane %v970, 2
    %v972 = vadd.f32 %v970, %v971
    %v973 = vrot.slane %v972, 1
    %v974 = vadd.f32 %v972, %v973
    %v975 = vadd.f32 %v927, %v935
    %v976 = vadd.f32 %v975, %v943
    %v977 = vadd.f32 %v976, %v951
    %v978 = vrot.slane %v977, 4
    %v979 = vadd.f32 %v977, %v978
    %v980 = vrot.slane %v979, 2
    %v981 = vadd.f32 %v979, %v980
    %v982 = vrot.slane %v981, 1
    %v983 = vadd.f32 %v981, %v982
    %v984 = vadd.f32 %v928, %v936
    %v985 = vadd.f32 %v984, %v944
    %v986 = vadd.f32 %v985, %v952
    %v987 = vrot.slane %v986, 4
    %v988 = vadd.f32 %v986, %v987
    %v989 = vrot.slane %v988, 2
    %v990 = vadd.f32 %v988, %v989
    %v991 = vrot.slane %v990, 1
    %v992 = vadd.f32 %v990, %v991
    %v993 = vadd.f32 %v929, %v937
    %v994 = vadd.f32 %v993, %v945
    %v995 = vadd.f32 %v994, %v953
    %v996 = vrot.slane %v995, 4
    %v997 = vadd.f32 %v995, %v996
    %v998 = vrot.slane %v997, 2
    %v999 = vadd.f32 %v997, %v998
    %v1000 = vrot.slane %v999, 1
    %v1001 = vadd.f32 %v999, %v1000
    %v1002 = vadd.f32 %v930, %v938
    %v1003 = vadd.f32 %v1002, %v946
    %v1004 = vadd.f32 %v1003, %v954
    %v1005 = vrot.slane %v1004, 4
    %v1006 = vadd.f32 %v1004, %v1005
    %v1007 = vrot.slane %v1006, 2
    %v1008 = vadd.f32 %v1006, %v1007
    %v1009 = vrot.slane %v1008, 1
    %v1010 = vadd.f32 %v1008, %v1009
    %v1011 = vadd.f32 %v931, %v939
    %v1012 = vadd.f32 %v1011, %v947
    %v1013 = vadd.f32 %v1012, %v955
    %v1014 = vrot.slane %v1013, 4
    %v1015 = vadd.f32 %v1013, %v1014
    %v1016 = vrot.slane %v1015, 2
    %v1017 = vadd.f32 %v1015, %v1016
    %v1018 = vrot.slane %v1017, 1
    %v1019 = vadd.f32 %v1017, %v1018
    %v1020 = vadd.f32 %v932, %v940
    %v1021 = vadd.f32 %v1020, %v948
    %v1022 = vadd.f32 %v1021, %v956
    %v1023 = vrot.slane %v1022, 4
    %v1024 = vadd.f32 %v1022, %v1023
    %v1025 = vrot.slane %v1024, 2
    %v1026 = vadd.f32 %v1024, %v1025
    %v1027 = vrot.slane %v1026, 1
    %v1028 = vadd.f32 %v1026, %v1027
    %v1029 = vmul.f32 %v925, %v925
    %v1030 = vmul.f32 %v926, %v926
    %v1031 = vmul.f32 %v927, %v927
    %v1032 = vmul.f32 %v928, %v928
    %v1033 = vmul.f32 %v929, %v929
    %v1034 = vmul.f32 %v930, %v930
    %v1035 = vmul.f32 %v931, %v931
    %v1036 = vmul.f32 %v932, %v932
    %v1037 = vmul.f32 %v933, %v933
    %v1038 = vmul.f32 %v934, %v934
    %v1039 = vmul.f32 %v935, %v935
    %v1040 = vmul.f32 %v936, %v936
    %v1041 = vmul.f32 %v937, %v937
    %v1042 = vmul.f32 %v938, %v938
    %v1043 = vmul.f32 %v939, %v939
    %v1044 = vmul.f32 %v940, %v940
    %v1045 = vmul.f32 %v941, %v941
    %v1046 = vmul.f32 %v942, %v942
    %v1047 = vmul.f32 %v943, %v943
    %v1048 = vmul.f32 %v944, %v944
    %v1049 = vmul.f32 %v945, %v945
    %v1050 = vmul.f32 %v946, %v946
    %v1051 = vmul.f32 %v947, %v947
    %v1052 = vmul.f32 %v948, %v948
    %v1053 = vmul.f32 %v949, %v949
    %v1054 = vmul.f32 %v950, %v950
    %v1055 = vmul.f32 %v951, %v951
    %v1056 = vmul.f32 %v952, %v952
    %v1057 = vmul.f32 %v953, %v953
    %v1058 = vmul.f32 %v954, %v954
    %v1059 = vmul.f32 %v955, %v955
    %v1060 = vmul.f32 %v956, %v956
    %v1061 = vadd.f32 %v1029, %v1037
    %v1062 = vadd.f32 %v1061, %v1045
    %v1063 = vadd.f32 %v1062, %v1053
    %v1064 = vrot.slane %v1063, 4
    %v1065 = vadd.f32 %v1063, %v1064
    %v1066 = vrot.slane %v1065, 2
    %v1067 = vadd.f32 %v1065, %v1066
    %v1068 = vrot.slane %v1067, 1
    %v1069 = vadd.f32 %v1067, %v1068
    %v1070 = vadd.f32 %v1030, %v1038
    %v1071 = vadd.f32 %v1070, %v1046
    %v1072 = vadd.f32 %v1071, %v1054
    %v1073 = vrot.slane %v1072, 4
    %v1074 = vadd.f32 %v1072, %v1073
    %v1075 = vrot.slane %v1074, 2
    %v1076 = vadd.f32 %v1074, %v1075
    %v1077 = vrot.slane %v1076, 1
    %v1078 = vadd.f32 %v1076, %v1077
    %v1079 = vadd.f32 %v1031, %v1039
    %v1080 = vadd.f32 %v1079, %v1047
    %v1081 = vadd.f32 %v1080, %v1055
    %v1082 = vrot.slane %v1081, 4
    %v1083 = vadd.f32 %v1081, %v1082
    %v1084 = vrot.slane %v1083, 2
    %v1085 = vadd.f32 %v1083, %v1084
    %v1086 = vrot.slane %v1085, 1
    %v1087 = vadd.f32 %v1085, %v1086
    %v1088 = vadd.f32 %v1032, %v1040
    %v1089 = vadd.f32 %v1088, %v1048
    %v1090 = vadd.f32 %v1089, %v1056
    %v1091 = vrot.slane %v1090, 4
    %v1092 = vadd.f32 %v1090, %v1091
    %v1093 = vrot.slane %v1092, 2
    %v1094 = vadd.f32 %v1092, %v1093
    %v1095 = vrot.slane %v1094, 1
    %v1096 = vadd.f32 %v1094, %v1095
    %v1097 = vadd.f32 %v1033, %v1041
    %v1098 = vadd.f32 %v1097, %v1049
    %v1099 = vadd.f32 %v1098, %v1057
    %v1100 = vrot.slane %v1099, 4
    %v1101 = vadd.f32 %v1099, %v1100
    %v1102 = vrot.slane %v1101, 2
    %v1103 = vadd.f32 %v1101, %v1102
    %v1104 = vrot.slane %v1103, 1
    %v1105 = vadd.f32 %v1103, %v1104
    %v1106 = vadd.f32 %v1034, %v1042
    %v1107 = vadd.f32 %v1106, %v1050
    %v1108 = vadd.f32 %v1107, %v1058
    %v1109 = vrot.slane %v1108, 4
    %v1110 = vadd.f32 %v1108, %v1109
    %v1111 = vrot.slane %v1110, 2
    %v1112 = vadd.f32 %v1110, %v1111
    %v1113 = vrot.slane %v1112, 1
    %v1114 = vadd.f32 %v1112, %v1113
    %v1115 = vadd.f32 %v1035, %v1043
    %v1116 = vadd.f32 %v1115, %v1051
    %v1117 = vadd.f32 %v1116, %v1059
    %v1118 = vrot.slane %v1117, 4
    %v1119 = vadd.f32 %v1117, %v1118
    %v1120 = vrot.slane %v1119, 2
    %v1121 = vadd.f32 %v1119, %v1120
    %v1122 = vrot.slane %v1121, 1
    %v1123 = vadd.f32 %v1121, %v1122
    %v1124 = vadd.f32 %v1036, %v1044
    %v1125 = vadd.f32 %v1124, %v1052
    %v1126 = vadd.f32 %v1125, %v1060
    %v1127 = vrot.slane %v1126, 4
    %v1128 = vadd.f32 %v1126, %v1127
    %v1129 = vrot.slane %v1128, 2
    %v1130 = vadd.f32 %v1128, %v1129
    %v1131 = vrot.slane %v1130, 1
    %v1132 = vadd.f32 %v1130, %v1131
    %vm1133 = vcmask 1040384
    %v1134 = vsel %vm1133, %v965, %v1069
    %v1135 = vsel %vm1133, %v974, %v1078
    %v1136 = vsel %vm1133, %v983, %v1087
    %v1137 = vsel %vm1133, %v992, %v1096
    %v1138 = vsel %vm1133, %v1001, %v1105
    %v1139 = vsel %vm1133, %v1010, %v1114
    %v1140 = vsel %vm1133, %v1019, %v1123
    %v1141 = vsel %vm1133, %v1028, %v1132
    %p1142 = scmp.eq.s32.totalorder 0, 0
    // Predicated region
    $region70: #{input_tnet_forward.7} parent=1 // pred_check
      %p1143 = pneg %p1142
    $region71: #{input_tnet_forward.7} parent=1 // pred_check_branch
      %1145 = sbr.rel (%p1143) target = $region73
    $region72: #{input_tnet_forward.7} parent=1 // pred_region
      %1146 = vst [vmem:[%s11] sm:$0xff] 0.0
      %1147 = vst [vmem:[%s11 + $0x8] sm:$0xff] 0.0
      %1148 = vst [vmem:[#allocation2] sm:$0xff] 0.0
      %1149 = vst [vmem:[#allocation2 + $0x8] sm:$0xff] 0.0
    $region73: #{input_tnet_forward.7} parent=1 // pred_fallthru
      _
    %v1150 = vld [vmem:[%s11] sm:$0xff]
    %v1151 = vld [vmem:[%s11 + $0x8] sm:$0xff]
    %v1152 = vld [vmem:[#allocation2] sm:$0xff]
    %v1153 = vld [vmem:[#allocation2 + $0x8] sm:$0xff]
    %v1156 = vcombine.high %v1152, %v1152
    %v1158 = vunpack.c.l.s4 1983009808
    %v1159 = vunpack.c.0.s8 %v1158
    %v1160 = vlaneseq
    %v1161 = vshrl.u32 %v1160, 7
    %v1162 = vsub.s32 %v1159, %v1161
    %v1163 = vrot.slane %v1152, %v1162
    %v1165 = vunpack.c.l.s4 1983009808
    %v1166 = vunpack.c.0.s8 %v1165
    %v1167 = vlaneseq
    %v1168 = vshrl.u32 %v1167, 7
    %v1169 = vsub.s32 %v1166, %v1168
    %v1170 = vrot.slane %v1156, %v1169
    %v1171 = vcombine.high %v1163, %v1163
    %v1172 = vcombine.high %v1170, %v1170
    %v1173 = vcombine.high %v1153, %v1153
    %v1175 = vunpack.c.l.s4 1983009808
    %v1176 = vunpack.c.0.s8 %v1175
    %v1177 = vlaneseq
    %v1178 = vshrl.u32 %v1177, 7
    %v1179 = vsub.s32 %v1176, %v1178
    %v1180 = vrot.slane %v1153, %v1179
    %v1182 = vunpack.c.l.s4 1983009808
    %v1183 = vunpack.c.0.s8 %v1182
    %v1184 = vlaneseq
    %v1185 = vshrl.u32 %v1184, 7
    %v1186 = vsub.s32 %v1183, %v1185
    %v1187 = vrot.slane %v1173, %v1186
    %v1188 = vcombine.high %v1180, %v1180
    %v1189 = vcombine.high %v1187, %v1187
    %v1198 = vsub.f32 %v1134, %v1163
    %v1199 = vsub.f32 %v1135, %v1171
    %v1200 = vsub.f32 %v1136, %v1170
    %v1201 = vsub.f32 %v1137, %v1172
    %v1202 = vsub.f32 %v1138, %v1180
    %v1203 = vsub.f32 %v1139, %v1188
    %v1204 = vsub.f32 %v1140, %v1187
    %v1205 = vsub.f32 %v1141, %v1189
    %v1214 = vcombine.low %v1198, %v1199
    %v1215 = vcombine.low %v1200, %v1201
    %v1217 = vunpack.c.l.s4 1983009808
    %v1218 = vunpack.c.0.s8 %v1217
    %v1219 = vlaneseq
    %v1220 = vshrl.u32 %v1219, 7
    %v1221 = vsub.s32 %v1218, %v1220
    %v1222 = vrot.slane %v1214, %v1221
    %v1224 = vunpack.c.l.s4 1983009808
    %v1225 = vunpack.c.0.s8 %v1224
    %v1226 = vlaneseq
    %v1227 = vshrl.u32 %v1226, 7
    %v1228 = vsub.s32 %v1225, %v1227
    %v1229 = vrot.slane %v1215, %v1228
    %v1230 = vcombine.low %v1222, %v1229
    %v1231 = vcombine.low %v1202, %v1203
    %v1232 = vcombine.low %v1204, %v1205
    %v1234 = vunpack.c.l.s4 1983009808
    %v1235 = vunpack.c.0.s8 %v1234
    %v1236 = vlaneseq
    %v1237 = vshrl.u32 %v1236, 7
    %v1238 = vsub.s32 %v1235, %v1237
    %v1239 = vrot.slane %v1231, %v1238
    %v1241 = vunpack.c.l.s4 1983009808
    %v1242 = vunpack.c.0.s8 %v1241
    %v1243 = vlaneseq
    %v1244 = vshrl.u32 %v1243, 7
    %v1245 = vsub.s32 %v1242, %v1244
    %v1246 = vrot.slane %v1232, %v1245
    %v1247 = vcombine.low %v1239, %v1246
    %v1250 = vadd.f32 %v1150, %v1230
    %v1251 = vadd.f32 %v1151, %v1247
    %v1252 = vsub.f32 %v1250, %v1150
    %v1253 = vsub.f32 %v1251, %v1151
    %v1254 = vsub.f32 %v1252, %v1230
    %v1255 = vsub.f32 %v1253, %v1247
    %1256 = vst [vmem:[#allocation2] sm:$0xff] %v1254
    %1257 = vst [vmem:[#allocation2 + $0x8] sm:$0xff] %v1255
    %1258 = vst [vmem:[%s11] sm:$0xff] %v1250
    %1259 = vst [vmem:[%s11 + $0x8] sm:$0xff] %v1251
    // Predicated region
    $region74: #{input_tnet_forward.7} parent=1 // pred_check
      _
    $region75: #{input_tnet_forward.7} parent=1 // pred_check_branch
      %1261 = sbr.rel (0) target = $region77
    $region76: #{input_tnet_forward.7} parent=1 // pred_region
      _
    $region77: #{input_tnet_forward.7} parent=1 // pred_fallthru
      _
    // Predicated region
    $region78: #{input_tnet_forward.7} parent=1 // pred_check
      _
    $region79: #{input_tnet_forward.7} parent=1 // pred_check_branch
      %1263 = sbr.rel (0) target = $region81
    $region80: #{input_tnet_forward.7} parent=1 // pred_region
      _
    $region81: #{input_tnet_forward.7} parent=1 // pred_fallthru
      _
    %1264 = vsyncpa [#allocation4], 1
    %1265 = vsyncpa [#allocation6], 1
    %1266 = vsyncpa [#allocation9], 1
    %1267 = vsyncpa [#allocation12], 1

// kernel: input_tnet_forward.8
$region0: #{input_tnet_forward.8}
  #allocation0 [shape = 'u32[]', space=smem, size = 0x4, offset = 0x4, fixed_abs, tag = 'smem constant byte address 0x4 - core index']
  #allocation1 [shape = 'u32[144,128]{1,0:T(1,128)}', space=vmem, size = 0x12000, scoped, tag = 'internal scratch']
  %s0 = inlined_call_operand.vmem [shape: f32[32,3], index: 0, kind: input, shape index: {}]
  %s1 = inlined_call_operand.hbm [shape: f32[3,64], index: 1, kind: input, shape index: {}]
  %s2 = inlined_call_operand.hbm [shape: f32[1,64], index: 2, kind: input, shape index: {}]
  %s3 = inlined_call_operand.vmem [shape: f32[1,64], index: 3, kind: input, shape index: {}]
  %s4 = inlined_call_operand.vmem [shape: f32[1,64], index: 4, kind: input, shape index: {}]
  %s5 = inlined_call_operand.hbm [shape: f32[64,128], index: 5, kind: input, shape index: {}]
  %s6 = inlined_call_operand.hbm [shape: f32[1,128], index: 6, kind: input, shape index: {}]
  %s7 = inlined_call_operand.vmem [shape: f32[1,128], index: 7, kind: input, shape index: {}]
  %s8 = inlined_call_operand.vmem [shape: f32[1,128], index: 8, kind: input, shape index: {}]
  %s9 = inlined_call_operand.hbm [shape: f32[128,1024], index: 9, kind: input, shape index: {}]
  %s10 = inlined_call_operand.hbm [shape: f32[1,1024], index: 10, kind: input, shape index: {}]
  %s11 = inlined_call_operand.vmem [shape: f32[1,1024], index: 11, kind: input, shape index: {}]
  %s12 = inlined_call_operand.vmem [shape: f32[1,1024], index: 12, kind: input, shape index: {}]
  %s13 = inlined_call_operand.vmem [shape: f32[1024,64], index: 13, kind: input, shape index: {}]
  %s14 = inlined_call_operand.vmem [shape: f32[32,64], index: 14, kind: output, shape index: {}]
  %s15 = sld [smem:[#allocation0]]
  $region90: #{input_tnet_forward.8} parent=0
    _
  %s17 = ssub.s32 1, %s15
  %s18 = scalar_select 0, %s17, %s15
  $region1: #{input_tnet_forward.8} parent=0
    #allocation2 [shape = 'u8[2048]{0}', space=vmem, size = 0x800, scoped, tag = 'input window, operand 1, single buffered']
    #allocation3 [shape = 's32[1]{0}', space=sflag, size = 0x4, scoped, tag = 'scoped memory for input_tnet_forward.8']
    #allocation4 [shape = 'u8[512]{0}', space=vmem, size = 0x400, scoped, tag = 'input window, operand 2, single buffered']
    #allocation5 [shape = 's32[1]{0}', space=sflag, size = 0x4, scoped, tag = 'scoped memory for input_tnet_forward.8']
    #allocation6 [shape = 'u8[32768]{0}', space=vmem, size = 0x8000, scoped, tag = 'input window, operand 5, single buffered']
    #allocation7 [shape = 'u8[512]{0}', space=vmem, size = 0x400, scoped, tag = 'input window, operand 6, single buffered']
    #allocation8 [shape = 's32[1]{0}', space=sflag, size = 0x4, scoped, tag = 'scoped memory for input_tnet_forward.8']
    #allocation9 [shape = 'u8[524288]{0}', space=vmem, size = 0x80000, scoped, tag = 'input window, operand 9, single buffered']
    #allocation10 [shape = 'u8[4096]{0}', space=vmem, size = 0x1000, scoped, tag = 'input window, operand 10, single buffered']
    #allocation11 [shape = 's32[1]{0}', space=sflag, size = 0x4, scoped, tag = 'scoped memory for input_tnet_forward.8']
    %19 = vsyncpa [#allocation3], 0
    %20 = vsyncpa [#allocation5], 0
    %21 = vsyncpa [#allocation8], 0
    %22 = vsyncpa [#allocation11], 0
    // Predicated region
    $region2: #{input_tnet_forward.8} parent=1 // pred_check
      _
    $region3: #{input_tnet_forward.8} parent=1 // pred_check_branch
      %24 = sbr.rel (0) target = $region5
    $region4: #{input_tnet_forward.8} parent=1 // pred_region
      _
    $region5: #{input_tnet_forward.8} parent=1 // pred_fallthru
      _
    // Predicated region
    $region6: #{input_tnet_forward.8} parent=1 // pred_check
      _
    $region7: #{input_tnet_forward.8} parent=1 // pred_check_branch
      %26 = sbr.rel (0) target = $region9
    $region8: #{input_tnet_forward.8} parent=1 // pred_region
      %s28 = ssub.s32 64, 64
      %29 = vsyncadd [#allocation3], %s28
      %s31 = sshll.u32 [#allocation2], 4
      %s32 = int_to_ptr.vmem [resolvable:$true] %s31
      %34 = dma.hbm_to_vmem [thread:$0]  %s1, 64, %s32, [#allocation3]
    $region9: #{input_tnet_forward.8} parent=1 // pred_fallthru
      _
    // Predicated region
    $region10: #{input_tnet_forward.8} parent=1 // pred_check
      _
    $region11: #{input_tnet_forward.8} parent=1 // pred_check_branch
      %36 = sbr.rel (0) target = $region13
    $region12: #{input_tnet_forward.8} parent=1 // pred_region
      %s38 = ssub.s32 16, 16
      %39 = vsyncadd [#allocation5], %s38
      %s41 = sshll.u32 [#allocation4], 4
      %s42 = int_to_ptr.vmem [resolvable:$true] %s41
      %44 = dma.hbm_to_vmem [thread:$0]  %s2, 16, %s42, [#allocation5]
    $region13: #{input_tnet_forward.8} parent=1 // pred_fallthru
      _
    // Predicated region
    $region14: #{input_tnet_forward.8} parent=1 // pred_check
      _
    $region15: #{input_tnet_forward.8} parent=1 // pred_check_branch
      %46 = sbr.rel (0) target = $region17
    $region16: #{input_tnet_forward.8} parent=1 // pred_region
      _
    $region17: #{input_tnet_forward.8} parent=1 // pred_fallthru
      _
    // Predicated region
    $region18: #{input_tnet_forward.8} parent=1 // pred_check
      _
    $region19: #{input_tnet_forward.8} parent=1 // pred_check_branch
      %48 = sbr.rel (0) target = $region21
    $region20: #{input_tnet_forward.8} parent=1 // pred_region
      _
    $region21: #{input_tnet_forward.8} parent=1 // pred_fallthru
      _
    // Predicated region
    $region22: #{input_tnet_forward.8} parent=1 // pred_check
      _
    $region23: #{input_tnet_forward.8} parent=1 // pred_check_branch
      %50 = sbr.rel (0) target = $region25
    $region24: #{input_tnet_forward.8} parent=1 // pred_region
      %s52 = ssub.s32 1024, 1024
      %53 = vsyncadd [#allocation5], %s52
      %s54 = sshll.u32 [#allocation6], 4
      %s55 = int_to_ptr.vmem [resolvable:$true] %s54
      %60 = dma.hbm_to_vmem [thread:$0]  %s5, 1024, %s55, [#allocation5], 128, 128, 8
    $region25: #{input_tnet_forward.8} parent=1 // pred_fallthru
      _
    // Predicated region
    $region26: #{input_tnet_forward.8} parent=1 // pred_check
      _
    $region27: #{input_tnet_forward.8} parent=1 // pred_check_branch
      %62 = sbr.rel (0) target = $region29
    $region28: #{input_tnet_forward.8} parent=1 // pred_region
      %s64 = ssub.s32 16, 16
      %65 = vsyncadd [#allocation8], %s64
      %s67 = sshll.u32 [#allocation7], 4
      %s68 = int_to_ptr.vmem [resolvable:$true] %s67
      %70 = dma.hbm_to_vmem [thread:$0]  %s6, 16, %s68, [#allocation8]
    $region29: #{input_tnet_forward.8} parent=1 // pred_fallthru
      _
    // Predicated region
    $region30: #{input_tnet_forward.8} parent=1 // pred_check
      _
    $region31: #{input_tnet_forward.8} parent=1 // pred_check_branch
      %72 = sbr.rel (0) target = $region33
    $region32: #{input_tnet_forward.8} parent=1 // pred_region
      _
    $region33: #{input_tnet_forward.8} parent=1 // pred_fallthru
      _
    // Predicated region
    $region34: #{input_tnet_forward.8} parent=1 // pred_check
      _
    $region35: #{input_tnet_forward.8} parent=1 // pred_check_branch
      %74 = sbr.rel (0) target = $region37
    $region36: #{input_tnet_forward.8} parent=1 // pred_region
      _
    $region37: #{input_tnet_forward.8} parent=1 // pred_fallthru
      _
    // Predicated region
    $region38: #{input_tnet_forward.8} parent=1 // pred_check
      _
    $region39: #{input_tnet_forward.8} parent=1 // pred_check_branch
      %76 = sbr.rel (0) target = $region41
    $region40: #{input_tnet_forward.8} parent=1 // pred_region
      %s78 = ssub.s32 16384, 16384
      %79 = vsyncadd [#allocation8], %s78
      %s80 = sshll.u32 [#allocation9], 4
      %s81 = int_to_ptr.vmem [resolvable:$true] %s80
      %86 = dma.hbm_to_vmem [thread:$0]  %s9, 16384, %s81, [#allocation8], 1024, 1024, 64
    $region41: #{input_tnet_forward.8} parent=1 // pred_fallthru
      _
    // Predicated region
    $region42: #{input_tnet_forward.8} parent=1 // pred_check
      _
    $region43: #{input_tnet_forward.8} parent=1 // pred_check_branch
      %88 = sbr.rel (0) target = $region45
    $region44: #{input_tnet_forward.8} parent=1 // pred_region
      %s90 = ssub.s32 128, 128
      %91 = vsyncadd [#allocation11], %s90
      %s93 = sshll.u32 [#allocation10], 4
      %s94 = int_to_ptr.vmem [resolvable:$true] %s93
      %96 = dma.hbm_to_vmem [thread:$0]  %s10, 128, %s94, [#allocation11]
    $region45: #{input_tnet_forward.8} parent=1 // pred_fallthru
      _
    // Predicated region
    $region46: #{input_tnet_forward.8} parent=1 // pred_check
      _
    $region47: #{input_tnet_forward.8} parent=1 // pred_check_branch
      %98 = sbr.rel (0) target = $region49
    $region48: #{input_tnet_forward.8} parent=1 // pred_region
      _
    $region49: #{input_tnet_forward.8} parent=1 // pred_fallthru
      _
    // Predicated region
    $region50: #{input_tnet_forward.8} parent=1 // pred_check
      _
    $region51: #{input_tnet_forward.8} parent=1 // pred_check_branch
      %100 = sbr.rel (0) target = $region53
    $region52: #{input_tnet_forward.8} parent=1 // pred_region
      _
    $region53: #{input_tnet_forward.8} parent=1 // pred_fallthru
      _
    // Predicated region
    $region54: #{input_tnet_forward.8} parent=1 // pred_check
      _
    $region55: #{input_tnet_forward.8} parent=1 // pred_check_branch
      %102 = sbr.rel (0) target = $region57
    $region56: #{input_tnet_forward.8} parent=1 // pred_region
      _
    $region57: #{input_tnet_forward.8} parent=1 // pred_fallthru
      _
    // Predicated region
    $region58: #{input_tnet_forward.8} parent=1 // pred_check
      _
    $region59: #{input_tnet_forward.8} parent=1 // pred_check_branch
      %104 = sbr.rel (0) target = $region61
    $region60: #{input_tnet_forward.8} parent=1 // pred_region
      %105 = dma.done [#allocation3], 64
    $region61: #{input_tnet_forward.8} parent=1 // pred_fallthru
      _
    // Predicated region
    $region62: #{input_tnet_forward.8} parent=1 // pred_check
      _
    $region63: #{input_tnet_forward.8} parent=1 // pred_check_branch
      %107 = sbr.rel (0) target = $region65
    $region64: #{input_tnet_forward.8} parent=1 // pred_region
      %108 = dma.done [#allocation5], 16
    $region65: #{input_tnet_forward.8} parent=1 // pred_fallthru
      _
    // Predicated region
    $region66: #{input_tnet_forward.8} parent=1 // pred_check
      _
    $region67: #{input_tnet_forward.8} parent=1 // pred_check_branch
      %110 = sbr.rel (0) target = $region69
    $region68: #{input_tnet_forward.8} parent=1 // pred_region
      %111 = dma.done [#allocation5], 1024
    $region69: #{input_tnet_forward.8} parent=1 // pred_fallthru
      _
    // Predicated region
    $region70: #{input_tnet_forward.8} parent=1 // pred_check
      _
    $region71: #{input_tnet_forward.8} parent=1 // pred_check_branch
      %113 = sbr.rel (0) target = $region73
    $region72: #{input_tnet_forward.8} parent=1 // pred_region
      %114 = dma.done [#allocation8], 16
    $region73: #{input_tnet_forward.8} parent=1 // pred_fallthru
      _
    // Predicated region
    $region74: #{input_tnet_forward.8} parent=1 // pred_check
      _
    $region75: #{input_tnet_forward.8} parent=1 // pred_check_branch
      %116 = sbr.rel (0) target = $region77
    $region76: #{input_tnet_forward.8} parent=1 // pred_region
      %117 = dma.done [#allocation8], 16384
    $region77: #{input_tnet_forward.8} parent=1 // pred_fallthru
      _
    // Predicated region
    $region78: #{input_tnet_forward.8} parent=1 // pred_check
      _
    $region79: #{input_tnet_forward.8} parent=1 // pred_check_branch
      %119 = sbr.rel (0) target = $region81
    $region80: #{input_tnet_forward.8} parent=1 // pred_region
      %120 = dma.done [#allocation11], 128
    $region81: #{input_tnet_forward.8} parent=1 // pred_fallthru
      _
    %v121 = vld [vmem:[%s0] sm:$0xff]
    %v122 = vld [vmem:[%s0 + $0x8] sm:$0xff]
    %v123 = vld [vmem:[%s0 + $0x10] sm:$0xff]
    %v124 = vld [vmem:[%s0 + $0x18] sm:$0xff]
    %v125 = vld [vmem:[#allocation2] sm:$0x7]
    %v126 = vld [vmem:[#allocation4] sm:$0x1]
    %v127 = vld [vmem:[%s3] sm:$0x1]
    %v128 = vld [vmem:[%s4] sm:$0x1]
    %v129 = vld [vmem:[#allocation6] sm:$0xff]
    %v130 = vld [vmem:[#allocation6 + $0x8] sm:$0xff]
    %v131 = vld [vmem:[#allocation6 + $0x10] sm:$0xff]
    %v132 = vld [vmem:[#allocation6 + $0x18] sm:$0xff]
    %v133 = vld [vmem:[#allocation6 + $0x20] sm:$0xff]
    %v134 = vld [vmem:[#allocation6 + $0x28] sm:$0xff]
    %v135 = vld [vmem:[#allocation6 + $0x30] sm:$0xff]
    %v136 = vld [vmem:[#allocation6 + $0x38] sm:$0xff]
    %v137 = vld [vmem:[#allocation7] sm:$0x1]
    %v138 = vld [vmem:[%s7] sm:$0x1]
    %v139 = vld [vmem:[%s8] sm:$0x1]
    %v140 = vld [vmem:[#allocation9] sm:$0xff]
    %v141 = vld [vmem:[#allocation9 + $0x8] sm:$0xff]
    %v142 = vld [vmem:[#allocation9 + $0x10] sm:$0xff]
    %v143 = vld [vmem:[#allocation9 + $0x18] sm:$0xff]
    %v144 = vld [vmem:[#allocation9 + $0x20] sm:$0xff]
    %v145 = vld [vmem:[#allocation9 + $0x28] sm:$0xff]
    %v146 = vld [vmem:[#allocation9 + $0x30] sm:$0xff]
    %v147 = vld [vmem:[#allocation9 + $0x38] sm:$0xff]
    %v148 = vld [vmem:[#allocation9 + $0x40] sm:$0xff]
    %v149 = vld [vmem:[#allocation9 + $0x48] sm:$0xff]
    %v150 = vld [vmem:[#allocation9 + $0x50] sm:$0xff]
    %v151 = vld [vmem:[#allocation9 + $0x58] sm:$0xff]
    %v152 = vld [vmem:[#allocation9 + $0x60] sm:$0xff]
    %v153 = vld [vmem:[#allocation9 + $0x68] sm:$0xff]
    %v154 = vld [vmem:[#allocation9 + $0x70] sm:$0xff]
    %v155 = vld [vmem:[#allocation9 + $0x78] sm:$0xff]
    %v156 = vld [vmem:[#allocation9 + $0x80] sm:$0xff]
    %v157 = vld [vmem:[#allocation9 + $0x88] sm:$0xff]
    %v158 = vld [vmem:[#allocation9 + $0x90] sm:$0xff]
    %v159 = vld [vmem:[#allocation9 + $0x98] sm:$0xff]
    %v160 = vld [vmem:[#allocation9 + $0xa0] sm:$0xff]
    %v161 = vld [vmem:[#allocation9 + $0xa8] sm:$0xff]
    %v162 = vld [vmem:[#allocation9 + $0xb0] sm:$0xff]
    %v163 = vld [vmem:[#allocation9 + $0xb8] sm:$0xff]
    %v164 = vld [vmem:[#allocation9 + $0xc0] sm:$0xff]
    %v165 = vld [vmem:[#allocation9 + $0xc8] sm:$0xff]
    %v166 = vld [vmem:[#allocation9 + $0xd0] sm:$0xff]
    %v167 = vld [vmem:[#allocation9 + $0xd8] sm:$0xff]
    %v168 = vld [vmem:[#allocation9 + $0xe0] sm:$0xff]
    %v169 = vld [vmem:[#allocation9 + $0xe8] sm:$0xff]
    %v170 = vld [vmem:[#allocation9 + $0xf0] sm:$0xff]
    %v171 = vld [vmem:[#allocation9 + $0xf8] sm:$0xff]
    %v172 = vld [vmem:[#allocation9 + $0x100] sm:$0xff]
    %v173 = vld [vmem:[#allocation9 + $0x108] sm:$0xff]
    %v174 = vld [vmem:[#allocation9 + $0x110] sm:$0xff]
    %v175 = vld [vmem:[#allocation9 + $0x118] sm:$0xff]
    %v176 = vld [vmem:[#allocation9 + $0x120] sm:$0xff]
    %v177 = vld [vmem:[#allocation9 + $0x128] sm:$0xff]
    %v178 = vld [vmem:[#allocation9 + $0x130] sm:$0xff]
    %v179 = vld [vmem:[#allocation9 + $0x138] sm:$0xff]
    %v180 = vld [vmem:[#allocation9 + $0x140] sm:$0xff]
    %v181 = vld [vmem:[#allocation9 + $0x148] sm:$0xff]
    %v182 = vld [vmem:[#allocation9 + $0x150] sm:$0xff]
    %v183 = vld [vmem:[#allocation9 + $0x158] sm:$0xff]
    %v184 = vld [vmem:[#allocation9 + $0x160] sm:$0xff]
    %v185 = vld [vmem:[#allocation9 + $0x168] sm:$0xff]
    %v186 = vld [vmem:[#allocation9 + $0x170] sm:$0xff]
    %v187 = vld [vmem:[#allocation9 + $0x178] sm:$0xff]
    %v188 = vld [vmem:[#allocation9 + $0x180] sm:$0xff]
    %v189 = vld [vmem:[#allocation9 + $0x188] sm:$0xff]
    %v190 = vld [vmem:[#allocation9 + $0x190] sm:$0xff]
    %v191 = vld [vmem:[#allocation9 + $0x198] sm:$0xff]
    %v192 = vld [vmem:[#allocation9 + $0x1a0] sm:$0xff]
    %v193 = vld [vmem:[#allocation9 + $0x1a8] sm:$0xff]
    %v194 = vld [vmem:[#allocation9 + $0x1b0] sm:$0xff]
    %v195 = vld [vmem:[#allocation9 + $0x1b8] sm:$0xff]
    %v196 = vld [vmem:[#allocation9 + $0x1c0] sm:$0xff]
    %v197 = vld [vmem:[#allocation9 + $0x1c8] sm:$0xff]
    %v198 = vld [vmem:[#allocation9 + $0x1d0] sm:$0xff]
    %v199 = vld [vmem:[#allocation9 + $0x1d8] sm:$0xff]
    %v200 = vld [vmem:[#allocation9 + $0x1e0] sm:$0xff]
    %v201 = vld [vmem:[#allocation9 + $0x1e8] sm:$0xff]
    %v202 = vld [vmem:[#allocation9 + $0x1f0] sm:$0xff]
    %v203 = vld [vmem:[#allocation9 + $0x1f8] sm:$0xff]
    %v204 = vld [vmem:[#allocation9 + $0x200] sm:$0xff]
    %v205 = vld [vmem:[#allocation9 + $0x208] sm:$0xff]
    %v206 = vld [vmem:[#allocation9 + $0x210] sm:$0xff]
    %v207 = vld [vmem:[#allocation9 + $0x218] sm:$0xff]
    %v208 = vld [vmem:[#allocation9 + $0x220] sm:$0xff]
    %v209 = vld [vmem:[#allocation9 + $0x228] sm:$0xff]
    %v210 = vld [vmem:[#allocation9 + $0x230] sm:$0xff]
    %v211 = vld [vmem:[#allocation9 + $0x238] sm:$0xff]
    %v212 = vld [vmem:[#allocation9 + $0x240] sm:$0xff]
    %v213 = vld [vmem:[#allocation9 + $0x248] sm:$0xff]
    %v214 = vld [vmem:[#allocation9 + $0x250] sm:$0xff]
    %v215 = vld [vmem:[#allocation9 + $0x258] sm:$0xff]
    %v216 = vld [vmem:[#allocation9 + $0x260] sm:$0xff]
    %v217 = vld [vmem:[#allocation9 + $0x268] sm:$0xff]
    %v218 = vld [vmem:[#allocation9 + $0x270] sm:$0xff]
    %v219 = vld [vmem:[#allocation9 + $0x278] sm:$0xff]
    %v220 = vld [vmem:[#allocation9 + $0x280] sm:$0xff]
    %v221 = vld [vmem:[#allocation9 + $0x288] sm:$0xff]
    %v222 = vld [vmem:[#allocation9 + $0x290] sm:$0xff]
    %v223 = vld [vmem:[#allocation9 + $0x298] sm:$0xff]
    %v224 = vld [vmem:[#allocation9 + $0x2a0] sm:$0xff]
    %v225 = vld [vmem:[#allocation9 + $0x2a8] sm:$0xff]
    %v226 = vld [vmem:[#allocation9 + $0x2b0] sm:$0xff]
    %v227 = vld [vmem:[#allocation9 + $0x2b8] sm:$0xff]
    %v228 = vld [vmem:[#allocation9 + $0x2c0] sm:$0xff]
    %v229 = vld [vmem:[#allocation9 + $0x2c8] sm:$0xff]
    %v230 = vld [vmem:[#allocation9 + $0x2d0] sm:$0xff]
    %v231 = vld [vmem:[#allocation9 + $0x2d8] sm:$0xff]
    %v232 = vld [vmem:[#allocation9 + $0x2e0] sm:$0xff]
    %v233 = vld [vmem:[#allocation9 + $0x2e8] sm:$0xff]
    %v234 = vld [vmem:[#allocation9 + $0x2f0] sm:$0xff]
    %v235 = vld [vmem:[#allocation9 + $0x2f8] sm:$0xff]
    %v236 = vld [vmem:[#allocation9 + $0x300] sm:$0xff]
    %v237 = vld [vmem:[#allocation9 + $0x308] sm:$0xff]
    %v238 = vld [vmem:[#allocation9 + $0x310] sm:$0xff]
    %v239 = vld [vmem:[#allocation9 + $0x318] sm:$0xff]
    %v240 = vld [vmem:[#allocation9 + $0x320] sm:$0xff]
    %v241 = vld [vmem:[#allocation9 + $0x328] sm:$0xff]
    %v242 = vld [vmem:[#allocation9 + $0x330] sm:$0xff]
    %v243 = vld [vmem:[#allocation9 + $0x338] sm:$0xff]
    %v244 = vld [vmem:[#allocation9 + $0x340] sm:$0xff]
    %v245 = vld [vmem:[#allocation9 + $0x348] sm:$0xff]
    %v246 = vld [vmem:[#allocation9 + $0x350] sm:$0xff]
    %v247 = vld [vmem:[#allocation9 + $0x358] sm:$0xff]
    %v248 = vld [vmem:[#allocation9 + $0x360] sm:$0xff]
    %v249 = vld [vmem:[#allocation9 + $0x368] sm:$0xff]
    %v250 = vld [vmem:[#allocation9 + $0x370] sm:$0xff]
    %v251 = vld [vmem:[#allocation9 + $0x378] sm:$0xff]
    %v252 = vld [vmem:[#allocation9 + $0x380] sm:$0xff]
    %v253 = vld [vmem:[#allocation9 + $0x388] sm:$0xff]
    %v254 = vld [vmem:[#allocation9 + $0x390] sm:$0xff]
    %v255 = vld [vmem:[#allocation9 + $0x398] sm:$0xff]
    %v256 = vld [vmem:[#allocation9 + $0x3a0] sm:$0xff]
    %v257 = vld [vmem:[#allocation9 + $0x3a8] sm:$0xff]
    %v258 = vld [vmem:[#allocation9 + $0x3b0] sm:$0xff]
    %v259 = vld [vmem:[#allocation9 + $0x3b8] sm:$0xff]
    %v260 = vld [vmem:[#allocation9 + $0x3c0] sm:$0xff]
    %v261 = vld [vmem:[#allocation9 + $0x3c8] sm:$0xff]
    %v262 = vld [vmem:[#allocation9 + $0x3d0] sm:$0xff]
    %v263 = vld [vmem:[#allocation9 + $0x3d8] sm:$0xff]
    %v264 = vld [vmem:[#allocation9 + $0x3e0] sm:$0xff]
    %v265 = vld [vmem:[#allocation9 + $0x3e8] sm:$0xff]
    %v266 = vld [vmem:[#allocation9 + $0x3f0] sm:$0xff]
    %v267 = vld [vmem:[#allocation9 + $0x3f8] sm:$0xff]
    %v268 = vld [vmem:[#allocation10] sm:$0xff]
    %v269 = vld [vmem:[%s11] sm:$0xff]
    %v270 = vld [vmem:[%s12] sm:$0xff]
    %272 = vset.pattern.permute.xlu0 0
    %273 = vperm.xlu0 %272, %v121
    %v274 = vpop.permute.xlu0 %273
    %277 = vset.pattern.permute.xlu0 0
    %278 = vperm.xlu0 %277, %v122
    %v279 = vpop.permute.xlu0 %278
    %282 = vset.pattern.permute.xlu0 0
    %283 = vperm.xlu0 %282, %v123
    %v284 = vpop.permute.xlu0 %283
    %287 = vset.pattern.permute.xlu0 0
    %288 = vperm.xlu0 %287, %v124
    %v289 = vpop.permute.xlu0 %288
    %v291 = vlaneseq
    %v292 = vshrl.u32 %v291, 7
    %v293 = vsub.s32 0, %v292
    %v294 = vrot.slane %v125, %v293
    %v295 = vmul.f32 %v274, %v294
    %v296 = vmul.f32 %v279, %v294
    %v297 = vmul.f32 %v284, %v294
    %v298 = vmul.f32 %v289, %v294
    %299 = vset.pattern.permute.xlu0 1
    %300 = vperm.xlu0 %299, %v121
    %v301 = vpop.permute.xlu0 %300
    %303 = vset.pattern.permute.xlu0 1
    %304 = vperm.xlu0 %303, %v122
    %v305 = vpop.permute.xlu0 %304
    %307 = vset.pattern.permute.xlu0 1
    %308 = vperm.xlu0 %307, %v123
    %v309 = vpop.permute.xlu0 %308
    %311 = vset.pattern.permute.xlu0 1
    %312 = vperm.xlu0 %311, %v124
    %v313 = vpop.permute.xlu0 %312
    %v315 = vlaneseq
    %v316 = vshrl.u32 %v315, 7
    %v317 = vsub.s32 1, %v316
    %v318 = vrot.slane %v125, %v317
    %v319 = vmul.f32 %v301, %v318
    %v320 = vmul.f32 %v305, %v318
    %v321 = vmul.f32 %v309, %v318
    %v322 = vmul.f32 %v313, %v318
    %v323 = vadd.f32 %v295, %v319
    %v324 = vadd.f32 %v296, %v320
    %v325 = vadd.f32 %v297, %v321
    %v326 = vadd.f32 %v298, %v322
    %327 = vset.pattern.permute.xlu0 2
    %328 = vperm.xlu0 %327, %v121
    %v329 = vpop.permute.xlu0 %328
    %331 = vset.pattern.permute.xlu0 2
    %332 = vperm.xlu0 %331, %v122
    %v333 = vpop.permute.xlu0 %332
    %335 = vset.pattern.permute.xlu0 2
    %336 = vperm.xlu0 %335, %v123
    %v337 = vpop.permute.xlu0 %336
    %339 = vset.pattern.permute.xlu0 2
    %340 = vperm.xlu0 %339, %v124
    %v341 = vpop.permute.xlu0 %340
    %v343 = vlaneseq
    %v344 = vshrl.u32 %v343, 7
    %v345 = vsub.s32 2, %v344
    %v346 = vrot.slane %v125, %v345
    %v347 = vmul.f32 %v329, %v346
    %v348 = vmul.f32 %v333, %v346
    %v349 = vmul.f32 %v337, %v346
    %v350 = vmul.f32 %v341, %v346
    %v351 = vadd.f32 %v323, %v347
    %v352 = vadd.f32 %v324, %v348
    %v353 = vadd.f32 %v325, %v349
    %v354 = vadd.f32 %v326, %v350
    %v356 = vlaneseq
    %v357 = vshrl.u32 %v356, 7
    %v358 = vsub.s32 0, %v357
    %v359 = vrot.slane %v126, %v358
    %v361 = vadd.f32 %v351, %v359
    %v362 = vadd.f32 %v352, %v359
    %v363 = vadd.f32 %v353, %v359
    %v364 = vadd.f32 %v354, %v359
    %v365 = vmax.f32 %v361, 0.0
    %v366 = vmax.f32 %v362, 0.0
    %v367 = vmax.f32 %v363, 0.0
    %v368 = vmax.f32 %v364, 0.0
    %v370 = vlaneseq
    %v371 = vshrl.u32 %v370, 7
    %v372 = vsub.s32 0, %v371
    %v373 = vrot.slane %v127, %v372
    %v375 = vmul.f32 %v365, %v373
    %v376 = vmul.f32 %v366, %v373
    %v377 = vmul.f32 %v367, %v373
    %v378 = vmul.f32 %v368, %v373
    %v380 = vlaneseq
    %v381 = vshrl.u32 %v380, 7
    %v382 = vsub.s32 0, %v381
    %v383 = vrot.slane %v128, %v382
    %v385 = vadd.f32 %v375, %v383
    %v386 = vadd.f32 %v376, %v383
    %v387 = vadd.f32 %v377, %v383
    %v388 = vadd.f32 %v378, %v383
    %v390 = vlaneseq
    %v391 = vshrl.u32 %v390, 7
    %v392 = vsub.s32 0, %v391
    %v393 = vrot.slane %v137, %v392
    %vm395 = vcmask 523264
    %v397 = vsel %vm395, %v385, 0
    %v400 = vsel %vm395, %v386, 0
    %v403 = vsel %vm395, %v387, 0
    %v406 = vsel %vm395, %v388, 0
    %408 = vmatprep.subr.mxu0 0.0
    %409 = vmatpush1.msra.mxu0 %v129
    %410 = vmatprep.subr.mxu0 0.0
    %411 = vmatpush1.msra.mxu0 %v130
    %412 = vmatprep.subr.mxu0 0.0
    %413 = vmatpush1.msra.mxu0 %v131
    %414 = vmatprep.subr.mxu0 0.0
    %415 = vmatpush1.msra.mxu0 %v132
    %416 = vmatprep.subr.mxu0 0.0
    %417 = vmatpush1.msra.mxu0 %v133
    %418 = vmatprep.subr.mxu0 0.0
    %419 = vmatpush1.msra.mxu0 %v134
    %420 = vmatprep.subr.mxu0 0.0
    %421 = vmatpush1.msra.mxu0 %v135
    %422 = vmatprep.subr.mxu0 0.0
    %423 = vmatpush1.msra.mxu0 %v136
    %424 = vmatprep.subr.mxu0 0.0
    %425 = vmatpush1.msra.mxu0 0.0
    %426 = vmatprep.subr.mxu0 0.0
    %427 = vmatpush1.msra.mxu0 0.0
    %428 = vmatprep.subr.mxu0 0.0
    %429 = vmatpush1.msra.mxu0 0.0
    %430 = vmatprep.subr.mxu0 0.0
    %431 = vmatpush1.msra.mxu0 0.0
    %432 = vmatprep.subr.mxu0 0.0
    %433 = vmatpush1.msra.mxu0 0.0
    %434 = vmatprep.subr.mxu0 0.0
    %435 = vmatpush1.msra.mxu0 0.0
    %436 = vmatprep.subr.mxu0 0.0
    %437 = vmatpush1.msra.mxu0 0.0
    %438 = vmatprep.subr.mxu0 0.0
    %439 = vmatpush1.msra.mxu0 0.0
    %440 = vmatprep.subr.mxu0 0.0
    %441 = vmatpush1.msra.mxu0 0.0
    %442 = vmatprep.subr.mxu0 0.0
    %443 = vmatpush1.msra.mxu0 0.0
    %444 = vmatprep.subr.mxu0 0.0
    %445 = vmatpush1.msra.mxu0 0.0
    %446 = vmatprep.subr.mxu0 0.0
    %447 = vmatpush1.msra.mxu0 0.0
    %448 = vmatprep.subr.mxu0 0.0
    %449 = vmatpush1.msra.mxu0 0.0
    %450 = vmatprep.subr.mxu0 0.0
    %451 = vmatpush1.msra.mxu0 0.0
    %452 = vmatprep.subr.mxu0 0.0
    %453 = vmatpush1.msra.mxu0 0.0
    %454 = vmatprep.subr.mxu0 0.0
    %455 = vmatpush1.msra.mxu0 0.0
    %456 = vmatprep.subr.mxu0 0.0
    %457 = vmatpush1.msra.mxu0 0.0
    %458 = vmatprep.subr.mxu0 0.0
    %459 = vmatpush1.msra.mxu0 0.0
    %460 = vmatprep.subr.mxu0 0.0
    %461 = vmatpush1.msra.mxu0 0.0
    %462 = vmatprep.subr.mxu0 0.0
    %463 = vmatpush1.msra.mxu0 0.0
    %464 = vmatprep.subr.mxu0 0.0
    %465 = vmatpush1.msra.mxu0 0.0
    %466 = vmatprep.subr.mxu0 0.0
    %467 = vmatpush1.msra.mxu0 0.0
    %468 = vmatprep.subr.mxu0 0.0
    %469 = vmatpush1.msra.mxu0 0.0
    %470 = vmatprep.subr.mxu0 0.0
    %471 = vmatpush1.msra.mxu0 0.0
    %472 = vmatprep.mubr.f32.mxu0 0.0
    %473 = vmatmul.mubr.f32.gmra.mrb[0].mxu0 %v397
    %v474 = vpop.f32.mrb[0].mxu0
    %v475 = vadd.f32 %v393, %v474
    %v476 = vpop.f32.mrb[0].mxu0
    %477 = vmatprep.mubr.f32.mxu0 0.0
    %478 = vmatmul.mubr.f32.gmra.mrb[0].mxu0 %v400
    %v479 = vpop.f32.mrb[0].mxu0
    %v480 = vadd.f32 %v393, %v479
    %v481 = vpop.f32.mrb[0].mxu0
    %482 = vmatprep.mubr.f32.mxu0 0.0
    %483 = vmatmul.mubr.f32.gmra.mrb[0].mxu0 %v403
    %v484 = vpop.f32.mrb[0].mxu0
    %v485 = vadd.f32 %v393, %v484
    %v486 = vpop.f32.mrb[0].mxu0
    %487 = vmatprep.mubr.f32.mxu0 0.0
    %488 = vmatmul.mubr.f32.gmra.mrb[0].mxu0 %v406
    %v489 = vpop.f32.mrb[0].mxu0
    %v490 = vadd.f32 %v393, %v489
    %v491 = vpop.f32.mrb[0].mxu0
    %492 = vdwg.mxu0
    %v493 = vmax.f32 %v475, 0.0
    %v494 = vmax.f32 %v480, 0.0
    %v495 = vmax.f32 %v485, 0.0
    %v496 = vmax.f32 %v490, 0.0
    %v498 = vlaneseq
    %v499 = vshrl.u32 %v498, 7
    %v500 = vsub.s32 0, %v499
    %v501 = vrot.slane %v138, %v500
    %v503 = vmul.f32 %v493, %v501
    %v504 = vmul.f32 %v494, %v501
    %v505 = vmul.f32 %v495, %v501
    %v506 = vmul.f32 %v496, %v501
    %v508 = vlaneseq
    %v509 = vshrl.u32 %v508, 7
    %v510 = vsub.s32 0, %v509
    %v511 = vrot.slane %v139, %v510
    %v513 = vadd.f32 %v503, %v511
    %v514 = vadd.f32 %v504, %v511
    %v515 = vadd.f32 %v505, %v511
    %v516 = vadd.f32 %v506, %v511
    %v518 = vlaneseq
    %v519 = vshrl.u32 %v518, 7
    %v520 = vsub.s32 0, %v519
    %v521 = vrot.slane %v268, %v520
    %v522 = vlaneseq
    %v523 = vshrl.u32 %v522, 7
    %v524 = vsub.s32 1, %v523
    %v525 = vrot.slane %v268, %v524
    %v526 = vlaneseq
    %v527 = vshrl.u32 %v526, 7
    %v528 = vsub.s32 2, %v527
    %v529 = vrot.slane %v268, %v528
    %v530 = vlaneseq
    %v531 = vshrl.u32 %v530, 7
    %v532 = vsub.s32 3, %v531
    %v533 = vrot.slane %v268, %v532
    %v534 = vlaneseq
    %v535 = vshrl.u32 %v534, 7
    %v536 = vsub.s32 4, %v535
    %v537 = vrot.slane %v268, %v536
    %v538 = vlaneseq
    %v539 = vshrl.u32 %v538, 7
    %v540 = vsub.s32 5, %v539
    %v541 = vrot.slane %v268, %v540
    %v542 = vlaneseq
    %v543 = vshrl.u32 %v542, 7
    %v544 = vsub.s32 6, %v543
    %v545 = vrot.slane %v268, %v544
    %v546 = vlaneseq
    %v547 = vshrl.u32 %v546, 7
    %v548 = vsub.s32 7, %v547
    %v549 = vrot.slane %v268, %v548
    %558 = vmatprep.subr.mxu0 %v141
    %559 = vmatpush1.msra.mxu0 %v140
    %560 = vmatprep.subr.mxu0 %v149
    %561 = vmatpush1.msra.mxu0 %v148
    %562 = vmatprep.subr.mxu0 %v157
    %563 = vmatpush1.msra.mxu0 %v156
    %564 = vmatprep.subr.mxu0 %v165
    %565 = vmatpush1.msra.mxu0 %v164
    %566 = vmatprep.subr.mxu0 %v173
    %567 = vmatpush1.msra.mxu0 %v172
    %568 = vmatprep.subr.mxu0 %v181
    %569 = vmatpush1.msra.mxu0 %v180
    %570 = vmatprep.subr.mxu0 %v189
    %571 = vmatpush1.msra.mxu0 %v188
    %572 = vmatprep.subr.mxu0 %v197
    %573 = vmatpush1.msra.mxu0 %v196
    %574 = vmatprep.subr.mxu0 %v205
    %575 = vmatpush1.msra.mxu0 %v204
    %576 = vmatprep.subr.mxu0 %v213
    %577 = vmatpush1.msra.mxu0 %v212
    %578 = vmatprep.subr.mxu0 %v221
    %579 = vmatpush1.msra.mxu0 %v220
    %580 = vmatprep.subr.mxu0 %v229
    %581 = vmatpush1.msra.mxu0 %v228
    %582 = vmatprep.subr.mxu0 %v237
    %583 = vmatpush1.msra.mxu0 %v236
    %584 = vmatprep.subr.mxu0 %v245
    %585 = vmatpush1.msra.mxu0 %v244
    %586 = vmatprep.subr.mxu0 %v253
    %587 = vmatpush1.msra.mxu0 %v252
    %588 = vmatprep.subr.mxu0 %v261
    %589 = vmatpush1.msra.mxu0 %v260
    %590 = vmatprep.subr.mxu0 0.0
    %591 = vmatpush1.msra.mxu0 0.0
    %592 = vmatprep.subr.mxu0 0.0
    %593 = vmatpush1.msra.mxu0 0.0
    %594 = vmatprep.subr.mxu0 0.0
    %595 = vmatpush1.msra.mxu0 0.0
    %596 = vmatprep.subr.mxu0 0.0
    %597 = vmatpush1.msra.mxu0 0.0
    %598 = vmatprep.subr.mxu0 0.0
    %599 = vmatpush1.msra.mxu0 0.0
    %600 = vmatprep.subr.mxu0 0.0
    %601 = vmatpush1.msra.mxu0 0.0
    %602 = vmatprep.subr.mxu0 0.0
    %603 = vmatpush1.msra.mxu0 0.0
    %604 = vmatprep.subr.mxu0 0.0
    %605 = vmatpush1.msra.mxu0 0.0
    %606 = vmatprep.subr.mxu0 0.0
    %607 = vmatpush1.msra.mxu0 0.0
    %608 = vmatprep.subr.mxu0 0.0
    %609 = vmatpush1.msra.mxu0 0.0
    %610 = vmatprep.subr.mxu0 0.0
    %611 = vmatpush1.msra.mxu0 0.0
    %612 = vmatprep.subr.mxu0 0.0
    %613 = vmatpush1.msra.mxu0 0.0
    %614 = vmatprep.subr.mxu0 0.0
    %615 = vmatpush1.msra.mxu0 0.0
    %616 = vmatprep.subr.mxu0 0.0
    %617 = vmatpush1.msra.mxu0 0.0
    %618 = vmatprep.subr.mxu0 0.0
    %619 = vmatpush1.msra.mxu0 0.0
    %620 = vmatprep.subr.mxu0 0.0
    %621 = vmatpush1.msra.mxu0 0.0
    %622 = vmatprep.mubr.f32.mxu0 0.0
    %623 = vmatmul.mubr.f32.gmra.mrb[0].mxu0 %v513
    %v624 = vpop.f32.mrb[0].mxu0
    %v625 = vadd.f32 %v521, %v624
    %v626 = vpop.f32.mrb[0].mxu0
    %v627 = vadd.f32 %v525, %v626
    %628 = vmatprep.mubr.f32.mxu0 0.0
    %629 = vmatmul.mubr.f32.gmra.mrb[0].mxu0 %v514
    %v630 = vpop.f32.mrb[0].mxu0
    %v631 = vadd.f32 %v521, %v630
    %v632 = vpop.f32.mrb[0].mxu0
    %v633 = vadd.f32 %v525, %v632
    %634 = vmatprep.mubr.f32.mxu0 0.0
    %635 = vmatmul.mubr.f32.gmra.mrb[0].mxu0 %v515
    %v636 = vpop.f32.mrb[0].mxu0
    %v637 = vadd.f32 %v521, %v636
    %v638 = vpop.f32.mrb[0].mxu0
    %v639 = vadd.f32 %v525, %v638
    %640 = vmatprep.mubr.f32.mxu0 0.0
    %641 = vmatmul.mubr.f32.gmra.mrb[0].mxu0 %v516
    %v642 = vpop.f32.mrb[0].mxu0
    %v643 = vadd.f32 %v521, %v642
    %v644 = vpop.f32.mrb[0].mxu0
    %v645 = vadd.f32 %v525, %v644
    %646 = vdwg.mxu0
    %647 = vmatprep.subr.mxu0 %v143
    %648 = vmatpush1.msra.mxu0 %v142
    %649 = vmatprep.subr.mxu0 %v151
    %650 = vmatpush1.msra.mxu0 %v150
    %651 = vmatprep.subr.mxu0 %v159
    %652 = vmatpush1.msra.mxu0 %v158
    %653 = vmatprep.subr.mxu0 %v167
    %654 = vmatpush1.msra.mxu0 %v166
    %655 = vmatprep.subr.mxu0 %v175
    %656 = vmatpush1.msra.mxu0 %v174
    %657 = vmatprep.subr.mxu0 %v183
    %658 = vmatpush1.msra.mxu0 %v182
    %659 = vmatprep.subr.mxu0 %v191
    %660 = vmatpush1.msra.mxu0 %v190
    %661 = vmatprep.subr.mxu0 %v199
    %662 = vmatpush1.msra.mxu0 %v198
    %663 = vmatprep.subr.mxu0 %v207
    %664 = vmatpush1.msra.mxu0 %v206
    %665 = vmatprep.subr.mxu0 %v215
    %666 = vmatpush1.msra.mxu0 %v214
    %667 = vmatprep.subr.mxu0 %v223
    %668 = vmatpush1.msra.mxu0 %v222
    %669 = vmatprep.subr.mxu0 %v231
    %670 = vmatpush1.msra.mxu0 %v230
    %671 = vmatprep.subr.mxu0 %v239
    %672 = vmatpush1.msra.mxu0 %v238
    %673 = vmatprep.subr.mxu0 %v247
    %674 = vmatpush1.msra.mxu0 %v246
    %675 = vmatprep.subr.mxu0 %v255
    %676 = vmatpush1.msra.mxu0 %v254
    %677 = vmatprep.subr.mxu0 %v263
    %678 = vmatpush1.msra.mxu0 %v262
    %679 = vmatprep.subr.mxu0 0.0
    %680 = vmatpush1.msra.mxu0 0.0
    %681 = vmatprep.subr.mxu0 0.0
    %682 = vmatpush1.msra.mxu0 0.0
    %683 = vmatprep.subr.mxu0 0.0
    %684 = vmatpush1.msra.mxu0 0.0
    %685 = vmatprep.subr.mxu0 0.0
    %686 = vmatpush1.msra.mxu0 0.0
    %687 = vmatprep.subr.mxu0 0.0
    %688 = vmatpush1.msra.mxu0 0.0
    %689 = vmatprep.subr.mxu0 0.0
    %690 = vmatpush1.msra.mxu0 0.0
    %691 = vmatprep.subr.mxu0 0.0
    %692 = vmatpush1.msra.mxu0 0.0
    %693 = vmatprep.subr.mxu0 0.0
    %694 = vmatpush1.msra.mxu0 0.0
    %695 = vmatprep.subr.mxu0 0.0
    %696 = vmatpush1.msra.mxu0 0.0
    %697 = vmatprep.subr.mxu0 0.0
    %698 = vmatpush1.msra.mxu0 0.0
    %699 = vmatprep.subr.mxu0 0.0
    %700 = vmatpush1.msra.mxu0 0.0
    %701 = vmatprep.subr.mxu0 0.0
    %702 = vmatpush1.msra.mxu0 0.0
    %703 = vmatprep.subr.mxu0 0.0
    %704 = vmatpush1.msra.mxu0 0.0
    %705 = vmatprep.subr.mxu0 0.0
    %706 = vmatpush1.msra.mxu0 0.0
    %707 = vmatprep.subr.mxu0 0.0
    %708 = vmatpush1.msra.mxu0 0.0
    %709 = vmatprep.subr.mxu0 0.0
    %710 = vmatpush1.msra.mxu0 0.0
    %711 = vmatprep.mubr.f32.mxu0 0.0
    %712 = vmatmul.mubr.f32.gmra.mrb[0].mxu0 %v513
    %v713 = vpop.f32.mrb[0].mxu0
    %v714 = vadd.f32 %v529, %v713
    %v715 = vpop.f32.mrb[0].mxu0
    %v716 = vadd.f32 %v533, %v715
    %717 = vmatprep.mubr.f32.mxu0 0.0
    %718 = vmatmul.mubr.f32.gmra.mrb[0].mxu0 %v514
    %v719 = vpop.f32.mrb[0].mxu0
    %v720 = vadd.f32 %v529, %v719
    %v721 = vpop.f32.mrb[0].mxu0
    %v722 = vadd.f32 %v533, %v721
    %723 = vmatprep.mubr.f32.mxu0 0.0
    %724 = vmatmul.mubr.f32.gmra.mrb[0].mxu0 %v515
    %v725 = vpop.f32.mrb[0].mxu0
    %v726 = vadd.f32 %v529, %v725
    %v727 = vpop.f32.mrb[0].mxu0
    %v728 = vadd.f32 %v533, %v727
    %729 = vmatprep.mubr.f32.mxu0 0.0
    %730 = vmatmul.mubr.f32.gmra.mrb[0].mxu0 %v516
    %v731 = vpop.f32.mrb[0].mxu0
    %v732 = vadd.f32 %v529, %v731
    %v733 = vpop.f32.mrb[0].mxu0
    %v734 = vadd.f32 %v533, %v733
    %735 = vdwg.mxu0
    %736 = vmatprep.subr.mxu0 %v145
    %737 = vmatpush1.msra.mxu0 %v144
    %738 = vmatprep.subr.mxu0 %v153
    %739 = vmatpush1.msra.mxu0 %v152
    %740 = vmatprep.subr.mxu0 %v161
    %741 = vmatpush1.msra.mxu0 %v160
    %742 = vmatprep.subr.mxu0 %v169
    %743 = vmatpush1.msra.mxu0 %v168
    %744 = vmatprep.subr.mxu0 %v177
    %745 = vmatpush1.msra.mxu0 %v176
    %746 = vmatprep.subr.mxu0 %v185
    %747 = vmatpush1.msra.mxu0 %v184
    %748 = vmatprep.subr.mxu0 %v193
    %749 = vmatpush1.msra.mxu0 %v192
    %750 = vmatprep.subr.mxu0 %v201
    %751 = vmatpush1.msra.mxu0 %v200
    %752 = vmatprep.subr.mxu0 %v209
    %753 = vmatpush1.msra.mxu0 %v208
    %754 = vmatprep.subr.mxu0 %v217
    %755 = vmatpush1.msra.mxu0 %v216
    %756 = vmatprep.subr.mxu0 %v225
    %757 = vmatpush1.msra.mxu0 %v224
    %758 = vmatprep.subr.mxu0 %v233
    %759 = vmatpush1.msra.mxu0 %v232
    %760 = vmatprep.subr.mxu0 %v241
    %761 = vmatpush1.msra.mxu0 %v240
    %762 = vmatprep.subr.mxu0 %v249
    %763 = vmatpush1.msra.mxu0 %v248
    %764 = vmatprep.subr.mxu0 %v257
    %765 = vmatpush1.msra.mxu0 %v256
    %766 = vmatprep.subr.mxu0 %v265
    %767 = vmatpush1.msra.mxu0 %v264
    %768 = vmatprep.subr.mxu0 0.0
    %769 = vmatpush1.msra.mxu0 0.0
    %770 = vmatprep.subr.mxu0 0.0
    %771 = vmatpush1.msra.mxu0 0.0
    %772 = vmatprep.subr.mxu0 0.0
    %773 = vmatpush1.msra.mxu0 0.0
    %774 = vmatprep.subr.mxu0 0.0
    %775 = vmatpush1.msra.mxu0 0.0
    %776 = vmatprep.subr.mxu0 0.0
    %777 = vmatpush1.msra.mxu0 0.0
    %778 = vmatprep.subr.mxu0 0.0
    %779 = vmatpush1.msra.mxu0 0.0
    %780 = vmatprep.subr.mxu0 0.0
    %781 = vmatpush1.msra.mxu0 0.0
    %782 = vmatprep.subr.mxu0 0.0
    %783 = vmatpush1.msra.mxu0 0.0
    %784 = vmatprep.subr.mxu0 0.0
    %785 = vmatpush1.msra.mxu0 0.0
    %786 = vmatprep.subr.mxu0 0.0
    %787 = vmatpush1.msra.mxu0 0.0
    %788 = vmatprep.subr.mxu0 0.0
    %789 = vmatpush1.msra.mxu0 0.0
    %790 = vmatprep.subr.mxu0 0.0
    %791 = vmatpush1.msra.mxu0 0.0
    %792 = vmatprep.subr.mxu0 0.0
    %793 = vmatpush1.msra.mxu0 0.0
    %794 = vmatprep.subr.mxu0 0.0
    %795 = vmatpush1.msra.mxu0 0.0
    %796 = vmatprep.subr.mxu0 0.0
    %797 = vmatpush1.msra.mxu0 0.0
    %798 = vmatprep.subr.mxu0 0.0
    %799 = vmatpush1.msra.mxu0 0.0
    %800 = vmatprep.mubr.f32.mxu0 0.0
    %801 = vmatmul.mubr.f32.gmra.mrb[0].mxu0 %v513
    %v802 = vpop.f32.mrb[0].mxu0
    %v803 = vadd.f32 %v537, %v802
    %v804 = vpop.f32.mrb[0].mxu0
    %v805 = vadd.f32 %v541, %v804
    %806 = vmatprep.mubr.f32.mxu0 0.0
    %807 = vmatmul.mubr.f32.gmra.mrb[0].mxu0 %v514
    %v808 = vpop.f32.mrb[0].mxu0
    %v809 = vadd.f32 %v537, %v808
    %v810 = vpop.f32.mrb[0].mxu0
    %v811 = vadd.f32 %v541, %v810
    %812 = vmatprep.mubr.f32.mxu0 0.0
    %813 = vmatmul.mubr.f32.gmra.mrb[0].mxu0 %v515
    %v814 = vpop.f32.mrb[0].mxu0
    %v815 = vadd.f32 %v537, %v814
    %v816 = vpop.f32.mrb[0].mxu0
    %v817 = vadd.f32 %v541, %v816
    %818 = vmatprep.mubr.f32.mxu0 0.0
    %819 = vmatmul.mubr.f32.gmra.mrb[0].mxu0 %v516
    %v820 = vpop.f32.mrb[0].mxu0
    %v821 = vadd.f32 %v537, %v820
    %v822 = vpop.f32.mrb[0].mxu0
    %v823 = vadd.f32 %v541, %v822
    %824 = vdwg.mxu0
    %825 = vmatprep.subr.mxu0 %v147
    %826 = vmatpush1.msra.mxu0 %v146
    %827 = vmatprep.subr.mxu0 %v155
    %828 = vmatpush1.msra.mxu0 %v154
    %829 = vmatprep.subr.mxu0 %v163
    %830 = vmatpush1.msra.mxu0 %v162
    %831 = vmatprep.subr.mxu0 %v171
    %832 = vmatpush1.msra.mxu0 %v170
    %833 = vmatprep.subr.mxu0 %v179
    %834 = vmatpush1.msra.mxu0 %v178
    %835 = vmatprep.subr.mxu0 %v187
    %836 = vmatpush1.msra.mxu0 %v186
    %837 = vmatprep.subr.mxu0 %v195
    %838 = vmatpush1.msra.mxu0 %v194
    %839 = vmatprep.subr.mxu0 %v203
    %840 = vmatpush1.msra.mxu0 %v202
    %841 = vmatprep.subr.mxu0 %v211
    %842 = vmatpush1.msra.mxu0 %v210
    %843 = vmatprep.subr.mxu0 %v219
    %844 = vmatpush1.msra.mxu0 %v218
    %845 = vmatprep.subr.mxu0 %v227
    %846 = vmatpush1.msra.mxu0 %v226
    %847 = vmatprep.subr.mxu0 %v235
    %848 = vmatpush1.msra.mxu0 %v234
    %849 = vmatprep.subr.mxu0 %v243
    %850 = vmatpush1.msra.mxu0 %v242
    %851 = vmatprep.subr.mxu0 %v251
    %852 = vmatpush1.msra.mxu0 %v250
    %853 = vmatprep.subr.mxu0 %v259
    %854 = vmatpush1.msra.mxu0 %v258
    %855 = vmatprep.subr.mxu0 %v267
    %856 = vmatpush1.msra.mxu0 %v266
    %857 = vmatprep.subr.mxu0 0.0
    %858 = vmatpush1.msra.mxu0 0.0
    %859 = vmatprep.subr.mxu0 0.0
    %860 = vmatpush1.msra.mxu0 0.0
    %861 = vmatprep.subr.mxu0 0.0
    %862 = vmatpush1.msra.mxu0 0.0
    %863 = vmatprep.subr.mxu0 0.0
    %864 = vmatpush1.msra.mxu0 0.0
    %865 = vmatprep.subr.mxu0 0.0
    %866 = vmatpush1.msra.mxu0 0.0
    %867 = vmatprep.subr.mxu0 0.0
    %868 = vmatpush1.msra.mxu0 0.0
    %869 = vmatprep.subr.mxu0 0.0
    %870 = vmatpush1.msra.mxu0 0.0
    %871 = vmatprep.subr.mxu0 0.0
    %872 = vmatpush1.msra.mxu0 0.0
    %873 = vmatprep.subr.mxu0 0.0
    %874 = vmatpush1.msra.mxu0 0.0
    %875 = vmatprep.subr.mxu0 0.0
    %876 = vmatpush1.msra.mxu0 0.0
    %877 = vmatprep.subr.mxu0 0.0
    %878 = vmatpush1.msra.mxu0 0.0
    %879 = vmatprep.subr.mxu0 0.0
    %880 = vmatpush1.msra.mxu0 0.0
    %881 = vmatprep.subr.mxu0 0.0
    %882 = vmatpush1.msra.mxu0 0.0
    %883 = vmatprep.subr.mxu0 0.0
    %884 = vmatpush1.msra.mxu0 0.0
    %885 = vmatprep.subr.mxu0 0.0
    %886 = vmatpush1.msra.mxu0 0.0
    %887 = vmatprep.subr.mxu0 0.0
    %888 = vmatpush1.msra.mxu0 0.0
    %889 = vmatprep.mubr.f32.mxu0 0.0
    %890 = vmatmul.mubr.f32.gmra.mrb[0].mxu0 %v513
    %v891 = vpop.f32.mrb[0].mxu0
    %v892 = vadd.f32 %v545, %v891
    %v893 = vpop.f32.mrb[0].mxu0
    %v894 = vadd.f32 %v549, %v893
    %895 = vmatprep.mubr.f32.mxu0 0.0
    %896 = vmatmul.mubr.f32.gmra.mrb[0].mxu0 %v514
    %v897 = vpop.f32.mrb[0].mxu0
    %v898 = vadd.f32 %v545, %v897
    %v899 = vpop.f32.mrb[0].mxu0
    %v900 = vadd.f32 %v549, %v899
    %901 = vmatprep.mubr.f32.mxu0 0.0
    %902 = vmatmul.mubr.f32.gmra.mrb[0].mxu0 %v515
    %v903 = vpop.f32.mrb[0].mxu0
    %v904 = vadd.f32 %v545, %v903
    %v905 = vpop.f32.mrb[0].mxu0
    %v906 = vadd.f32 %v549, %v905
    %907 = vmatprep.mubr.f32.mxu0 0.0
    %908 = vmatmul.mubr.f32.gmra.mrb[0].mxu0 %v516
    %v909 = vpop.f32.mrb[0].mxu0
    %v910 = vadd.f32 %v545, %v909
    %v911 = vpop.f32.mrb[0].mxu0
    %v912 = vadd.f32 %v549, %v911
    %913 = vdwg.mxu0
    %v914 = vmax.f32 %v625, 0.0
    %v915 = vmax.f32 %v627, 0.0
    %v916 = vmax.f32 %v714, 0.0
    %v917 = vmax.f32 %v716, 0.0
    %v918 = vmax.f32 %v803, 0.0
    %v919 = vmax.f32 %v805, 0.0
    %v920 = vmax.f32 %v892, 0.0
    %v921 = vmax.f32 %v894, 0.0
    %v922 = vmax.f32 %v631, 0.0
    %v923 = vmax.f32 %v633, 0.0
    %v924 = vmax.f32 %v720, 0.0
    %v925 = vmax.f32 %v722, 0.0
    %v926 = vmax.f32 %v809, 0.0
    %v927 = vmax.f32 %v811, 0.0
    %v928 = vmax.f32 %v898, 0.0
    %v929 = vmax.f32 %v900, 0.0
    %v930 = vmax.f32 %v637, 0.0
    %v931 = vmax.f32 %v639, 0.0
    %v932 = vmax.f32 %v726, 0.0
    %v933 = vmax.f32 %v728, 0.0
    %v934 = vmax.f32 %v815, 0.0
    %v935 = vmax.f32 %v817, 0.0
    %v936 = vmax.f32 %v904, 0.0
    %v937 = vmax.f32 %v906, 0.0
    %v938 = vmax.f32 %v643, 0.0
    %v939 = vmax.f32 %v645, 0.0
    %v940 = vmax.f32 %v732, 0.0
    %v941 = vmax.f32 %v734, 0.0
    %v942 = vmax.f32 %v821, 0.0
    %v943 = vmax.f32 %v823, 0.0
    %v944 = vmax.f32 %v910, 0.0
    %v945 = vmax.f32 %v912, 0.0
    %v947 = vlaneseq
    %v948 = vshrl.u32 %v947, 7
    %v949 = vsub.s32 0, %v948
    %v950 = vrot.slane %v269, %v949
    %v951 = vlaneseq
    %v952 = vshrl.u32 %v951, 7
    %v953 = vsub.s32 1, %v952
    %v954 = vrot.slane %v269, %v953
    %v955 = vlaneseq
    %v956 = vshrl.u32 %v955, 7
    %v957 = vsub.s32 2, %v956
    %v958 = vrot.slane %v269, %v957
    %v959 = vlaneseq
    %v960 = vshrl.u32 %v959, 7
    %v961 = vsub.s32 3, %v960
    %v962 = vrot.slane %v269, %v961
    %v963 = vlaneseq
    %v964 = vshrl.u32 %v963, 7
    %v965 = vsub.s32 4, %v964
    %v966 = vrot.slane %v269, %v965
    %v967 = vlaneseq
    %v968 = vshrl.u32 %v967, 7
    %v969 = vsub.s32 5, %v968
    %v970 = vrot.slane %v269, %v969
    %v971 = vlaneseq
    %v972 = vshrl.u32 %v971, 7
    %v973 = vsub.s32 6, %v972
    %v974 = vrot.slane %v269, %v973
    %v975 = vlaneseq
    %v976 = vshrl.u32 %v975, 7
    %v977 = vsub.s32 7, %v976
    %v978 = vrot.slane %v269, %v977
    %v987 = vmul.f32 %v914, %v950
    %v988 = vmul.f32 %v915, %v954
    %v989 = vmul.f32 %v916, %v958
    %v990 = vmul.f32 %v917, %v962
    %v991 = vmul.f32 %v918, %v966
    %v992 = vmul.f32 %v919, %v970
    %v993 = vmul.f32 %v920, %v974
    %v994 = vmul.f32 %v921, %v978
    %v995 = vmul.f32 %v922, %v950
    %v996 = vmul.f32 %v923, %v954
    %v997 = vmul.f32 %v924, %v958
    %v998 = vmul.f32 %v925, %v962
    %v999 = vmul.f32 %v926, %v966
    %v1000 = vmul.f32 %v927, %v970
    %v1001 = vmul.f32 %v928, %v974
    %v1002 = vmul.f32 %v929, %v978
    %v1003 = vmul.f32 %v930, %v950
    %v1004 = vmul.f32 %v931, %v954
    %v1005 = vmul.f32 %v932, %v958
    %v1006 = vmul.f32 %v933, %v962
    %v1007 = vmul.f32 %v934, %v966
    %v1008 = vmul.f32 %v935, %v970
    %v1009 = vmul.f32 %v936, %v974
    %v1010 = vmul.f32 %v937, %v978
    %v1011 = vmul.f32 %v938, %v950
    %v1012 = vmul.f32 %v939, %v954
    %v1013 = vmul.f32 %v940, %v958
    %v1014 = vmul.f32 %v941, %v962
    %v1015 = vmul.f32 %v942, %v966
    %v1016 = vmul.f32 %v943, %v970
    %v1017 = vmul.f32 %v944, %v974
    %v1018 = vmul.f32 %v945, %v978
    %v1020 = vlaneseq
    %v1021 = vshrl.u32 %v1020, 7
    %v1022 = vsub.s32 0, %v1021
    %v1023 = vrot.slane %v270, %v1022
    %v1024 = vlaneseq
    %v1025 = vshrl.u32 %v1024, 7
    %v1026 = vsub.s32 1, %v1025
    %v1027 = vrot.slane %v270, %v1026
    %v1028 = vlaneseq
    %v1029 = vshrl.u32 %v1028, 7
    %v1030 = vsub.s32 2, %v1029
    %v1031 = vrot.slane %v270, %v1030
    %v1032 = vlaneseq
    %v1033 = vshrl.u32 %v1032, 7
    %v1034 = vsub.s32 3, %v1033
    %v1035 = vrot.slane %v270, %v1034
    %v1036 = vlaneseq
    %v1037 = vshrl.u32 %v1036, 7
    %v1038 = vsub.s32 4, %v1037
    %v1039 = vrot.slane %v270, %v1038
    %v1040 = vlaneseq
    %v1041 = vshrl.u32 %v1040, 7
    %v1042 = vsub.s32 5, %v1041
    %v1043 = vrot.slane %v270, %v1042
    %v1044 = vlaneseq
    %v1045 = vshrl.u32 %v1044, 7
    %v1046 = vsub.s32 6, %v1045
    %v1047 = vrot.slane %v270, %v1046
    %v1048 = vlaneseq
    %v1049 = vshrl.u32 %v1048, 7
    %v1050 = vsub.s32 7, %v1049
    %v1051 = vrot.slane %v270, %v1050
    %v1060 = vadd.f32 %v987, %v1023
    %v1061 = vadd.f32 %v988, %v1027
    %v1062 = vadd.f32 %v989, %v1031
    %v1063 = vadd.f32 %v990, %v1035
    %v1064 = vadd.f32 %v991, %v1039
    %v1065 = vadd.f32 %v992, %v1043
    %v1066 = vadd.f32 %v993, %v1047
    %v1067 = vadd.f32 %v994, %v1051
    %v1068 = vadd.f32 %v995, %v1023
    %v1069 = vadd.f32 %v996, %v1027
    %v1070 = vadd.f32 %v997, %v1031
    %v1071 = vadd.f32 %v998, %v1035
    %v1072 = vadd.f32 %v999, %v1039
    %v1073 = vadd.f32 %v1000, %v1043
    %v1074 = vadd.f32 %v1001, %v1047
    %v1075 = vadd.f32 %v1002, %v1051
    %v1076 = vadd.f32 %v1003, %v1023
    %v1077 = vadd.f32 %v1004, %v1027
    %v1078 = vadd.f32 %v1005, %v1031
    %v1079 = vadd.f32 %v1006, %v1035
    %v1080 = vadd.f32 %v1007, %v1039
    %v1081 = vadd.f32 %v1008, %v1043
    %v1082 = vadd.f32 %v1009, %v1047
    %v1083 = vadd.f32 %v1010, %v1051
    %v1084 = vadd.f32 %v1011, %v1023
    %v1085 = vadd.f32 %v1012, %v1027
    %v1086 = vadd.f32 %v1013, %v1031
    %v1087 = vadd.f32 %v1014, %v1035
    %v1088 = vadd.f32 %v1015, %v1039
    %v1089 = vadd.f32 %v1016, %v1043
    %v1090 = vadd.f32 %v1017, %v1047
    %v1091 = vadd.f32 %v1018, %v1051
    %1092 = vrot.lane.b32.xlu0 %v1060, 127
    %v1093 = vpop.permute.xlu0 %1092
    %1094 = vrot.lane.b32.xlu0 %v1068, 127
    %v1095 = vpop.permute.xlu0 %1094
    %1096 = vrot.lane.b32.xlu0 %v1076, 127
    %v1097 = vpop.permute.xlu0 %1096
    %1098 = vrot.lane.b32.xlu0 %v1084, 127
    %v1099 = vpop.permute.xlu0 %1098
    %1100 = vrot.lane.b32.xlu0 %v1061, 127
    %v1101 = vpop.permute.xlu0 %1100
    %1102 = vrot.lane.b32.xlu0 %v1069, 127
    %v1103 = vpop.permute.xlu0 %1102
    %1104 = vrot.lane.b32.xlu0 %v1077, 127
    %v1105 = vpop.permute.xlu0 %1104
    %1106 = vrot.lane.b32.xlu0 %v1085, 127
    %v1107 = vpop.permute.xlu0 %1106
    %1108 = vrot.lane.b32.xlu0 %v1062, 127
    %v1109 = vpop.permute.xlu0 %1108
    %1110 = vrot.lane.b32.xlu0 %v1070, 127
    %v1111 = vpop.permute.xlu0 %1110
    %1112 = vrot.lane.b32.xlu0 %v1078, 127
    %v1113 = vpop.permute.xlu0 %1112
    %1114 = vrot.lane.b32.xlu0 %v1086, 127
    %v1115 = vpop.permute.xlu0 %1114
    %1116 = vrot.lane.b32.xlu0 %v1063, 127
    %v1117 = vpop.permute.xlu0 %1116
    %1118 = vrot.lane.b32.xlu0 %v1071, 127
    %v1119 = vpop.permute.xlu0 %1118
    %1120 = vrot.lane.b32.xlu0 %v1079, 127
    %v1121 = vpop.permute.xlu0 %1120
    %1122 = vrot.lane.b32.xlu0 %v1087, 127
    %v1123 = vpop.permute.xlu0 %1122
    %1124 = vrot.lane.b32.xlu0 %v1064, 127
    %v1125 = vpop.permute.xlu0 %1124
    %1126 = vrot.lane.b32.xlu0 %v1072, 127
    %v1127 = vpop.permute.xlu0 %1126
    %1128 = vrot.lane.b32.xlu0 %v1080, 127
    %v1129 = vpop.permute.xlu0 %1128
    %1130 = vrot.lane.b32.xlu0 %v1088, 127
    %v1131 = vpop.permute.xlu0 %1130
    %1132 = vrot.lane.b32.xlu0 %v1065, 127
    %v1133 = vpop.permute.xlu0 %1132
    %1134 = vrot.lane.b32.xlu0 %v1073, 127
    %v1135 = vpop.permute.xlu0 %1134
    %1136 = vrot.lane.b32.xlu0 %v1081, 127
    %v1137 = vpop.permute.xlu0 %1136
    %1138 = vrot.lane.b32.xlu0 %v1089, 127
    %v1139 = vpop.permute.xlu0 %1138
    %1140 = vrot.lane.b32.xlu0 %v1066, 127
    %v1141 = vpop.permute.xlu0 %1140
    %1142 = vrot.lane.b32.xlu0 %v1074, 127
    %v1143 = vpop.permute.xlu0 %1142
    %1144 = vrot.lane.b32.xlu0 %v1082, 127
    %v1145 = vpop.permute.xlu0 %1144
    %1146 = vrot.lane.b32.xlu0 %v1090, 127
    %v1147 = vpop.permute.xlu0 %1146
    %1148 = vrot.lane.b32.xlu0 %v1067, 127
    %v1149 = vpop.permute.xlu0 %1148
    %1150 = vrot.lane.b32.xlu0 %v1075, 127
    %v1151 = vpop.permute.xlu0 %1150
    %1152 = vrot.lane.b32.xlu0 %v1083, 127
    %v1153 = vpop.permute.xlu0 %1152
    %1154 = vrot.lane.b32.xlu0 %v1091, 127
    %v1155 = vpop.permute.xlu0 %1154
    %v1156 = vlaneseq
    %v1157 = vand.u32 %v1156, 127
    %vm1158 = vcmp.lt.s32.totalorder %v1157, 127
    %v1159 = vsel %vm1158, %v1141, %v1149
    %v1160 = vsel %vm1158, %v1143, %v1151
    %v1161 = vsel %vm1158, %v1145, %v1153
    %v1162 = vsel %vm1158, %v1147, %v1155
    %v1163 = vsel %vm1158, %v1133, %v1141
    %v1164 = vsel %vm1158, %v1135, %v1143
    %v1165 = vsel %vm1158, %v1137, %v1145
    %v1166 = vsel %vm1158, %v1139, %v1147
    %v1167 = vsel %vm1158, %v1125, %v1133
    %v1168 = vsel %vm1158, %v1127, %v1135
    %v1169 = vsel %vm1158, %v1129, %v1137
    %v1170 = vsel %vm1158, %v1131, %v1139
    %v1171 = vsel %vm1158, %v1117, %v1125
    %v1172 = vsel %vm1158, %v1119, %v1127
    %v1173 = vsel %vm1158, %v1121, %v1129
    %v1174 = vsel %vm1158, %v1123, %v1131
    %v1175 = vsel %vm1158, %v1109, %v1117
    %v1176 = vsel %vm1158, %v1111, %v1119
    %v1177 = vsel %vm1158, %v1113, %v1121
    %v1178 = vsel %vm1158, %v1115, %v1123
    %v1179 = vsel %vm1158, %v1101, %v1109
    %v1180 = vsel %vm1158, %v1103, %v1111
    %v1181 = vsel %vm1158, %v1105, %v1113
    %v1182 = vsel %vm1158, %v1107, %v1115
    %v1183 = vsel %vm1158, %v1093, %v1101
    %v1184 = vsel %vm1158, %v1095, %v1103
    %v1185 = vsel %vm1158, %v1097, %v1105
    %v1186 = vsel %vm1158, %v1099, %v1107
    %v1187 = vsel %vm1158, %v1149, %v1093
    %v1188 = vsel %vm1158, %v1151, %v1095
    %v1189 = vsel %vm1158, %v1153, %v1097
    %v1190 = vsel %vm1158, %v1155, %v1099
    %v1191 = vmax.f32 %v1060, %v1183
    %v1192 = vmax.f32 %v1061, %v1179
    %v1193 = vmax.f32 %v1062, %v1175
    %v1194 = vmax.f32 %v1063, %v1171
    %v1195 = vmax.f32 %v1064, %v1167
    %v1196 = vmax.f32 %v1065, %v1163
    %v1197 = vmax.f32 %v1066, %v1159
    %v1198 = vmax.f32 %v1067, %v1187
    %v1199 = vmax.f32 %v1068, %v1184
    %v1200 = vmax.f32 %v1069, %v1180
    %v1201 = vmax.f32 %v1070, %v1176
    %v1202 = vmax.f32 %v1071, %v1172
    %v1203 = vmax.f32 %v1072, %v1168
    %v1204 = vmax.f32 %v1073, %v1164
    %v1205 = vmax.f32 %v1074, %v1160
    %v1206 = vmax.f32 %v1075, %v1188
    %v1207 = vmax.f32 %v1076, %v1185
    %v1208 = vmax.f32 %v1077, %v1181
    %v1209 = vmax.f32 %v1078, %v1177
    %v1210 = vmax.f32 %v1079, %v1173
    %v1211 = vmax.f32 %v1080, %v1169
    %v1212 = vmax.f32 %v1081, %v1165
    %v1213 = vmax.f32 %v1082, %v1161
    %v1214 = vmax.f32 %v1083, %v1189
    %v1215 = vmax.f32 %v1084, %v1186
    %v1216 = vmax.f32 %v1085, %v1182
    %v1217 = vmax.f32 %v1086, %v1178
    %v1218 = vmax.f32 %v1087, %v1174
    %v1219 = vmax.f32 %v1088, %v1170
    %v1220 = vmax.f32 %v1089, %v1166
    %v1221 = vmax.f32 %v1090, %v1162
    %v1222 = vmax.f32 %v1091, %v1190
    %1223 = vrot.lane.b32.xlu0 %v1191, 126
    %v1224 = vpop.permute.xlu0 %1223
    %1225 = vrot.lane.b32.xlu0 %v1199, 126
    %v1226 = vpop.permute.xlu0 %1225
    %1227 = vrot.lane.b32.xlu0 %v1207, 126
    %v1228 = vpop.permute.xlu0 %1227
    %1229 = vrot.lane.b32.xlu0 %v1215, 126
    %v1230 = vpop.permute.xlu0 %1229
    %1231 = vrot.lane.b32.xlu0 %v1192, 126
    %v1232 = vpop.permute.xlu0 %1231
    %1233 = vrot.lane.b32.xlu0 %v1200, 126
    %v1234 = vpop.permute.xlu0 %1233
    %1235 = vrot.lane.b32.xlu0 %v1208, 126
    %v1236 = vpop.permute.xlu0 %1235
    %1237 = vrot.lane.b32.xlu0 %v1216, 126
    %v1238 = vpop.permute.xlu0 %1237
    %1239 = vrot.lane.b32.xlu0 %v1193, 126
    %v1240 = vpop.permute.xlu0 %1239
    %1241 = vrot.lane.b32.xlu0 %v1201, 126
    %v1242 = vpop.permute.xlu0 %1241
    %1243 = vrot.lane.b32.xlu0 %v1209, 126
    %v1244 = vpop.permute.xlu0 %1243
    %1245 = vrot.lane.b32.xlu0 %v1217, 126
    %v1246 = vpop.permute.xlu0 %1245
    %1247 = vrot.lane.b32.xlu0 %v1194, 126
    %v1248 = vpop.permute.xlu0 %1247
    %1249 = vrot.lane.b32.xlu0 %v1202, 126
    %v1250 = vpop.permute.xlu0 %1249
    %1251 = vrot.lane.b32.xlu0 %v1210, 126
    %v1252 = vpop.permute.xlu0 %1251
    %1253 = vrot.lane.b32.xlu0 %v1218, 126
    %v1254 = vpop.permute.xlu0 %1253
    %1255 = vrot.lane.b32.xlu0 %v1195, 126
    %v1256 = vpop.permute.xlu0 %1255
    %1257 = vrot.lane.b32.xlu0 %v1203, 126
    %v1258 = vpop.permute.xlu0 %1257
    %1259 = vrot.lane.b32.xlu0 %v1211, 126
    %v1260 = vpop.permute.xlu0 %1259
    %1261 = vrot.lane.b32.xlu0 %v1219, 126
    %v1262 = vpop.permute.xlu0 %1261
    %1263 = vrot.lane.b32.xlu0 %v1196, 126
    %v1264 = vpop.permute.xlu0 %1263
    %1265 = vrot.lane.b32.xlu0 %v1204, 126
    %v1266 = vpop.permute.xlu0 %1265
    %1267 = vrot.lane.b32.xlu0 %v1212, 126
    %v1268 = vpop.permute.xlu0 %1267
    %1269 = vrot.lane.b32.xlu0 %v1220, 126
    %v1270 = vpop.permute.xlu0 %1269
    %1271 = vrot.lane.b32.xlu0 %v1197, 126
    %v1272 = vpop.permute.xlu0 %1271
    %1273 = vrot.lane.b32.xlu0 %v1205, 126
    %v1274 = vpop.permute.xlu0 %1273
    %1275 = vrot.lane.b32.xlu0 %v1213, 126
    %v1276 = vpop.permute.xlu0 %1275
    %1277 = vrot.lane.b32.xlu0 %v1221, 126
    %v1278 = vpop.permute.xlu0 %1277
    %1279 = vrot.lane.b32.xlu0 %v1198, 126
    %v1280 = vpop.permute.xlu0 %1279
    %1281 = vrot.lane.b32.xlu0 %v1206, 126
    %v1282 = vpop.permute.xlu0 %1281
    %1283 = vrot.lane.b32.xlu0 %v1214, 126
    %v1284 = vpop.permute.xlu0 %1283
    %1285 = vrot.lane.b32.xlu0 %v1222, 126
    %v1286 = vpop.permute.xlu0 %1285
    %vm1287 = vcmp.lt.s32.totalorder %v1157, 126
    %v1288 = vsel %vm1287, %v1272, %v1280
    %v1289 = vsel %vm1287, %v1274, %v1282
    %v1290 = vsel %vm1287, %v1276, %v1284
    %v1291 = vsel %vm1287, %v1278, %v1286
    %v1292 = vsel %vm1287, %v1264, %v1272
    %v1293 = vsel %vm1287, %v1266, %v1274
    %v1294 = vsel %vm1287, %v1268, %v1276
    %v1295 = vsel %vm1287, %v1270, %v1278
    %v1296 = vsel %vm1287, %v1256, %v1264
    %v1297 = vsel %vm1287, %v1258, %v1266
    %v1298 = vsel %vm1287, %v1260, %v1268
    %v1299 = vsel %vm1287, %v1262, %v1270
    %v1300 = vsel %vm1287, %v1248, %v1256
    %v1301 = vsel %vm1287, %v1250, %v1258
    %v1302 = vsel %vm1287, %v1252, %v1260
    %v1303 = vsel %vm1287, %v1254, %v1262
    %v1304 = vsel %vm1287, %v1240, %v1248
    %v1305 = vsel %vm1287, %v1242, %v1250
    %v1306 = vsel %vm1287, %v1244, %v1252
    %v1307 = vsel %vm1287, %v1246, %v1254
    %v1308 = vsel %vm1287, %v1232, %v1240
    %v1309 = vsel %vm1287, %v1234, %v1242
    %v1310 = vsel %vm1287, %v1236, %v1244
    %v1311 = vsel %vm1287, %v1238, %v1246
    %v1312 = vsel %vm1287, %v1224, %v1232
    %v1313 = vsel %vm1287, %v1226, %v1234
    %v1314 = vsel %vm1287, %v1228, %v1236
    %v1315 = vsel %vm1287, %v1230, %v1238
    %v1316 = vsel %vm1287, %v1280, %v1224
    %v1317 = vsel %vm1287, %v1282, %v1226
    %v1318 = vsel %vm1287, %v1284, %v1228
    %v1319 = vsel %vm1287, %v1286, %v1230
    %v1320 = vmax.f32 %v1191, %v1312
    %v1321 = vmax.f32 %v1192, %v1308
    %v1322 = vmax.f32 %v1193, %v1304
    %v1323 = vmax.f32 %v1194, %v1300
    %v1324 = vmax.f32 %v1195, %v1296
    %v1325 = vmax.f32 %v1196, %v1292
    %v1326 = vmax.f32 %v1197, %v1288
    %v1327 = vmax.f32 %v1198, %v1316
    %v1328 = vmax.f32 %v1199, %v1313
    %v1329 = vmax.f32 %v1200, %v1309
    %v1330 = vmax.f32 %v1201, %v1305
    %v1331 = vmax.f32 %v1202, %v1301
    %v1332 = vmax.f32 %v1203, %v1297
    %v1333 = vmax.f32 %v1204, %v1293
    %v1334 = vmax.f32 %v1205, %v1289
    %v1335 = vmax.f32 %v1206, %v1317
    %v1336 = vmax.f32 %v1207, %v1314
    %v1337 = vmax.f32 %v1208, %v1310
    %v1338 = vmax.f32 %v1209, %v1306
    %v1339 = vmax.f32 %v1210, %v1302
    %v1340 = vmax.f32 %v1211, %v1298
    %v1341 = vmax.f32 %v1212, %v1294
    %v1342 = vmax.f32 %v1213, %v1290
    %v1343 = vmax.f32 %v1214, %v1318
    %v1344 = vmax.f32 %v1215, %v1315
    %v1345 = vmax.f32 %v1216, %v1311
    %v1346 = vmax.f32 %v1217, %v1307
    %v1347 = vmax.f32 %v1218, %v1303
    %v1348 = vmax.f32 %v1219, %v1299
    %v1349 = vmax.f32 %v1220, %v1295
    %v1350 = vmax.f32 %v1221, %v1291
    %v1351 = vmax.f32 %v1222, %v1319
    %1352 = vrot.lane.b32.xlu0 %v1320, 124
    %v1353 = vpop.permute.xlu0 %1352
    %1354 = vrot.lane.b32.xlu0 %v1328, 124
    %v1355 = vpop.permute.xlu0 %1354
    %1356 = vrot.lane.b32.xlu0 %v1336, 124
    %v1357 = vpop.permute.xlu0 %1356
    %1358 = vrot.lane.b32.xlu0 %v1344, 124
    %v1359 = vpop.permute.xlu0 %1358
    %1360 = vrot.lane.b32.xlu0 %v1321, 124
    %v1361 = vpop.permute.xlu0 %1360
    %1362 = vrot.lane.b32.xlu0 %v1329, 124
    %v1363 = vpop.permute.xlu0 %1362
    %1364 = vrot.lane.b32.xlu0 %v1337, 124
    %v1365 = vpop.permute.xlu0 %1364
    %1366 = vrot.lane.b32.xlu0 %v1345, 124
    %v1367 = vpop.permute.xlu0 %1366
    %1368 = vrot.lane.b32.xlu0 %v1322, 124
    %v1369 = vpop.permute.xlu0 %1368
    %1370 = vrot.lane.b32.xlu0 %v1330, 124
    %v1371 = vpop.permute.xlu0 %1370
    %1372 = vrot.lane.b32.xlu0 %v1338, 124
    %v1373 = vpop.permute.xlu0 %1372
    %1374 = vrot.lane.b32.xlu0 %v1346, 124
    %v1375 = vpop.permute.xlu0 %1374
    %1376 = vrot.lane.b32.xlu0 %v1323, 124
    %v1377 = vpop.permute.xlu0 %1376
    %1378 = vrot.lane.b32.xlu0 %v1331, 124
    %v1379 = vpop.permute.xlu0 %1378
    %1380 = vrot.lane.b32.xlu0 %v1339, 124
    %v1381 = vpop.permute.xlu0 %1380
    %1382 = vrot.lane.b32.xlu0 %v1347, 124
    %v1383 = vpop.permute.xlu0 %1382
    %1384 = vrot.lane.b32.xlu0 %v1324, 124
    %v1385 = vpop.permute.xlu0 %1384
    %1386 = vrot.lane.b32.xlu0 %v1332, 124
    %v1387 = vpop.permute.xlu0 %1386
    %1388 = vrot.lane.b32.xlu0 %v1340, 124
    %v1389 = vpop.permute.xlu0 %1388
    %1390 = vrot.lane.b32.xlu0 %v1348, 124
    %v1391 = vpop.permute.xlu0 %1390
    %1392 = vrot.lane.b32.xlu0 %v1325, 124
    %v1393 = vpop.permute.xlu0 %1392
    %1394 = vrot.lane.b32.xlu0 %v1333, 124
    %v1395 = vpop.permute.xlu0 %1394
    %1396 = vrot.lane.b32.xlu0 %v1341, 124
    %v1397 = vpop.permute.xlu0 %1396
    %1398 = vrot.lane.b32.xlu0 %v1349, 124
    %v1399 = vpop.permute.xlu0 %1398
    %1400 = vrot.lane.b32.xlu0 %v1326, 124
    %v1401 = vpop.permute.xlu0 %1400
    %1402 = vrot.lane.b32.xlu0 %v1334, 124
    %v1403 = vpop.permute.xlu0 %1402
    %1404 = vrot.lane.b32.xlu0 %v1342, 124
    %v1405 = vpop.permute.xlu0 %1404
    %1406 = vrot.lane.b32.xlu0 %v1350, 124
    %v1407 = vpop.permute.xlu0 %1406
    %1408 = vrot.lane.b32.xlu0 %v1327, 124
    %v1409 = vpop.permute.xlu0 %1408
    %1410 = vrot.lane.b32.xlu0 %v1335, 124
    %v1411 = vpop.permute.xlu0 %1410
    %1412 = vrot.lane.b32.xlu0 %v1343, 124
    %v1413 = vpop.permute.xlu0 %1412
    %1414 = vrot.lane.b32.xlu0 %v1351, 124
    %v1415 = vpop.permute.xlu0 %1414
    %vm1416 = vcmp.lt.s32.totalorder %v1157, 124
    %v1417 = vsel %vm1416, %v1401, %v1409
    %v1418 = vsel %vm1416, %v1403, %v1411
    %v1419 = vsel %vm1416, %v1405, %v1413
    %v1420 = vsel %vm1416, %v1407, %v1415
    %v1421 = vsel %vm1416, %v1393, %v1401
    %v1422 = vsel %vm1416, %v1395, %v1403
    %v1423 = vsel %vm1416, %v1397, %v1405
    %v1424 = vsel %vm1416, %v1399, %v1407
    %v1425 = vsel %vm1416, %v1385, %v1393
    %v1426 = vsel %vm1416, %v1387, %v1395
    %v1427 = vsel %vm1416, %v1389, %v1397
    %v1428 = vsel %vm1416, %v1391, %v1399
    %v1429 = vsel %vm1416, %v1377, %v1385
    %v1430 = vsel %vm1416, %v1379, %v1387
    %v1431 = vsel %vm1416, %v1381, %v1389
    %v1432 = vsel %vm1416, %v1383, %v1391
    %v1433 = vsel %vm1416, %v1369, %v1377
    %v1434 = vsel %vm1416, %v1371, %v1379
    %v1435 = vsel %vm1416, %v1373, %v1381
    %v1436 = vsel %vm1416, %v1375, %v1383
    %v1437 = vsel %vm1416, %v1361, %v1369
    %v1438 = vsel %vm1416, %v1363, %v1371
    %v1439 = vsel %vm1416, %v1365, %v1373
    %v1440 = vsel %vm1416, %v1367, %v1375
    %v1441 = vsel %vm1416, %v1353, %v1361
    %v1442 = vsel %vm1416, %v1355, %v1363
    %v1443 = vsel %vm1416, %v1357, %v1365
    %v1444 = vsel %vm1416, %v1359, %v1367
    %v1445 = vsel %vm1416, %v1409, %v1353
    %v1446 = vsel %vm1416, %v1411, %v1355
    %v1447 = vsel %vm1416, %v1413, %v1357
    %v1448 = vsel %vm1416, %v1415, %v1359
    %v1449 = vmax.f32 %v1320, %v1441
    %v1450 = vmax.f32 %v1321, %v1437
    %v1451 = vmax.f32 %v1322, %v1433
    %v1452 = vmax.f32 %v1323, %v1429
    %v1453 = vmax.f32 %v1324, %v1425
    %v1454 = vmax.f32 %v1325, %v1421
    %v1455 = vmax.f32 %v1326, %v1417
    %v1456 = vmax.f32 %v1327, %v1445
    %v1457 = vmax.f32 %v1328, %v1442
    %v1458 = vmax.f32 %v1329, %v1438
    %v1459 = vmax.f32 %v1330, %v1434
    %v1460 = vmax.f32 %v1331, %v1430
    %v1461 = vmax.f32 %v1332, %v1426
    %v1462 = vmax.f32 %v1333, %v1422
    %v1463 = vmax.f32 %v1334, %v1418
    %v1464 = vmax.f32 %v1335, %v1446
    %v1465 = vmax.f32 %v1336, %v1443
    %v1466 = vmax.f32 %v1337, %v1439
    %v1467 = vmax.f32 %v1338, %v1435
    %v1468 = vmax.f32 %v1339, %v1431
    %v1469 = vmax.f32 %v1340, %v1427
    %v1470 = vmax.f32 %v1341, %v1423
    %v1471 = vmax.f32 %v1342, %v1419
    %v1472 = vmax.f32 %v1343, %v1447
    %v1473 = vmax.f32 %v1344, %v1444
    %v1474 = vmax.f32 %v1345, %v1440
    %v1475 = vmax.f32 %v1346, %v1436
    %v1476 = vmax.f32 %v1347, %v1432
    %v1477 = vmax.f32 %v1348, %v1428
    %v1478 = vmax.f32 %v1349, %v1424
    %v1479 = vmax.f32 %v1350, %v1420
    %v1480 = vmax.f32 %v1351, %v1448
    %1481 = vrot.lane.b32.xlu0 %v1449, 120
    %v1482 = vpop.permute.xlu0 %1481
    %1483 = vrot.lane.b32.xlu0 %v1457, 120
    %v1484 = vpop.permute.xlu0 %1483
    %1485 = vrot.lane.b32.xlu0 %v1465, 120
    %v1486 = vpop.permute.xlu0 %1485
    %1487 = vrot.lane.b32.xlu0 %v1473, 120
    %v1488 = vpop.permute.xlu0 %1487
    %1489 = vrot.lane.b32.xlu0 %v1450, 120
    %v1490 = vpop.permute.xlu0 %1489
    %1491 = vrot.lane.b32.xlu0 %v1458, 120
    %v1492 = vpop.permute.xlu0 %1491
    %1493 = vrot.lane.b32.xlu0 %v1466, 120
    %v1494 = vpop.permute.xlu0 %1493
    %1495 = vrot.lane.b32.xlu0 %v1474, 120
    %v1496 = vpop.permute.xlu0 %1495
    %1497 = vrot.lane.b32.xlu0 %v1451, 120
    %v1498 = vpop.permute.xlu0 %1497
    %1499 = vrot.lane.b32.xlu0 %v1459, 120
    %v1500 = vpop.permute.xlu0 %1499
    %1501 = vrot.lane.b32.xlu0 %v1467, 120
    %v1502 = vpop.permute.xlu0 %1501
    %1503 = vrot.lane.b32.xlu0 %v1475, 120
    %v1504 = vpop.permute.xlu0 %1503
    %1505 = vrot.lane.b32.xlu0 %v1452, 120
    %v1506 = vpop.permute.xlu0 %1505
    %1507 = vrot.lane.b32.xlu0 %v1460, 120
    %v1508 = vpop.permute.xlu0 %1507
    %1509 = vrot.lane.b32.xlu0 %v1468, 120
    %v1510 = vpop.permute.xlu0 %1509
    %1511 = vrot.lane.b32.xlu0 %v1476, 120
    %v1512 = vpop.permute.xlu0 %1511
    %1513 = vrot.lane.b32.xlu0 %v1453, 120
    %v1514 = vpop.permute.xlu0 %1513
    %1515 = vrot.lane.b32.xlu0 %v1461, 120
    %v1516 = vpop.permute.xlu0 %1515
    %1517 = vrot.lane.b32.xlu0 %v1469, 120
    %v1518 = vpop.permute.xlu0 %1517
    %1519 = vrot.lane.b32.xlu0 %v1477, 120
    %v1520 = vpop.permute.xlu0 %1519
    %1521 = vrot.lane.b32.xlu0 %v1454, 120
    %v1522 = vpop.permute.xlu0 %1521
    %1523 = vrot.lane.b32.xlu0 %v1462, 120
    %v1524 = vpop.permute.xlu0 %1523
    %1525 = vrot.lane.b32.xlu0 %v1470, 120
    %v1526 = vpop.permute.xlu0 %1525
    %1527 = vrot.lane.b32.xlu0 %v1478, 120
    %v1528 = vpop.permute.xlu0 %1527
    %1529 = vrot.lane.b32.xlu0 %v1455, 120
    %v1530 = vpop.permute.xlu0 %1529
    %1531 = vrot.lane.b32.xlu0 %v1463, 120
    %v1532 = vpop.permute.xlu0 %1531
    %1533 = vrot.lane.b32.xlu0 %v1471, 120
    %v1534 = vpop.permute.xlu0 %1533
    %1535 = vrot.lane.b32.xlu0 %v1479, 120
    %v1536 = vpop.permute.xlu0 %1535
    %1537 = vrot.lane.b32.xlu0 %v1456, 120
    %v1538 = vpop.permute.xlu0 %1537
    %1539 = vrot.lane.b32.xlu0 %v1464, 120
    %v1540 = vpop.permute.xlu0 %1539
    %1541 = vrot.lane.b32.xlu0 %v1472, 120
    %v1542 = vpop.permute.xlu0 %1541
    %1543 = vrot.lane.b32.xlu0 %v1480, 120
    %v1544 = vpop.permute.xlu0 %1543
    %vm1545 = vcmp.lt.s32.totalorder %v1157, 120
    %v1546 = vsel %vm1545, %v1530, %v1538
    %v1547 = vsel %vm1545, %v1532, %v1540
    %v1548 = vsel %vm1545, %v1534, %v1542
    %v1549 = vsel %vm1545, %v1536, %v1544
    %v1550 = vsel %vm1545, %v1522, %v1530
    %v1551 = vsel %vm1545, %v1524, %v1532
    %v1552 = vsel %vm1545, %v1526, %v1534
    %v1553 = vsel %vm1545, %v1528, %v1536
    %v1554 = vsel %vm1545, %v1514, %v1522
    %v1555 = vsel %vm1545, %v1516, %v1524
    %v1556 = vsel %vm1545, %v1518, %v1526
    %v1557 = vsel %vm1545, %v1520, %v1528
    %v1558 = vsel %vm1545, %v1506, %v1514
    %v1559 = vsel %vm1545, %v1508, %v1516
    %v1560 = vsel %vm1545, %v1510, %v1518
    %v1561 = vsel %vm1545, %v1512, %v1520
    %v1562 = vsel %vm1545, %v1498, %v1506
    %v1563 = vsel %vm1545, %v1500, %v1508
    %v1564 = vsel %vm1545, %v1502, %v1510
    %v1565 = vsel %vm1545, %v1504, %v1512
    %v1566 = vsel %vm1545, %v1490, %v1498
    %v1567 = vsel %vm1545, %v1492, %v1500
    %v1568 = vsel %vm1545, %v1494, %v1502
    %v1569 = vsel %vm1545, %v1496, %v1504
    %v1570 = vsel %vm1545, %v1482, %v1490
    %v1571 = vsel %vm1545, %v1484, %v1492
    %v1572 = vsel %vm1545, %v1486, %v1494
    %v1573 = vsel %vm1545, %v1488, %v1496
    %v1574 = vsel %vm1545, %v1538, %v1482
    %v1575 = vsel %vm1545, %v1540, %v1484
    %v1576 = vsel %vm1545, %v1542, %v1486
    %v1577 = vsel %vm1545, %v1544, %v1488
    %v1578 = vmax.f32 %v1449, %v1570
    %v1579 = vmax.f32 %v1450, %v1566
    %v1580 = vmax.f32 %v1451, %v1562
    %v1581 = vmax.f32 %v1452, %v1558
    %v1582 = vmax.f32 %v1453, %v1554
    %v1583 = vmax.f32 %v1454, %v1550
    %v1584 = vmax.f32 %v1455, %v1546
    %v1585 = vmax.f32 %v1456, %v1574
    %v1586 = vmax.f32 %v1457, %v1571
    %v1587 = vmax.f32 %v1458, %v1567
    %v1588 = vmax.f32 %v1459, %v1563
    %v1589 = vmax.f32 %v1460, %v1559
    %v1590 = vmax.f32 %v1461, %v1555
    %v1591 = vmax.f32 %v1462, %v1551
    %v1592 = vmax.f32 %v1463, %v1547
    %v1593 = vmax.f32 %v1464, %v1575
    %v1594 = vmax.f32 %v1465, %v1572
    %v1595 = vmax.f32 %v1466, %v1568
    %v1596 = vmax.f32 %v1467, %v1564
    %v1597 = vmax.f32 %v1468, %v1560
    %v1598 = vmax.f32 %v1469, %v1556
    %v1599 = vmax.f32 %v1470, %v1552
    %v1600 = vmax.f32 %v1471, %v1548
    %v1601 = vmax.f32 %v1472, %v1576
    %v1602 = vmax.f32 %v1473, %v1573
    %v1603 = vmax.f32 %v1474, %v1569
    %v1604 = vmax.f32 %v1475, %v1565
    %v1605 = vmax.f32 %v1476, %v1561
    %v1606 = vmax.f32 %v1477, %v1557
    %v1607 = vmax.f32 %v1478, %v1553
    %v1608 = vmax.f32 %v1479, %v1549
    %v1609 = vmax.f32 %v1480, %v1577
    %v1610 = vld [vmem:[%s13] sm:$0xff]
    %v1611 = vld [vmem:[%s13 + $0x8] sm:$0xff]
    %v1612 = vld [vmem:[%s13 + $0x10] sm:$0xff]
    %v1613 = vld [vmem:[%s13 + $0x18] sm:$0xff]
    %v1614 = vld [vmem:[%s13 + $0x20] sm:$0xff]
    %v1615 = vld [vmem:[%s13 + $0x28] sm:$0xff]
    %v1616 = vld [vmem:[%s13 + $0x30] sm:$0xff]
    %v1617 = vld [vmem:[%s13 + $0x38] sm:$0xff]
    %v1618 = vld [vmem:[%s13 + $0x40] sm:$0xff]
    %v1619 = vld [vmem:[%s13 + $0x48] sm:$0xff]
    %v1620 = vld [vmem:[%s13 + $0x50] sm:$0xff]
    %v1621 = vld [vmem:[%s13 + $0x58] sm:$0xff]
    %v1622 = vld [vmem:[%s13 + $0x60] sm:$0xff]
    %v1623 = vld [vmem:[%s13 + $0x68] sm:$0xff]
    %v1624 = vld [vmem:[%s13 + $0x70] sm:$0xff]
    %v1625 = vld [vmem:[%s13 + $0x78] sm:$0xff]
    %v1626 = vld [vmem:[%s13 + $0x80] sm:$0xff]
    %v1627 = vld [vmem:[%s13 + $0x88] sm:$0xff]
    %v1628 = vld [vmem:[%s13 + $0x90] sm:$0xff]
    %v1629 = vld [vmem:[%s13 + $0x98] sm:$0xff]
    %v1630 = vld [vmem:[%s13 + $0xa0] sm:$0xff]
    %v1631 = vld [vmem:[%s13 + $0xa8] sm:$0xff]
    %v1632 = vld [vmem:[%s13 + $0xb0] sm:$0xff]
    %v1633 = vld [vmem:[%s13 + $0xb8] sm:$0xff]
    %v1634 = vld [vmem:[%s13 + $0xc0] sm:$0xff]
    %v1635 = vld [vmem:[%s13 + $0xc8] sm:$0xff]
    %v1636 = vld [vmem:[%s13 + $0xd0] sm:$0xff]
    %v1637 = vld [vmem:[%s13 + $0xd8] sm:$0xff]
    %v1638 = vld [vmem:[%s13 + $0xe0] sm:$0xff]
    %v1639 = vld [vmem:[%s13 + $0xe8] sm:$0xff]
    %v1640 = vld [vmem:[%s13 + $0xf0] sm:$0xff]
    %v1641 = vld [vmem:[%s13 + $0xf8] sm:$0xff]
    %v1642 = vld [vmem:[%s13 + $0x100] sm:$0xff]
    %v1643 = vld [vmem:[%s13 + $0x108] sm:$0xff]
    %v1644 = vld [vmem:[%s13 + $0x110] sm:$0xff]
    %v1645 = vld [vmem:[%s13 + $0x118] sm:$0xff]
    %v1646 = vld [vmem:[%s13 + $0x120] sm:$0xff]
    %v1647 = vld [vmem:[%s13 + $0x128] sm:$0xff]
    %v1648 = vld [vmem:[%s13 + $0x130] sm:$0xff]
    %v1649 = vld [vmem:[%s13 + $0x138] sm:$0xff]
    %v1650 = vld [vmem:[%s13 + $0x140] sm:$0xff]
    %v1651 = vld [vmem:[%s13 + $0x148] sm:$0xff]
    %v1652 = vld [vmem:[%s13 + $0x150] sm:$0xff]
    %v1653 = vld [vmem:[%s13 + $0x158] sm:$0xff]
    %v1654 = vld [vmem:[%s13 + $0x160] sm:$0xff]
    %v1655 = vld [vmem:[%s13 + $0x168] sm:$0xff]
    %v1656 = vld [vmem:[%s13 + $0x170] sm:$0xff]
    %v1657 = vld [vmem:[%s13 + $0x178] sm:$0xff]
    %v1658 = vld [vmem:[%s13 + $0x180] sm:$0xff]
    %v1659 = vld [vmem:[%s13 + $0x188] sm:$0xff]
    %v1660 = vld [vmem:[%s13 + $0x190] sm:$0xff]
    %v1661 = vld [vmem:[%s13 + $0x198] sm:$0xff]
    %v1662 = vld [vmem:[%s13 + $0x1a0] sm:$0xff]
    %v1663 = vld [vmem:[%s13 + $0x1a8] sm:$0xff]
    %v1664 = vld [vmem:[%s13 + $0x1b0] sm:$0xff]
    %v1665 = vld [vmem:[%s13 + $0x1b8] sm:$0xff]
    %v1666 = vld [vmem:[%s13 + $0x1c0] sm:$0xff]
    %v1667 = vld [vmem:[%s13 + $0x1c8] sm:$0xff]
    %v1668 = vld [vmem:[%s13 + $0x1d0] sm:$0xff]
    %v1669 = vld [vmem:[%s13 + $0x1d8] sm:$0xff]
    %v1670 = vld [vmem:[%s13 + $0x1e0] sm:$0xff]
    %v1671 = vld [vmem:[%s13 + $0x1e8] sm:$0xff]
    %v1672 = vld [vmem:[%s13 + $0x1f0] sm:$0xff]
    %v1673 = vld [vmem:[%s13 + $0x1f8] sm:$0xff]
    %v1674 = vld [vmem:[%s13 + $0x200] sm:$0xff]
    %v1675 = vld [vmem:[%s13 + $0x208] sm:$0xff]
    %v1676 = vld [vmem:[%s13 + $0x210] sm:$0xff]
    %v1677 = vld [vmem:[%s13 + $0x218] sm:$0xff]
    %v1678 = vld [vmem:[%s13 + $0x220] sm:$0xff]
    %v1679 = vld [vmem:[%s13 + $0x228] sm:$0xff]
    %v1680 = vld [vmem:[%s13 + $0x230] sm:$0xff]
    %v1681 = vld [vmem:[%s13 + $0x238] sm:$0xff]
    %v1682 = vld [vmem:[%s13 + $0x240] sm:$0xff]
    %v1683 = vld [vmem:[%s13 + $0x248] sm:$0xff]
    %v1684 = vld [vmem:[%s13 + $0x250] sm:$0xff]
    %v1685 = vld [vmem:[%s13 + $0x258] sm:$0xff]
    %v1686 = vld [vmem:[%s13 + $0x260] sm:$0xff]
    %v1687 = vld [vmem:[%s13 + $0x268] sm:$0xff]
    %v1688 = vld [vmem:[%s13 + $0x270] sm:$0xff]
    %v1689 = vld [vmem:[%s13 + $0x278] sm:$0xff]
    %v1690 = vld [vmem:[%s13 + $0x280] sm:$0xff]
    %v1691 = vld [vmem:[%s13 + $0x288] sm:$0xff]
    %v1692 = vld [vmem:[%s13 + $0x290] sm:$0xff]
    %v1693 = vld [vmem:[%s13 + $0x298] sm:$0xff]
    %v1694 = vld [vmem:[%s13 + $0x2a0] sm:$0xff]
    %v1695 = vld [vmem:[%s13 + $0x2a8] sm:$0xff]
    %v1696 = vld [vmem:[%s13 + $0x2b0] sm:$0xff]
    %v1697 = vld [vmem:[%s13 + $0x2b8] sm:$0xff]
    %v1698 = vld [vmem:[%s13 + $0x2c0] sm:$0xff]
    %v1699 = vld [vmem:[%s13 + $0x2c8] sm:$0xff]
    %v1700 = vld [vmem:[%s13 + $0x2d0] sm:$0xff]
    %v1701 = vld [vmem:[%s13 + $0x2d8] sm:$0xff]
    %v1702 = vld [vmem:[%s13 + $0x2e0] sm:$0xff]
    %v1703 = vld [vmem:[%s13 + $0x2e8] sm:$0xff]
    %v1704 = vld [vmem:[%s13 + $0x2f0] sm:$0xff]
    %v1705 = vld [vmem:[%s13 + $0x2f8] sm:$0xff]
    %v1706 = vld [vmem:[%s13 + $0x300] sm:$0xff]
    %v1707 = vld [vmem:[%s13 + $0x308] sm:$0xff]
    %v1708 = vld [vmem:[%s13 + $0x310] sm:$0xff]
    %v1709 = vld [vmem:[%s13 + $0x318] sm:$0xff]
    %v1710 = vld [vmem:[%s13 + $0x320] sm:$0xff]
    %v1711 = vld [vmem:[%s13 + $0x328] sm:$0xff]
    %v1712 = vld [vmem:[%s13 + $0x330] sm:$0xff]
    %v1713 = vld [vmem:[%s13 + $0x338] sm:$0xff]
    %v1714 = vld [vmem:[%s13 + $0x340] sm:$0xff]
    %v1715 = vld [vmem:[%s13 + $0x348] sm:$0xff]
    %v1716 = vld [vmem:[%s13 + $0x350] sm:$0xff]
    %v1717 = vld [vmem:[%s13 + $0x358] sm:$0xff]
    %v1718 = vld [vmem:[%s13 + $0x360] sm:$0xff]
    %v1719 = vld [vmem:[%s13 + $0x368] sm:$0xff]
    %v1720 = vld [vmem:[%s13 + $0x370] sm:$0xff]
    %v1721 = vld [vmem:[%s13 + $0x378] sm:$0xff]
    %v1722 = vld [vmem:[%s13 + $0x380] sm:$0xff]
    %v1723 = vld [vmem:[%s13 + $0x388] sm:$0xff]
    %v1724 = vld [vmem:[%s13 + $0x390] sm:$0xff]
    %v1725 = vld [vmem:[%s13 + $0x398] sm:$0xff]
    %v1726 = vld [vmem:[%s13 + $0x3a0] sm:$0xff]
    %v1727 = vld [vmem:[%s13 + $0x3a8] sm:$0xff]
    %v1728 = vld [vmem:[%s13 + $0x3b0] sm:$0xff]
    %v1729 = vld [vmem:[%s13 + $0x3b8] sm:$0xff]
    %v1730 = vld [vmem:[%s13 + $0x3c0] sm:$0xff]
    %v1731 = vld [vmem:[%s13 + $0x3c8] sm:$0xff]
    %v1732 = vld [vmem:[%s13 + $0x3d0] sm:$0xff]
    %v1733 = vld [vmem:[%s13 + $0x3d8] sm:$0xff]
    %v1734 = vld [vmem:[%s13 + $0x3e0] sm:$0xff]
    %v1735 = vld [vmem:[%s13 + $0x3e8] sm:$0xff]
    %v1736 = vld [vmem:[%s13 + $0x3f0] sm:$0xff]
    %v1737 = vld [vmem:[%s13 + $0x3f8] sm:$0xff]
    %1738 = vmatprep.subr.mxu0 0.0
    %1739 = vmatpush1.msra.mxu0 %v1610
    %1740 = vmatprep.subr.mxu0 0.0
    %1741 = vmatpush1.msra.mxu0 %v1611
    %1742 = vmatprep.subr.mxu0 0.0
    %1743 = vmatpush1.msra.mxu0 %v1612
    %1744 = vmatprep.subr.mxu0 0.0
    %1745 = vmatpush1.msra.mxu0 %v1613
    %1746 = vmatprep.subr.mxu0 0.0
    %1747 = vmatpush1.msra.mxu0 %v1614
    %1748 = vmatprep.subr.mxu0 0.0
    %1749 = vmatpush1.msra.mxu0 %v1615
    %1750 = vmatprep.subr.mxu0 0.0
    %1751 = vmatpush1.msra.mxu0 %v1616
    %1752 = vmatprep.subr.mxu0 0.0
    %1753 = vmatpush1.msra.mxu0 %v1617
    %1754 = vmatprep.subr.mxu0 0.0
    %1755 = vmatpush1.msra.mxu0 %v1618
    %1756 = vmatprep.subr.mxu0 0.0
    %1757 = vmatpush1.msra.mxu0 %v1619
    %1758 = vmatprep.subr.mxu0 0.0
    %1759 = vmatpush1.msra.mxu0 %v1620
    %1760 = vmatprep.subr.mxu0 0.0
    %1761 = vmatpush1.msra.mxu0 %v1621
    %1762 = vmatprep.subr.mxu0 0.0
    %1763 = vmatpush1.msra.mxu0 %v1622
    %1764 = vmatprep.subr.mxu0 0.0
    %1765 = vmatpush1.msra.mxu0 %v1623
    %1766 = vmatprep.subr.mxu0 0.0
    %1767 = vmatpush1.msra.mxu0 %v1624
    %1768 = vmatprep.subr.mxu0 0.0
    %1769 = vmatpush1.msra.mxu0 %v1625
    %1770 = vmatprep.subr.mxu0 0.0
    %1771 = vmatpush1.msra.mxu0 %v1626
    %1772 = vmatprep.subr.mxu0 0.0
    %1773 = vmatpush1.msra.mxu0 %v1627
    %1774 = vmatprep.subr.mxu0 0.0
    %1775 = vmatpush1.msra.mxu0 %v1628
    %1776 = vmatprep.subr.mxu0 0.0
    %1777 = vmatpush1.msra.mxu0 %v1629
    %1778 = vmatprep.subr.mxu0 0.0
    %1779 = vmatpush1.msra.mxu0 %v1630
    %1780 = vmatprep.subr.mxu0 0.0
    %1781 = vmatpush1.msra.mxu0 %v1631
    %1782 = vmatprep.subr.mxu0 0.0
    %1783 = vmatpush1.msra.mxu0 %v1632
    %1784 = vmatprep.subr.mxu0 0.0
    %1785 = vmatpush1.msra.mxu0 %v1633
    %1786 = vmatprep.subr.mxu0 0.0
    %1787 = vmatpush1.msra.mxu0 %v1634
    %1788 = vmatprep.subr.mxu0 0.0
    %1789 = vmatpush1.msra.mxu0 %v1635
    %1790 = vmatprep.subr.mxu0 0.0
    %1791 = vmatpush1.msra.mxu0 %v1636
    %1792 = vmatprep.subr.mxu0 0.0
    %1793 = vmatpush1.msra.mxu0 %v1637
    %1794 = vmatprep.subr.mxu0 0.0
    %1795 = vmatpush1.msra.mxu0 %v1638
    %1796 = vmatprep.subr.mxu0 0.0
    %1797 = vmatpush1.msra.mxu0 %v1639
    %1798 = vmatprep.subr.mxu0 0.0
    %1799 = vmatpush1.msra.mxu0 %v1640
    %1800 = vmatprep.subr.mxu0 0.0
    %1801 = vmatpush1.msra.mxu0 %v1641
    %1802 = vmatprep.mubr.f32.mxu0 %v1579
    %1803 = vmatmul.mubr.f32.gmra.mrb[0].mxu0 %v1578
    %v1804 = vpop.f32.mrb[0].mxu0
    %v1805 = vadd.f32 0.0, %v1804
    %v1806 = vpop.f32.mrb[0].mxu0
    %1807 = vmatprep.mubr.f32.mxu0 %v1587
    %1808 = vmatmul.mubr.f32.gmra.mrb[0].mxu0 %v1586
    %v1809 = vpop.f32.mrb[0].mxu0
    %v1810 = vadd.f32 0.0, %v1809
    %v1811 = vpop.f32.mrb[0].mxu0
    %1812 = vmatprep.mubr.f32.mxu0 %v1595
    %1813 = vmatmul.mubr.f32.gmra.mrb[0].mxu0 %v1594
    %v1814 = vpop.f32.mrb[0].mxu0
    %v1815 = vadd.f32 0.0, %v1814
    %v1816 = vpop.f32.mrb[0].mxu0
    %1817 = vmatprep.mubr.f32.mxu0 %v1603
    %1818 = vmatmul.mubr.f32.gmra.mrb[0].mxu0 %v1602
    %v1819 = vpop.f32.mrb[0].mxu0
    %v1820 = vadd.f32 0.0, %v1819
    %v1821 = vpop.f32.mrb[0].mxu0
    %1822 = vdwg.mxu0
    %1823 = vmatprep.subr.mxu0 0.0
    %1824 = vmatpush1.msra.mxu0 %v1642
    %1825 = vmatprep.subr.mxu0 0.0
    %1826 = vmatpush1.msra.mxu0 %v1643
    %1827 = vmatprep.subr.mxu0 0.0
    %1828 = vmatpush1.msra.mxu0 %v1644
    %1829 = vmatprep.subr.mxu0 0.0
    %1830 = vmatpush1.msra.mxu0 %v1645
    %1831 = vmatprep.subr.mxu0 0.0
    %1832 = vmatpush1.msra.mxu0 %v1646
    %1833 = vmatprep.subr.mxu0 0.0
    %1834 = vmatpush1.msra.mxu0 %v1647
    %1835 = vmatprep.subr.mxu0 0.0
    %1836 = vmatpush1.msra.mxu0 %v1648
    %1837 = vmatprep.subr.mxu0 0.0
    %1838 = vmatpush1.msra.mxu0 %v1649
    %1839 = vmatprep.subr.mxu0 0.0
    %1840 = vmatpush1.msra.mxu0 %v1650
    %1841 = vmatprep.subr.mxu0 0.0
    %1842 = vmatpush1.msra.mxu0 %v1651
    %1843 = vmatprep.subr.mxu0 0.0
    %1844 = vmatpush1.msra.mxu0 %v1652
    %1845 = vmatprep.subr.mxu0 0.0
    %1846 = vmatpush1.msra.mxu0 %v1653
    %1847 = vmatprep.subr.mxu0 0.0
    %1848 = vmatpush1.msra.mxu0 %v1654
    %1849 = vmatprep.subr.mxu0 0.0
    %1850 = vmatpush1.msra.mxu0 %v1655
    %1851 = vmatprep.subr.mxu0 0.0
    %1852 = vmatpush1.msra.mxu0 %v1656
    %1853 = vmatprep.subr.mxu0 0.0
    %1854 = vmatpush1.msra.mxu0 %v1657
    %1855 = vmatprep.subr.mxu0 0.0
    %1856 = vmatpush1.msra.mxu0 %v1658
    %1857 = vmatprep.subr.mxu0 0.0
    %1858 = vmatpush1.msra.mxu0 %v1659
    %1859 = vmatprep.subr.mxu0 0.0
    %1860 = vmatpush1.msra.mxu0 %v1660
    %1861 = vmatprep.subr.mxu0 0.0
    %1862 = vmatpush1.msra.mxu0 %v1661
    %1863 = vmatprep.subr.mxu0 0.0
    %1864 = vmatpush1.msra.mxu0 %v1662
    %1865 = vmatprep.subr.mxu0 0.0
    %1866 = vmatpush1.msra.mxu0 %v1663
    %1867 = vmatprep.subr.mxu0 0.0
    %1868 = vmatpush1.msra.mxu0 %v1664
    %1869 = vmatprep.subr.mxu0 0.0
    %1870 = vmatpush1.msra.mxu0 %v1665
    %1871 = vmatprep.subr.mxu0 0.0
    %1872 = vmatpush1.msra.mxu0 %v1666
    %1873 = vmatprep.subr.mxu0 0.0
    %1874 = vmatpush1.msra.mxu0 %v1667
    %1875 = vmatprep.subr.mxu0 0.0
    %1876 = vmatpush1.msra.mxu0 %v1668
    %1877 = vmatprep.subr.mxu0 0.0
    %1878 = vmatpush1.msra.mxu0 %v1669
    %1879 = vmatprep.subr.mxu0 0.0
    %1880 = vmatpush1.msra.mxu0 %v1670
    %1881 = vmatprep.subr.mxu0 0.0
    %1882 = vmatpush1.msra.mxu0 %v1671
    %1883 = vmatprep.subr.mxu0 0.0
    %1884 = vmatpush1.msra.mxu0 %v1672
    %1885 = vmatprep.subr.mxu0 0.0
    %1886 = vmatpush1.msra.mxu0 %v1673
    %1887 = vmatprep.mubr.f32.mxu0 %v1581
    %1888 = vmatmul.mubr.f32.gmra.mrb[0].mxu0 %v1580
    %v1889 = vpop.f32.mrb[0].mxu0
    %v1890 = vadd.f32 %v1805, %v1889
    %v1891 = vpop.f32.mrb[0].mxu0
    %1892 = vmatprep.mubr.f32.mxu0 %v1589
    %1893 = vmatmul.mubr.f32.gmra.mrb[0].mxu0 %v1588
    %v1894 = vpop.f32.mrb[0].mxu0
    %v1895 = vadd.f32 %v1810, %v1894
    %v1896 = vpop.f32.mrb[0].mxu0
    %1897 = vmatprep.mubr.f32.mxu0 %v1597
    %1898 = vmatmul.mubr.f32.gmra.mrb[0].mxu0 %v1596
    %v1899 = vpop.f32.mrb[0].mxu0
    %v1900 = vadd.f32 %v1815, %v1899
    %v1901 = vpop.f32.mrb[0].mxu0
    %1902 = vmatprep.mubr.f32.mxu0 %v1605
    %1903 = vmatmul.mubr.f32.gmra.mrb[0].mxu0 %v1604
    %v1904 = vpop.f32.mrb[0].mxu0
    %v1905 = vadd.f32 %v1820, %v1904
    %v1906 = vpop.f32.mrb[0].mxu0
    %1907 = vdwg.mxu0
    %1908 = vmatprep.subr.mxu0 0.0
    %1909 = vmatpush1.msra.mxu0 %v1674
    %1910 = vmatprep.subr.mxu0 0.0
    %1911 = vmatpush1.msra.mxu0 %v1675
    %1912 = vmatprep.subr.mxu0 0.0
    %1913 = vmatpush1.msra.mxu0 %v1676
    %1914 = vmatprep.subr.mxu0 0.0
    %1915 = vmatpush1.msra.mxu0 %v1677
    %1916 = vmatprep.subr.mxu0 0.0
    %1917 = vmatpush1.msra.mxu0 %v1678
    %1918 = vmatprep.subr.mxu0 0.0
    %1919 = vmatpush1.msra.mxu0 %v1679
    %1920 = vmatprep.subr.mxu0 0.0
    %1921 = vmatpush1.msra.mxu0 %v1680
    %1922 = vmatprep.subr.mxu0 0.0
    %1923 = vmatpush1.msra.mxu0 %v1681
    %1924 = vmatprep.subr.mxu0 0.0
    %1925 = vmatpush1.msra.mxu0 %v1682
    %1926 = vmatprep.subr.mxu0 0.0
    %1927 = vmatpush1.msra.mxu0 %v1683
    %1928 = vmatprep.subr.mxu0 0.0
    %1929 = vmatpush1.msra.mxu0 %v1684
    %1930 = vmatprep.subr.mxu0 0.0
    %1931 = vmatpush1.msra.mxu0 %v1685
    %1932 = vmatprep.subr.mxu0 0.0
    %1933 = vmatpush1.msra.mxu0 %v1686
    %1934 = vmatprep.subr.mxu0 0.0
    %1935 = vmatpush1.msra.mxu0 %v1687
    %1936 = vmatprep.subr.mxu0 0.0
    %1937 = vmatpush1.msra.mxu0 %v1688
    %1938 = vmatprep.subr.mxu0 0.0
    %1939 = vmatpush1.msra.mxu0 %v1689
    %1940 = vmatprep.subr.mxu0 0.0
    %1941 = vmatpush1.msra.mxu0 %v1690
    %1942 = vmatprep.subr.mxu0 0.0
    %1943 = vmatpush1.msra.mxu0 %v1691
    %1944 = vmatprep.subr.mxu0 0.0
    %1945 = vmatpush1.msra.mxu0 %v1692
    %1946 = vmatprep.subr.mxu0 0.0
    %1947 = vmatpush1.msra.mxu0 %v1693
    %1948 = vmatprep.subr.mxu0 0.0
    %1949 = vmatpush1.msra.mxu0 %v1694
    %1950 = vmatprep.subr.mxu0 0.0
    %1951 = vmatpush1.msra.mxu0 %v1695
    %1952 = vmatprep.subr.mxu0 0.0
    %1953 = vmatpush1.msra.mxu0 %v1696
    %1954 = vmatprep.subr.mxu0 0.0
    %1955 = vmatpush1.msra.mxu0 %v1697
    %1956 = vmatprep.subr.mxu0 0.0
    %1957 = vmatpush1.msra.mxu0 %v1698
    %1958 = vmatprep.subr.mxu0 0.0
    %1959 = vmatpush1.msra.mxu0 %v1699
    %1960 = vmatprep.subr.mxu0 0.0
    %1961 = vmatpush1.msra.mxu0 %v1700
    %1962 = vmatprep.subr.mxu0 0.0
    %1963 = vmatpush1.msra.mxu0 %v1701
    %1964 = vmatprep.subr.mxu0 0.0
    %1965 = vmatpush1.msra.mxu0 %v1702
    %1966 = vmatprep.subr.mxu0 0.0
    %1967 = vmatpush1.msra.mxu0 %v1703
    %1968 = vmatprep.subr.mxu0 0.0
    %1969 = vmatpush1.msra.mxu0 %v1704
    %1970 = vmatprep.subr.mxu0 0.0
    %1971 = vmatpush1.msra.mxu0 %v1705
    %1972 = vmatprep.mubr.f32.mxu0 %v1583
    %1973 = vmatmul.mubr.f32.gmra.mrb[0].mxu0 %v1582
    %v1974 = vpop.f32.mrb[0].mxu0
    %v1975 = vadd.f32 %v1890, %v1974
    %v1976 = vpop.f32.mrb[0].mxu0
    %1977 = vmatprep.mubr.f32.mxu0 %v1591
    %1978 = vmatmul.mubr.f32.gmra.mrb[0].mxu0 %v1590
    %v1979 = vpop.f32.mrb[0].mxu0
    %v1980 = vadd.f32 %v1895, %v1979
    %v1981 = vpop.f32.mrb[0].mxu0
    %1982 = vmatprep.mubr.f32.mxu0 %v1599
    %1983 = vmatmul.mubr.f32.gmra.mrb[0].mxu0 %v1598
    %v1984 = vpop.f32.mrb[0].mxu0
    %v1985 = vadd.f32 %v1900, %v1984
    %v1986 = vpop.f32.mrb[0].mxu0
    %1987 = vmatprep.mubr.f32.mxu0 %v1607
    %1988 = vmatmul.mubr.f32.gmra.mrb[0].mxu0 %v1606
    %v1989 = vpop.f32.mrb[0].mxu0
    %v1990 = vadd.f32 %v1905, %v1989
    %v1991 = vpop.f32.mrb[0].mxu0
    %1992 = vdwg.mxu0
    %1993 = vmatprep.subr.mxu0 0.0
    %1994 = vmatpush1.msra.mxu0 %v1706
    %1995 = vmatprep.subr.mxu0 0.0
    %1996 = vmatpush1.msra.mxu0 %v1707
    %1997 = vmatprep.subr.mxu0 0.0
    %1998 = vmatpush1.msra.mxu0 %v1708
    %1999 = vmatprep.subr.mxu0 0.0
    %2000 = vmatpush1.msra.mxu0 %v1709
    %2001 = vmatprep.subr.mxu0 0.0
    %2002 = vmatpush1.msra.mxu0 %v1710
    %2003 = vmatprep.subr.mxu0 0.0
    %2004 = vmatpush1.msra.mxu0 %v1711
    %2005 = vmatprep.subr.mxu0 0.0
    %2006 = vmatpush1.msra.mxu0 %v1712
    %2007 = vmatprep.subr.mxu0 0.0
    %2008 = vmatpush1.msra.mxu0 %v1713
    %2009 = vmatprep.subr.mxu0 0.0
    %2010 = vmatpush1.msra.mxu0 %v1714
    %2011 = vmatprep.subr.mxu0 0.0
    %2012 = vmatpush1.msra.mxu0 %v1715
    %2013 = vmatprep.subr.mxu0 0.0
    %2014 = vmatpush1.msra.mxu0 %v1716
    %2015 = vmatprep.subr.mxu0 0.0
    %2016 = vmatpush1.msra.mxu0 %v1717
    %2017 = vmatprep.subr.mxu0 0.0
    %2018 = vmatpush1.msra.mxu0 %v1718
    %2019 = vmatprep.subr.mxu0 0.0
    %2020 = vmatpush1.msra.mxu0 %v1719
    %2021 = vmatprep.subr.mxu0 0.0
    %2022 = vmatpush1.msra.mxu0 %v1720
    %2023 = vmatprep.subr.mxu0 0.0
    %2024 = vmatpush1.msra.mxu0 %v1721
    %2025 = vmatprep.subr.mxu0 0.0
    %2026 = vmatpush1.msra.mxu0 %v1722
    %2027 = vmatprep.subr.mxu0 0.0
    %2028 = vmatpush1.msra.mxu0 %v1723
    %2029 = vmatprep.subr.mxu0 0.0
    %2030 = vmatpush1.msra.mxu0 %v1724
    %2031 = vmatprep.subr.mxu0 0.0
    %2032 = vmatpush1.msra.mxu0 %v1725
    %2033 = vmatprep.subr.mxu0 0.0
    %2034 = vmatpush1.msra.mxu0 %v1726
    %2035 = vmatprep.subr.mxu0 0.0
    %2036 = vmatpush1.msra.mxu0 %v1727
    %2037 = vmatprep.subr.mxu0 0.0
    %2038 = vmatpush1.msra.mxu0 %v1728
    %2039 = vmatprep.subr.mxu0 0.0
    %2040 = vmatpush1.msra.mxu0 %v1729
    %2041 = vmatprep.subr.mxu0 0.0
    %2042 = vmatpush1.msra.mxu0 %v1730
    %2043 = vmatprep.subr.mxu0 0.0
    %2044 = vmatpush1.msra.mxu0 %v1731
    %2045 = vmatprep.subr.mxu0 0.0
    %2046 = vmatpush1.msra.mxu0 %v1732
    %2047 = vmatprep.subr.mxu0 0.0
    %2048 = vmatpush1.msra.mxu0 %v1733
    %2049 = vmatprep.subr.mxu0 0.0
    %2050 = vmatpush1.msra.mxu0 %v1734
    %2051 = vmatprep.subr.mxu0 0.0
    %2052 = vmatpush1.msra.mxu0 %v1735
    %2053 = vmatprep.subr.mxu0 0.0
    %2054 = vmatpush1.msra.mxu0 %v1736
    %2055 = vmatprep.subr.mxu0 0.0
    %2056 = vmatpush1.msra.mxu0 %v1737
    %2057 = vmatprep.mubr.f32.mxu0 %v1585
    %2058 = vmatmul.mubr.f32.gmra.mrb[0].mxu0 %v1584
    %v2059 = vpop.f32.mrb[0].mxu0
    %v2060 = vadd.f32 %v1975, %v2059
    %v2061 = vpop.f32.mrb[0].mxu0
    %2062 = vmatprep.mubr.f32.mxu0 %v1593
    %2063 = vmatmul.mubr.f32.gmra.mrb[0].mxu0 %v1592
    %v2064 = vpop.f32.mrb[0].mxu0
    %v2065 = vadd.f32 %v1980, %v2064
    %v2066 = vpop.f32.mrb[0].mxu0
    %2067 = vmatprep.mubr.f32.mxu0 %v1601
    %2068 = vmatmul.mubr.f32.gmra.mrb[0].mxu0 %v1600
    %v2069 = vpop.f32.mrb[0].mxu0
    %v2070 = vadd.f32 %v1985, %v2069
    %v2071 = vpop.f32.mrb[0].mxu0
    %2072 = vmatprep.mubr.f32.mxu0 %v1609
    %2073 = vmatmul.mubr.f32.gmra.mrb[0].mxu0 %v1608
    %v2074 = vpop.f32.mrb[0].mxu0
    %v2075 = vadd.f32 %v1990, %v2074
    %v2076 = vpop.f32.mrb[0].mxu0
    %2077 = vdwg.mxu0
    %2078 = vst.msk [vmem:[%s14] sm:$0xff] %vm395, %v2060
    %2079 = vst.msk [vmem:[%s14 + $0x8] sm:$0xff] %vm395, %v2065
    %2080 = vst.msk [vmem:[%s14 + $0x10] sm:$0xff] %vm395, %v2070
    %2081 = vst.msk [vmem:[%s14 + $0x18] sm:$0xff] %vm395, %v2075
    // Predicated region
    $region82: #{input_tnet_forward.8} parent=1 // pred_check
      _
    $region83: #{input_tnet_forward.8} parent=1 // pred_check_branch
      %2083 = sbr.rel (0) target = $region85
    $region84: #{input_tnet_forward.8} parent=1 // pred_region
      _
    $region85: #{input_tnet_forward.8} parent=1 // pred_fallthru
      _
    // Predicated region
    $region86: #{input_tnet_forward.8} parent=1 // pred_check
      _
    $region87: #{input_tnet_forward.8} parent=1 // pred_check_branch
      %2085 = sbr.rel (0) target = $region89
    $region88: #{input_tnet_forward.8} parent=1 // pred_region
      _
    $region89: #{input_tnet_forward.8} parent=1 // pred_fallthru
      _
    %2086 = vsyncpa [#allocation3], 1
    %2087 = vsyncpa [#allocation5], 1
    %2088 = vsyncpa [#allocation8], 1
    %2089 = vsyncpa [#allocation11], 1

// kernel: input_tnet_forward.9
$region0: #{input_tnet_forward.9}
  #allocation0 [shape = 'u32[]', space=smem, size = 0x4, offset = 0x4, fixed_abs, tag = 'smem constant byte address 0x4 - core index']
  #allocation1 [shape = 'u32[144,128]{1,0:T(1,128)}', space=vmem, size = 0x12000, scoped, tag = 'internal scratch']
  %s0 = inlined_call_operand.vmem [shape: f32[2,1024], index: 0, kind: input, shape index: {}]
  %s1 = inlined_call_operand.vmem [shape: f32[1024,512], index: 1, kind: input, shape index: {}]
  %s2 = inlined_call_operand.vmem [shape: f32[1,512], index: 2, kind: input, shape index: {}]
  %s3 = inlined_call_operand.vmem [shape: f32[1,512], index: 3, kind: input, shape index: {}]
  %s4 = inlined_call_operand.vmem [shape: f32[1,512], index: 4, kind: input, shape index: {}]
  %s5 = inlined_call_operand.hbm [shape: f32[512,256], index: 5, kind: input, shape index: {}]
  %s6 = inlined_call_operand.vmem [shape: f32[1,256], index: 6, kind: input, shape index: {}]
  %s7 = inlined_call_operand.vmem [shape: f32[1,256], index: 7, kind: input, shape index: {}]
  %s8 = inlined_call_operand.vmem [shape: f32[1,256], index: 8, kind: input, shape index: {}]
  %s9 = inlined_call_operand.vmem [shape: f32[256,9], index: 9, kind: input, shape index: {}]
  %s10 = inlined_call_operand.vmem [shape: f32[1,9], index: 10, kind: input, shape index: {}]
  %s11 = inlined_call_operand.vmem [shape: f32[2,9], index: 11, kind: output, shape index: {}]
  %s12 = sld [smem:[#allocation0]]
  $region58: #{input_tnet_forward.9} parent=0
    _
  %s14 = ssub.s32 1, %s12
  %s15 = scalar_select 0, %s14, %s12
  $region1: #{input_tnet_forward.9} parent=0
    #allocation2 [shape = 'u8[524288]{0}', space=vmem, size = 0x80000, scoped, tag = 'input window, operand 5, single buffered']
    #allocation3 [shape = 's32[1]{0}', space=sflag, size = 0x4, scoped, tag = 'scoped memory for input_tnet_forward.9']
    %16 = vsyncpa [#allocation3], 0
    // Predicated region
    $region2: #{input_tnet_forward.9} parent=1 // pred_check
      _
    $region3: #{input_tnet_forward.9} parent=1 // pred_check_branch
      %18 = sbr.rel (0) target = $region5
    $region4: #{input_tnet_forward.9} parent=1 // pred_region
      _
    $region5: #{input_tnet_forward.9} parent=1 // pred_fallthru
      _
    // Predicated region
    $region6: #{input_tnet_forward.9} parent=1 // pred_check
      _
    $region7: #{input_tnet_forward.9} parent=1 // pred_check_branch
      %20 = sbr.rel (0) target = $region9
    $region8: #{input_tnet_forward.9} parent=1 // pred_region
      _
    $region9: #{input_tnet_forward.9} parent=1 // pred_fallthru
      _
    // Predicated region
    $region10: #{input_tnet_forward.9} parent=1 // pred_check
      _
    $region11: #{input_tnet_forward.9} parent=1 // pred_check_branch
      %22 = sbr.rel (0) target = $region13
    $region12: #{input_tnet_forward.9} parent=1 // pred_region
      _
    $region13: #{input_tnet_forward.9} parent=1 // pred_fallthru
      _
    // Predicated region
    $region14: #{input_tnet_forward.9} parent=1 // pred_check
      _
    $region15: #{input_tnet_forward.9} parent=1 // pred_check_branch
      %24 = sbr.rel (0) target = $region17
    $region16: #{input_tnet_forward.9} parent=1 // pred_region
      _
    $region17: #{input_tnet_forward.9} parent=1 // pred_fallthru
      _
    // Predicated region
    $region18: #{input_tnet_forward.9} parent=1 // pred_check
      _
    $region19: #{input_tnet_forward.9} parent=1 // pred_check_branch
      %26 = sbr.rel (0) target = $region21
    $region20: #{input_tnet_forward.9} parent=1 // pred_region
      _
    $region21: #{input_tnet_forward.9} parent=1 // pred_fallthru
      _
    // Predicated region
    $region22: #{input_tnet_forward.9} parent=1 // pred_check
      _
    $region23: #{input_tnet_forward.9} parent=1 // pred_check_branch
      %28 = sbr.rel (0) target = $region25
    $region24: #{input_tnet_forward.9} parent=1 // pred_region
      %s30 = ssub.s32 16384, 16384
      %31 = vsyncadd [#allocation3], %s30
      %s32 = sshll.u32 [#allocation2], 4
      %s33 = int_to_ptr.vmem [resolvable:$true] %s32
      %38 = dma.hbm_to_vmem [thread:$0]  %s5, 16384, %s33, [#allocation3], 256, 256, 16
    $region25: #{input_tnet_forward.9} parent=1 // pred_fallthru
      _
    // Predicated region
    $region26: #{input_tnet_forward.9} parent=1 // pred_check
      _
    $region27: #{input_tnet_forward.9} parent=1 // pred_check_branch
      %40 = sbr.rel (0) target = $region29
    $region28: #{input_tnet_forward.9} parent=1 // pred_region
      _
    $region29: #{input_tnet_forward.9} parent=1 // pred_fallthru
      _
    // Predicated region
    $region30: #{input_tnet_forward.9} parent=1 // pred_check
      _
    $region31: #{input_tnet_forward.9} parent=1 // pred_check_branch
      %42 = sbr.rel (0) target = $region33
    $region32: #{input_tnet_forward.9} parent=1 // pred_region
      _
    $region33: #{input_tnet_forward.9} parent=1 // pred_fallthru
      _
    // Predicated region
    $region34: #{input_tnet_forward.9} parent=1 // pred_check
      _
    $region35: #{input_tnet_forward.9} parent=1 // pred_check_branch
      %44 = sbr.rel (0) target = $region37
    $region36: #{input_tnet_forward.9} parent=1 // pred_region
      _
    $region37: #{input_tnet_forward.9} parent=1 // pred_fallthru
      _
    // Predicated region
    $region38: #{input_tnet_forward.9} parent=1 // pred_check
      _
    $region39: #{input_tnet_forward.9} parent=1 // pred_check_branch
      %46 = sbr.rel (0) target = $region41
    $region40: #{input_tnet_forward.9} parent=1 // pred_region
      _
    $region41: #{input_tnet_forward.9} parent=1 // pred_fallthru
      _
    // Predicated region
    $region42: #{input_tnet_forward.9} parent=1 // pred_check
      _
    $region43: #{input_tnet_forward.9} parent=1 // pred_check_branch
      %48 = sbr.rel (0) target = $region45
    $region44: #{input_tnet_forward.9} parent=1 // pred_region
      _
    $region45: #{input_tnet_forward.9} parent=1 // pred_fallthru
      _
    // Predicated region
    $region46: #{input_tnet_forward.9} parent=1 // pred_check
      _
    $region47: #{input_tnet_forward.9} parent=1 // pred_check_branch
      %50 = sbr.rel (0) target = $region49
    $region48: #{input_tnet_forward.9} parent=1 // pred_region
      %51 = dma.done [#allocation3], 16384
    $region49: #{input_tnet_forward.9} parent=1 // pred_fallthru
      _
    %v52 = vld [vmem:[%s0] sm:$0xff]
    %v53 = vld [vmem:[%s0 + $0x8] sm:$0xff]
    %v54 = vld [vmem:[%s1] sm:$0xff]
    %v55 = vld [vmem:[%s1 + $0x8] sm:$0xff]
    %v56 = vld [vmem:[%s1 + $0x10] sm:$0xff]
    %v57 = vld [vmem:[%s1 + $0x18] sm:$0xff]
    %v58 = vld [vmem:[%s1 + $0x20] sm:$0xff]
    %v59 = vld [vmem:[%s1 + $0x28] sm:$0xff]
    %v60 = vld [vmem:[%s1 + $0x30] sm:$0xff]
    %v61 = vld [vmem:[%s1 + $0x38] sm:$0xff]
    %v62 = vld [vmem:[%s1 + $0x40] sm:$0xff]
    %v63 = vld [vmem:[%s1 + $0x48] sm:$0xff]
    %v64 = vld [vmem:[%s1 + $0x50] sm:$0xff]
    %v65 = vld [vmem:[%s1 + $0x58] sm:$0xff]
    %v66 = vld [vmem:[%s1 + $0x60] sm:$0xff]
    %v67 = vld [vmem:[%s1 + $0x68] sm:$0xff]
    %v68 = vld [vmem:[%s1 + $0x70] sm:$0xff]
    %v69 = vld [vmem:[%s1 + $0x78] sm:$0xff]
    %v70 = vld [vmem:[%s1 + $0x80] sm:$0xff]
    %v71 = vld [vmem:[%s1 + $0x88] sm:$0xff]
    %v72 = vld [vmem:[%s1 + $0x90] sm:$0xff]
    %v73 = vld [vmem:[%s1 + $0x98] sm:$0xff]
    %v74 = vld [vmem:[%s1 + $0xa0] sm:$0xff]
    %v75 = vld [vmem:[%s1 + $0xa8] sm:$0xff]
    %v76 = vld [vmem:[%s1 + $0xb0] sm:$0xff]
    %v77 = vld [vmem:[%s1 + $0xb8] sm:$0xff]
    %v78 = vld [vmem:[%s1 + $0xc0] sm:$0xff]
    %v79 = vld [vmem:[%s1 + $0xc8] sm:$0xff]
    %v80 = vld [vmem:[%s1 + $0xd0] sm:$0xff]
    %v81 = vld [vmem:[%s1 + $0xd8] sm:$0xff]
    %v82 = vld [vmem:[%s1 + $0xe0] sm:$0xff]
    %v83 = vld [vmem:[%s1 + $0xe8] sm:$0xff]
    %v84 = vld [vmem:[%s1 + $0xf0] sm:$0xff]
    %v85 = vld [vmem:[%s1 + $0xf8] sm:$0xff]
    %v86 = vld [vmem:[%s1 + $0x100] sm:$0xff]
    %v87 = vld [vmem:[%s1 + $0x108] sm:$0xff]
    %v88 = vld [vmem:[%s1 + $0x110] sm:$0xff]
    %v89 = vld [vmem:[%s1 + $0x118] sm:$0xff]
    %v90 = vld [vmem:[%s1 + $0x120] sm:$0xff]
    %v91 = vld [vmem:[%s1 + $0x128] sm:$0xff]
    %v92 = vld [vmem:[%s1 + $0x130] sm:$0xff]
    %v93 = vld [vmem:[%s1 + $0x138] sm:$0xff]
    %v94 = vld [vmem:[%s1 + $0x140] sm:$0xff]
    %v95 = vld [vmem:[%s1 + $0x148] sm:$0xff]
    %v96 = vld [vmem:[%s1 + $0x150] sm:$0xff]
    %v97 = vld [vmem:[%s1 + $0x158] sm:$0xff]
    %v98 = vld [vmem:[%s1 + $0x160] sm:$0xff]
    %v99 = vld [vmem:[%s1 + $0x168] sm:$0xff]
    %v100 = vld [vmem:[%s1 + $0x170] sm:$0xff]
    %v101 = vld [vmem:[%s1 + $0x178] sm:$0xff]
    %v102 = vld [vmem:[%s1 + $0x180] sm:$0xff]
    %v103 = vld [vmem:[%s1 + $0x188] sm:$0xff]
    %v104 = vld [vmem:[%s1 + $0x190] sm:$0xff]
    %v105 = vld [vmem:[%s1 + $0x198] sm:$0xff]
    %v106 = vld [vmem:[%s1 + $0x1a0] sm:$0xff]
    %v107 = vld [vmem:[%s1 + $0x1a8] sm:$0xff]
    %v108 = vld [vmem:[%s1 + $0x1b0] sm:$0xff]
    %v109 = vld [vmem:[%s1 + $0x1b8] sm:$0xff]
    %v110 = vld [vmem:[%s1 + $0x1c0] sm:$0xff]
    %v111 = vld [vmem:[%s1 + $0x1c8] sm:$0xff]
    %v112 = vld [vmem:[%s1 + $0x1d0] sm:$0xff]
    %v113 = vld [vmem:[%s1 + $0x1d8] sm:$0xff]
    %v114 = vld [vmem:[%s1 + $0x1e0] sm:$0xff]
    %v115 = vld [vmem:[%s1 + $0x1e8] sm:$0xff]
    %v116 = vld [vmem:[%s1 + $0x1f0] sm:$0xff]
    %v117 = vld [vmem:[%s1 + $0x1f8] sm:$0xff]
    %v118 = vld [vmem:[%s1 + $0x200] sm:$0xff]
    %v119 = vld [vmem:[%s1 + $0x208] sm:$0xff]
    %v120 = vld [vmem:[%s1 + $0x210] sm:$0xff]
    %v121 = vld [vmem:[%s1 + $0x218] sm:$0xff]
    %v122 = vld [vmem:[%s1 + $0x220] sm:$0xff]
    %v123 = vld [vmem:[%s1 + $0x228] sm:$0xff]
    %v124 = vld [vmem:[%s1 + $0x230] sm:$0xff]
    %v125 = vld [vmem:[%s1 + $0x238] sm:$0xff]
    %v126 = vld [vmem:[%s1 + $0x240] sm:$0xff]
    %v127 = vld [vmem:[%s1 + $0x248] sm:$0xff]
    %v128 = vld [vmem:[%s1 + $0x250] sm:$0xff]
    %v129 = vld [vmem:[%s1 + $0x258] sm:$0xff]
    %v130 = vld [vmem:[%s1 + $0x260] sm:$0xff]
    %v131 = vld [vmem:[%s1 + $0x268] sm:$0xff]
    %v132 = vld [vmem:[%s1 + $0x270] sm:$0xff]
    %v133 = vld [vmem:[%s1 + $0x278] sm:$0xff]
    %v134 = vld [vmem:[%s1 + $0x280] sm:$0xff]
    %v135 = vld [vmem:[%s1 + $0x288] sm:$0xff]
    %v136 = vld [vmem:[%s1 + $0x290] sm:$0xff]
    %v137 = vld [vmem:[%s1 + $0x298] sm:$0xff]
    %v138 = vld [vmem:[%s1 + $0x2a0] sm:$0xff]
    %v139 = vld [vmem:[%s1 + $0x2a8] sm:$0xff]
    %v140 = vld [vmem:[%s1 + $0x2b0] sm:$0xff]
    %v141 = vld [vmem:[%s1 + $0x2b8] sm:$0xff]
    %v142 = vld [vmem:[%s1 + $0x2c0] sm:$0xff]
    %v143 = vld [vmem:[%s1 + $0x2c8] sm:$0xff]
    %v144 = vld [vmem:[%s1 + $0x2d0] sm:$0xff]
    %v145 = vld [vmem:[%s1 + $0x2d8] sm:$0xff]
    %v146 = vld [vmem:[%s1 + $0x2e0] sm:$0xff]
    %v147 = vld [vmem:[%s1 + $0x2e8] sm:$0xff]
    %v148 = vld [vmem:[%s1 + $0x2f0] sm:$0xff]
    %v149 = vld [vmem:[%s1 + $0x2f8] sm:$0xff]
    %v150 = vld [vmem:[%s1 + $0x300] sm:$0xff]
    %v151 = vld [vmem:[%s1 + $0x308] sm:$0xff]
    %v152 = vld [vmem:[%s1 + $0x310] sm:$0xff]
    %v153 = vld [vmem:[%s1 + $0x318] sm:$0xff]
    %v154 = vld [vmem:[%s1 + $0x320] sm:$0xff]
    %v155 = vld [vmem:[%s1 + $0x328] sm:$0xff]
    %v156 = vld [vmem:[%s1 + $0x330] sm:$0xff]
    %v157 = vld [vmem:[%s1 + $0x338] sm:$0xff]
    %v158 = vld [vmem:[%s1 + $0x340] sm:$0xff]
    %v159 = vld [vmem:[%s1 + $0x348] sm:$0xff]
    %v160 = vld [vmem:[%s1 + $0x350] sm:$0xff]
    %v161 = vld [vmem:[%s1 + $0x358] sm:$0xff]
    %v162 = vld [vmem:[%s1 + $0x360] sm:$0xff]
    %v163 = vld [vmem:[%s1 + $0x368] sm:$0xff]
    %v164 = vld [vmem:[%s1 + $0x370] sm:$0xff]
    %v165 = vld [vmem:[%s1 + $0x378] sm:$0xff]
    %v166 = vld [vmem:[%s1 + $0x380] sm:$0xff]
    %v167 = vld [vmem:[%s1 + $0x388] sm:$0xff]
    %v168 = vld [vmem:[%s1 + $0x390] sm:$0xff]
    %v169 = vld [vmem:[%s1 + $0x398] sm:$0xff]
    %v170 = vld [vmem:[%s1 + $0x3a0] sm:$0xff]
    %v171 = vld [vmem:[%s1 + $0x3a8] sm:$0xff]
    %v172 = vld [vmem:[%s1 + $0x3b0] sm:$0xff]
    %v173 = vld [vmem:[%s1 + $0x3b8] sm:$0xff]
    %v174 = vld [vmem:[%s1 + $0x3c0] sm:$0xff]
    %v175 = vld [vmem:[%s1 + $0x3c8] sm:$0xff]
    %v176 = vld [vmem:[%s1 + $0x3d0] sm:$0xff]
    %v177 = vld [vmem:[%s1 + $0x3d8] sm:$0xff]
    %v178 = vld [vmem:[%s1 + $0x3e0] sm:$0xff]
    %v179 = vld [vmem:[%s1 + $0x3e8] sm:$0xff]
    %v180 = vld [vmem:[%s1 + $0x3f0] sm:$0xff]
    %v181 = vld [vmem:[%s1 + $0x3f8] sm:$0xff]
    %v182 = vld [vmem:[%s1 + $0x400] sm:$0xff]
    %v183 = vld [vmem:[%s1 + $0x408] sm:$0xff]
    %v184 = vld [vmem:[%s1 + $0x410] sm:$0xff]
    %v185 = vld [vmem:[%s1 + $0x418] sm:$0xff]
    %v186 = vld [vmem:[%s1 + $0x420] sm:$0xff]
    %v187 = vld [vmem:[%s1 + $0x428] sm:$0xff]
    %v188 = vld [vmem:[%s1 + $0x430] sm:$0xff]
    %v189 = vld [vmem:[%s1 + $0x438] sm:$0xff]
    %v190 = vld [vmem:[%s1 + $0x440] sm:$0xff]
    %v191 = vld [vmem:[%s1 + $0x448] sm:$0xff]
    %v192 = vld [vmem:[%s1 + $0x450] sm:$0xff]
    %v193 = vld [vmem:[%s1 + $0x458] sm:$0xff]
    %v194 = vld [vmem:[%s1 + $0x460] sm:$0xff]
    %v195 = vld [vmem:[%s1 + $0x468] sm:$0xff]
    %v196 = vld [vmem:[%s1 + $0x470] sm:$0xff]
    %v197 = vld [vmem:[%s1 + $0x478] sm:$0xff]
    %v198 = vld [vmem:[%s1 + $0x480] sm:$0xff]
    %v199 = vld [vmem:[%s1 + $0x488] sm:$0xff]
    %v200 = vld [vmem:[%s1 + $0x490] sm:$0xff]
    %v201 = vld [vmem:[%s1 + $0x498] sm:$0xff]
    %v202 = vld [vmem:[%s1 + $0x4a0] sm:$0xff]
    %v203 = vld [vmem:[%s1 + $0x4a8] sm:$0xff]
    %v204 = vld [vmem:[%s1 + $0x4b0] sm:$0xff]
    %v205 = vld [vmem:[%s1 + $0x4b8] sm:$0xff]
    %v206 = vld [vmem:[%s1 + $0x4c0] sm:$0xff]
    %v207 = vld [vmem:[%s1 + $0x4c8] sm:$0xff]
    %v208 = vld [vmem:[%s1 + $0x4d0] sm:$0xff]
    %v209 = vld [vmem:[%s1 + $0x4d8] sm:$0xff]
    %v210 = vld [vmem:[%s1 + $0x4e0] sm:$0xff]
    %v211 = vld [vmem:[%s1 + $0x4e8] sm:$0xff]
    %v212 = vld [vmem:[%s1 + $0x4f0] sm:$0xff]
    %v213 = vld [vmem:[%s1 + $0x4f8] sm:$0xff]
    %v214 = vld [vmem:[%s1 + $0x500] sm:$0xff]
    %v215 = vld [vmem:[%s1 + $0x508] sm:$0xff]
    %v216 = vld [vmem:[%s1 + $0x510] sm:$0xff]
    %v217 = vld [vmem:[%s1 + $0x518] sm:$0xff]
    %v218 = vld [vmem:[%s1 + $0x520] sm:$0xff]
    %v219 = vld [vmem:[%s1 + $0x528] sm:$0xff]
    %v220 = vld [vmem:[%s1 + $0x530] sm:$0xff]
    %v221 = vld [vmem:[%s1 + $0x538] sm:$0xff]
    %v222 = vld [vmem:[%s1 + $0x540] sm:$0xff]
    %v223 = vld [vmem:[%s1 + $0x548] sm:$0xff]
    %v224 = vld [vmem:[%s1 + $0x550] sm:$0xff]
    %v225 = vld [vmem:[%s1 + $0x558] sm:$0xff]
    %v226 = vld [vmem:[%s1 + $0x560] sm:$0xff]
    %v227 = vld [vmem:[%s1 + $0x568] sm:$0xff]
    %v228 = vld [vmem:[%s1 + $0x570] sm:$0xff]
    %v229 = vld [vmem:[%s1 + $0x578] sm:$0xff]
    %v230 = vld [vmem:[%s1 + $0x580] sm:$0xff]
    %v231 = vld [vmem:[%s1 + $0x588] sm:$0xff]
    %v232 = vld [vmem:[%s1 + $0x590] sm:$0xff]
    %v233 = vld [vmem:[%s1 + $0x598] sm:$0xff]
    %v234 = vld [vmem:[%s1 + $0x5a0] sm:$0xff]
    %v235 = vld [vmem:[%s1 + $0x5a8] sm:$0xff]
    %v236 = vld [vmem:[%s1 + $0x5b0] sm:$0xff]
    %v237 = vld [vmem:[%s1 + $0x5b8] sm:$0xff]
    %v238 = vld [vmem:[%s1 + $0x5c0] sm:$0xff]
    %v239 = vld [vmem:[%s1 + $0x5c8] sm:$0xff]
    %v240 = vld [vmem:[%s1 + $0x5d0] sm:$0xff]
    %v241 = vld [vmem:[%s1 + $0x5d8] sm:$0xff]
    %v242 = vld [vmem:[%s1 + $0x5e0] sm:$0xff]
    %v243 = vld [vmem:[%s1 + $0x5e8] sm:$0xff]
    %v244 = vld [vmem:[%s1 + $0x5f0] sm:$0xff]
    %v245 = vld [vmem:[%s1 + $0x5f8] sm:$0xff]
    %v246 = vld [vmem:[%s1 + $0x600] sm:$0xff]
    %v247 = vld [vmem:[%s1 + $0x608] sm:$0xff]
    %v248 = vld [vmem:[%s1 + $0x610] sm:$0xff]
    %v249 = vld [vmem:[%s1 + $0x618] sm:$0xff]
    %v250 = vld [vmem:[%s1 + $0x620] sm:$0xff]
    %v251 = vld [vmem:[%s1 + $0x628] sm:$0xff]
    %v252 = vld [vmem:[%s1 + $0x630] sm:$0xff]
    %v253 = vld [vmem:[%s1 + $0x638] sm:$0xff]
    %v254 = vld [vmem:[%s1 + $0x640] sm:$0xff]
    %v255 = vld [vmem:[%s1 + $0x648] sm:$0xff]
    %v256 = vld [vmem:[%s1 + $0x650] sm:$0xff]
    %v257 = vld [vmem:[%s1 + $0x658] sm:$0xff]
    %v258 = vld [vmem:[%s1 + $0x660] sm:$0xff]
    %v259 = vld [vmem:[%s1 + $0x668] sm:$0xff]
    %v260 = vld [vmem:[%s1 + $0x670] sm:$0xff]
    %v261 = vld [vmem:[%s1 + $0x678] sm:$0xff]
    %v262 = vld [vmem:[%s1 + $0x680] sm:$0xff]
    %v263 = vld [vmem:[%s1 + $0x688] sm:$0xff]
    %v264 = vld [vmem:[%s1 + $0x690] sm:$0xff]
    %v265 = vld [vmem:[%s1 + $0x698] sm:$0xff]
    %v266 = vld [vmem:[%s1 + $0x6a0] sm:$0xff]
    %v267 = vld [vmem:[%s1 + $0x6a8] sm:$0xff]
    %v268 = vld [vmem:[%s1 + $0x6b0] sm:$0xff]
    %v269 = vld [vmem:[%s1 + $0x6b8] sm:$0xff]
    %v270 = vld [vmem:[%s1 + $0x6c0] sm:$0xff]
    %v271 = vld [vmem:[%s1 + $0x6c8] sm:$0xff]
    %v272 = vld [vmem:[%s1 + $0x6d0] sm:$0xff]
    %v273 = vld [vmem:[%s1 + $0x6d8] sm:$0xff]
    %v274 = vld [vmem:[%s1 + $0x6e0] sm:$0xff]
    %v275 = vld [vmem:[%s1 + $0x6e8] sm:$0xff]
    %v276 = vld [vmem:[%s1 + $0x6f0] sm:$0xff]
    %v277 = vld [vmem:[%s1 + $0x6f8] sm:$0xff]
    %v278 = vld [vmem:[%s1 + $0x700] sm:$0xff]
    %v279 = vld [vmem:[%s1 + $0x708] sm:$0xff]
    %v280 = vld [vmem:[%s1 + $0x710] sm:$0xff]
    %v281 = vld [vmem:[%s1 + $0x718] sm:$0xff]
    %v282 = vld [vmem:[%s1 + $0x720] sm:$0xff]
    %v283 = vld [vmem:[%s1 + $0x728] sm:$0xff]
    %v284 = vld [vmem:[%s1 + $0x730] sm:$0xff]
    %v285 = vld [vmem:[%s1 + $0x738] sm:$0xff]
    %v286 = vld [vmem:[%s1 + $0x740] sm:$0xff]
    %v287 = vld [vmem:[%s1 + $0x748] sm:$0xff]
    %v288 = vld [vmem:[%s1 + $0x750] sm:$0xff]
    %v289 = vld [vmem:[%s1 + $0x758] sm:$0xff]
    %v290 = vld [vmem:[%s1 + $0x760] sm:$0xff]
    %v291 = vld [vmem:[%s1 + $0x768] sm:$0xff]
    %v292 = vld [vmem:[%s1 + $0x770] sm:$0xff]
    %v293 = vld [vmem:[%s1 + $0x778] sm:$0xff]
    %v294 = vld [vmem:[%s1 + $0x780] sm:$0xff]
    %v295 = vld [vmem:[%s1 + $0x788] sm:$0xff]
    %v296 = vld [vmem:[%s1 + $0x790] sm:$0xff]
    %v297 = vld [vmem:[%s1 + $0x798] sm:$0xff]
    %v298 = vld [vmem:[%s1 + $0x7a0] sm:$0xff]
    %v299 = vld [vmem:[%s1 + $0x7a8] sm:$0xff]
    %v300 = vld [vmem:[%s1 + $0x7b0] sm:$0xff]
    %v301 = vld [vmem:[%s1 + $0x7b8] sm:$0xff]
    %v302 = vld [vmem:[%s1 + $0x7c0] sm:$0xff]
    %v303 = vld [vmem:[%s1 + $0x7c8] sm:$0xff]
    %v304 = vld [vmem:[%s1 + $0x7d0] sm:$0xff]
    %v305 = vld [vmem:[%s1 + $0x7d8] sm:$0xff]
    %v306 = vld [vmem:[%s1 + $0x7e0] sm:$0xff]
    %v307 = vld [vmem:[%s1 + $0x7e8] sm:$0xff]
    %v308 = vld [vmem:[%s1 + $0x7f0] sm:$0xff]
    %v309 = vld [vmem:[%s1 + $0x7f8] sm:$0xff]
    %v310 = vld [vmem:[%s1 + $0x800] sm:$0xff]
    %v311 = vld [vmem:[%s1 + $0x808] sm:$0xff]
    %v312 = vld [vmem:[%s1 + $0x810] sm:$0xff]
    %v313 = vld [vmem:[%s1 + $0x818] sm:$0xff]
    %v314 = vld [vmem:[%s1 + $0x820] sm:$0xff]
    %v315 = vld [vmem:[%s1 + $0x828] sm:$0xff]
    %v316 = vld [vmem:[%s1 + $0x830] sm:$0xff]
    %v317 = vld [vmem:[%s1 + $0x838] sm:$0xff]
    %v318 = vld [vmem:[%s1 + $0x840] sm:$0xff]
    %v319 = vld [vmem:[%s1 + $0x848] sm:$0xff]
    %v320 = vld [vmem:[%s1 + $0x850] sm:$0xff]
    %v321 = vld [vmem:[%s1 + $0x858] sm:$0xff]
    %v322 = vld [vmem:[%s1 + $0x860] sm:$0xff]
    %v323 = vld [vmem:[%s1 + $0x868] sm:$0xff]
    %v324 = vld [vmem:[%s1 + $0x870] sm:$0xff]
    %v325 = vld [vmem:[%s1 + $0x878] sm:$0xff]
    %v326 = vld [vmem:[%s1 + $0x880] sm:$0xff]
    %v327 = vld [vmem:[%s1 + $0x888] sm:$0xff]
    %v328 = vld [vmem:[%s1 + $0x890] sm:$0xff]
    %v329 = vld [vmem:[%s1 + $0x898] sm:$0xff]
    %v330 = vld [vmem:[%s1 + $0x8a0] sm:$0xff]
    %v331 = vld [vmem:[%s1 + $0x8a8] sm:$0xff]
    %v332 = vld [vmem:[%s1 + $0x8b0] sm:$0xff]
    %v333 = vld [vmem:[%s1 + $0x8b8] sm:$0xff]
    %v334 = vld [vmem:[%s1 + $0x8c0] sm:$0xff]
    %v335 = vld [vmem:[%s1 + $0x8c8] sm:$0xff]
    %v336 = vld [vmem:[%s1 + $0x8d0] sm:$0xff]
    %v337 = vld [vmem:[%s1 + $0x8d8] sm:$0xff]
    %v338 = vld [vmem:[%s1 + $0x8e0] sm:$0xff]
    %v339 = vld [vmem:[%s1 + $0x8e8] sm:$0xff]
    %v340 = vld [vmem:[%s1 + $0x8f0] sm:$0xff]
    %v341 = vld [vmem:[%s1 + $0x8f8] sm:$0xff]
    %v342 = vld [vmem:[%s1 + $0x900] sm:$0xff]
    %v343 = vld [vmem:[%s1 + $0x908] sm:$0xff]
    %v344 = vld [vmem:[%s1 + $0x910] sm:$0xff]
    %v345 = vld [vmem:[%s1 + $0x918] sm:$0xff]
    %v346 = vld [vmem:[%s1 + $0x920] sm:$0xff]
    %v347 = vld [vmem:[%s1 + $0x928] sm:$0xff]
    %v348 = vld [vmem:[%s1 + $0x930] sm:$0xff]
    %v349 = vld [vmem:[%s1 + $0x938] sm:$0xff]
    %v350 = vld [vmem:[%s1 + $0x940] sm:$0xff]
    %v351 = vld [vmem:[%s1 + $0x948] sm:$0xff]
    %v352 = vld [vmem:[%s1 + $0x950] sm:$0xff]
    %v353 = vld [vmem:[%s1 + $0x958] sm:$0xff]
    %v354 = vld [vmem:[%s1 + $0x960] sm:$0xff]
    %v355 = vld [vmem:[%s1 + $0x968] sm:$0xff]
    %v356 = vld [vmem:[%s1 + $0x970] sm:$0xff]
    %v357 = vld [vmem:[%s1 + $0x978] sm:$0xff]
    %v358 = vld [vmem:[%s1 + $0x980] sm:$0xff]
    %v359 = vld [vmem:[%s1 + $0x988] sm:$0xff]
    %v360 = vld [vmem:[%s1 + $0x990] sm:$0xff]
    %v361 = vld [vmem:[%s1 + $0x998] sm:$0xff]
    %v362 = vld [vmem:[%s1 + $0x9a0] sm:$0xff]
    %v363 = vld [vmem:[%s1 + $0x9a8] sm:$0xff]
    %v364 = vld [vmem:[%s1 + $0x9b0] sm:$0xff]
    %v365 = vld [vmem:[%s1 + $0x9b8] sm:$0xff]
    %v366 = vld [vmem:[%s1 + $0x9c0] sm:$0xff]
    %v367 = vld [vmem:[%s1 + $0x9c8] sm:$0xff]
    %v368 = vld [vmem:[%s1 + $0x9d0] sm:$0xff]
    %v369 = vld [vmem:[%s1 + $0x9d8] sm:$0xff]
    %v370 = vld [vmem:[%s1 + $0x9e0] sm:$0xff]
    %v371 = vld [vmem:[%s1 + $0x9e8] sm:$0xff]
    %v372 = vld [vmem:[%s1 + $0x9f0] sm:$0xff]
    %v373 = vld [vmem:[%s1 + $0x9f8] sm:$0xff]
    %v374 = vld [vmem:[%s1 + $0xa00] sm:$0xff]
    %v375 = vld [vmem:[%s1 + $0xa08] sm:$0xff]
    %v376 = vld [vmem:[%s1 + $0xa10] sm:$0xff]
    %v377 = vld [vmem:[%s1 + $0xa18] sm:$0xff]
    %v378 = vld [vmem:[%s1 + $0xa20] sm:$0xff]
    %v379 = vld [vmem:[%s1 + $0xa28] sm:$0xff]
    %v380 = vld [vmem:[%s1 + $0xa30] sm:$0xff]
    %v381 = vld [vmem:[%s1 + $0xa38] sm:$0xff]
    %v382 = vld [vmem:[%s1 + $0xa40] sm:$0xff]
    %v383 = vld [vmem:[%s1 + $0xa48] sm:$0xff]
    %v384 = vld [vmem:[%s1 + $0xa50] sm:$0xff]
    %v385 = vld [vmem:[%s1 + $0xa58] sm:$0xff]
    %v386 = vld [vmem:[%s1 + $0xa60] sm:$0xff]
    %v387 = vld [vmem:[%s1 + $0xa68] sm:$0xff]
    %v388 = vld [vmem:[%s1 + $0xa70] sm:$0xff]
    %v389 = vld [vmem:[%s1 + $0xa78] sm:$0xff]
    %v390 = vld [vmem:[%s1 + $0xa80] sm:$0xff]
    %v391 = vld [vmem:[%s1 + $0xa88] sm:$0xff]
    %v392 = vld [vmem:[%s1 + $0xa90] sm:$0xff]
    %v393 = vld [vmem:[%s1 + $0xa98] sm:$0xff]
    %v394 = vld [vmem:[%s1 + $0xaa0] sm:$0xff]
    %v395 = vld [vmem:[%s1 + $0xaa8] sm:$0xff]
    %v396 = vld [vmem:[%s1 + $0xab0] sm:$0xff]
    %v397 = vld [vmem:[%s1 + $0xab8] sm:$0xff]
    %v398 = vld [vmem:[%s1 + $0xac0] sm:$0xff]
    %v399 = vld [vmem:[%s1 + $0xac8] sm:$0xff]
    %v400 = vld [vmem:[%s1 + $0xad0] sm:$0xff]
    %v401 = vld [vmem:[%s1 + $0xad8] sm:$0xff]
    %v402 = vld [vmem:[%s1 + $0xae0] sm:$0xff]
    %v403 = vld [vmem:[%s1 + $0xae8] sm:$0xff]
    %v404 = vld [vmem:[%s1 + $0xaf0] sm:$0xff]
    %v405 = vld [vmem:[%s1 + $0xaf8] sm:$0xff]
    %v406 = vld [vmem:[%s1 + $0xb00] sm:$0xff]
    %v407 = vld [vmem:[%s1 + $0xb08] sm:$0xff]
    %v408 = vld [vmem:[%s1 + $0xb10] sm:$0xff]
    %v409 = vld [vmem:[%s1 + $0xb18] sm:$0xff]
    %v410 = vld [vmem:[%s1 + $0xb20] sm:$0xff]
    %v411 = vld [vmem:[%s1 + $0xb28] sm:$0xff]
    %v412 = vld [vmem:[%s1 + $0xb30] sm:$0xff]
    %v413 = vld [vmem:[%s1 + $0xb38] sm:$0xff]
    %v414 = vld [vmem:[%s1 + $0xb40] sm:$0xff]
    %v415 = vld [vmem:[%s1 + $0xb48] sm:$0xff]
    %v416 = vld [vmem:[%s1 + $0xb50] sm:$0xff]
    %v417 = vld [vmem:[%s1 + $0xb58] sm:$0xff]
    %v418 = vld [vmem:[%s1 + $0xb60] sm:$0xff]
    %v419 = vld [vmem:[%s1 + $0xb68] sm:$0xff]
    %v420 = vld [vmem:[%s1 + $0xb70] sm:$0xff]
    %v421 = vld [vmem:[%s1 + $0xb78] sm:$0xff]
    %v422 = vld [vmem:[%s1 + $0xb80] sm:$0xff]
    %v423 = vld [vmem:[%s1 + $0xb88] sm:$0xff]
    %v424 = vld [vmem:[%s1 + $0xb90] sm:$0xff]
    %v425 = vld [vmem:[%s1 + $0xb98] sm:$0xff]
    %v426 = vld [vmem:[%s1 + $0xba0] sm:$0xff]
    %v427 = vld [vmem:[%s1 + $0xba8] sm:$0xff]
    %v428 = vld [vmem:[%s1 + $0xbb0] sm:$0xff]
    %v429 = vld [vmem:[%s1 + $0xbb8] sm:$0xff]
    %v430 = vld [vmem:[%s1 + $0xbc0] sm:$0xff]
    %v431 = vld [vmem:[%s1 + $0xbc8] sm:$0xff]
    %v432 = vld [vmem:[%s1 + $0xbd0] sm:$0xff]
    %v433 = vld [vmem:[%s1 + $0xbd8] sm:$0xff]
    %v434 = vld [vmem:[%s1 + $0xbe0] sm:$0xff]
    %v435 = vld [vmem:[%s1 + $0xbe8] sm:$0xff]
    %v436 = vld [vmem:[%s1 + $0xbf0] sm:$0xff]
    %v437 = vld [vmem:[%s1 + $0xbf8] sm:$0xff]
    %v438 = vld [vmem:[%s1 + $0xc00] sm:$0xff]
    %v439 = vld [vmem:[%s1 + $0xc08] sm:$0xff]
    %v440 = vld [vmem:[%s1 + $0xc10] sm:$0xff]
    %v441 = vld [vmem:[%s1 + $0xc18] sm:$0xff]
    %v442 = vld [vmem:[%s1 + $0xc20] sm:$0xff]
    %v443 = vld [vmem:[%s1 + $0xc28] sm:$0xff]
    %v444 = vld [vmem:[%s1 + $0xc30] sm:$0xff]
    %v445 = vld [vmem:[%s1 + $0xc38] sm:$0xff]
    %v446 = vld [vmem:[%s1 + $0xc40] sm:$0xff]
    %v447 = vld [vmem:[%s1 + $0xc48] sm:$0xff]
    %v448 = vld [vmem:[%s1 + $0xc50] sm:$0xff]
    %v449 = vld [vmem:[%s1 + $0xc58] sm:$0xff]
    %v450 = vld [vmem:[%s1 + $0xc60] sm:$0xff]
    %v451 = vld [vmem:[%s1 + $0xc68] sm:$0xff]
    %v452 = vld [vmem:[%s1 + $0xc70] sm:$0xff]
    %v453 = vld [vmem:[%s1 + $0xc78] sm:$0xff]
    %v454 = vld [vmem:[%s1 + $0xc80] sm:$0xff]
    %v455 = vld [vmem:[%s1 + $0xc88] sm:$0xff]
    %v456 = vld [vmem:[%s1 + $0xc90] sm:$0xff]
    %v457 = vld [vmem:[%s1 + $0xc98] sm:$0xff]
    %v458 = vld [vmem:[%s1 + $0xca0] sm:$0xff]
    %v459 = vld [vmem:[%s1 + $0xca8] sm:$0xff]
    %v460 = vld [vmem:[%s1 + $0xcb0] sm:$0xff]
    %v461 = vld [vmem:[%s1 + $0xcb8] sm:$0xff]
    %v462 = vld [vmem:[%s1 + $0xcc0] sm:$0xff]
    %v463 = vld [vmem:[%s1 + $0xcc8] sm:$0xff]
    %v464 = vld [vmem:[%s1 + $0xcd0] sm:$0xff]
    %v465 = vld [vmem:[%s1 + $0xcd8] sm:$0xff]
    %v466 = vld [vmem:[%s1 + $0xce0] sm:$0xff]
    %v467 = vld [vmem:[%s1 + $0xce8] sm:$0xff]
    %v468 = vld [vmem:[%s1 + $0xcf0] sm:$0xff]
    %v469 = vld [vmem:[%s1 + $0xcf8] sm:$0xff]
    %v470 = vld [vmem:[%s1 + $0xd00] sm:$0xff]
    %v471 = vld [vmem:[%s1 + $0xd08] sm:$0xff]
    %v472 = vld [vmem:[%s1 + $0xd10] sm:$0xff]
    %v473 = vld [vmem:[%s1 + $0xd18] sm:$0xff]
    %v474 = vld [vmem:[%s1 + $0xd20] sm:$0xff]
    %v475 = vld [vmem:[%s1 + $0xd28] sm:$0xff]
    %v476 = vld [vmem:[%s1 + $0xd30] sm:$0xff]
    %v477 = vld [vmem:[%s1 + $0xd38] sm:$0xff]
    %v478 = vld [vmem:[%s1 + $0xd40] sm:$0xff]
    %v479 = vld [vmem:[%s1 + $0xd48] sm:$0xff]
    %v480 = vld [vmem:[%s1 + $0xd50] sm:$0xff]
    %v481 = vld [vmem:[%s1 + $0xd58] sm:$0xff]
    %v482 = vld [vmem:[%s1 + $0xd60] sm:$0xff]
    %v483 = vld [vmem:[%s1 + $0xd68] sm:$0xff]
    %v484 = vld [vmem:[%s1 + $0xd70] sm:$0xff]
    %v485 = vld [vmem:[%s1 + $0xd78] sm:$0xff]
    %v486 = vld [vmem:[%s1 + $0xd80] sm:$0xff]
    %v487 = vld [vmem:[%s1 + $0xd88] sm:$0xff]
    %v488 = vld [vmem:[%s1 + $0xd90] sm:$0xff]
    %v489 = vld [vmem:[%s1 + $0xd98] sm:$0xff]
    %v490 = vld [vmem:[%s1 + $0xda0] sm:$0xff]
    %v491 = vld [vmem:[%s1 + $0xda8] sm:$0xff]
    %v492 = vld [vmem:[%s1 + $0xdb0] sm:$0xff]
    %v493 = vld [vmem:[%s1 + $0xdb8] sm:$0xff]
    %v494 = vld [vmem:[%s1 + $0xdc0] sm:$0xff]
    %v495 = vld [vmem:[%s1 + $0xdc8] sm:$0xff]
    %v496 = vld [vmem:[%s1 + $0xdd0] sm:$0xff]
    %v497 = vld [vmem:[%s1 + $0xdd8] sm:$0xff]
    %v498 = vld [vmem:[%s1 + $0xde0] sm:$0xff]
    %v499 = vld [vmem:[%s1 + $0xde8] sm:$0xff]
    %v500 = vld [vmem:[%s1 + $0xdf0] sm:$0xff]
    %v501 = vld [vmem:[%s1 + $0xdf8] sm:$0xff]
    %v502 = vld [vmem:[%s1 + $0xe00] sm:$0xff]
    %v503 = vld [vmem:[%s1 + $0xe08] sm:$0xff]
    %v504 = vld [vmem:[%s1 + $0xe10] sm:$0xff]
    %v505 = vld [vmem:[%s1 + $0xe18] sm:$0xff]
    %v506 = vld [vmem:[%s1 + $0xe20] sm:$0xff]
    %v507 = vld [vmem:[%s1 + $0xe28] sm:$0xff]
    %v508 = vld [vmem:[%s1 + $0xe30] sm:$0xff]
    %v509 = vld [vmem:[%s1 + $0xe38] sm:$0xff]
    %v510 = vld [vmem:[%s1 + $0xe40] sm:$0xff]
    %v511 = vld [vmem:[%s1 + $0xe48] sm:$0xff]
    %v512 = vld [vmem:[%s1 + $0xe50] sm:$0xff]
    %v513 = vld [vmem:[%s1 + $0xe58] sm:$0xff]
    %v514 = vld [vmem:[%s1 + $0xe60] sm:$0xff]
    %v515 = vld [vmem:[%s1 + $0xe68] sm:$0xff]
    %v516 = vld [vmem:[%s1 + $0xe70] sm:$0xff]
    %v517 = vld [vmem:[%s1 + $0xe78] sm:$0xff]
    %v518 = vld [vmem:[%s1 + $0xe80] sm:$0xff]
    %v519 = vld [vmem:[%s1 + $0xe88] sm:$0xff]
    %v520 = vld [vmem:[%s1 + $0xe90] sm:$0xff]
    %v521 = vld [vmem:[%s1 + $0xe98] sm:$0xff]
    %v522 = vld [vmem:[%s1 + $0xea0] sm:$0xff]
    %v523 = vld [vmem:[%s1 + $0xea8] sm:$0xff]
    %v524 = vld [vmem:[%s1 + $0xeb0] sm:$0xff]
    %v525 = vld [vmem:[%s1 + $0xeb8] sm:$0xff]
    %v526 = vld [vmem:[%s1 + $0xec0] sm:$0xff]
    %v527 = vld [vmem:[%s1 + $0xec8] sm:$0xff]
    %v528 = vld [vmem:[%s1 + $0xed0] sm:$0xff]
    %v529 = vld [vmem:[%s1 + $0xed8] sm:$0xff]
    %v530 = vld [vmem:[%s1 + $0xee0] sm:$0xff]
    %v531 = vld [vmem:[%s1 + $0xee8] sm:$0xff]
    %v532 = vld [vmem:[%s1 + $0xef0] sm:$0xff]
    %v533 = vld [vmem:[%s1 + $0xef8] sm:$0xff]
    %v534 = vld [vmem:[%s1 + $0xf00] sm:$0xff]
    %v535 = vld [vmem:[%s1 + $0xf08] sm:$0xff]
    %v536 = vld [vmem:[%s1 + $0xf10] sm:$0xff]
    %v537 = vld [vmem:[%s1 + $0xf18] sm:$0xff]
    %v538 = vld [vmem:[%s1 + $0xf20] sm:$0xff]
    %v539 = vld [vmem:[%s1 + $0xf28] sm:$0xff]
    %v540 = vld [vmem:[%s1 + $0xf30] sm:$0xff]
    %v541 = vld [vmem:[%s1 + $0xf38] sm:$0xff]
    %v542 = vld [vmem:[%s1 + $0xf40] sm:$0xff]
    %v543 = vld [vmem:[%s1 + $0xf48] sm:$0xff]
    %v544 = vld [vmem:[%s1 + $0xf50] sm:$0xff]
    %v545 = vld [vmem:[%s1 + $0xf58] sm:$0xff]
    %v546 = vld [vmem:[%s1 + $0xf60] sm:$0xff]
    %v547 = vld [vmem:[%s1 + $0xf68] sm:$0xff]
    %v548 = vld [vmem:[%s1 + $0xf70] sm:$0xff]
    %v549 = vld [vmem:[%s1 + $0xf78] sm:$0xff]
    %v550 = vld [vmem:[%s1 + $0xf80] sm:$0xff]
    %v551 = vld [vmem:[%s1 + $0xf88] sm:$0xff]
    %v552 = vld [vmem:[%s1 + $0xf90] sm:$0xff]
    %v553 = vld [vmem:[%s1 + $0xf98] sm:$0xff]
    %v554 = vld [vmem:[%s1 + $0xfa0] sm:$0xff]
    %v555 = vld [vmem:[%s1 + $0xfa8] sm:$0xff]
    %v556 = vld [vmem:[%s1 + $0xfb0] sm:$0xff]
    %v557 = vld [vmem:[%s1 + $0xfb8] sm:$0xff]
    %v558 = vld [vmem:[%s1 + $0xfc0] sm:$0xff]
    %v559 = vld [vmem:[%s1 + $0xfc8] sm:$0xff]
    %v560 = vld [vmem:[%s1 + $0xfd0] sm:$0xff]
    %v561 = vld [vmem:[%s1 + $0xfd8] sm:$0xff]
    %v562 = vld [vmem:[%s1 + $0xfe0] sm:$0xff]
    %v563 = vld [vmem:[%s1 + $0xfe8] sm:$0xff]
    %v564 = vld [vmem:[%s1 + $0xff0] sm:$0xff]
    %v565 = vld [vmem:[%s1 + $0xff8] sm:$0xff]
    %v566 = vld [vmem:[%s2] sm:$0xf]
    %v567 = vld [vmem:[%s3] sm:$0xf]
    %v568 = vld [vmem:[%s4] sm:$0xf]
    %v570 = vlaneseq
    %v571 = vshrl.u32 %v570, 7
    %v572 = vsub.s32 0, %v571
    %v573 = vrot.slane %v566, %v572
    %v574 = vlaneseq
    %v575 = vshrl.u32 %v574, 7
    %v576 = vsub.s32 1, %v575
    %v577 = vrot.slane %v566, %v576
    %v578 = vlaneseq
    %v579 = vshrl.u32 %v578, 7
    %v580 = vsub.s32 2, %v579
    %v581 = vrot.slane %v566, %v580
    %v582 = vlaneseq
    %v583 = vshrl.u32 %v582, 7
    %v584 = vsub.s32 3, %v583
    %v585 = vrot.slane %v566, %v584
    %v592 = vcombine.high %v52, %v52
    %v594 = vunpack.c.l.s4 1983009808
    %v595 = vunpack.c.0.s8 %v594
    %v596 = vlaneseq
    %v597 = vshrl.u32 %v596, 7
    %v598 = vsub.s32 %v595, %v597
    %v599 = vrot.slane %v52, %v598
    %v601 = vunpack.c.l.s4 1983009808
    %v602 = vunpack.c.0.s8 %v601
    %v603 = vlaneseq
    %v604 = vshrl.u32 %v603, 7
    %v605 = vsub.s32 %v602, %v604
    %v606 = vrot.slane %v592, %v605
    %v607 = vcombine.high %v599, %v599
    %v608 = vcombine.high %v606, %v606
    %v609 = vcombine.high %v53, %v53
    %v611 = vunpack.c.l.s4 1983009808
    %v612 = vunpack.c.0.s8 %v611
    %v613 = vlaneseq
    %v614 = vshrl.u32 %v613, 7
    %v615 = vsub.s32 %v612, %v614
    %v616 = vrot.slane %v53, %v615
    %v618 = vunpack.c.l.s4 1983009808
    %v619 = vunpack.c.0.s8 %v618
    %v620 = vlaneseq
    %v621 = vshrl.u32 %v620, 7
    %v622 = vsub.s32 %v619, %v621
    %v623 = vrot.slane %v609, %v622
    %v624 = vcombine.high %v616, %v616
    %v625 = vcombine.high %v623, %v623
    %634 = vmatprep.subr.mxu0 %v55
    %635 = vmatpush1.msra.mxu0 %v54
    %636 = vmatprep.subr.mxu0 %v59
    %637 = vmatpush1.msra.mxu0 %v58
    %638 = vmatprep.subr.mxu0 %v63
    %639 = vmatpush1.msra.mxu0 %v62
    %640 = vmatprep.subr.mxu0 %v67
    %641 = vmatpush1.msra.mxu0 %v66
    %642 = vmatprep.subr.mxu0 %v71
    %643 = vmatpush1.msra.mxu0 %v70
    %644 = vmatprep.subr.mxu0 %v75
    %645 = vmatpush1.msra.mxu0 %v74
    %646 = vmatprep.subr.mxu0 %v79
    %647 = vmatpush1.msra.mxu0 %v78
    %648 = vmatprep.subr.mxu0 %v83
    %649 = vmatpush1.msra.mxu0 %v82
    %650 = vmatprep.subr.mxu0 %v87
    %651 = vmatpush1.msra.mxu0 %v86
    %652 = vmatprep.subr.mxu0 %v91
    %653 = vmatpush1.msra.mxu0 %v90
    %654 = vmatprep.subr.mxu0 %v95
    %655 = vmatpush1.msra.mxu0 %v94
    %656 = vmatprep.subr.mxu0 %v99
    %657 = vmatpush1.msra.mxu0 %v98
    %658 = vmatprep.subr.mxu0 %v103
    %659 = vmatpush1.msra.mxu0 %v102
    %660 = vmatprep.subr.mxu0 %v107
    %661 = vmatpush1.msra.mxu0 %v106
    %662 = vmatprep.subr.mxu0 %v111
    %663 = vmatpush1.msra.mxu0 %v110
    %664 = vmatprep.subr.mxu0 %v115
    %665 = vmatpush1.msra.mxu0 %v114
    %666 = vmatprep.subr.mxu0 %v119
    %667 = vmatpush1.msra.mxu0 %v118
    %668 = vmatprep.subr.mxu0 %v123
    %669 = vmatpush1.msra.mxu0 %v122
    %670 = vmatprep.subr.mxu0 %v127
    %671 = vmatpush1.msra.mxu0 %v126
    %672 = vmatprep.subr.mxu0 %v131
    %673 = vmatpush1.msra.mxu0 %v130
    %674 = vmatprep.subr.mxu0 %v135
    %675 = vmatpush1.msra.mxu0 %v134
    %676 = vmatprep.subr.mxu0 %v139
    %677 = vmatpush1.msra.mxu0 %v138
    %678 = vmatprep.subr.mxu0 %v143
    %679 = vmatpush1.msra.mxu0 %v142
    %680 = vmatprep.subr.mxu0 %v147
    %681 = vmatpush1.msra.mxu0 %v146
    %682 = vmatprep.subr.mxu0 %v151
    %683 = vmatpush1.msra.mxu0 %v150
    %684 = vmatprep.subr.mxu0 %v155
    %685 = vmatpush1.msra.mxu0 %v154
    %686 = vmatprep.subr.mxu0 %v159
    %687 = vmatpush1.msra.mxu0 %v158
    %688 = vmatprep.subr.mxu0 %v163
    %689 = vmatpush1.msra.mxu0 %v162
    %690 = vmatprep.subr.mxu0 %v167
    %691 = vmatpush1.msra.mxu0 %v166
    %692 = vmatprep.subr.mxu0 %v171
    %693 = vmatpush1.msra.mxu0 %v170
    %694 = vmatprep.subr.mxu0 %v175
    %695 = vmatpush1.msra.mxu0 %v174
    %696 = vmatprep.subr.mxu0 %v179
    %697 = vmatpush1.msra.mxu0 %v178
    %698 = vmatprep.mubr.f32.mxu0 %v607
    %699 = vmatmul.mubr.f32.gmra.mrb[0].mxu0 %v599
    %v700 = vpop.f32.mrb[0].mxu0
    %v701 = vadd.f32 %v573, %v700
    %v702 = vpop.f32.mrb[0].mxu0
    %v703 = vadd.f32 %v577, %v702
    %704 = vdwg.mxu0
    %705 = vmatprep.subr.mxu0 %v183
    %706 = vmatpush1.msra.mxu0 %v182
    %707 = vmatprep.subr.mxu0 %v187
    %708 = vmatpush1.msra.mxu0 %v186
    %709 = vmatprep.subr.mxu0 %v191
    %710 = vmatpush1.msra.mxu0 %v190
    %711 = vmatprep.subr.mxu0 %v195
    %712 = vmatpush1.msra.mxu0 %v194
    %713 = vmatprep.subr.mxu0 %v199
    %714 = vmatpush1.msra.mxu0 %v198
    %715 = vmatprep.subr.mxu0 %v203
    %716 = vmatpush1.msra.mxu0 %v202
    %717 = vmatprep.subr.mxu0 %v207
    %718 = vmatpush1.msra.mxu0 %v206
    %719 = vmatprep.subr.mxu0 %v211
    %720 = vmatpush1.msra.mxu0 %v210
    %721 = vmatprep.subr.mxu0 %v215
    %722 = vmatpush1.msra.mxu0 %v214
    %723 = vmatprep.subr.mxu0 %v219
    %724 = vmatpush1.msra.mxu0 %v218
    %725 = vmatprep.subr.mxu0 %v223
    %726 = vmatpush1.msra.mxu0 %v222
    %727 = vmatprep.subr.mxu0 %v227
    %728 = vmatpush1.msra.mxu0 %v226
    %729 = vmatprep.subr.mxu0 %v231
    %730 = vmatpush1.msra.mxu0 %v230
    %731 = vmatprep.subr.mxu0 %v235
    %732 = vmatpush1.msra.mxu0 %v234
    %733 = vmatprep.subr.mxu0 %v239
    %734 = vmatpush1.msra.mxu0 %v238
    %735 = vmatprep.subr.mxu0 %v243
    %736 = vmatpush1.msra.mxu0 %v242
    %737 = vmatprep.subr.mxu0 %v247
    %738 = vmatpush1.msra.mxu0 %v246
    %739 = vmatprep.subr.mxu0 %v251
    %740 = vmatpush1.msra.mxu0 %v250
    %741 = vmatprep.subr.mxu0 %v255
    %742 = vmatpush1.msra.mxu0 %v254
    %743 = vmatprep.subr.mxu0 %v259
    %744 = vmatpush1.msra.mxu0 %v258
    %745 = vmatprep.subr.mxu0 %v263
    %746 = vmatpush1.msra.mxu0 %v262
    %747 = vmatprep.subr.mxu0 %v267
    %748 = vmatpush1.msra.mxu0 %v266
    %749 = vmatprep.subr.mxu0 %v271
    %750 = vmatpush1.msra.mxu0 %v270
    %751 = vmatprep.subr.mxu0 %v275
    %752 = vmatpush1.msra.mxu0 %v274
    %753 = vmatprep.subr.mxu0 %v279
    %754 = vmatpush1.msra.mxu0 %v278
    %755 = vmatprep.subr.mxu0 %v283
    %756 = vmatpush1.msra.mxu0 %v282
    %757 = vmatprep.subr.mxu0 %v287
    %758 = vmatpush1.msra.mxu0 %v286
    %759 = vmatprep.subr.mxu0 %v291
    %760 = vmatpush1.msra.mxu0 %v290
    %761 = vmatprep.subr.mxu0 %v295
    %762 = vmatpush1.msra.mxu0 %v294
    %763 = vmatprep.subr.mxu0 %v299
    %764 = vmatpush1.msra.mxu0 %v298
    %765 = vmatprep.subr.mxu0 %v303
    %766 = vmatpush1.msra.mxu0 %v302
    %767 = vmatprep.subr.mxu0 %v307
    %768 = vmatpush1.msra.mxu0 %v306
    %769 = vmatprep.mubr.f32.mxu0 %v608
    %770 = vmatmul.mubr.f32.gmra.mrb[0].mxu0 %v606
    %v771 = vpop.f32.mrb[0].mxu0
    %v772 = vadd.f32 %v701, %v771
    %v773 = vpop.f32.mrb[0].mxu0
    %v774 = vadd.f32 %v703, %v773
    %775 = vdwg.mxu0
    %776 = vmatprep.subr.mxu0 %v311
    %777 = vmatpush1.msra.mxu0 %v310
    %778 = vmatprep.subr.mxu0 %v315
    %779 = vmatpush1.msra.mxu0 %v314
    %780 = vmatprep.subr.mxu0 %v319
    %781 = vmatpush1.msra.mxu0 %v318
    %782 = vmatprep.subr.mxu0 %v323
    %783 = vmatpush1.msra.mxu0 %v322
    %784 = vmatprep.subr.mxu0 %v327
    %785 = vmatpush1.msra.mxu0 %v326
    %786 = vmatprep.subr.mxu0 %v331
    %787 = vmatpush1.msra.mxu0 %v330
    %788 = vmatprep.subr.mxu0 %v335
    %789 = vmatpush1.msra.mxu0 %v334
    %790 = vmatprep.subr.mxu0 %v339
    %791 = vmatpush1.msra.mxu0 %v338
    %792 = vmatprep.subr.mxu0 %v343
    %793 = vmatpush1.msra.mxu0 %v342
    %794 = vmatprep.subr.mxu0 %v347
    %795 = vmatpush1.msra.mxu0 %v346
    %796 = vmatprep.subr.mxu0 %v351
    %797 = vmatpush1.msra.mxu0 %v350
    %798 = vmatprep.subr.mxu0 %v355
    %799 = vmatpush1.msra.mxu0 %v354
    %800 = vmatprep.subr.mxu0 %v359
    %801 = vmatpush1.msra.mxu0 %v358
    %802 = vmatprep.subr.mxu0 %v363
    %803 = vmatpush1.msra.mxu0 %v362
    %804 = vmatprep.subr.mxu0 %v367
    %805 = vmatpush1.msra.mxu0 %v366
    %806 = vmatprep.subr.mxu0 %v371
    %807 = vmatpush1.msra.mxu0 %v370
    %808 = vmatprep.subr.mxu0 %v375
    %809 = vmatpush1.msra.mxu0 %v374
    %810 = vmatprep.subr.mxu0 %v379
    %811 = vmatpush1.msra.mxu0 %v378
    %812 = vmatprep.subr.mxu0 %v383
    %813 = vmatpush1.msra.mxu0 %v382
    %814 = vmatprep.subr.mxu0 %v387
    %815 = vmatpush1.msra.mxu0 %v386
    %816 = vmatprep.subr.mxu0 %v391
    %817 = vmatpush1.msra.mxu0 %v390
    %818 = vmatprep.subr.mxu0 %v395
    %819 = vmatpush1.msra.mxu0 %v394
    %820 = vmatprep.subr.mxu0 %v399
    %821 = vmatpush1.msra.mxu0 %v398
    %822 = vmatprep.subr.mxu0 %v403
    %823 = vmatpush1.msra.mxu0 %v402
    %824 = vmatprep.subr.mxu0 %v407
    %825 = vmatpush1.msra.mxu0 %v406
    %826 = vmatprep.subr.mxu0 %v411
    %827 = vmatpush1.msra.mxu0 %v410
    %828 = vmatprep.subr.mxu0 %v415
    %829 = vmatpush1.msra.mxu0 %v414
    %830 = vmatprep.subr.mxu0 %v419
    %831 = vmatpush1.msra.mxu0 %v418
    %832 = vmatprep.subr.mxu0 %v423
    %833 = vmatpush1.msra.mxu0 %v422
    %834 = vmatprep.subr.mxu0 %v427
    %835 = vmatpush1.msra.mxu0 %v426
    %836 = vmatprep.subr.mxu0 %v431
    %837 = vmatpush1.msra.mxu0 %v430
    %838 = vmatprep.subr.mxu0 %v435
    %839 = vmatpush1.msra.mxu0 %v434
    %840 = vmatprep.mubr.f32.mxu0 %v624
    %841 = vmatmul.mubr.f32.gmra.mrb[0].mxu0 %v616
    %v842 = vpop.f32.mrb[0].mxu0
    %v843 = vadd.f32 %v772, %v842
    %v844 = vpop.f32.mrb[0].mxu0
    %v845 = vadd.f32 %v774, %v844
    %846 = vdwg.mxu0
    %847 = vmatprep.subr.mxu0 %v439
    %848 = vmatpush1.msra.mxu0 %v438
    %849 = vmatprep.subr.mxu0 %v443
    %850 = vmatpush1.msra.mxu0 %v442
    %851 = vmatprep.subr.mxu0 %v447
    %852 = vmatpush1.msra.mxu0 %v446
    %853 = vmatprep.subr.mxu0 %v451
    %854 = vmatpush1.msra.mxu0 %v450
    %855 = vmatprep.subr.mxu0 %v455
    %856 = vmatpush1.msra.mxu0 %v454
    %857 = vmatprep.subr.mxu0 %v459
    %858 = vmatpush1.msra.mxu0 %v458
    %859 = vmatprep.subr.mxu0 %v463
    %860 = vmatpush1.msra.mxu0 %v462
    %861 = vmatprep.subr.mxu0 %v467
    %862 = vmatpush1.msra.mxu0 %v466
    %863 = vmatprep.subr.mxu0 %v471
    %864 = vmatpush1.msra.mxu0 %v470
    %865 = vmatprep.subr.mxu0 %v475
    %866 = vmatpush1.msra.mxu0 %v474
    %867 = vmatprep.subr.mxu0 %v479
    %868 = vmatpush1.msra.mxu0 %v478
    %869 = vmatprep.subr.mxu0 %v483
    %870 = vmatpush1.msra.mxu0 %v482
    %871 = vmatprep.subr.mxu0 %v487
    %872 = vmatpush1.msra.mxu0 %v486
    %873 = vmatprep.subr.mxu0 %v491
    %874 = vmatpush1.msra.mxu0 %v490
    %875 = vmatprep.subr.mxu0 %v495
    %876 = vmatpush1.msra.mxu0 %v494
    %877 = vmatprep.subr.mxu0 %v499
    %878 = vmatpush1.msra.mxu0 %v498
    %879 = vmatprep.subr.mxu0 %v503
    %880 = vmatpush1.msra.mxu0 %v502
    %881 = vmatprep.subr.mxu0 %v507
    %882 = vmatpush1.msra.mxu0 %v506
    %883 = vmatprep.subr.mxu0 %v511
    %884 = vmatpush1.msra.mxu0 %v510
    %885 = vmatprep.subr.mxu0 %v515
    %886 = vmatpush1.msra.mxu0 %v514
    %887 = vmatprep.subr.mxu0 %v519
    %888 = vmatpush1.msra.mxu0 %v518
    %889 = vmatprep.subr.mxu0 %v523
    %890 = vmatpush1.msra.mxu0 %v522
    %891 = vmatprep.subr.mxu0 %v527
    %892 = vmatpush1.msra.mxu0 %v526
    %893 = vmatprep.subr.mxu0 %v531
    %894 = vmatpush1.msra.mxu0 %v530
    %895 = vmatprep.subr.mxu0 %v535
    %896 = vmatpush1.msra.mxu0 %v534
    %897 = vmatprep.subr.mxu0 %v539
    %898 = vmatpush1.msra.mxu0 %v538
    %899 = vmatprep.subr.mxu0 %v543
    %900 = vmatpush1.msra.mxu0 %v542
    %901 = vmatprep.subr.mxu0 %v547
    %902 = vmatpush1.msra.mxu0 %v546
    %903 = vmatprep.subr.mxu0 %v551
    %904 = vmatpush1.msra.mxu0 %v550
    %905 = vmatprep.subr.mxu0 %v555
    %906 = vmatpush1.msra.mxu0 %v554
    %907 = vmatprep.subr.mxu0 %v559
    %908 = vmatpush1.msra.mxu0 %v558
    %909 = vmatprep.subr.mxu0 %v563
    %910 = vmatpush1.msra.mxu0 %v562
    %911 = vmatprep.mubr.f32.mxu0 %v625
    %912 = vmatmul.mubr.f32.gmra.mrb[0].mxu0 %v623
    %v913 = vpop.f32.mrb[0].mxu0
    %v914 = vadd.f32 %v843, %v913
    %v915 = vpop.f32.mrb[0].mxu0
    %v916 = vadd.f32 %v845, %v915
    %917 = vdwg.mxu0
    %918 = vmatprep.subr.mxu0 %v57
    %919 = vmatpush1.msra.mxu0 %v56
    %920 = vmatprep.subr.mxu0 %v61
    %921 = vmatpush1.msra.mxu0 %v60
    %922 = vmatprep.subr.mxu0 %v65
    %923 = vmatpush1.msra.mxu0 %v64
    %924 = vmatprep.subr.mxu0 %v69
    %925 = vmatpush1.msra.mxu0 %v68
    %926 = vmatprep.subr.mxu0 %v73
    %927 = vmatpush1.msra.mxu0 %v72
    %928 = vmatprep.subr.mxu0 %v77
    %929 = vmatpush1.msra.mxu0 %v76
    %930 = vmatprep.subr.mxu0 %v81
    %931 = vmatpush1.msra.mxu0 %v80
    %932 = vmatprep.subr.mxu0 %v85
    %933 = vmatpush1.msra.mxu0 %v84
    %934 = vmatprep.subr.mxu0 %v89
    %935 = vmatpush1.msra.mxu0 %v88
    %936 = vmatprep.subr.mxu0 %v93
    %937 = vmatpush1.msra.mxu0 %v92
    %938 = vmatprep.subr.mxu0 %v97
    %939 = vmatpush1.msra.mxu0 %v96
    %940 = vmatprep.subr.mxu0 %v101
    %941 = vmatpush1.msra.mxu0 %v100
    %942 = vmatprep.subr.mxu0 %v105
    %943 = vmatpush1.msra.mxu0 %v104
    %944 = vmatprep.subr.mxu0 %v109
    %945 = vmatpush1.msra.mxu0 %v108
    %946 = vmatprep.subr.mxu0 %v113
    %947 = vmatpush1.msra.mxu0 %v112
    %948 = vmatprep.subr.mxu0 %v117
    %949 = vmatpush1.msra.mxu0 %v116
    %950 = vmatprep.subr.mxu0 %v121
    %951 = vmatpush1.msra.mxu0 %v120
    %952 = vmatprep.subr.mxu0 %v125
    %953 = vmatpush1.msra.mxu0 %v124
    %954 = vmatprep.subr.mxu0 %v129
    %955 = vmatpush1.msra.mxu0 %v128
    %956 = vmatprep.subr.mxu0 %v133
    %957 = vmatpush1.msra.mxu0 %v132
    %958 = vmatprep.subr.mxu0 %v137
    %959 = vmatpush1.msra.mxu0 %v136
    %960 = vmatprep.subr.mxu0 %v141
    %961 = vmatpush1.msra.mxu0 %v140
    %962 = vmatprep.subr.mxu0 %v145
    %963 = vmatpush1.msra.mxu0 %v144
    %964 = vmatprep.subr.mxu0 %v149
    %965 = vmatpush1.msra.mxu0 %v148
    %966 = vmatprep.subr.mxu0 %v153
    %967 = vmatpush1.msra.mxu0 %v152
    %968 = vmatprep.subr.mxu0 %v157
    %969 = vmatpush1.msra.mxu0 %v156
    %970 = vmatprep.subr.mxu0 %v161
    %971 = vmatpush1.msra.mxu0 %v160
    %972 = vmatprep.subr.mxu0 %v165
    %973 = vmatpush1.msra.mxu0 %v164
    %974 = vmatprep.subr.mxu0 %v169
    %975 = vmatpush1.msra.mxu0 %v168
    %976 = vmatprep.subr.mxu0 %v173
    %977 = vmatpush1.msra.mxu0 %v172
    %978 = vmatprep.subr.mxu0 %v177
    %979 = vmatpush1.msra.mxu0 %v176
    %980 = vmatprep.subr.mxu0 %v181
    %981 = vmatpush1.msra.mxu0 %v180
    %982 = vmatprep.mubr.f32.mxu0 %v607
    %983 = vmatmul.mubr.f32.gmra.mrb[0].mxu0 %v599
    %v984 = vpop.f32.mrb[0].mxu0
    %v985 = vadd.f32 %v581, %v984
    %v986 = vpop.f32.mrb[0].mxu0
    %v987 = vadd.f32 %v585, %v986
    %988 = vdwg.mxu0
    %989 = vmatprep.subr.mxu0 %v185
    %990 = vmatpush1.msra.mxu0 %v184
    %991 = vmatprep.subr.mxu0 %v189
    %992 = vmatpush1.msra.mxu0 %v188
    %993 = vmatprep.subr.mxu0 %v193
    %994 = vmatpush1.msra.mxu0 %v192
    %995 = vmatprep.subr.mxu0 %v197
    %996 = vmatpush1.msra.mxu0 %v196
    %997 = vmatprep.subr.mxu0 %v201
    %998 = vmatpush1.msra.mxu0 %v200
    %999 = vmatprep.subr.mxu0 %v205
    %1000 = vmatpush1.msra.mxu0 %v204
    %1001 = vmatprep.subr.mxu0 %v209
    %1002 = vmatpush1.msra.mxu0 %v208
    %1003 = vmatprep.subr.mxu0 %v213
    %1004 = vmatpush1.msra.mxu0 %v212
    %1005 = vmatprep.subr.mxu0 %v217
    %1006 = vmatpush1.msra.mxu0 %v216
    %1007 = vmatprep.subr.mxu0 %v221
    %1008 = vmatpush1.msra.mxu0 %v220
    %1009 = vmatprep.subr.mxu0 %v225
    %1010 = vmatpush1.msra.mxu0 %v224
    %1011 = vmatprep.subr.mxu0 %v229
    %1012 = vmatpush1.msra.mxu0 %v228
    %1013 = vmatprep.subr.mxu0 %v233
    %1014 = vmatpush1.msra.mxu0 %v232
    %1015 = vmatprep.subr.mxu0 %v237
    %1016 = vmatpush1.msra.mxu0 %v236
    %1017 = vmatprep.subr.mxu0 %v241
    %1018 = vmatpush1.msra.mxu0 %v240
    %1019 = vmatprep.subr.mxu0 %v245
    %1020 = vmatpush1.msra.mxu0 %v244
    %1021 = vmatprep.subr.mxu0 %v249
    %1022 = vmatpush1.msra.mxu0 %v248
    %1023 = vmatprep.subr.mxu0 %v253
    %1024 = vmatpush1.msra.mxu0 %v252
    %1025 = vmatprep.subr.mxu0 %v257
    %1026 = vmatpush1.msra.mxu0 %v256
    %1027 = vmatprep.subr.mxu0 %v261
    %1028 = vmatpush1.msra.mxu0 %v260
    %1029 = vmatprep.subr.mxu0 %v265
    %1030 = vmatpush1.msra.mxu0 %v264
    %1031 = vmatprep.subr.mxu0 %v269
    %1032 = vmatpush1.msra.mxu0 %v268
    %1033 = vmatprep.subr.mxu0 %v273
    %1034 = vmatpush1.msra.mxu0 %v272
    %1035 = vmatprep.subr.mxu0 %v277
    %1036 = vmatpush1.msra.mxu0 %v276
    %1037 = vmatprep.subr.mxu0 %v281
    %1038 = vmatpush1.msra.mxu0 %v280
    %1039 = vmatprep.subr.mxu0 %v285
    %1040 = vmatpush1.msra.mxu0 %v284
    %1041 = vmatprep.subr.mxu0 %v289
    %1042 = vmatpush1.msra.mxu0 %v288
    %1043 = vmatprep.subr.mxu0 %v293
    %1044 = vmatpush1.msra.mxu0 %v292
    %1045 = vmatprep.subr.mxu0 %v297
    %1046 = vmatpush1.msra.mxu0 %v296
    %1047 = vmatprep.subr.mxu0 %v301
    %1048 = vmatpush1.msra.mxu0 %v300
    %1049 = vmatprep.subr.mxu0 %v305
    %1050 = vmatpush1.msra.mxu0 %v304
    %1051 = vmatprep.subr.mxu0 %v309
    %1052 = vmatpush1.msra.mxu0 %v308
    %1053 = vmatprep.mubr.f32.mxu0 %v608
    %1054 = vmatmul.mubr.f32.gmra.mrb[0].mxu0 %v606
    %v1055 = vpop.f32.mrb[0].mxu0
    %v1056 = vadd.f32 %v985, %v1055
    %v1057 = vpop.f32.mrb[0].mxu0
    %v1058 = vadd.f32 %v987, %v1057
    %1059 = vdwg.mxu0
    %1060 = vmatprep.subr.mxu0 %v313
    %1061 = vmatpush1.msra.mxu0 %v312
    %1062 = vmatprep.subr.mxu0 %v317
    %1063 = vmatpush1.msra.mxu0 %v316
    %1064 = vmatprep.subr.mxu0 %v321
    %1065 = vmatpush1.msra.mxu0 %v320
    %1066 = vmatprep.subr.mxu0 %v325
    %1067 = vmatpush1.msra.mxu0 %v324
    %1068 = vmatprep.subr.mxu0 %v329
    %1069 = vmatpush1.msra.mxu0 %v328
    %1070 = vmatprep.subr.mxu0 %v333
    %1071 = vmatpush1.msra.mxu0 %v332
    %1072 = vmatprep.subr.mxu0 %v337
    %1073 = vmatpush1.msra.mxu0 %v336
    %1074 = vmatprep.subr.mxu0 %v341
    %1075 = vmatpush1.msra.mxu0 %v340
    %1076 = vmatprep.subr.mxu0 %v345
    %1077 = vmatpush1.msra.mxu0 %v344
    %1078 = vmatprep.subr.mxu0 %v349
    %1079 = vmatpush1.msra.mxu0 %v348
    %1080 = vmatprep.subr.mxu0 %v353
    %1081 = vmatpush1.msra.mxu0 %v352
    %1082 = vmatprep.subr.mxu0 %v357
    %1083 = vmatpush1.msra.mxu0 %v356
    %1084 = vmatprep.subr.mxu0 %v361
    %1085 = vmatpush1.msra.mxu0 %v360
    %1086 = vmatprep.subr.mxu0 %v365
    %1087 = vmatpush1.msra.mxu0 %v364
    %1088 = vmatprep.subr.mxu0 %v369
    %1089 = vmatpush1.msra.mxu0 %v368
    %1090 = vmatprep.subr.mxu0 %v373
    %1091 = vmatpush1.msra.mxu0 %v372
    %1092 = vmatprep.subr.mxu0 %v377
    %1093 = vmatpush1.msra.mxu0 %v376
    %1094 = vmatprep.subr.mxu0 %v381
    %1095 = vmatpush1.msra.mxu0 %v380
    %1096 = vmatprep.subr.mxu0 %v385
    %1097 = vmatpush1.msra.mxu0 %v384
    %1098 = vmatprep.subr.mxu0 %v389
    %1099 = vmatpush1.msra.mxu0 %v388
    %1100 = vmatprep.subr.mxu0 %v393
    %1101 = vmatpush1.msra.mxu0 %v392
    %1102 = vmatprep.subr.mxu0 %v397
    %1103 = vmatpush1.msra.mxu0 %v396
    %1104 = vmatprep.subr.mxu0 %v401
    %1105 = vmatpush1.msra.mxu0 %v400
    %1106 = vmatprep.subr.mxu0 %v405
    %1107 = vmatpush1.msra.mxu0 %v404
    %1108 = vmatprep.subr.mxu0 %v409
    %1109 = vmatpush1.msra.mxu0 %v408
    %1110 = vmatprep.subr.mxu0 %v413
    %1111 = vmatpush1.msra.mxu0 %v412
    %1112 = vmatprep.subr.mxu0 %v417
    %1113 = vmatpush1.msra.mxu0 %v416
    %1114 = vmatprep.subr.mxu0 %v421
    %1115 = vmatpush1.msra.mxu0 %v420
    %1116 = vmatprep.subr.mxu0 %v425
    %1117 = vmatpush1.msra.mxu0 %v424
    %1118 = vmatprep.subr.mxu0 %v429
    %1119 = vmatpush1.msra.mxu0 %v428
    %1120 = vmatprep.subr.mxu0 %v433
    %1121 = vmatpush1.msra.mxu0 %v432
    %1122 = vmatprep.subr.mxu0 %v437
    %1123 = vmatpush1.msra.mxu0 %v436
    %1124 = vmatprep.mubr.f32.mxu0 %v624
    %1125 = vmatmul.mubr.f32.gmra.mrb[0].mxu0 %v616
    %v1126 = vpop.f32.mrb[0].mxu0
    %v1127 = vadd.f32 %v1056, %v1126
    %v1128 = vpop.f32.mrb[0].mxu0
    %v1129 = vadd.f32 %v1058, %v1128
    %1130 = vdwg.mxu0
    %1131 = vmatprep.subr.mxu0 %v441
    %1132 = vmatpush1.msra.mxu0 %v440
    %1133 = vmatprep.subr.mxu0 %v445
    %1134 = vmatpush1.msra.mxu0 %v444
    %1135 = vmatprep.subr.mxu0 %v449
    %1136 = vmatpush1.msra.mxu0 %v448
    %1137 = vmatprep.subr.mxu0 %v453
    %1138 = vmatpush1.msra.mxu0 %v452
    %1139 = vmatprep.subr.mxu0 %v457
    %1140 = vmatpush1.msra.mxu0 %v456
    %1141 = vmatprep.subr.mxu0 %v461
    %1142 = vmatpush1.msra.mxu0 %v460
    %1143 = vmatprep.subr.mxu0 %v465
    %1144 = vmatpush1.msra.mxu0 %v464
    %1145 = vmatprep.subr.mxu0 %v469
    %1146 = vmatpush1.msra.mxu0 %v468
    %1147 = vmatprep.subr.mxu0 %v473
    %1148 = vmatpush1.msra.mxu0 %v472
    %1149 = vmatprep.subr.mxu0 %v477
    %1150 = vmatpush1.msra.mxu0 %v476
    %1151 = vmatprep.subr.mxu0 %v481
    %1152 = vmatpush1.msra.mxu0 %v480
    %1153 = vmatprep.subr.mxu0 %v485
    %1154 = vmatpush1.msra.mxu0 %v484
    %1155 = vmatprep.subr.mxu0 %v489
    %1156 = vmatpush1.msra.mxu0 %v488
    %1157 = vmatprep.subr.mxu0 %v493
    %1158 = vmatpush1.msra.mxu0 %v492
    %1159 = vmatprep.subr.mxu0 %v497
    %1160 = vmatpush1.msra.mxu0 %v496
    %1161 = vmatprep.subr.mxu0 %v501
    %1162 = vmatpush1.msra.mxu0 %v500
    %1163 = vmatprep.subr.mxu0 %v505
    %1164 = vmatpush1.msra.mxu0 %v504
    %1165 = vmatprep.subr.mxu0 %v509
    %1166 = vmatpush1.msra.mxu0 %v508
    %1167 = vmatprep.subr.mxu0 %v513
    %1168 = vmatpush1.msra.mxu0 %v512
    %1169 = vmatprep.subr.mxu0 %v517
    %1170 = vmatpush1.msra.mxu0 %v516
    %1171 = vmatprep.subr.mxu0 %v521
    %1172 = vmatpush1.msra.mxu0 %v520
    %1173 = vmatprep.subr.mxu0 %v525
    %1174 = vmatpush1.msra.mxu0 %v524
    %1175 = vmatprep.subr.mxu0 %v529
    %1176 = vmatpush1.msra.mxu0 %v528
    %1177 = vmatprep.subr.mxu0 %v533
    %1178 = vmatpush1.msra.mxu0 %v532
    %1179 = vmatprep.subr.mxu0 %v537
    %1180 = vmatpush1.msra.mxu0 %v536
    %1181 = vmatprep.subr.mxu0 %v541
    %1182 = vmatpush1.msra.mxu0 %v540
    %1183 = vmatprep.subr.mxu0 %v545
    %1184 = vmatpush1.msra.mxu0 %v544
    %1185 = vmatprep.subr.mxu0 %v549
    %1186 = vmatpush1.msra.mxu0 %v548
    %1187 = vmatprep.subr.mxu0 %v553
    %1188 = vmatpush1.msra.mxu0 %v552
    %1189 = vmatprep.subr.mxu0 %v557
    %1190 = vmatpush1.msra.mxu0 %v556
    %1191 = vmatprep.subr.mxu0 %v561
    %1192 = vmatpush1.msra.mxu0 %v560
    %1193 = vmatprep.subr.mxu0 %v565
    %1194 = vmatpush1.msra.mxu0 %v564
    %1195 = vmatprep.mubr.f32.mxu0 %v625
    %1196 = vmatmul.mubr.f32.gmra.mrb[0].mxu0 %v623
    %v1197 = vpop.f32.mrb[0].mxu0
    %v1198 = vadd.f32 %v1127, %v1197
    %v1199 = vpop.f32.mrb[0].mxu0
    %v1200 = vadd.f32 %v1129, %v1199
    %1201 = vdwg.mxu0
    %v1202 = vmax.f32 %v914, 0.0
    %v1203 = vmax.f32 %v916, 0.0
    %v1204 = vmax.f32 %v1198, 0.0
    %v1205 = vmax.f32 %v1200, 0.0
    %vm1206 = vcmask 1041408
    %v1207 = vsel %vm1206, %v1202, 0.0
    %v1208 = vrot.slane %v1207, 4
    %v1209 = vadd.f32 %v1207, %v1208
    %v1210 = vrot.slane %v1209, 2
    %v1211 = vadd.f32 %v1209, %v1210
    %v1212 = vrot.slane %v1211, 1
    %v1213 = vadd.f32 %v1211, %v1212
    %v1214 = vsel %vm1206, %v1203, 0.0
    %v1215 = vrot.slane %v1214, 4
    %v1216 = vadd.f32 %v1214, %v1215
    %v1217 = vrot.slane %v1216, 2
    %v1218 = vadd.f32 %v1216, %v1217
    %v1219 = vrot.slane %v1218, 1
    %v1220 = vadd.f32 %v1218, %v1219
    %v1221 = vsel %vm1206, %v1204, 0.0
    %v1222 = vrot.slane %v1221, 4
    %v1223 = vadd.f32 %v1221, %v1222
    %v1224 = vrot.slane %v1223, 2
    %v1225 = vadd.f32 %v1223, %v1224
    %v1226 = vrot.slane %v1225, 1
    %v1227 = vadd.f32 %v1225, %v1226
    %v1228 = vsel %vm1206, %v1205, 0.0
    %v1229 = vrot.slane %v1228, 4
    %v1230 = vadd.f32 %v1228, %v1229
    %v1231 = vrot.slane %v1230, 2
    %v1232 = vadd.f32 %v1230, %v1231
    %v1233 = vrot.slane %v1232, 1
    %v1234 = vadd.f32 %v1232, %v1233
    %v1235 = vrcp.pop 2.0
    %v1236 = vmul.f32 %v1213, %v1235
    %v1237 = vmul.f32 %v1220, %v1235
    %v1238 = vmul.f32 %v1227, %v1235
    %v1239 = vmul.f32 %v1234, %v1235
    %v1240 = vsub.f32 %v1202, %v1236
    %v1241 = vsub.f32 %v1203, %v1237
    %v1242 = vsub.f32 %v1204, %v1238
    %v1243 = vsub.f32 %v1205, %v1239
    %v1244 = vmul.f32 %v1240, %v1240
    %v1245 = vmul.f32 %v1241, %v1241
    %v1246 = vmul.f32 %v1242, %v1242
    %v1247 = vmul.f32 %v1243, %v1243
    %v1248 = vsel %vm1206, %v1244, 0.0
    %v1249 = vrot.slane %v1248, 4
    %v1250 = vadd.f32 %v1248, %v1249
    %v1251 = vrot.slane %v1250, 2
    %v1252 = vadd.f32 %v1250, %v1251
    %v1253 = vrot.slane %v1252, 1
    %v1254 = vadd.f32 %v1252, %v1253
    %v1255 = vsel %vm1206, %v1245, 0.0
    %v1256 = vrot.slane %v1255, 4
    %v1257 = vadd.f32 %v1255, %v1256
    %v1258 = vrot.slane %v1257, 2
    %v1259 = vadd.f32 %v1257, %v1258
    %v1260 = vrot.slane %v1259, 1
    %v1261 = vadd.f32 %v1259, %v1260
    %v1262 = vsel %vm1206, %v1246, 0.0
    %v1263 = vrot.slane %v1262, 4
    %v1264 = vadd.f32 %v1262, %v1263
    %v1265 = vrot.slane %v1264, 2
    %v1266 = vadd.f32 %v1264, %v1265
    %v1267 = vrot.slane %v1266, 1
    %v1268 = vadd.f32 %v1266, %v1267
    %v1269 = vsel %vm1206, %v1247, 0.0
    %v1270 = vrot.slane %v1269, 4
    %v1271 = vadd.f32 %v1269, %v1270
    %v1272 = vrot.slane %v1271, 2
    %v1273 = vadd.f32 %v1271, %v1272
    %v1274 = vrot.slane %v1273, 1
    %v1275 = vadd.f32 %v1273, %v1274
    %v1276 = vmul.f32 %v1254, %v1235
    %v1277 = vmul.f32 %v1261, %v1235
    %v1278 = vmul.f32 %v1268, %v1235
    %v1279 = vmul.f32 %v1275, %v1235
    %v1281 = vlaneseq
    %v1282 = vshrl.u32 %v1281, 7
    %v1283 = vsub.s32 0, %v1282
    %v1284 = vrot.slane %v567, %v1283
    %v1285 = vlaneseq
    %v1286 = vshrl.u32 %v1285, 7
    %v1287 = vsub.s32 1, %v1286
    %v1288 = vrot.slane %v567, %v1287
    %v1289 = vlaneseq
    %v1290 = vshrl.u32 %v1289, 7
    %v1291 = vsub.s32 2, %v1290
    %v1292 = vrot.slane %v567, %v1291
    %v1293 = vlaneseq
    %v1294 = vshrl.u32 %v1293, 7
    %v1295 = vsub.s32 3, %v1294
    %v1296 = vrot.slane %v567, %v1295
    %v1301 = vmul.f32 %v1284, %v1240
    %v1302 = vmul.f32 %v1288, %v1241
    %v1303 = vmul.f32 %v1292, %v1242
    %v1304 = vmul.f32 %v1296, %v1243
    %v1305 = vadd.f32 %v1276, 1e-05
    %v1306 = vadd.f32 %v1277, 1e-05
    %v1307 = vadd.f32 %v1278, 1e-05
    %v1308 = vadd.f32 %v1279, 1e-05
    %v1309 = vrsqrt.pop %v1305
    %v1310 = vrsqrt.pop %v1306
    %v1311 = vrsqrt.pop %v1307
    %v1312 = vrsqrt.pop %v1308
    %v1313 = vmul.f32 %v1301, %v1309
    %v1314 = vmul.f32 %v1302, %v1310
    %v1315 = vmul.f32 %v1303, %v1311
    %v1316 = vmul.f32 %v1304, %v1312
    %v1318 = vlaneseq
    %v1319 = vshrl.u32 %v1318, 7
    %v1320 = vsub.s32 0, %v1319
    %v1321 = vrot.slane %v568, %v1320
    %v1322 = vlaneseq
    %v1323 = vshrl.u32 %v1322, 7
    %v1324 = vsub.s32 1, %v1323
    %v1325 = vrot.slane %v568, %v1324
    %v1326 = vlaneseq
    %v1327 = vshrl.u32 %v1326, 7
    %v1328 = vsub.s32 2, %v1327
    %v1329 = vrot.slane %v568, %v1328
    %v1330 = vlaneseq
    %v1331 = vshrl.u32 %v1330, 7
    %v1332 = vsub.s32 3, %v1331
    %v1333 = vrot.slane %v568, %v1332
    %v1338 = vadd.f32 %v1313, %v1321
    %v1339 = vadd.f32 %v1314, %v1325
    %v1340 = vadd.f32 %v1315, %v1329
    %v1341 = vadd.f32 %v1316, %v1333
    %v1342 = vld [vmem:[#allocation2] sm:$0xff]
    %v1343 = vld [vmem:[#allocation2 + $0x8] sm:$0xff]
    %v1344 = vld [vmem:[#allocation2 + $0x10] sm:$0xff]
    %v1345 = vld [vmem:[#allocation2 + $0x18] sm:$0xff]
    %v1346 = vld [vmem:[#allocation2 + $0x20] sm:$0xff]
    %v1347 = vld [vmem:[#allocation2 + $0x28] sm:$0xff]
    %v1348 = vld [vmem:[#allocation2 + $0x30] sm:$0xff]
    %v1349 = vld [vmem:[#allocation2 + $0x38] sm:$0xff]
    %v1350 = vld [vmem:[#allocation2 + $0x40] sm:$0xff]
    %v1351 = vld [vmem:[#allocation2 + $0x48] sm:$0xff]
    %v1352 = vld [vmem:[#allocation2 + $0x50] sm:$0xff]
    %v1353 = vld [vmem:[#allocation2 + $0x58] sm:$0xff]
    %v1354 = vld [vmem:[#allocation2 + $0x60] sm:$0xff]
    %v1355 = vld [vmem:[#allocation2 + $0x68] sm:$0xff]
    %v1356 = vld [vmem:[#allocation2 + $0x70] sm:$0xff]
    %v1357 = vld [vmem:[#allocation2 + $0x78] sm:$0xff]
    %v1358 = vld [vmem:[#allocation2 + $0x80] sm:$0xff]
    %v1359 = vld [vmem:[#allocation2 + $0x88] sm:$0xff]
    %v1360 = vld [vmem:[#allocation2 + $0x90] sm:$0xff]
    %v1361 = vld [vmem:[#allocation2 + $0x98] sm:$0xff]
    %v1362 = vld [vmem:[#allocation2 + $0xa0] sm:$0xff]
    %v1363 = vld [vmem:[#allocation2 + $0xa8] sm:$0xff]
    %v1364 = vld [vmem:[#allocation2 + $0xb0] sm:$0xff]
    %v1365 = vld [vmem:[#allocation2 + $0xb8] sm:$0xff]
    %v1366 = vld [vmem:[#allocation2 + $0xc0] sm:$0xff]
    %v1367 = vld [vmem:[#allocation2 + $0xc8] sm:$0xff]
    %v1368 = vld [vmem:[#allocation2 + $0xd0] sm:$0xff]
    %v1369 = vld [vmem:[#allocation2 + $0xd8] sm:$0xff]
    %v1370 = vld [vmem:[#allocation2 + $0xe0] sm:$0xff]
    %v1371 = vld [vmem:[#allocation2 + $0xe8] sm:$0xff]
    %v1372 = vld [vmem:[#allocation2 + $0xf0] sm:$0xff]
    %v1373 = vld [vmem:[#allocation2 + $0xf8] sm:$0xff]
    %v1374 = vld [vmem:[#allocation2 + $0x100] sm:$0xff]
    %v1375 = vld [vmem:[#allocation2 + $0x108] sm:$0xff]
    %v1376 = vld [vmem:[#allocation2 + $0x110] sm:$0xff]
    %v1377 = vld [vmem:[#allocation2 + $0x118] sm:$0xff]
    %v1378 = vld [vmem:[#allocation2 + $0x120] sm:$0xff]
    %v1379 = vld [vmem:[#allocation2 + $0x128] sm:$0xff]
    %v1380 = vld [vmem:[#allocation2 + $0x130] sm:$0xff]
    %v1381 = vld [vmem:[#allocation2 + $0x138] sm:$0xff]
    %v1382 = vld [vmem:[#allocation2 + $0x140] sm:$0xff]
    %v1383 = vld [vmem:[#allocation2 + $0x148] sm:$0xff]
    %v1384 = vld [vmem:[#allocation2 + $0x150] sm:$0xff]
    %v1385 = vld [vmem:[#allocation2 + $0x158] sm:$0xff]
    %v1386 = vld [vmem:[#allocation2 + $0x160] sm:$0xff]
    %v1387 = vld [vmem:[#allocation2 + $0x168] sm:$0xff]
    %v1388 = vld [vmem:[#allocation2 + $0x170] sm:$0xff]
    %v1389 = vld [vmem:[#allocation2 + $0x178] sm:$0xff]
    %v1390 = vld [vmem:[#allocation2 + $0x180] sm:$0xff]
    %v1391 = vld [vmem:[#allocation2 + $0x188] sm:$0xff]
    %v1392 = vld [vmem:[#allocation2 + $0x190] sm:$0xff]
    %v1393 = vld [vmem:[#allocation2 + $0x198] sm:$0xff]
    %v1394 = vld [vmem:[#allocation2 + $0x1a0] sm:$0xff]
    %v1395 = vld [vmem:[#allocation2 + $0x1a8] sm:$0xff]
    %v1396 = vld [vmem:[#allocation2 + $0x1b0] sm:$0xff]
    %v1397 = vld [vmem:[#allocation2 + $0x1b8] sm:$0xff]
    %v1398 = vld [vmem:[#allocation2 + $0x1c0] sm:$0xff]
    %v1399 = vld [vmem:[#allocation2 + $0x1c8] sm:$0xff]
    %v1400 = vld [vmem:[#allocation2 + $0x1d0] sm:$0xff]
    %v1401 = vld [vmem:[#allocation2 + $0x1d8] sm:$0xff]
    %v1402 = vld [vmem:[#allocation2 + $0x1e0] sm:$0xff]
    %v1403 = vld [vmem:[#allocation2 + $0x1e8] sm:$0xff]
    %v1404 = vld [vmem:[#allocation2 + $0x1f0] sm:$0xff]
    %v1405 = vld [vmem:[#allocation2 + $0x1f8] sm:$0xff]
    %v1406 = vld [vmem:[#allocation2 + $0x200] sm:$0xff]
    %v1407 = vld [vmem:[#allocation2 + $0x208] sm:$0xff]
    %v1408 = vld [vmem:[#allocation2 + $0x210] sm:$0xff]
    %v1409 = vld [vmem:[#allocation2 + $0x218] sm:$0xff]
    %v1410 = vld [vmem:[#allocation2 + $0x220] sm:$0xff]
    %v1411 = vld [vmem:[#allocation2 + $0x228] sm:$0xff]
    %v1412 = vld [vmem:[#allocation2 + $0x230] sm:$0xff]
    %v1413 = vld [vmem:[#allocation2 + $0x238] sm:$0xff]
    %v1414 = vld [vmem:[#allocation2 + $0x240] sm:$0xff]
    %v1415 = vld [vmem:[#allocation2 + $0x248] sm:$0xff]
    %v1416 = vld [vmem:[#allocation2 + $0x250] sm:$0xff]
    %v1417 = vld [vmem:[#allocation2 + $0x258] sm:$0xff]
    %v1418 = vld [vmem:[#allocation2 + $0x260] sm:$0xff]
    %v1419 = vld [vmem:[#allocation2 + $0x268] sm:$0xff]
    %v1420 = vld [vmem:[#allocation2 + $0x270] sm:$0xff]
    %v1421 = vld [vmem:[#allocation2 + $0x278] sm:$0xff]
    %v1422 = vld [vmem:[#allocation2 + $0x280] sm:$0xff]
    %v1423 = vld [vmem:[#allocation2 + $0x288] sm:$0xff]
    %v1424 = vld [vmem:[#allocation2 + $0x290] sm:$0xff]
    %v1425 = vld [vmem:[#allocation2 + $0x298] sm:$0xff]
    %v1426 = vld [vmem:[#allocation2 + $0x2a0] sm:$0xff]
    %v1427 = vld [vmem:[#allocation2 + $0x2a8] sm:$0xff]
    %v1428 = vld [vmem:[#allocation2 + $0x2b0] sm:$0xff]
    %v1429 = vld [vmem:[#allocation2 + $0x2b8] sm:$0xff]
    %v1430 = vld [vmem:[#allocation2 + $0x2c0] sm:$0xff]
    %v1431 = vld [vmem:[#allocation2 + $0x2c8] sm:$0xff]
    %v1432 = vld [vmem:[#allocation2 + $0x2d0] sm:$0xff]
    %v1433 = vld [vmem:[#allocation2 + $0x2d8] sm:$0xff]
    %v1434 = vld [vmem:[#allocation2 + $0x2e0] sm:$0xff]
    %v1435 = vld [vmem:[#allocation2 + $0x2e8] sm:$0xff]
    %v1436 = vld [vmem:[#allocation2 + $0x2f0] sm:$0xff]
    %v1437 = vld [vmem:[#allocation2 + $0x2f8] sm:$0xff]
    %v1438 = vld [vmem:[#allocation2 + $0x300] sm:$0xff]
    %v1439 = vld [vmem:[#allocation2 + $0x308] sm:$0xff]
    %v1440 = vld [vmem:[#allocation2 + $0x310] sm:$0xff]
    %v1441 = vld [vmem:[#allocation2 + $0x318] sm:$0xff]
    %v1442 = vld [vmem:[#allocation2 + $0x320] sm:$0xff]
    %v1443 = vld [vmem:[#allocation2 + $0x328] sm:$0xff]
    %v1444 = vld [vmem:[#allocation2 + $0x330] sm:$0xff]
    %v1445 = vld [vmem:[#allocation2 + $0x338] sm:$0xff]
    %v1446 = vld [vmem:[#allocation2 + $0x340] sm:$0xff]
    %v1447 = vld [vmem:[#allocation2 + $0x348] sm:$0xff]
    %v1448 = vld [vmem:[#allocation2 + $0x350] sm:$0xff]
    %v1449 = vld [vmem:[#allocation2 + $0x358] sm:$0xff]
    %v1450 = vld [vmem:[#allocation2 + $0x360] sm:$0xff]
    %v1451 = vld [vmem:[#allocation2 + $0x368] sm:$0xff]
    %v1452 = vld [vmem:[#allocation2 + $0x370] sm:$0xff]
    %v1453 = vld [vmem:[#allocation2 + $0x378] sm:$0xff]
    %v1454 = vld [vmem:[#allocation2 + $0x380] sm:$0xff]
    %v1455 = vld [vmem:[#allocation2 + $0x388] sm:$0xff]
    %v1456 = vld [vmem:[#allocation2 + $0x390] sm:$0xff]
    %v1457 = vld [vmem:[#allocation2 + $0x398] sm:$0xff]
    %v1458 = vld [vmem:[#allocation2 + $0x3a0] sm:$0xff]
    %v1459 = vld [vmem:[#allocation2 + $0x3a8] sm:$0xff]
    %v1460 = vld [vmem:[#allocation2 + $0x3b0] sm:$0xff]
    %v1461 = vld [vmem:[#allocation2 + $0x3b8] sm:$0xff]
    %v1462 = vld [vmem:[#allocation2 + $0x3c0] sm:$0xff]
    %v1463 = vld [vmem:[#allocation2 + $0x3c8] sm:$0xff]
    %v1464 = vld [vmem:[#allocation2 + $0x3d0] sm:$0xff]
    %v1465 = vld [vmem:[#allocation2 + $0x3d8] sm:$0xff]
    %v1466 = vld [vmem:[#allocation2 + $0x3e0] sm:$0xff]
    %v1467 = vld [vmem:[#allocation2 + $0x3e8] sm:$0xff]
    %v1468 = vld [vmem:[#allocation2 + $0x3f0] sm:$0xff]
    %v1469 = vld [vmem:[#allocation2 + $0x3f8] sm:$0xff]
    %v1470 = vld [vmem:[%s6] sm:$0x3]
    %v1471 = vld [vmem:[%s7] sm:$0x3]
    %v1472 = vld [vmem:[%s8] sm:$0x3]
    %v1474 = vlaneseq
    %v1475 = vshrl.u32 %v1474, 7
    %v1476 = vsub.s32 0, %v1475
    %v1477 = vrot.slane %v1470, %v1476
    %v1478 = vlaneseq
    %v1479 = vshrl.u32 %v1478, 7
    %v1480 = vsub.s32 1, %v1479
    %v1481 = vrot.slane %v1470, %v1480
    %1484 = vmatprep.subr.mxu0 %v1343
    %1485 = vmatpush1.msra.mxu0 %v1342
    %1486 = vmatprep.subr.mxu0 %v1345
    %1487 = vmatpush1.msra.mxu0 %v1344
    %1488 = vmatprep.subr.mxu0 %v1347
    %1489 = vmatpush1.msra.mxu0 %v1346
    %1490 = vmatprep.subr.mxu0 %v1349
    %1491 = vmatpush1.msra.mxu0 %v1348
    %1492 = vmatprep.subr.mxu0 %v1351
    %1493 = vmatpush1.msra.mxu0 %v1350
    %1494 = vmatprep.subr.mxu0 %v1353
    %1495 = vmatpush1.msra.mxu0 %v1352
    %1496 = vmatprep.subr.mxu0 %v1355
    %1497 = vmatpush1.msra.mxu0 %v1354
    %1498 = vmatprep.subr.mxu0 %v1357
    %1499 = vmatpush1.msra.mxu0 %v1356
    %1500 = vmatprep.subr.mxu0 %v1359
    %1501 = vmatpush1.msra.mxu0 %v1358
    %1502 = vmatprep.subr.mxu0 %v1361
    %1503 = vmatpush1.msra.mxu0 %v1360
    %1504 = vmatprep.subr.mxu0 %v1363
    %1505 = vmatpush1.msra.mxu0 %v1362
    %1506 = vmatprep.subr.mxu0 %v1365
    %1507 = vmatpush1.msra.mxu0 %v1364
    %1508 = vmatprep.subr.mxu0 %v1367
    %1509 = vmatpush1.msra.mxu0 %v1366
    %1510 = vmatprep.subr.mxu0 %v1369
    %1511 = vmatpush1.msra.mxu0 %v1368
    %1512 = vmatprep.subr.mxu0 %v1371
    %1513 = vmatpush1.msra.mxu0 %v1370
    %1514 = vmatprep.subr.mxu0 %v1373
    %1515 = vmatpush1.msra.mxu0 %v1372
    %1516 = vmatprep.subr.mxu0 %v1375
    %1517 = vmatpush1.msra.mxu0 %v1374
    %1518 = vmatprep.subr.mxu0 %v1377
    %1519 = vmatpush1.msra.mxu0 %v1376
    %1520 = vmatprep.subr.mxu0 %v1379
    %1521 = vmatpush1.msra.mxu0 %v1378
    %1522 = vmatprep.subr.mxu0 %v1381
    %1523 = vmatpush1.msra.mxu0 %v1380
    %1524 = vmatprep.subr.mxu0 %v1383
    %1525 = vmatpush1.msra.mxu0 %v1382
    %1526 = vmatprep.subr.mxu0 %v1385
    %1527 = vmatpush1.msra.mxu0 %v1384
    %1528 = vmatprep.subr.mxu0 %v1387
    %1529 = vmatpush1.msra.mxu0 %v1386
    %1530 = vmatprep.subr.mxu0 %v1389
    %1531 = vmatpush1.msra.mxu0 %v1388
    %1532 = vmatprep.subr.mxu0 %v1391
    %1533 = vmatpush1.msra.mxu0 %v1390
    %1534 = vmatprep.subr.mxu0 %v1393
    %1535 = vmatpush1.msra.mxu0 %v1392
    %1536 = vmatprep.subr.mxu0 %v1395
    %1537 = vmatpush1.msra.mxu0 %v1394
    %1538 = vmatprep.subr.mxu0 %v1397
    %1539 = vmatpush1.msra.mxu0 %v1396
    %1540 = vmatprep.subr.mxu0 %v1399
    %1541 = vmatpush1.msra.mxu0 %v1398
    %1542 = vmatprep.subr.mxu0 %v1401
    %1543 = vmatpush1.msra.mxu0 %v1400
    %1544 = vmatprep.subr.mxu0 %v1403
    %1545 = vmatpush1.msra.mxu0 %v1402
    %1546 = vmatprep.subr.mxu0 %v1405
    %1547 = vmatpush1.msra.mxu0 %v1404
    %1548 = vmatprep.mubr.f32.mxu0 %v1339
    %1549 = vmatmul.mubr.f32.gmra.mrb[0].mxu0 %v1338
    %v1550 = vpop.f32.mrb[0].mxu0
    %v1551 = vadd.f32 %v1477, %v1550
    %v1552 = vpop.f32.mrb[0].mxu0
    %v1553 = vadd.f32 %v1481, %v1552
    %1554 = vdwg.mxu0
    %1555 = vmatprep.subr.mxu0 %v1407
    %1556 = vmatpush1.msra.mxu0 %v1406
    %1557 = vmatprep.subr.mxu0 %v1409
    %1558 = vmatpush1.msra.mxu0 %v1408
    %1559 = vmatprep.subr.mxu0 %v1411
    %1560 = vmatpush1.msra.mxu0 %v1410
    %1561 = vmatprep.subr.mxu0 %v1413
    %1562 = vmatpush1.msra.mxu0 %v1412
    %1563 = vmatprep.subr.mxu0 %v1415
    %1564 = vmatpush1.msra.mxu0 %v1414
    %1565 = vmatprep.subr.mxu0 %v1417
    %1566 = vmatpush1.msra.mxu0 %v1416
    %1567 = vmatprep.subr.mxu0 %v1419
    %1568 = vmatpush1.msra.mxu0 %v1418
    %1569 = vmatprep.subr.mxu0 %v1421
    %1570 = vmatpush1.msra.mxu0 %v1420
    %1571 = vmatprep.subr.mxu0 %v1423
    %1572 = vmatpush1.msra.mxu0 %v1422
    %1573 = vmatprep.subr.mxu0 %v1425
    %1574 = vmatpush1.msra.mxu0 %v1424
    %1575 = vmatprep.subr.mxu0 %v1427
    %1576 = vmatpush1.msra.mxu0 %v1426
    %1577 = vmatprep.subr.mxu0 %v1429
    %1578 = vmatpush1.msra.mxu0 %v1428
    %1579 = vmatprep.subr.mxu0 %v1431
    %1580 = vmatpush1.msra.mxu0 %v1430
    %1581 = vmatprep.subr.mxu0 %v1433
    %1582 = vmatpush1.msra.mxu0 %v1432
    %1583 = vmatprep.subr.mxu0 %v1435
    %1584 = vmatpush1.msra.mxu0 %v1434
    %1585 = vmatprep.subr.mxu0 %v1437
    %1586 = vmatpush1.msra.mxu0 %v1436
    %1587 = vmatprep.subr.mxu0 %v1439
    %1588 = vmatpush1.msra.mxu0 %v1438
    %1589 = vmatprep.subr.mxu0 %v1441
    %1590 = vmatpush1.msra.mxu0 %v1440
    %1591 = vmatprep.subr.mxu0 %v1443
    %1592 = vmatpush1.msra.mxu0 %v1442
    %1593 = vmatprep.subr.mxu0 %v1445
    %1594 = vmatpush1.msra.mxu0 %v1444
    %1595 = vmatprep.subr.mxu0 %v1447
    %1596 = vmatpush1.msra.mxu0 %v1446
    %1597 = vmatprep.subr.mxu0 %v1449
    %1598 = vmatpush1.msra.mxu0 %v1448
    %1599 = vmatprep.subr.mxu0 %v1451
    %1600 = vmatpush1.msra.mxu0 %v1450
    %1601 = vmatprep.subr.mxu0 %v1453
    %1602 = vmatpush1.msra.mxu0 %v1452
    %1603 = vmatprep.subr.mxu0 %v1455
    %1604 = vmatpush1.msra.mxu0 %v1454
    %1605 = vmatprep.subr.mxu0 %v1457
    %1606 = vmatpush1.msra.mxu0 %v1456
    %1607 = vmatprep.subr.mxu0 %v1459
    %1608 = vmatpush1.msra.mxu0 %v1458
    %1609 = vmatprep.subr.mxu0 %v1461
    %1610 = vmatpush1.msra.mxu0 %v1460
    %1611 = vmatprep.subr.mxu0 %v1463
    %1612 = vmatpush1.msra.mxu0 %v1462
    %1613 = vmatprep.subr.mxu0 %v1465
    %1614 = vmatpush1.msra.mxu0 %v1464
    %1615 = vmatprep.subr.mxu0 %v1467
    %1616 = vmatpush1.msra.mxu0 %v1466
    %1617 = vmatprep.subr.mxu0 %v1469
    %1618 = vmatpush1.msra.mxu0 %v1468
    %1619 = vmatprep.mubr.f32.mxu0 %v1341
    %1620 = vmatmul.mubr.f32.gmra.mrb[0].mxu0 %v1340
    %v1621 = vpop.f32.mrb[0].mxu0
    %v1622 = vadd.f32 %v1551, %v1621
    %v1623 = vpop.f32.mrb[0].mxu0
    %v1624 = vadd.f32 %v1553, %v1623
    %1625 = vdwg.mxu0
    %v1626 = vmax.f32 %v1622, 0.0
    %v1627 = vmax.f32 %v1624, 0.0
    %v1628 = vsel %vm1206, %v1626, 0.0
    %v1629 = vrot.slane %v1628, 4
    %v1630 = vadd.f32 %v1628, %v1629
    %v1631 = vrot.slane %v1630, 2
    %v1632 = vadd.f32 %v1630, %v1631
    %v1633 = vrot.slane %v1632, 1
    %v1634 = vadd.f32 %v1632, %v1633
    %v1635 = vsel %vm1206, %v1627, 0.0
    %v1636 = vrot.slane %v1635, 4
    %v1637 = vadd.f32 %v1635, %v1636
    %v1638 = vrot.slane %v1637, 2
    %v1639 = vadd.f32 %v1637, %v1638
    %v1640 = vrot.slane %v1639, 1
    %v1641 = vadd.f32 %v1639, %v1640
    %v1642 = vmul.f32 %v1634, %v1235
    %v1643 = vmul.f32 %v1641, %v1235
    %v1644 = vsub.f32 %v1626, %v1642
    %v1645 = vsub.f32 %v1627, %v1643
    %v1646 = vmul.f32 %v1644, %v1644
    %v1647 = vmul.f32 %v1645, %v1645
    %v1648 = vsel %vm1206, %v1646, 0.0
    %v1649 = vrot.slane %v1648, 4
    %v1650 = vadd.f32 %v1648, %v1649
    %v1651 = vrot.slane %v1650, 2
    %v1652 = vadd.f32 %v1650, %v1651
    %v1653 = vrot.slane %v1652, 1
    %v1654 = vadd.f32 %v1652, %v1653
    %v1655 = vsel %vm1206, %v1647, 0.0
    %v1656 = vrot.slane %v1655, 4
    %v1657 = vadd.f32 %v1655, %v1656
    %v1658 = vrot.slane %v1657, 2
    %v1659 = vadd.f32 %v1657, %v1658
    %v1660 = vrot.slane %v1659, 1
    %v1661 = vadd.f32 %v1659, %v1660
    %v1662 = vmul.f32 %v1654, %v1235
    %v1663 = vmul.f32 %v1661, %v1235
    %v1665 = vlaneseq
    %v1666 = vshrl.u32 %v1665, 7
    %v1667 = vsub.s32 0, %v1666
    %v1668 = vrot.slane %v1471, %v1667
    %v1669 = vlaneseq
    %v1670 = vshrl.u32 %v1669, 7
    %v1671 = vsub.s32 1, %v1670
    %v1672 = vrot.slane %v1471, %v1671
    %v1675 = vmul.f32 %v1668, %v1644
    %v1676 = vmul.f32 %v1672, %v1645
    %v1677 = vadd.f32 %v1662, 1e-05
    %v1678 = vadd.f32 %v1663, 1e-05
    %v1679 = vrsqrt.pop %v1677
    %v1680 = vrsqrt.pop %v1678
    %v1681 = vmul.f32 %v1675, %v1679
    %v1682 = vmul.f32 %v1676, %v1680
    %v1684 = vlaneseq
    %v1685 = vshrl.u32 %v1684, 7
    %v1686 = vsub.s32 0, %v1685
    %v1687 = vrot.slane %v1472, %v1686
    %v1688 = vlaneseq
    %v1689 = vshrl.u32 %v1688, 7
    %v1690 = vsub.s32 1, %v1689
    %v1691 = vrot.slane %v1472, %v1690
    %v1694 = vadd.f32 %v1681, %v1687
    %v1695 = vadd.f32 %v1682, %v1691
    %v1696 = vld [vmem:[%s9] sm:$0xff]
    %v1697 = vld [vmem:[%s9 + $0x8] sm:$0xff]
    %v1698 = vld [vmem:[%s9 + $0x10] sm:$0xff]
    %v1699 = vld [vmem:[%s9 + $0x18] sm:$0xff]
    %v1700 = vld [vmem:[%s9 + $0x20] sm:$0xff]
    %v1701 = vld [vmem:[%s9 + $0x28] sm:$0xff]
    %v1702 = vld [vmem:[%s9 + $0x30] sm:$0xff]
    %v1703 = vld [vmem:[%s9 + $0x38] sm:$0xff]
    %v1704 = vld [vmem:[%s9 + $0x40] sm:$0xff]
    %v1705 = vld [vmem:[%s9 + $0x48] sm:$0xff]
    %v1706 = vld [vmem:[%s9 + $0x50] sm:$0xff]
    %v1707 = vld [vmem:[%s9 + $0x58] sm:$0xff]
    %v1708 = vld [vmem:[%s9 + $0x60] sm:$0xff]
    %v1709 = vld [vmem:[%s9 + $0x68] sm:$0xff]
    %v1710 = vld [vmem:[%s9 + $0x70] sm:$0xff]
    %v1711 = vld [vmem:[%s9 + $0x78] sm:$0xff]
    %v1712 = vld [vmem:[%s9 + $0x80] sm:$0xff]
    %v1713 = vld [vmem:[%s9 + $0x88] sm:$0xff]
    %v1714 = vld [vmem:[%s9 + $0x90] sm:$0xff]
    %v1715 = vld [vmem:[%s9 + $0x98] sm:$0xff]
    %v1716 = vld [vmem:[%s9 + $0xa0] sm:$0xff]
    %v1717 = vld [vmem:[%s9 + $0xa8] sm:$0xff]
    %v1718 = vld [vmem:[%s9 + $0xb0] sm:$0xff]
    %v1719 = vld [vmem:[%s9 + $0xb8] sm:$0xff]
    %v1720 = vld [vmem:[%s9 + $0xc0] sm:$0xff]
    %v1721 = vld [vmem:[%s9 + $0xc8] sm:$0xff]
    %v1722 = vld [vmem:[%s9 + $0xd0] sm:$0xff]
    %v1723 = vld [vmem:[%s9 + $0xd8] sm:$0xff]
    %v1724 = vld [vmem:[%s9 + $0xe0] sm:$0xff]
    %v1725 = vld [vmem:[%s9 + $0xe8] sm:$0xff]
    %v1726 = vld [vmem:[%s9 + $0xf0] sm:$0xff]
    %v1727 = vld [vmem:[%s9 + $0xf8] sm:$0xff]
    %v1728 = vld [vmem:[%s10] sm:$0x1]
    %v1730 = vlaneseq
    %v1731 = vshrl.u32 %v1730, 7
    %v1732 = vsub.s32 0, %v1731
    %v1733 = vrot.slane %v1728, %v1732
    %1735 = vmatprep.subr.mxu0 0.0
    %1736 = vmatpush1.msra.mxu0 %v1696
    %1737 = vmatprep.subr.mxu0 0.0
    %1738 = vmatpush1.msra.mxu0 %v1697
    %1739 = vmatprep.subr.mxu0 0.0
    %1740 = vmatpush1.msra.mxu0 %v1698
    %1741 = vmatprep.subr.mxu0 0.0
    %1742 = vmatpush1.msra.mxu0 %v1699
    %1743 = vmatprep.subr.mxu0 0.0
    %1744 = vmatpush1.msra.mxu0 %v1700
    %1745 = vmatprep.subr.mxu0 0.0
    %1746 = vmatpush1.msra.mxu0 %v1701
    %1747 = vmatprep.subr.mxu0 0.0
    %1748 = vmatpush1.msra.mxu0 %v1702
    %1749 = vmatprep.subr.mxu0 0.0
    %1750 = vmatpush1.msra.mxu0 %v1703
    %1751 = vmatprep.subr.mxu0 0.0
    %1752 = vmatpush1.msra.mxu0 %v1704
    %1753 = vmatprep.subr.mxu0 0.0
    %1754 = vmatpush1.msra.mxu0 %v1705
    %1755 = vmatprep.subr.mxu0 0.0
    %1756 = vmatpush1.msra.mxu0 %v1706
    %1757 = vmatprep.subr.mxu0 0.0
    %1758 = vmatpush1.msra.mxu0 %v1707
    %1759 = vmatprep.subr.mxu0 0.0
    %1760 = vmatpush1.msra.mxu0 %v1708
    %1761 = vmatprep.subr.mxu0 0.0
    %1762 = vmatpush1.msra.mxu0 %v1709
    %1763 = vmatprep.subr.mxu0 0.0
    %1764 = vmatpush1.msra.mxu0 %v1710
    %1765 = vmatprep.subr.mxu0 0.0
    %1766 = vmatpush1.msra.mxu0 %v1711
    %1767 = vmatprep.subr.mxu0 0.0
    %1768 = vmatpush1.msra.mxu0 %v1712
    %1769 = vmatprep.subr.mxu0 0.0
    %1770 = vmatpush1.msra.mxu0 %v1713
    %1771 = vmatprep.subr.mxu0 0.0
    %1772 = vmatpush1.msra.mxu0 %v1714
    %1773 = vmatprep.subr.mxu0 0.0
    %1774 = vmatpush1.msra.mxu0 %v1715
    %1775 = vmatprep.subr.mxu0 0.0
    %1776 = vmatpush1.msra.mxu0 %v1716
    %1777 = vmatprep.subr.mxu0 0.0
    %1778 = vmatpush1.msra.mxu0 %v1717
    %1779 = vmatprep.subr.mxu0 0.0
    %1780 = vmatpush1.msra.mxu0 %v1718
    %1781 = vmatprep.subr.mxu0 0.0
    %1782 = vmatpush1.msra.mxu0 %v1719
    %1783 = vmatprep.subr.mxu0 0.0
    %1784 = vmatpush1.msra.mxu0 %v1720
    %1785 = vmatprep.subr.mxu0 0.0
    %1786 = vmatpush1.msra.mxu0 %v1721
    %1787 = vmatprep.subr.mxu0 0.0
    %1788 = vmatpush1.msra.mxu0 %v1722
    %1789 = vmatprep.subr.mxu0 0.0
    %1790 = vmatpush1.msra.mxu0 %v1723
    %1791 = vmatprep.subr.mxu0 0.0
    %1792 = vmatpush1.msra.mxu0 %v1724
    %1793 = vmatprep.subr.mxu0 0.0
    %1794 = vmatpush1.msra.mxu0 %v1725
    %1795 = vmatprep.subr.mxu0 0.0
    %1796 = vmatpush1.msra.mxu0 %v1726
    %1797 = vmatprep.subr.mxu0 0.0
    %1798 = vmatpush1.msra.mxu0 %v1727
    %1799 = vmatprep.mubr.f32.mxu0 %v1695
    %1800 = vmatmul.mubr.f32.gmra.mrb[0].mxu0 %v1694
    %v1801 = vpop.f32.mrb[0].mxu0
    %v1802 = vadd.f32 %v1733, %v1801
    %v1803 = vpop.f32.mrb[0].mxu0
    %1804 = vdwg.mxu0
    %vm1805 = vcmask 66560
    %1806 = vst.msk [vmem:[%s11] sm:$0x3] %vm1805, %v1802
    // Predicated region
    $region50: #{input_tnet_forward.9} parent=1 // pred_check
      _
    $region51: #{input_tnet_forward.9} parent=1 // pred_check_branch
      %1808 = sbr.rel (0) target = $region53
    $region52: #{input_tnet_forward.9} parent=1 // pred_region
      _
    $region53: #{input_tnet_forward.9} parent=1 // pred_fallthru
      _
    // Predicated region
    $region54: #{input_tnet_forward.9} parent=1 // pred_check
      _
    $region55: #{input_tnet_forward.9} parent=1 // pred_check_branch
      %1810 = sbr.rel (0) target = $region57
    $region56: #{input_tnet_forward.9} parent=1 // pred_region
      _
    $region57: #{input_tnet_forward.9} parent=1 // pred_fallthru
      _
    %1811 = vsyncpa [#allocation3], 1

</llo_original>
